<compile_context>
chip_gen: v7x
topology: tpu7x:2x2x1
jax: 0.10.0
libtpu: 0.0.40
codegen_flags: <defaults>
</compile_context>

<pallas_src>
import functools

import jax
import jax.numpy as jnp
from jax import lax
from jax.experimental import pallas as pl
from jax.experimental.pallas import tpu as pltpu

F32 = jnp.float32
SMEM = pltpu.MemorySpace.SMEM
SLAB = 128  # lane-dense packed per-image output row


def _softplus(x):
    # log(1 + exp(x)), numerically stable, only VPU/EUP-friendly ops.
    return jnp.maximum(x, 0.0) + jnp.log(1.0 + jnp.exp(-jnp.abs(x)))


def _sum2d(x):
    return jnp.sum(jnp.sum(x, axis=1, keepdims=True), axis=0, keepdims=True)


def _max2d(x):
    return jnp.max(jnp.max(x, axis=1, keepdims=True), axis=0, keepdims=True)


def _min2d(x):
    return jnp.min(jnp.min(x, axis=1, keepdims=True), axis=0, keepdims=True)


# ------------------------------ fused kernel ----------------------------------


def _ugpl_kernel(xp_ref, gcw_ref, gcb_ref, gclw_ref, gclb_ref, guw_ref, gub_ref,
                 ph_ref, pw_ref, lcw_ref, lcb_ref, llw_ref, llb_ref,
                 lfw_ref, lfb_ref, *out_refs,
                 C, H, W, F, NC, P, ps, Gh, Gw, bb, emit_inter):
    if emit_inter:
        slab_ref, umap_ref, upar_ref, patches_ref = out_refs
    else:
        (slab_ref,) = out_refs

    inv_hw = 1.0 / float(H * W)
    inv_pp = 1.0 / float(ps * ps)

    gclw = gclw_ref[...]                   # [F, NC]
    gclb = gclb_ref[...]                   # [1, NC]
    llw = llw_ref[...]                     # [F, NC]
    llb = llb_ref[...]                     # [1, NC]
    ph = ph_ref[...]                       # [Gh, H]
    pw = pw_ref[...]                       # [W, Gw]

    # Static index helpers (constants).
    iota_f = (lax.broadcasted_iota(jnp.int32, (Gh, Gw), 0) * Gw
              + lax.broadcasted_iota(jnp.int32, (Gh, Gw), 1)).astype(F32)
    iy = lax.broadcasted_iota(jnp.int32, (ps + 2, ps + 2), 0)
    ix = lax.broadcasted_iota(jnp.int32, (ps + 2, ps + 2), 1)
    halo = jnp.logical_and(jnp.logical_and(iy >= 1, iy <= ps),
                           jnp.logical_and(ix >= 1, ix <= ps)).astype(F32)

    for bi in range(bb):
        # -------- global path: 3x3 conv (pad=1) + ReLU, heads fused per feature
        taps = []
        for c in range(C):
            for dy in range(3):
                for dx in range(3):
                    taps.append(xp_ref[bi, c, dy:dy + H, dx:dx + W])   # [H, W]

        glogits = gclb                      # [1, NC]
        ev_a = jnp.zeros((H, W), F32)
        ev_b = jnp.zeros((H, W), F32)
        for f in range(F):
            acc = jnp.zeros((H, W), F32)
            for c in range(C):
                for t in range(9):
                    acc = acc + taps[c * 9 + t] * gcw_ref[c * 9 + t, f]
            feat = jnp.maximum(acc + gcb_ref[0, f], 0.0)
            pooled = _sum2d(feat) * inv_hw                 # (1, 1) GAP
            glogits = glogits + pooled * gclw[f:f + 1, :]  # classifier head
            ev_a = ev_a + feat * guw_ref[f, 0]             # evidential head
            ev_b = ev_b + feat * guw_ref[f, 1]
            # feat dies here -> no spills

        alpha = _softplus(ev_a + gub_ref[0, 0]) + 1.0
        beta = _softplus(ev_b + gub_ref[0, 1]) + 1.0
        umap = beta / (alpha + beta)                       # exact division
        if emit_inter:
            umap_ref[bi] = umap
            upar_ref[bi, 0] = alpha
            upar_ref[bi, 1] = beta

        mu = _sum2d(umap) * inv_hw                         # (1, 1) mean uncertainty
        scores = jnp.dot(jnp.dot(ph, umap, preferred_element_type=F32), pw,
                         preferred_element_type=F32) * inv_pp   # [Gh, Gw]

        # -------- in-kernel top-k window selection (vector one-hot, no scalars)
        sel_onehots, widx_f = [], []
        s = scores
        for _ in range(P):
            m = _max2d(s)
            cand = jnp.where(s >= m, iota_f, 1e9)          # flat idx at maxima
            mn = _min2d(cand)                              # first max (flat order)
            sel = cand <= mn                               # exactly-one one-hot
            sel_onehots.append(sel.astype(F32))
            widx_f.append(mn)                              # (1,1) window index (f32)
            s = jnp.where(sel, -1e30, s)

        # -------- patch gather directly from the in-VMEM padded image
        wins = []
        for c in range(C):
            wc = []
            for gy in range(Gh):
                for gx in range(Gw):
                    wc.append(xp_ref[bi, c,
                                     gy * ps:gy * ps + ps + 2,
                                     gx * ps:gx * ps + ps + 2])        # [ps+2, ps+2]
            wins.append(wc)

        llog_list, conf_list = [], []
        for p in range(P):
            sel_f = sel_onehots[p]
            padded_patch = []
            for c in range(C):
                acc = jnp.zeros((ps + 2, ps + 2), F32)
                for gy in range(Gh):
                    for gx in range(Gw):
                        acc = acc + sel_f[gy:gy + 1, gx:gx + 1] * wins[c][gy * Gw + gx]
                # zero halo: local net convs the extracted patch with padding=1
                padded_patch.append(acc * halo)
                if emit_inter:
                    patches_ref[bi, p, c] = acc[1:1 + ps, 1:1 + ps]

            ltaps = []
            for c in range(C):
                pc = padded_patch[c]
                for dy in range(3):
                    for dx in range(3):
                        ltaps.append(pc[dy:dy + ps, dx:dx + ps])        # [ps, ps]

            logits = llb                                   # [1, NC]
            confl = jnp.zeros((1, 1), F32) + lfb_ref[0, 0]
            for f in range(F):
                acc = jnp.zeros((ps, ps), F32)
                for c in range(C):
                    for t in range(9):
                        acc = acc + ltaps[c * 9 + t] * lcw_ref[c * 9 + t, f]
                acc = jnp.maximum(acc + lcb_ref[0, f], 0.0)
                pooled = _sum2d(acc) * inv_pp              # (1, 1)
                logits = logits + pooled * llw[f:f + 1, :]
                confl = confl + pooled * lfw_ref[f, 0]
            conf = 1.0 / (1.0 + jnp.exp(-confl))           # sigmoid, exact division
            llog_list.append(logits)
            conf_list.append(conf)

        # -------- adaptive fusion: uncertainty-gated global + conf-weighted locals
        gweight = 1.0 - mu                                 # (1, 1)
        conf_sum = conf_list[0]
        for p in range(1, P):
            conf_sum = conf_sum + conf_list[p]
        inv_cs = 1.0 / (conf_sum + 1e-8)                   # exact division
        local_agg = jnp.zeros((1, NC), F32)
        for p in range(P):
            local_agg = local_agg + (conf_list[p] * inv_cs) * llog_list[p]
        fused = gweight * glogits + (1.0 - gweight) * local_agg

        # -------- pack all tiny outputs into one lane-dense (1, 128) row
        parts = [fused, glogits] + llog_list + conf_list + [gweight, mu] + widx_f
        used = 2 * NC + P * NC + P + 2 + P
        row = jnp.concatenate(parts + [jnp.zeros((1, SLAB - used), F32)], axis=1)
        slab_ref[bi] = row


# ------------------------------- pallas_call -----------------------------------


def _ugpl_pallas(xp, params, pool_h, pool_w, *, B, C, H, W, F, NC, P, ps, Gh, Gw,
                 bb, emit_inter):
    kernel = functools.partial(_ugpl_kernel, C=C, H=H, W=W, F=F, NC=NC, P=P,
                               ps=ps, Gh=Gh, Gw=Gw, bb=bb, emit_inter=emit_inter)
    nb = B // bb
    in_specs = [
        pl.BlockSpec((bb, C, H + 2, W + 2), lambda i: (i, 0, 0, 0)),  # padded image
        pl.BlockSpec(memory_space=SMEM),                  # global conv weights
        pl.BlockSpec(memory_space=SMEM),                  # global conv bias
        pl.BlockSpec((F, NC), lambda i: (0, 0)),          # global cls weight
        pl.BlockSpec((1, NC), lambda i: (0, 0)),          # global cls bias
        pl.BlockSpec(memory_space=SMEM),                  # evidential weight
        pl.BlockSpec(memory_space=SMEM),                  # evidential bias
        pl.BlockSpec((Gh, H), lambda i: (0, 0)),          # window pooling (rows)
        pl.BlockSpec((W, Gw), lambda i: (0, 0)),          # window pooling (cols)
        pl.BlockSpec(memory_space=SMEM),                  # local conv weights
        pl.BlockSpec(memory_space=SMEM),                  # local conv bias
        pl.BlockSpec((F, NC), lambda i: (0, 0)),          # local cls weight
        pl.BlockSpec((1, NC), lambda i: (0, 0)),          # local cls bias
        pl.BlockSpec(memory_space=SMEM),                  # local conf weight
        pl.BlockSpec(memory_space=SMEM),                  # local conf bias
    ]
    out_specs = [pl.BlockSpec((bb, 1, SLAB), lambda i: (i, 0, 0))]
    out_shapes = [jax.ShapeDtypeStruct((B, 1, SLAB), F32)]
    if emit_inter:
        out_specs += [
            pl.BlockSpec((bb, H, W), lambda i: (i, 0, 0)),             # uncertainty map
            pl.BlockSpec((bb, 2, H, W), lambda i: (i, 0, 0, 0)),       # alpha / beta
            pl.BlockSpec((bb, P, C, ps, ps), lambda i: (i, 0, 0, 0, 0)),  # patches
        ]
        out_shapes += [
            jax.ShapeDtypeStruct((B, H, W), F32),
            jax.ShapeDtypeStruct((B, 2, H, W), F32),
            jax.ShapeDtypeStruct((B, P, C, ps, ps), F32),
        ]

    grid_spec = pltpu.PrefetchScalarGridSpec(
        num_scalar_prefetch=0,
        grid=(nb,),
        in_specs=in_specs,
        out_specs=tuple(out_specs),
    )
    return pl.pallas_call(
        kernel,
        out_shape=tuple(out_shapes),
        grid_spec=grid_spec,
        compiler_params=pltpu.CompilerParams(dimension_semantics=("parallel",)),
    )(xp, params["g_conv_w"], params["g_conv_b"], params["g_cls_w"],
      params["g_cls_b"], params["g_unc_w"], params["g_unc_b"], pool_h, pool_w,
      params["l_conv_w"], params["l_conv_b"], params["l_cls_w"],
      params["l_cls_b"], params["l_conf_w"], params["l_conf_b"])


# --------------------------------- forward -------------------------------------


def init_params(key, in_ch, feat, num_classes):
    ks = jax.random.split(key, 6)
    s = 0.1
    return {
        "g_conv_w": s * jax.random.normal(ks[0], (in_ch * 9, feat), F32),
        "g_conv_b": jnp.zeros((1, feat), F32),
        "g_cls_w": s * jax.random.normal(ks[1], (feat, num_classes), F32),
        "g_cls_b": jnp.zeros((1, num_classes), F32),
        "g_unc_w": s * jax.random.normal(ks[2], (feat, 2), F32),
        "g_unc_b": jnp.zeros((1, 2), F32),
        "l_conv_w": s * jax.random.normal(ks[3], (in_ch * 9, feat), F32),
        "l_conv_b": jnp.zeros((1, feat), F32),
        "l_cls_w": s * jax.random.normal(ks[4], (feat, num_classes), F32),
        "l_cls_b": jnp.zeros((1, num_classes), F32),
        "l_conf_w": s * jax.random.normal(ks[5], (feat, 1), F32),
        "l_conf_b": jnp.zeros((1, 1), F32),
    }


def ugpl_forward(params, x, *, num_classes=3, patch_size=8, num_patches=2, feat=8,
                 return_intermediate=True, batch_block=1):
    B, C, H, W = x.shape
    NC, F, P, ps = num_classes, feat, num_patches, patch_size
    Gh, Gw = H // ps, W // ps
    assert B % batch_block == 0

    # Pad once; everything else (conv, uncertainty, top-k, patch gather, local
    # refinement, fusion) happens inside the single fused kernel.
    xp = jnp.pad(x, ((0, 0), (0, 0), (1, 1), (1, 1)))
    # Window-mean pooling matrices (compile-time constants).
    pool_h = (jnp.arange(H)[None, :] // ps == jnp.arange(Gh)[:, None]).astype(F32)
    pool_w = (jnp.arange(W)[:, None] // ps == jnp.arange(Gw)[None, :]).astype(F32)

    outs = _ugpl_pallas(xp, params, pool_h, pool_w, B=B, C=C, H=H, W=W, F=F,
                        NC=NC, P=P, ps=ps, Gh=Gh, Gw=Gw, bb=batch_block,
                        emit_inter=return_intermediate)

    # Unpack the lane-dense per-image slab.
    slab = outs[0][:, 0, :]
    o = 0
    fused_logits = slab[:, o:o + NC]; o += NC
    global_logits = slab[:, o:o + NC]; o += NC
    local_logits = slab[:, o:o + P * NC].reshape(B, P, NC); o += P * NC
    local_conf = slab[:, o:o + P].reshape(B, P, 1); o += P
    global_weight = slab[:, o:o + 1]; o += 1
    o += 1  # per-image mean uncertainty (consumed in-kernel by the fusion)
    widx = jnp.round(slab[:, o:o + P]).astype(jnp.int32)   # selected window indices

    output = {
        "fused_logits": fused_logits,
        "global_logits": global_logits,
        "local_logits": local_logits,
        "local_confidences": local_conf,
        "global_weight": global_weight,
    }
    if return_intermediate:
        umap, uparams, patches = outs[1], outs[2], outs[3]
        gy, gx = widx // Gw, widx % Gw
        x1 = (gx * ps).astype(F32)
        y1 = (gy * ps).astype(F32)
        patch_coords = jnp.stack([x1, y1, x1 + ps, y1 + ps], axis=-1)
        output.update({
            "uncertainty_map": umap.reshape(B, 1, H, W),
            "uncertainty_params": uparams,
            "patches": patches,
            "patch_coords": patch_coords,
        })
    return output


if __name__ == "__main__":
    key = jax.random.PRNGKey(0)
    k_x, k_p = jax.random.split(key)

    # Small shapes consistent with the module (single-channel CT-style input,
    # input_size=32, patch_size=8, num_patches=2, num_classes=3).
    B, C, H, W = 2, 1, 32, 32
    x = jax.random.normal(k_x, (B, C, H, W), dtype=jnp.float32)
    params = init_params(k_p, in_ch=C, feat=8, num_classes=3)

    fwd = jax.jit(functools.partial(
        ugpl_forward, num_classes=3, patch_size=8, num_patches=2, feat=8,
        return_intermediate=True, batch_block=1))
    out = fwd(params, x)
    jax.block_until_ready(out["fused_logits"])
    jax.block_until_ready(out["global_weight"])
    jax.block_until_ready(out["uncertainty_map"])

    assert out["fused_logits"].shape == (B, 3)
    assert out["global_logits"].shape == (B, 3)
    assert out["local_logits"].shape == (B, 2, 3)
    assert out["local_confidences"].shape == (B, 2, 1)
    assert out["global_weight"].shape == (B, 1)
    assert out["uncertainty_map"].shape == (B, 1, H, W)
    assert out["uncertainty_params"].shape == (B, 2, H, W)
    assert out["patches"].shape == (B, 2, C, 8, 8)
    assert out["patch_coords"].shape == (B, 2, 4)

    print("KERNEL_OK")
</pallas_src>

<mosaic_0001>
module attributes {stable_mosaic.version = 11 : i64} {
  func.func @_ugpl_kernel(%arg0: i32, %arg1: memref<1x1x34x34xf32, #tpu.memory_space<vmem>>, %arg2: memref<9x8xf32, #tpu.memory_space<smem>>, %arg3: memref<1x8xf32, #tpu.memory_space<smem>>, %arg4: memref<8x3xf32, #tpu.memory_space<vmem>>, %arg5: memref<1x3xf32, #tpu.memory_space<vmem>>, %arg6: memref<8x2xf32, #tpu.memory_space<smem>>, %arg7: memref<1x2xf32, #tpu.memory_space<smem>>, %arg8: memref<4x32xf32, #tpu.memory_space<vmem>>, %arg9: memref<32x4xf32, #tpu.memory_space<vmem>>, %arg10: memref<9x8xf32, #tpu.memory_space<smem>>, %arg11: memref<1x8xf32, #tpu.memory_space<smem>>, %arg12: memref<8x3xf32, #tpu.memory_space<vmem>>, %arg13: memref<1x3xf32, #tpu.memory_space<vmem>>, %arg14: memref<8x1xf32, #tpu.memory_space<smem>>, %arg15: memref<1x1xf32, #tpu.memory_space<smem>>, %arg16: memref<1x1x128xf32, #tpu.memory_space<vmem>>, %arg17: memref<1x32x32xf32, #tpu.memory_space<vmem>>, %arg18: memref<1x2x32x32xf32, #tpu.memory_space<vmem>>, %arg19: memref<1x2x1x8x8xf32, #tpu.memory_space<vmem>>) attributes {dimension_semantics = [#tpu.dimension_semantics<parallel>], iteration_bounds = array<i64: 2>, scalar_prefetch = 0 : i64, scratch_operands = 0 : i64, tpu.core_type = #tpu.core_type<tc>, window_params = [{transform_indices = @transform_0, window_bounds = array<i64: 1, 1, 34, 34>}, {transform_indices = @transform_1, window_bounds = array<i64: 9, 8>}, {transform_indices = @transform_2, window_bounds = array<i64: 1, 8>}, {pipeline_mode = #tpu.pipeline_mode<synchronous>, transform_indices = @transform_3, window_bounds = array<i64: 8, 3>}, {pipeline_mode = #tpu.pipeline_mode<synchronous>, transform_indices = @transform_4, window_bounds = array<i64: 1, 3>}, {transform_indices = @transform_5, window_bounds = array<i64: 8, 2>}, {transform_indices = @transform_6, window_bounds = array<i64: 1, 2>}, {pipeline_mode = #tpu.pipeline_mode<synchronous>, transform_indices = @transform_7, window_bounds = array<i64: 4, 32>}, {pipeline_mode = #tpu.pipeline_mode<synchronous>, transform_indices = @transform_8, window_bounds = array<i64: 32, 4>}, {transform_indices = @transform_9, window_bounds = array<i64: 9, 8>}, {transform_indices = @transform_10, window_bounds = array<i64: 1, 8>}, {pipeline_mode = #tpu.pipeline_mode<synchronous>, transform_indices = @transform_11, window_bounds = array<i64: 8, 3>}, {pipeline_mode = #tpu.pipeline_mode<synchronous>, transform_indices = @transform_12, window_bounds = array<i64: 1, 3>}, {transform_indices = @transform_13, window_bounds = array<i64: 8, 1>}, {transform_indices = @transform_14, window_bounds = array<i64: 1, 1>}, {transform_indices = @transform_15, window_bounds = array<i64: 1, 1, 128>}, {transform_indices = @transform_16, window_bounds = array<i64: 1, 32, 32>}, {transform_indices = @transform_17, window_bounds = array<i64: 1, 2, 32, 32>}, {transform_indices = @transform_18, window_bounds = array<i64: 1, 2, 1, 8, 8>}]} {
    %c0 = arith.constant 0 : index
    %c0_0 = arith.constant 0 : index
    %0 = vector.load %arg4[%c0, %c0_0] : memref<8x3xf32, #tpu.memory_space<vmem>>, vector<8x3xf32>
    %c0_1 = arith.constant 0 : index
    %c0_2 = arith.constant 0 : index
    %1 = vector.load %arg5[%c0_1, %c0_2] : memref<1x3xf32, #tpu.memory_space<vmem>>, vector<1x3xf32>
    %c0_3 = arith.constant 0 : index
    %c0_4 = arith.constant 0 : index
    %2 = vector.load %arg12[%c0_3, %c0_4] : memref<8x3xf32, #tpu.memory_space<vmem>>, vector<8x3xf32>
    %c0_5 = arith.constant 0 : index
    %c0_6 = arith.constant 0 : index
    %3 = vector.load %arg13[%c0_5, %c0_6] : memref<1x3xf32, #tpu.memory_space<vmem>>, vector<1x3xf32>
    %c0_7 = arith.constant 0 : index
    %c0_8 = arith.constant 0 : index
    %4 = vector.load %arg8[%c0_7, %c0_8] : memref<4x32xf32, #tpu.memory_space<vmem>>, vector<4x32xf32>
    %c0_9 = arith.constant 0 : index
    %c0_10 = arith.constant 0 : index
    %5 = vector.load %arg9[%c0_9, %c0_10] : memref<32x4xf32, #tpu.memory_space<vmem>>, vector<32x4xf32>
    %6 = tpu.iota {dimensions = array<i32: 0>} : vector<4x4xi32>
    %c4_i32 = arith.constant 4 : i32
    %7 = vector.broadcast %c4_i32 : i32 to vector<4x4xi32>
    %8 = arith.muli %6, %7 : vector<4x4xi32>
    %9 = tpu.iota {dimensions = array<i32: 1>} : vector<4x4xi32>
    %10 = arith.addi %8, %9 : vector<4x4xi32>
    %11 = arith.sitofp %10 : vector<4x4xi32> to vector<4x4xf32>
    %12 = tpu.iota {dimensions = array<i32: 0>} : vector<10x10xi32>
    %13 = tpu.iota {dimensions = array<i32: 1>} : vector<10x10xi32>
    %c1_i32 = arith.constant 1 : i32
    %14 = vector.broadcast %c1_i32 : i32 to vector<10x10xi32>
    %15 = arith.cmpi sge, %12, %14 : vector<10x10xi32>
    %c8_i32 = arith.constant 8 : i32
    %16 = vector.broadcast %c8_i32 : i32 to vector<10x10xi32>
    %17 = arith.cmpi sle, %12, %16 : vector<10x10xi32>
    %18 = arith.andi %15, %17 : vector<10x10xi1>
    %c1_i32_11 = arith.constant 1 : i32
    %19 = vector.broadcast %c1_i32_11 : i32 to vector<10x10xi32>
    %20 = arith.cmpi sge, %13, %19 : vector<10x10xi32>
    %c8_i32_12 = arith.constant 8 : i32
    %21 = vector.broadcast %c8_i32_12 : i32 to vector<10x10xi32>
    %22 = arith.cmpi sle, %13, %21 : vector<10x10xi32>
    %23 = arith.andi %20, %22 : vector<10x10xi1>
    %24 = arith.andi %18, %23 : vector<10x10xi1>
    %25 = arith.extui %24 : vector<10x10xi1> to vector<10x10xi32>
    %26 = arith.sitofp %25 : vector<10x10xi32> to vector<10x10xf32>
    %c0_13 = arith.constant 0 : index
    %c0_14 = arith.constant 0 : index
    %c0_15 = arith.constant 0 : index
    %c0_16 = arith.constant 0 : index
    %27 = vector.load %arg1[%c0_13, %c0_14, %c0_15, %c0_16] : memref<1x1x34x34xf32, #tpu.memory_space<vmem>>, vector<1x1x32x32xf32>
    %28 = vector.shape_cast %27 : vector<1x1x32x32xf32> to vector<32x32xf32>
    %c0_17 = arith.constant 0 : index
    %c0_18 = arith.constant 0 : index
    %c0_19 = arith.constant 0 : index
    %c1 = arith.constant 1 : index
    %29 = vector.load %arg1[%c0_17, %c0_18, %c0_19, %c1] : memref<1x1x34x34xf32, #tpu.memory_space<vmem>>, vector<1x1x32x32xf32>
    %30 = vector.shape_cast %29 : vector<1x1x32x32xf32> to vector<32x32xf32>
    %c0_20 = arith.constant 0 : index
    %c0_21 = arith.constant 0 : index
    %c0_22 = arith.constant 0 : index
    %c2 = arith.constant 2 : index
    %31 = vector.load %arg1[%c0_20, %c0_21, %c0_22, %c2] : memref<1x1x34x34xf32, #tpu.memory_space<vmem>>, vector<1x1x32x32xf32>
    %32 = vector.shape_cast %31 : vector<1x1x32x32xf32> to vector<32x32xf32>
    %c0_23 = arith.constant 0 : index
    %c0_24 = arith.constant 0 : index
    %c1_25 = arith.constant 1 : index
    %c0_26 = arith.constant 0 : index
    %33 = vector.load %arg1[%c0_23, %c0_24, %c1_25, %c0_26] : memref<1x1x34x34xf32, #tpu.memory_space<vmem>>, vector<1x1x32x32xf32>
    %34 = vector.shape_cast %33 : vector<1x1x32x32xf32> to vector<32x32xf32>
    %c0_27 = arith.constant 0 : index
    %c0_28 = arith.constant 0 : index
    %c1_29 = arith.constant 1 : index
    %c1_30 = arith.constant 1 : index
    %35 = vector.load %arg1[%c0_27, %c0_28, %c1_29, %c1_30] : memref<1x1x34x34xf32, #tpu.memory_space<vmem>>, vector<1x1x32x32xf32>
    %36 = vector.shape_cast %35 : vector<1x1x32x32xf32> to vector<32x32xf32>
    %c0_31 = arith.constant 0 : index
    %c0_32 = arith.constant 0 : index
    %c1_33 = arith.constant 1 : index
    %c2_34 = arith.constant 2 : index
    %37 = vector.load %arg1[%c0_31, %c0_32, %c1_33, %c2_34] : memref<1x1x34x34xf32, #tpu.memory_space<vmem>>, vector<1x1x32x32xf32>
    %38 = vector.shape_cast %37 : vector<1x1x32x32xf32> to vector<32x32xf32>
    %c0_35 = arith.constant 0 : index
    %c0_36 = arith.constant 0 : index
    %c2_37 = arith.constant 2 : index
    %c0_38 = arith.constant 0 : index
    %39 = vector.load %arg1[%c0_35, %c0_36, %c2_37, %c0_38] : memref<1x1x34x34xf32, #tpu.memory_space<vmem>>, vector<1x1x32x32xf32>
    %40 = vector.shape_cast %39 : vector<1x1x32x32xf32> to vector<32x32xf32>
    %c0_39 = arith.constant 0 : index
    %c0_40 = arith.constant 0 : index
    %c2_41 = arith.constant 2 : index
    %c1_42 = arith.constant 1 : index
    %41 = vector.load %arg1[%c0_39, %c0_40, %c2_41, %c1_42] : memref<1x1x34x34xf32, #tpu.memory_space<vmem>>, vector<1x1x32x32xf32>
    %42 = vector.shape_cast %41 : vector<1x1x32x32xf32> to vector<32x32xf32>
    %c0_43 = arith.constant 0 : index
    %c0_44 = arith.constant 0 : index
    %c2_45 = arith.constant 2 : index
    %c2_46 = arith.constant 2 : index
    %43 = vector.load %arg1[%c0_43, %c0_44, %c2_45, %c2_46] : memref<1x1x34x34xf32, #tpu.memory_space<vmem>>, vector<1x1x32x32xf32>
    %44 = vector.shape_cast %43 : vector<1x1x32x32xf32> to vector<32x32xf32>
    %cst = arith.constant 0.000000e+00 : f32
    %45 = vector.broadcast %cst : f32 to vector<32x32xf32>
    %cst_47 = arith.constant 0.000000e+00 : f32
    %46 = vector.broadcast %cst_47 : f32 to vector<32x32xf32>
    %cst_48 = arith.constant 0.000000e+00 : f32
    %47 = vector.broadcast %cst_48 : f32 to vector<32x32xf32>
    %c0_49 = arith.constant 0 : index
    %c0_50 = arith.constant 0 : index
    %48 = memref.load %arg2[%c0_49, %c0_50] : memref<9x8xf32, #tpu.memory_space<smem>>
    %49 = vector.broadcast %48 : f32 to vector<32x32xf32>
    %50 = arith.mulf %28, %49 : vector<32x32xf32>
    %51 = arith.addf %47, %50 : vector<32x32xf32>
    %c1_51 = arith.constant 1 : index
    %c0_52 = arith.constant 0 : index
    %52 = memref.load %arg2[%c1_51, %c0_52] : memref<9x8xf32, #tpu.memory_space<smem>>
    %53 = vector.broadcast %52 : f32 to vector<32x32xf32>
    %54 = arith.mulf %30, %53 : vector<32x32xf32>
    %55 = arith.addf %51, %54 : vector<32x32xf32>
    %c2_53 = arith.constant 2 : index
    %c0_54 = arith.constant 0 : index
    %56 = memref.load %arg2[%c2_53, %c0_54] : memref<9x8xf32, #tpu.memory_space<smem>>
    %57 = vector.broadcast %56 : f32 to vector<32x32xf32>
    %58 = arith.mulf %32, %57 : vector<32x32xf32>
    %59 = arith.addf %55, %58 : vector<32x32xf32>
    %c3 = arith.constant 3 : index
    %c0_55 = arith.constant 0 : index
    %60 = memref.load %arg2[%c3, %c0_55] : memref<9x8xf32, #tpu.memory_space<smem>>
    %61 = vector.broadcast %60 : f32 to vector<32x32xf32>
    %62 = arith.mulf %34, %61 : vector<32x32xf32>
    %63 = arith.addf %59, %62 : vector<32x32xf32>
    %c4 = arith.constant 4 : index
    %c0_56 = arith.constant 0 : index
    %64 = memref.load %arg2[%c4, %c0_56] : memref<9x8xf32, #tpu.memory_space<smem>>
    %65 = vector.broadcast %64 : f32 to vector<32x32xf32>
    %66 = arith.mulf %36, %65 : vector<32x32xf32>
    %67 = arith.addf %63, %66 : vector<32x32xf32>
    %c5 = arith.constant 5 : index
    %c0_57 = arith.constant 0 : index
    %68 = memref.load %arg2[%c5, %c0_57] : memref<9x8xf32, #tpu.memory_space<smem>>
    %69 = vector.broadcast %68 : f32 to vector<32x32xf32>
    %70 = arith.mulf %38, %69 : vector<32x32xf32>
    %71 = arith.addf %67, %70 : vector<32x32xf32>
    %c6 = arith.constant 6 : index
    %c0_58 = arith.constant 0 : index
    %72 = memref.load %arg2[%c6, %c0_58] : memref<9x8xf32, #tpu.memory_space<smem>>
    %73 = vector.broadcast %72 : f32 to vector<32x32xf32>
    %74 = arith.mulf %40, %73 : vector<32x32xf32>
    %75 = arith.addf %71, %74 : vector<32x32xf32>
    %c7 = arith.constant 7 : index
    %c0_59 = arith.constant 0 : index
    %76 = memref.load %arg2[%c7, %c0_59] : memref<9x8xf32, #tpu.memory_space<smem>>
    %77 = vector.broadcast %76 : f32 to vector<32x32xf32>
    %78 = arith.mulf %42, %77 : vector<32x32xf32>
    %79 = arith.addf %75, %78 : vector<32x32xf32>
    %c8 = arith.constant 8 : index
    %c0_60 = arith.constant 0 : index
    %80 = memref.load %arg2[%c8, %c0_60] : memref<9x8xf32, #tpu.memory_space<smem>>
    %81 = vector.broadcast %80 : f32 to vector<32x32xf32>
    %82 = arith.mulf %44, %81 : vector<32x32xf32>
    %83 = arith.addf %79, %82 : vector<32x32xf32>
    %c0_61 = arith.constant 0 : index
    %c0_62 = arith.constant 0 : index
    %84 = memref.load %arg3[%c0_61, %c0_62] : memref<1x8xf32, #tpu.memory_space<smem>>
    %85 = vector.broadcast %84 : f32 to vector<32x32xf32>
    %86 = arith.addf %83, %85 : vector<32x32xf32>
    %cst_63 = arith.constant 0.000000e+00 : f32
    %87 = vector.broadcast %cst_63 : f32 to vector<32x32xf32>
    %88 = arith.maximumf %86, %87 : vector<32x32xf32>
    %cst_64 = arith.constant dense<0.000000e+00> : vector<32xf32>
    %89 = vector.multi_reduction <add>, %88, %cst_64 [1] : vector<32x32xf32> to vector<32xf32>
    %90 = vector.shape_cast %89 : vector<32xf32> to vector<32x1xf32>
    %cst_65 = arith.constant dense<0.000000e+00> : vector<1xf32>
    %91 = vector.multi_reduction <add>, %90, %cst_65 [0] : vector<32x1xf32> to vector<1xf32>
    %92 = vector.shape_cast %91 : vector<1xf32> to vector<1x1xf32>
    %cst_66 = arith.constant 9.765625E-4 : f32
    %93 = vector.broadcast %cst_66 : f32 to vector<1x1xf32>
    %94 = arith.mulf %92, %93 : vector<1x1xf32>
    %95 = vector.extract_strided_slice %0 {offsets = [0, 0], sizes = [1, 3], strides = [1, 1]} : vector<8x3xf32> to vector<1x3xf32>
    %96 = vector.broadcast %94 : vector<1x1xf32> to vector<1x3xf32>
    %97 = arith.mulf %96, %95 : vector<1x3xf32>
    %98 = arith.addf %1, %97 : vector<1x3xf32>
    %c0_67 = arith.constant 0 : index
    %c0_68 = arith.constant 0 : index
    %99 = memref.load %arg6[%c0_67, %c0_68] : memref<8x2xf32, #tpu.memory_space<smem>>
    %100 = vector.broadcast %99 : f32 to vector<32x32xf32>
    %101 = arith.mulf %88, %100 : vector<32x32xf32>
    %102 = arith.addf %45, %101 : vector<32x32xf32>
    %c0_69 = arith.constant 0 : index
    %c1_70 = arith.constant 1 : index
    %103 = memref.load %arg6[%c0_69, %c1_70] : memref<8x2xf32, #tpu.memory_space<smem>>
    %104 = vector.broadcast %103 : f32 to vector<32x32xf32>
    %105 = arith.mulf %88, %104 : vector<32x32xf32>
    %106 = arith.addf %46, %105 : vector<32x32xf32>
    %cst_71 = arith.constant 0.000000e+00 : f32
    %107 = vector.broadcast %cst_71 : f32 to vector<32x32xf32>
    %c0_72 = arith.constant 0 : index
    %c1_73 = arith.constant 1 : index
    %108 = memref.load %arg2[%c0_72, %c1_73] : memref<9x8xf32, #tpu.memory_space<smem>>
    %109 = vector.broadcast %108 : f32 to vector<32x32xf32>
    %110 = arith.mulf %28, %109 : vector<32x32xf32>
    %111 = arith.addf %107, %110 : vector<32x32xf32>
    %c1_74 = arith.constant 1 : index
    %c1_75 = arith.constant 1 : index
    %112 = memref.load %arg2[%c1_74, %c1_75] : memref<9x8xf32, #tpu.memory_space<smem>>
    %113 = vector.broadcast %112 : f32 to vector<32x32xf32>
    %114 = arith.mulf %30, %113 : vector<32x32xf32>
    %115 = arith.addf %111, %114 : vector<32x32xf32>
    %c2_76 = arith.constant 2 : index
    %c1_77 = arith.constant 1 : index
    %116 = memref.load %arg2[%c2_76, %c1_77] : memref<9x8xf32, #tpu.memory_space<smem>>
    %117 = vector.broadcast %116 : f32 to vector<32x32xf32>
    %118 = arith.mulf %32, %117 : vector<32x32xf32>
    %119 = arith.addf %115, %118 : vector<32x32xf32>
    %c3_78 = arith.constant 3 : index
    %c1_79 = arith.constant 1 : index
    %120 = memref.load %arg2[%c3_78, %c1_79] : memref<9x8xf32, #tpu.memory_space<smem>>
    %121 = vector.broadcast %120 : f32 to vector<32x32xf32>
    %122 = arith.mulf %34, %121 : vector<32x32xf32>
    %123 = arith.addf %119, %122 : vector<32x32xf32>
    %c4_80 = arith.constant 4 : index
    %c1_81 = arith.constant 1 : index
    %124 = memref.load %arg2[%c4_80, %c1_81] : memref<9x8xf32, #tpu.memory_space<smem>>
    %125 = vector.broadcast %124 : f32 to vector<32x32xf32>
    %126 = arith.mulf %36, %125 : vector<32x32xf32>
    %127 = arith.addf %123, %126 : vector<32x32xf32>
    %c5_82 = arith.constant 5 : index
    %c1_83 = arith.constant 1 : index
    %128 = memref.load %arg2[%c5_82, %c1_83] : memref<9x8xf32, #tpu.memory_space<smem>>
    %129 = vector.broadcast %128 : f32 to vector<32x32xf32>
    %130 = arith.mulf %38, %129 : vector<32x32xf32>
    %131 = arith.addf %127, %130 : vector<32x32xf32>
    %c6_84 = arith.constant 6 : index
    %c1_85 = arith.constant 1 : index
    %132 = memref.load %arg2[%c6_84, %c1_85] : memref<9x8xf32, #tpu.memory_space<smem>>
    %133 = vector.broadcast %132 : f32 to vector<32x32xf32>
    %134 = arith.mulf %40, %133 : vector<32x32xf32>
    %135 = arith.addf %131, %134 : vector<32x32xf32>
    %c7_86 = arith.constant 7 : index
    %c1_87 = arith.constant 1 : index
    %136 = memref.load %arg2[%c7_86, %c1_87] : memref<9x8xf32, #tpu.memory_space<smem>>
    %137 = vector.broadcast %136 : f32 to vector<32x32xf32>
    %138 = arith.mulf %42, %137 : vector<32x32xf32>
    %139 = arith.addf %135, %138 : vector<32x32xf32>
    %c8_88 = arith.constant 8 : index
    %c1_89 = arith.constant 1 : index
    %140 = memref.load %arg2[%c8_88, %c1_89] : memref<9x8xf32, #tpu.memory_space<smem>>
    %141 = vector.broadcast %140 : f32 to vector<32x32xf32>
    %142 = arith.mulf %44, %141 : vector<32x32xf32>
    %143 = arith.addf %139, %142 : vector<32x32xf32>
    %c0_90 = arith.constant 0 : index
    %c1_91 = arith.constant 1 : index
    %144 = memref.load %arg3[%c0_90, %c1_91] : memref<1x8xf32, #tpu.memory_space<smem>>
    %145 = vector.broadcast %144 : f32 to vector<32x32xf32>
    %146 = arith.addf %143, %145 : vector<32x32xf32>
    %cst_92 = arith.constant 0.000000e+00 : f32
    %147 = vector.broadcast %cst_92 : f32 to vector<32x32xf32>
    %148 = arith.maximumf %146, %147 : vector<32x32xf32>
    %cst_93 = arith.constant dense<0.000000e+00> : vector<32xf32>
    %149 = vector.multi_reduction <add>, %148, %cst_93 [1] : vector<32x32xf32> to vector<32xf32>
    %150 = vector.shape_cast %149 : vector<32xf32> to vector<32x1xf32>
    %cst_94 = arith.constant dense<0.000000e+00> : vector<1xf32>
    %151 = vector.multi_reduction <add>, %150, %cst_94 [0] : vector<32x1xf32> to vector<1xf32>
    %152 = vector.shape_cast %151 : vector<1xf32> to vector<1x1xf32>
    %cst_95 = arith.constant 9.765625E-4 : f32
    %153 = vector.broadcast %cst_95 : f32 to vector<1x1xf32>
    %154 = arith.mulf %152, %153 : vector<1x1xf32>
    %155 = vector.extract_strided_slice %0 {offsets = [1, 0], sizes = [1, 3], strides = [1, 1]} : vector<8x3xf32> to vector<1x3xf32>
    %156 = vector.broadcast %154 : vector<1x1xf32> to vector<1x3xf32>
    %157 = arith.mulf %156, %155 : vector<1x3xf32>
    %158 = arith.addf %98, %157 : vector<1x3xf32>
    %c1_96 = arith.constant 1 : index
    %c0_97 = arith.constant 0 : index
    %159 = memref.load %arg6[%c1_96, %c0_97] : memref<8x2xf32, #tpu.memory_space<smem>>
    %160 = vector.broadcast %159 : f32 to vector<32x32xf32>
    %161 = arith.mulf %148, %160 : vector<32x32xf32>
    %162 = arith.addf %102, %161 : vector<32x32xf32>
    %c1_98 = arith.constant 1 : index
    %c1_99 = arith.constant 1 : index
    %163 = memref.load %arg6[%c1_98, %c1_99] : memref<8x2xf32, #tpu.memory_space<smem>>
    %164 = vector.broadcast %163 : f32 to vector<32x32xf32>
    %165 = arith.mulf %148, %164 : vector<32x32xf32>
    %166 = arith.addf %106, %165 : vector<32x32xf32>
    %cst_100 = arith.constant 0.000000e+00 : f32
    %167 = vector.broadcast %cst_100 : f32 to vector<32x32xf32>
    %c0_101 = arith.constant 0 : index
    %c2_102 = arith.constant 2 : index
    %168 = memref.load %arg2[%c0_101, %c2_102] : memref<9x8xf32, #tpu.memory_space<smem>>
    %169 = vector.broadcast %168 : f32 to vector<32x32xf32>
    %170 = arith.mulf %28, %169 : vector<32x32xf32>
    %171 = arith.addf %167, %170 : vector<32x32xf32>
    %c1_103 = arith.constant 1 : index
    %c2_104 = arith.constant 2 : index
    %172 = memref.load %arg2[%c1_103, %c2_104] : memref<9x8xf32, #tpu.memory_space<smem>>
    %173 = vector.broadcast %172 : f32 to vector<32x32xf32>
    %174 = arith.mulf %30, %173 : vector<32x32xf32>
    %175 = arith.addf %171, %174 : vector<32x32xf32>
    %c2_105 = arith.constant 2 : index
    %c2_106 = arith.constant 2 : index
    %176 = memref.load %arg2[%c2_105, %c2_106] : memref<9x8xf32, #tpu.memory_space<smem>>
    %177 = vector.broadcast %176 : f32 to vector<32x32xf32>
    %178 = arith.mulf %32, %177 : vector<32x32xf32>
    %179 = arith.addf %175, %178 : vector<32x32xf32>
    %c3_107 = arith.constant 3 : index
    %c2_108 = arith.constant 2 : index
    %180 = memref.load %arg2[%c3_107, %c2_108] : memref<9x8xf32, #tpu.memory_space<smem>>
    %181 = vector.broadcast %180 : f32 to vector<32x32xf32>
    %182 = arith.mulf %34, %181 : vector<32x32xf32>
    %183 = arith.addf %179, %182 : vector<32x32xf32>
    %c4_109 = arith.constant 4 : index
    %c2_110 = arith.constant 2 : index
    %184 = memref.load %arg2[%c4_109, %c2_110] : memref<9x8xf32, #tpu.memory_space<smem>>
    %185 = vector.broadcast %184 : f32 to vector<32x32xf32>
    %186 = arith.mulf %36, %185 : vector<32x32xf32>
    %187 = arith.addf %183, %186 : vector<32x32xf32>
    %c5_111 = arith.constant 5 : index
    %c2_112 = arith.constant 2 : index
    %188 = memref.load %arg2[%c5_111, %c2_112] : memref<9x8xf32, #tpu.memory_space<smem>>
    %189 = vector.broadcast %188 : f32 to vector<32x32xf32>
    %190 = arith.mulf %38, %189 : vector<32x32xf32>
    %191 = arith.addf %187, %190 : vector<32x32xf32>
    %c6_113 = arith.constant 6 : index
    %c2_114 = arith.constant 2 : index
    %192 = memref.load %arg2[%c6_113, %c2_114] : memref<9x8xf32, #tpu.memory_space<smem>>
    %193 = vector.broadcast %192 : f32 to vector<32x32xf32>
    %194 = arith.mulf %40, %193 : vector<32x32xf32>
    %195 = arith.addf %191, %194 : vector<32x32xf32>
    %c7_115 = arith.constant 7 : index
    %c2_116 = arith.constant 2 : index
    %196 = memref.load %arg2[%c7_115, %c2_116] : memref<9x8xf32, #tpu.memory_space<smem>>
    %197 = vector.broadcast %196 : f32 to vector<32x32xf32>
    %198 = arith.mulf %42, %197 : vector<32x32xf32>
    %199 = arith.addf %195, %198 : vector<32x32xf32>
    %c8_117 = arith.constant 8 : index
    %c2_118 = arith.constant 2 : index
    %200 = memref.load %arg2[%c8_117, %c2_118] : memref<9x8xf32, #tpu.memory_space<smem>>
    %201 = vector.broadcast %200 : f32 to vector<32x32xf32>
    %202 = arith.mulf %44, %201 : vector<32x32xf32>
    %203 = arith.addf %199, %202 : vector<32x32xf32>
    %c0_119 = arith.constant 0 : index
    %c2_120 = arith.constant 2 : index
    %204 = memref.load %arg3[%c0_119, %c2_120] : memref<1x8xf32, #tpu.memory_space<smem>>
    %205 = vector.broadcast %204 : f32 to vector<32x32xf32>
    %206 = arith.addf %203, %205 : vector<32x32xf32>
    %cst_121 = arith.constant 0.000000e+00 : f32
    %207 = vector.broadcast %cst_121 : f32 to vector<32x32xf32>
    %208 = arith.maximumf %206, %207 : vector<32x32xf32>
    %cst_122 = arith.constant dense<0.000000e+00> : vector<32xf32>
    %209 = vector.multi_reduction <add>, %208, %cst_122 [1] : vector<32x32xf32> to vector<32xf32>
    %210 = vector.shape_cast %209 : vector<32xf32> to vector<32x1xf32>
    %cst_123 = arith.constant dense<0.000000e+00> : vector<1xf32>
    %211 = vector.multi_reduction <add>, %210, %cst_123 [0] : vector<32x1xf32> to vector<1xf32>
    %212 = vector.shape_cast %211 : vector<1xf32> to vector<1x1xf32>
    %cst_124 = arith.constant 9.765625E-4 : f32
    %213 = vector.broadcast %cst_124 : f32 to vector<1x1xf32>
    %214 = arith.mulf %212, %213 : vector<1x1xf32>
    %215 = vector.extract_strided_slice %0 {offsets = [2, 0], sizes = [1, 3], strides = [1, 1]} : vector<8x3xf32> to vector<1x3xf32>
    %216 = vector.broadcast %214 : vector<1x1xf32> to vector<1x3xf32>
    %217 = arith.mulf %216, %215 : vector<1x3xf32>
    %218 = arith.addf %158, %217 : vector<1x3xf32>
    %c2_125 = arith.constant 2 : index
    %c0_126 = arith.constant 0 : index
    %219 = memref.load %arg6[%c2_125, %c0_126] : memref<8x2xf32, #tpu.memory_space<smem>>
    %220 = vector.broadcast %219 : f32 to vector<32x32xf32>
    %221 = arith.mulf %208, %220 : vector<32x32xf32>
    %222 = arith.addf %162, %221 : vector<32x32xf32>
    %c2_127 = arith.constant 2 : index
    %c1_128 = arith.constant 1 : index
    %223 = memref.load %arg6[%c2_127, %c1_128] : memref<8x2xf32, #tpu.memory_space<smem>>
    %224 = vector.broadcast %223 : f32 to vector<32x32xf32>
    %225 = arith.mulf %208, %224 : vector<32x32xf32>
    %226 = arith.addf %166, %225 : vector<32x32xf32>
    %cst_129 = arith.constant 0.000000e+00 : f32
    %227 = vector.broadcast %cst_129 : f32 to vector<32x32xf32>
    %c0_130 = arith.constant 0 : index
    %c3_131 = arith.constant 3 : index
    %228 = memref.load %arg2[%c0_130, %c3_131] : memref<9x8xf32, #tpu.memory_space<smem>>
    %229 = vector.broadcast %228 : f32 to vector<32x32xf32>
    %230 = arith.mulf %28, %229 : vector<32x32xf32>
    %231 = arith.addf %227, %230 : vector<32x32xf32>
    %c1_132 = arith.constant 1 : index
    %c3_133 = arith.constant 3 : index
    %232 = memref.load %arg2[%c1_132, %c3_133] : memref<9x8xf32, #tpu.memory_space<smem>>
    %233 = vector.broadcast %232 : f32 to vector<32x32xf32>
    %234 = arith.mulf %30, %233 : vector<32x32xf32>
    %235 = arith.addf %231, %234 : vector<32x32xf32>
    %c2_134 = arith.constant 2 : index
    %c3_135 = arith.constant 3 : index
    %236 = memref.load %arg2[%c2_134, %c3_135] : memref<9x8xf32, #tpu.memory_space<smem>>
    %237 = vector.broadcast %236 : f32 to vector<32x32xf32>
    %238 = arith.mulf %32, %237 : vector<32x32xf32>
    %239 = arith.addf %235, %238 : vector<32x32xf32>
    %c3_136 = arith.constant 3 : index
    %c3_137 = arith.constant 3 : index
    %240 = memref.load %arg2[%c3_136, %c3_137] : memref<9x8xf32, #tpu.memory_space<smem>>
    %241 = vector.broadcast %240 : f32 to vector<32x32xf32>
    %242 = arith.mulf %34, %241 : vector<32x32xf32>
    %243 = arith.addf %239, %242 : vector<32x32xf32>
    %c4_138 = arith.constant 4 : index
    %c3_139 = arith.constant 3 : index
    %244 = memref.load %arg2[%c4_138, %c3_139] : memref<9x8xf32, #tpu.memory_space<smem>>
    %245 = vector.broadcast %244 : f32 to vector<32x32xf32>
    %246 = arith.mulf %36, %245 : vector<32x32xf32>
    %247 = arith.addf %243, %246 : vector<32x32xf32>
    %c5_140 = arith.constant 5 : index
    %c3_141 = arith.constant 3 : index
    %248 = memref.load %arg2[%c5_140, %c3_141] : memref<9x8xf32, #tpu.memory_space<smem>>
    %249 = vector.broadcast %248 : f32 to vector<32x32xf32>
    %250 = arith.mulf %38, %249 : vector<32x32xf32>
    %251 = arith.addf %247, %250 : vector<32x32xf32>
    %c6_142 = arith.constant 6 : index
    %c3_143 = arith.constant 3 : index
    %252 = memref.load %arg2[%c6_142, %c3_143] : memref<9x8xf32, #tpu.memory_space<smem>>
    %253 = vector.broadcast %252 : f32 to vector<32x32xf32>
    %254 = arith.mulf %40, %253 : vector<32x32xf32>
    %255 = arith.addf %251, %254 : vector<32x32xf32>
    %c7_144 = arith.constant 7 : index
    %c3_145 = arith.constant 3 : index
    %256 = memref.load %arg2[%c7_144, %c3_145] : memref<9x8xf32, #tpu.memory_space<smem>>
    %257 = vector.broadcast %256 : f32 to vector<32x32xf32>
    %258 = arith.mulf %42, %257 : vector<32x32xf32>
    %259 = arith.addf %255, %258 : vector<32x32xf32>
    %c8_146 = arith.constant 8 : index
    %c3_147 = arith.constant 3 : index
    %260 = memref.load %arg2[%c8_146, %c3_147] : memref<9x8xf32, #tpu.memory_space<smem>>
    %261 = vector.broadcast %260 : f32 to vector<32x32xf32>
    %262 = arith.mulf %44, %261 : vector<32x32xf32>
    %263 = arith.addf %259, %262 : vector<32x32xf32>
    %c0_148 = arith.constant 0 : index
    %c3_149 = arith.constant 3 : index
    %264 = memref.load %arg3[%c0_148, %c3_149] : memref<1x8xf32, #tpu.memory_space<smem>>
    %265 = vector.broadcast %264 : f32 to vector<32x32xf32>
    %266 = arith.addf %263, %265 : vector<32x32xf32>
    %cst_150 = arith.constant 0.000000e+00 : f32
    %267 = vector.broadcast %cst_150 : f32 to vector<32x32xf32>
    %268 = arith.maximumf %266, %267 : vector<32x32xf32>
    %cst_151 = arith.constant dense<0.000000e+00> : vector<32xf32>
    %269 = vector.multi_reduction <add>, %268, %cst_151 [1] : vector<32x32xf32> to vector<32xf32>
    %270 = vector.shape_cast %269 : vector<32xf32> to vector<32x1xf32>
    %cst_152 = arith.constant dense<0.000000e+00> : vector<1xf32>
    %271 = vector.multi_reduction <add>, %270, %cst_152 [0] : vector<32x1xf32> to vector<1xf32>
    %272 = vector.shape_cast %271 : vector<1xf32> to vector<1x1xf32>
    %cst_153 = arith.constant 9.765625E-4 : f32
    %273 = vector.broadcast %cst_153 : f32 to vector<1x1xf32>
    %274 = arith.mulf %272, %273 : vector<1x1xf32>
    %275 = vector.extract_strided_slice %0 {offsets = [3, 0], sizes = [1, 3], strides = [1, 1]} : vector<8x3xf32> to vector<1x3xf32>
    %276 = vector.broadcast %274 : vector<1x1xf32> to vector<1x3xf32>
    %277 = arith.mulf %276, %275 : vector<1x3xf32>
    %278 = arith.addf %218, %277 : vector<1x3xf32>
    %c3_154 = arith.constant 3 : index
    %c0_155 = arith.constant 0 : index
    %279 = memref.load %arg6[%c3_154, %c0_155] : memref<8x2xf32, #tpu.memory_space<smem>>
    %280 = vector.broadcast %279 : f32 to vector<32x32xf32>
    %281 = arith.mulf %268, %280 : vector<32x32xf32>
    %282 = arith.addf %222, %281 : vector<32x32xf32>
    %c3_156 = arith.constant 3 : index
    %c1_157 = arith.constant 1 : index
    %283 = memref.load %arg6[%c3_156, %c1_157] : memref<8x2xf32, #tpu.memory_space<smem>>
    %284 = vector.broadcast %283 : f32 to vector<32x32xf32>
    %285 = arith.mulf %268, %284 : vector<32x32xf32>
    %286 = arith.addf %226, %285 : vector<32x32xf32>
    %cst_158 = arith.constant 0.000000e+00 : f32
    %287 = vector.broadcast %cst_158 : f32 to vector<32x32xf32>
    %c0_159 = arith.constant 0 : index
    %c4_160 = arith.constant 4 : index
    %288 = memref.load %arg2[%c0_159, %c4_160] : memref<9x8xf32, #tpu.memory_space<smem>>
    %289 = vector.broadcast %288 : f32 to vector<32x32xf32>
    %290 = arith.mulf %28, %289 : vector<32x32xf32>
    %291 = arith.addf %287, %290 : vector<32x32xf32>
    %c1_161 = arith.constant 1 : index
    %c4_162 = arith.constant 4 : index
    %292 = memref.load %arg2[%c1_161, %c4_162] : memref<9x8xf32, #tpu.memory_space<smem>>
    %293 = vector.broadcast %292 : f32 to vector<32x32xf32>
    %294 = arith.mulf %30, %293 : vector<32x32xf32>
    %295 = arith.addf %291, %294 : vector<32x32xf32>
    %c2_163 = arith.constant 2 : index
    %c4_164 = arith.constant 4 : index
    %296 = memref.load %arg2[%c2_163, %c4_164] : memref<9x8xf32, #tpu.memory_space<smem>>
    %297 = vector.broadcast %296 : f32 to vector<32x32xf32>
    %298 = arith.mulf %32, %297 : vector<32x32xf32>
    %299 = arith.addf %295, %298 : vector<32x32xf32>
    %c3_165 = arith.constant 3 : index
    %c4_166 = arith.constant 4 : index
    %300 = memref.load %arg2[%c3_165, %c4_166] : memref<9x8xf32, #tpu.memory_space<smem>>
    %301 = vector.broadcast %300 : f32 to vector<32x32xf32>
    %302 = arith.mulf %34, %301 : vector<32x32xf32>
    %303 = arith.addf %299, %302 : vector<32x32xf32>
    %c4_167 = arith.constant 4 : index
    %c4_168 = arith.constant 4 : index
    %304 = memref.load %arg2[%c4_167, %c4_168] : memref<9x8xf32, #tpu.memory_space<smem>>
    %305 = vector.broadcast %304 : f32 to vector<32x32xf32>
    %306 = arith.mulf %36, %305 : vector<32x32xf32>
    %307 = arith.addf %303, %306 : vector<32x32xf32>
    %c5_169 = arith.constant 5 : index
    %c4_170 = arith.constant 4 : index
    %308 = memref.load %arg2[%c5_169, %c4_170] : memref<9x8xf32, #tpu.memory_space<smem>>
    %309 = vector.broadcast %308 : f32 to vector<32x32xf32>
    %310 = arith.mulf %38, %309 : vector<32x32xf32>
    %311 = arith.addf %307, %310 : vector<32x32xf32>
    %c6_171 = arith.constant 6 : index
    %c4_172 = arith.constant 4 : index
    %312 = memref.load %arg2[%c6_171, %c4_172] : memref<9x8xf32, #tpu.memory_space<smem>>
    %313 = vector.broadcast %312 : f32 to vector<32x32xf32>
    %314 = arith.mulf %40, %313 : vector<32x32xf32>
    %315 = arith.addf %311, %314 : vector<32x32xf32>
    %c7_173 = arith.constant 7 : index
    %c4_174 = arith.constant 4 : index
    %316 = memref.load %arg2[%c7_173, %c4_174] : memref<9x8xf32, #tpu.memory_space<smem>>
    %317 = vector.broadcast %316 : f32 to vector<32x32xf32>
    %318 = arith.mulf %42, %317 : vector<32x32xf32>
    %319 = arith.addf %315, %318 : vector<32x32xf32>
    %c8_175 = arith.constant 8 : index
    %c4_176 = arith.constant 4 : index
    %320 = memref.load %arg2[%c8_175, %c4_176] : memref<9x8xf32, #tpu.memory_space<smem>>
    %321 = vector.broadcast %320 : f32 to vector<32x32xf32>
    %322 = arith.mulf %44, %321 : vector<32x32xf32>
    %323 = arith.addf %319, %322 : vector<32x32xf32>
    %c0_177 = arith.constant 0 : index
    %c4_178 = arith.constant 4 : index
    %324 = memref.load %arg3[%c0_177, %c4_178] : memref<1x8xf32, #tpu.memory_space<smem>>
    %325 = vector.broadcast %324 : f32 to vector<32x32xf32>
    %326 = arith.addf %323, %325 : vector<32x32xf32>
    %cst_179 = arith.constant 0.000000e+00 : f32
    %327 = vector.broadcast %cst_179 : f32 to vector<32x32xf32>
    %328 = arith.maximumf %326, %327 : vector<32x32xf32>
    %cst_180 = arith.constant dense<0.000000e+00> : vector<32xf32>
    %329 = vector.multi_reduction <add>, %328, %cst_180 [1] : vector<32x32xf32> to vector<32xf32>
    %330 = vector.shape_cast %329 : vector<32xf32> to vector<32x1xf32>
    %cst_181 = arith.constant dense<0.000000e+00> : vector<1xf32>
    %331 = vector.multi_reduction <add>, %330, %cst_181 [0] : vector<32x1xf32> to vector<1xf32>
    %332 = vector.shape_cast %331 : vector<1xf32> to vector<1x1xf32>
    %cst_182 = arith.constant 9.765625E-4 : f32
    %333 = vector.broadcast %cst_182 : f32 to vector<1x1xf32>
    %334 = arith.mulf %332, %333 : vector<1x1xf32>
    %335 = vector.extract_strided_slice %0 {offsets = [4, 0], sizes = [1, 3], strides = [1, 1]} : vector<8x3xf32> to vector<1x3xf32>
    %336 = vector.broadcast %334 : vector<1x1xf32> to vector<1x3xf32>
    %337 = arith.mulf %336, %335 : vector<1x3xf32>
    %338 = arith.addf %278, %337 : vector<1x3xf32>
    %c4_183 = arith.constant 4 : index
    %c0_184 = arith.constant 0 : index
    %339 = memref.load %arg6[%c4_183, %c0_184] : memref<8x2xf32, #tpu.memory_space<smem>>
    %340 = vector.broadcast %339 : f32 to vector<32x32xf32>
    %341 = arith.mulf %328, %340 : vector<32x32xf32>
    %342 = arith.addf %282, %341 : vector<32x32xf32>
    %c4_185 = arith.constant 4 : index
    %c1_186 = arith.constant 1 : index
    %343 = memref.load %arg6[%c4_185, %c1_186] : memref<8x2xf32, #tpu.memory_space<smem>>
    %344 = vector.broadcast %343 : f32 to vector<32x32xf32>
    %345 = arith.mulf %328, %344 : vector<32x32xf32>
    %346 = arith.addf %286, %345 : vector<32x32xf32>
    %cst_187 = arith.constant 0.000000e+00 : f32
    %347 = vector.broadcast %cst_187 : f32 to vector<32x32xf32>
    %c0_188 = arith.constant 0 : index
    %c5_189 = arith.constant 5 : index
    %348 = memref.load %arg2[%c0_188, %c5_189] : memref<9x8xf32, #tpu.memory_space<smem>>
    %349 = vector.broadcast %348 : f32 to vector<32x32xf32>
    %350 = arith.mulf %28, %349 : vector<32x32xf32>
    %351 = arith.addf %347, %350 : vector<32x32xf32>
    %c1_190 = arith.constant 1 : index
    %c5_191 = arith.constant 5 : index
    %352 = memref.load %arg2[%c1_190, %c5_191] : memref<9x8xf32, #tpu.memory_space<smem>>
    %353 = vector.broadcast %352 : f32 to vector<32x32xf32>
    %354 = arith.mulf %30, %353 : vector<32x32xf32>
    %355 = arith.addf %351, %354 : vector<32x32xf32>
    %c2_192 = arith.constant 2 : index
    %c5_193 = arith.constant 5 : index
    %356 = memref.load %arg2[%c2_192, %c5_193] : memref<9x8xf32, #tpu.memory_space<smem>>
    %357 = vector.broadcast %356 : f32 to vector<32x32xf32>
    %358 = arith.mulf %32, %357 : vector<32x32xf32>
    %359 = arith.addf %355, %358 : vector<32x32xf32>
    %c3_194 = arith.constant 3 : index
    %c5_195 = arith.constant 5 : index
    %360 = memref.load %arg2[%c3_194, %c5_195] : memref<9x8xf32, #tpu.memory_space<smem>>
    %361 = vector.broadcast %360 : f32 to vector<32x32xf32>
    %362 = arith.mulf %34, %361 : vector<32x32xf32>
    %363 = arith.addf %359, %362 : vector<32x32xf32>
    %c4_196 = arith.constant 4 : index
    %c5_197 = arith.constant 5 : index
    %364 = memref.load %arg2[%c4_196, %c5_197] : memref<9x8xf32, #tpu.memory_space<smem>>
    %365 = vector.broadcast %364 : f32 to vector<32x32xf32>
    %366 = arith.mulf %36, %365 : vector<32x32xf32>
    %367 = arith.addf %363, %366 : vector<32x32xf32>
    %c5_198 = arith.constant 5 : index
    %c5_199 = arith.constant 5 : index
    %368 = memref.load %arg2[%c5_198, %c5_199] : memref<9x8xf32, #tpu.memory_space<smem>>
    %369 = vector.broadcast %368 : f32 to vector<32x32xf32>
    %370 = arith.mulf %38, %369 : vector<32x32xf32>
    %371 = arith.addf %367, %370 : vector<32x32xf32>
    %c6_200 = arith.constant 6 : index
    %c5_201 = arith.constant 5 : index
    %372 = memref.load %arg2[%c6_200, %c5_201] : memref<9x8xf32, #tpu.memory_space<smem>>
    %373 = vector.broadcast %372 : f32 to vector<32x32xf32>
    %374 = arith.mulf %40, %373 : vector<32x32xf32>
    %375 = arith.addf %371, %374 : vector<32x32xf32>
    %c7_202 = arith.constant 7 : index
    %c5_203 = arith.constant 5 : index
    %376 = memref.load %arg2[%c7_202, %c5_203] : memref<9x8xf32, #tpu.memory_space<smem>>
    %377 = vector.broadcast %376 : f32 to vector<32x32xf32>
    %378 = arith.mulf %42, %377 : vector<32x32xf32>
    %379 = arith.addf %375, %378 : vector<32x32xf32>
    %c8_204 = arith.constant 8 : index
    %c5_205 = arith.constant 5 : index
    %380 = memref.load %arg2[%c8_204, %c5_205] : memref<9x8xf32, #tpu.memory_space<smem>>
    %381 = vector.broadcast %380 : f32 to vector<32x32xf32>
    %382 = arith.mulf %44, %381 : vector<32x32xf32>
    %383 = arith.addf %379, %382 : vector<32x32xf32>
    %c0_206 = arith.constant 0 : index
    %c5_207 = arith.constant 5 : index
    %384 = memref.load %arg3[%c0_206, %c5_207] : memref<1x8xf32, #tpu.memory_space<smem>>
    %385 = vector.broadcast %384 : f32 to vector<32x32xf32>
    %386 = arith.addf %383, %385 : vector<32x32xf32>
    %cst_208 = arith.constant 0.000000e+00 : f32
    %387 = vector.broadcast %cst_208 : f32 to vector<32x32xf32>
    %388 = arith.maximumf %386, %387 : vector<32x32xf32>
    %cst_209 = arith.constant dense<0.000000e+00> : vector<32xf32>
    %389 = vector.multi_reduction <add>, %388, %cst_209 [1] : vector<32x32xf32> to vector<32xf32>
    %390 = vector.shape_cast %389 : vector<32xf32> to vector<32x1xf32>
    %cst_210 = arith.constant dense<0.000000e+00> : vector<1xf32>
    %391 = vector.multi_reduction <add>, %390, %cst_210 [0] : vector<32x1xf32> to vector<1xf32>
    %392 = vector.shape_cast %391 : vector<1xf32> to vector<1x1xf32>
    %cst_211 = arith.constant 9.765625E-4 : f32
    %393 = vector.broadcast %cst_211 : f32 to vector<1x1xf32>
    %394 = arith.mulf %392, %393 : vector<1x1xf32>
    %395 = vector.extract_strided_slice %0 {offsets = [5, 0], sizes = [1, 3], strides = [1, 1]} : vector<8x3xf32> to vector<1x3xf32>
    %396 = vector.broadcast %394 : vector<1x1xf32> to vector<1x3xf32>
    %397 = arith.mulf %396, %395 : vector<1x3xf32>
    %398 = arith.addf %338, %397 : vector<1x3xf32>
    %c5_212 = arith.constant 5 : index
    %c0_213 = arith.constant 0 : index
    %399 = memref.load %arg6[%c5_212, %c0_213] : memref<8x2xf32, #tpu.memory_space<smem>>
    %400 = vector.broadcast %399 : f32 to vector<32x32xf32>
    %401 = arith.mulf %388, %400 : vector<32x32xf32>
    %402 = arith.addf %342, %401 : vector<32x32xf32>
    %c5_214 = arith.constant 5 : index
    %c1_215 = arith.constant 1 : index
    %403 = memref.load %arg6[%c5_214, %c1_215] : memref<8x2xf32, #tpu.memory_space<smem>>
    %404 = vector.broadcast %403 : f32 to vector<32x32xf32>
    %405 = arith.mulf %388, %404 : vector<32x32xf32>
    %406 = arith.addf %346, %405 : vector<32x32xf32>
    %cst_216 = arith.constant 0.000000e+00 : f32
    %407 = vector.broadcast %cst_216 : f32 to vector<32x32xf32>
    %c0_217 = arith.constant 0 : index
    %c6_218 = arith.constant 6 : index
    %408 = memref.load %arg2[%c0_217, %c6_218] : memref<9x8xf32, #tpu.memory_space<smem>>
    %409 = vector.broadcast %408 : f32 to vector<32x32xf32>
    %410 = arith.mulf %28, %409 : vector<32x32xf32>
    %411 = arith.addf %407, %410 : vector<32x32xf32>
    %c1_219 = arith.constant 1 : index
    %c6_220 = arith.constant 6 : index
    %412 = memref.load %arg2[%c1_219, %c6_220] : memref<9x8xf32, #tpu.memory_space<smem>>
    %413 = vector.broadcast %412 : f32 to vector<32x32xf32>
    %414 = arith.mulf %30, %413 : vector<32x32xf32>
    %415 = arith.addf %411, %414 : vector<32x32xf32>
    %c2_221 = arith.constant 2 : index
    %c6_222 = arith.constant 6 : index
    %416 = memref.load %arg2[%c2_221, %c6_222] : memref<9x8xf32, #tpu.memory_space<smem>>
    %417 = vector.broadcast %416 : f32 to vector<32x32xf32>
    %418 = arith.mulf %32, %417 : vector<32x32xf32>
    %419 = arith.addf %415, %418 : vector<32x32xf32>
    %c3_223 = arith.constant 3 : index
    %c6_224 = arith.constant 6 : index
    %420 = memref.load %arg2[%c3_223, %c6_224] : memref<9x8xf32, #tpu.memory_space<smem>>
    %421 = vector.broadcast %420 : f32 to vector<32x32xf32>
    %422 = arith.mulf %34, %421 : vector<32x32xf32>
    %423 = arith.addf %419, %422 : vector<32x32xf32>
    %c4_225 = arith.constant 4 : index
    %c6_226 = arith.constant 6 : index
    %424 = memref.load %arg2[%c4_225, %c6_226] : memref<9x8xf32, #tpu.memory_space<smem>>
    %425 = vector.broadcast %424 : f32 to vector<32x32xf32>
    %426 = arith.mulf %36, %425 : vector<32x32xf32>
    %427 = arith.addf %423, %426 : vector<32x32xf32>
    %c5_227 = arith.constant 5 : index
    %c6_228 = arith.constant 6 : index
    %428 = memref.load %arg2[%c5_227, %c6_228] : memref<9x8xf32, #tpu.memory_space<smem>>
    %429 = vector.broadcast %428 : f32 to vector<32x32xf32>
    %430 = arith.mulf %38, %429 : vector<32x32xf32>
    %431 = arith.addf %427, %430 : vector<32x32xf32>
    %c6_229 = arith.constant 6 : index
    %c6_230 = arith.constant 6 : index
    %432 = memref.load %arg2[%c6_229, %c6_230] : memref<9x8xf32, #tpu.memory_space<smem>>
    %433 = vector.broadcast %432 : f32 to vector<32x32xf32>
    %434 = arith.mulf %40, %433 : vector<32x32xf32>
    %435 = arith.addf %431, %434 : vector<32x32xf32>
    %c7_231 = arith.constant 7 : index
    %c6_232 = arith.constant 6 : index
    %436 = memref.load %arg2[%c7_231, %c6_232] : memref<9x8xf32, #tpu.memory_space<smem>>
    %437 = vector.broadcast %436 : f32 to vector<32x32xf32>
    %438 = arith.mulf %42, %437 : vector<32x32xf32>
    %439 = arith.addf %435, %438 : vector<32x32xf32>
    %c8_233 = arith.constant 8 : index
    %c6_234 = arith.constant 6 : index
    %440 = memref.load %arg2[%c8_233, %c6_234] : memref<9x8xf32, #tpu.memory_space<smem>>
    %441 = vector.broadcast %440 : f32 to vector<32x32xf32>
    %442 = arith.mulf %44, %441 : vector<32x32xf32>
    %443 = arith.addf %439, %442 : vector<32x32xf32>
    %c0_235 = arith.constant 0 : index
    %c6_236 = arith.constant 6 : index
    %444 = memref.load %arg3[%c0_235, %c6_236] : memref<1x8xf32, #tpu.memory_space<smem>>
    %445 = vector.broadcast %444 : f32 to vector<32x32xf32>
    %446 = arith.addf %443, %445 : vector<32x32xf32>
    %cst_237 = arith.constant 0.000000e+00 : f32
    %447 = vector.broadcast %cst_237 : f32 to vector<32x32xf32>
    %448 = arith.maximumf %446, %447 : vector<32x32xf32>
    %cst_238 = arith.constant dense<0.000000e+00> : vector<32xf32>
    %449 = vector.multi_reduction <add>, %448, %cst_238 [1] : vector<32x32xf32> to vector<32xf32>
    %450 = vector.shape_cast %449 : vector<32xf32> to vector<32x1xf32>
    %cst_239 = arith.constant dense<0.000000e+00> : vector<1xf32>
    %451 = vector.multi_reduction <add>, %450, %cst_239 [0] : vector<32x1xf32> to vector<1xf32>
    %452 = vector.shape_cast %451 : vector<1xf32> to vector<1x1xf32>
    %cst_240 = arith.constant 9.765625E-4 : f32
    %453 = vector.broadcast %cst_240 : f32 to vector<1x1xf32>
    %454 = arith.mulf %452, %453 : vector<1x1xf32>
    %455 = vector.extract_strided_slice %0 {offsets = [6, 0], sizes = [1, 3], strides = [1, 1]} : vector<8x3xf32> to vector<1x3xf32>
    %456 = vector.broadcast %454 : vector<1x1xf32> to vector<1x3xf32>
    %457 = arith.mulf %456, %455 : vector<1x3xf32>
    %458 = arith.addf %398, %457 : vector<1x3xf32>
    %c6_241 = arith.constant 6 : index
    %c0_242 = arith.constant 0 : index
    %459 = memref.load %arg6[%c6_241, %c0_242] : memref<8x2xf32, #tpu.memory_space<smem>>
    %460 = vector.broadcast %459 : f32 to vector<32x32xf32>
    %461 = arith.mulf %448, %460 : vector<32x32xf32>
    %462 = arith.addf %402, %461 : vector<32x32xf32>
    %c6_243 = arith.constant 6 : index
    %c1_244 = arith.constant 1 : index
    %463 = memref.load %arg6[%c6_243, %c1_244] : memref<8x2xf32, #tpu.memory_space<smem>>
    %464 = vector.broadcast %463 : f32 to vector<32x32xf32>
    %465 = arith.mulf %448, %464 : vector<32x32xf32>
    %466 = arith.addf %406, %465 : vector<32x32xf32>
    %cst_245 = arith.constant 0.000000e+00 : f32
    %467 = vector.broadcast %cst_245 : f32 to vector<32x32xf32>
    %c0_246 = arith.constant 0 : index
    %c7_247 = arith.constant 7 : index
    %468 = memref.load %arg2[%c0_246, %c7_247] : memref<9x8xf32, #tpu.memory_space<smem>>
    %469 = vector.broadcast %468 : f32 to vector<32x32xf32>
    %470 = arith.mulf %28, %469 : vector<32x32xf32>
    %471 = arith.addf %467, %470 : vector<32x32xf32>
    %c1_248 = arith.constant 1 : index
    %c7_249 = arith.constant 7 : index
    %472 = memref.load %arg2[%c1_248, %c7_249] : memref<9x8xf32, #tpu.memory_space<smem>>
    %473 = vector.broadcast %472 : f32 to vector<32x32xf32>
    %474 = arith.mulf %30, %473 : vector<32x32xf32>
    %475 = arith.addf %471, %474 : vector<32x32xf32>
    %c2_250 = arith.constant 2 : index
    %c7_251 = arith.constant 7 : index
    %476 = memref.load %arg2[%c2_250, %c7_251] : memref<9x8xf32, #tpu.memory_space<smem>>
    %477 = vector.broadcast %476 : f32 to vector<32x32xf32>
    %478 = arith.mulf %32, %477 : vector<32x32xf32>
    %479 = arith.addf %475, %478 : vector<32x32xf32>
    %c3_252 = arith.constant 3 : index
    %c7_253 = arith.constant 7 : index
    %480 = memref.load %arg2[%c3_252, %c7_253] : memref<9x8xf32, #tpu.memory_space<smem>>
    %481 = vector.broadcast %480 : f32 to vector<32x32xf32>
    %482 = arith.mulf %34, %481 : vector<32x32xf32>
    %483 = arith.addf %479, %482 : vector<32x32xf32>
    %c4_254 = arith.constant 4 : index
    %c7_255 = arith.constant 7 : index
    %484 = memref.load %arg2[%c4_254, %c7_255] : memref<9x8xf32, #tpu.memory_space<smem>>
    %485 = vector.broadcast %484 : f32 to vector<32x32xf32>
    %486 = arith.mulf %36, %485 : vector<32x32xf32>
    %487 = arith.addf %483, %486 : vector<32x32xf32>
    %c5_256 = arith.constant 5 : index
    %c7_257 = arith.constant 7 : index
    %488 = memref.load %arg2[%c5_256, %c7_257] : memref<9x8xf32, #tpu.memory_space<smem>>
    %489 = vector.broadcast %488 : f32 to vector<32x32xf32>
    %490 = arith.mulf %38, %489 : vector<32x32xf32>
    %491 = arith.addf %487, %490 : vector<32x32xf32>
    %c6_258 = arith.constant 6 : index
    %c7_259 = arith.constant 7 : index
    %492 = memref.load %arg2[%c6_258, %c7_259] : memref<9x8xf32, #tpu.memory_space<smem>>
    %493 = vector.broadcast %492 : f32 to vector<32x32xf32>
    %494 = arith.mulf %40, %493 : vector<32x32xf32>
    %495 = arith.addf %491, %494 : vector<32x32xf32>
    %c7_260 = arith.constant 7 : index
    %c7_261 = arith.constant 7 : index
    %496 = memref.load %arg2[%c7_260, %c7_261] : memref<9x8xf32, #tpu.memory_space<smem>>
    %497 = vector.broadcast %496 : f32 to vector<32x32xf32>
    %498 = arith.mulf %42, %497 : vector<32x32xf32>
    %499 = arith.addf %495, %498 : vector<32x32xf32>
    %c8_262 = arith.constant 8 : index
    %c7_263 = arith.constant 7 : index
    %500 = memref.load %arg2[%c8_262, %c7_263] : memref<9x8xf32, #tpu.memory_space<smem>>
    %501 = vector.broadcast %500 : f32 to vector<32x32xf32>
    %502 = arith.mulf %44, %501 : vector<32x32xf32>
    %503 = arith.addf %499, %502 : vector<32x32xf32>
    %c0_264 = arith.constant 0 : index
    %c7_265 = arith.constant 7 : index
    %504 = memref.load %arg3[%c0_264, %c7_265] : memref<1x8xf32, #tpu.memory_space<smem>>
    %505 = vector.broadcast %504 : f32 to vector<32x32xf32>
    %506 = arith.addf %503, %505 : vector<32x32xf32>
    %cst_266 = arith.constant 0.000000e+00 : f32
    %507 = vector.broadcast %cst_266 : f32 to vector<32x32xf32>
    %508 = arith.maximumf %506, %507 : vector<32x32xf32>
    %cst_267 = arith.constant dense<0.000000e+00> : vector<32xf32>
    %509 = vector.multi_reduction <add>, %508, %cst_267 [1] : vector<32x32xf32> to vector<32xf32>
    %510 = vector.shape_cast %509 : vector<32xf32> to vector<32x1xf32>
    %cst_268 = arith.constant dense<0.000000e+00> : vector<1xf32>
    %511 = vector.multi_reduction <add>, %510, %cst_268 [0] : vector<32x1xf32> to vector<1xf32>
    %512 = vector.shape_cast %511 : vector<1xf32> to vector<1x1xf32>
    %cst_269 = arith.constant 9.765625E-4 : f32
    %513 = vector.broadcast %cst_269 : f32 to vector<1x1xf32>
    %514 = arith.mulf %512, %513 : vector<1x1xf32>
    %515 = vector.extract_strided_slice %0 {offsets = [7, 0], sizes = [1, 3], strides = [1, 1]} : vector<8x3xf32> to vector<1x3xf32>
    %516 = vector.broadcast %514 : vector<1x1xf32> to vector<1x3xf32>
    %517 = arith.mulf %516, %515 : vector<1x3xf32>
    %518 = arith.addf %458, %517 : vector<1x3xf32>
    %c7_270 = arith.constant 7 : index
    %c0_271 = arith.constant 0 : index
    %519 = memref.load %arg6[%c7_270, %c0_271] : memref<8x2xf32, #tpu.memory_space<smem>>
    %520 = vector.broadcast %519 : f32 to vector<32x32xf32>
    %521 = arith.mulf %508, %520 : vector<32x32xf32>
    %522 = arith.addf %462, %521 : vector<32x32xf32>
    %c7_272 = arith.constant 7 : index
    %c1_273 = arith.constant 1 : index
    %523 = memref.load %arg6[%c7_272, %c1_273] : memref<8x2xf32, #tpu.memory_space<smem>>
    %524 = vector.broadcast %523 : f32 to vector<32x32xf32>
    %525 = arith.mulf %508, %524 : vector<32x32xf32>
    %526 = arith.addf %466, %525 : vector<32x32xf32>
    %c0_274 = arith.constant 0 : index
    %c0_275 = arith.constant 0 : index
    %527 = memref.load %arg7[%c0_274, %c0_275] : memref<1x2xf32, #tpu.memory_space<smem>>
    %528 = vector.broadcast %527 : f32 to vector<32x32xf32>
    %529 = arith.addf %522, %528 : vector<32x32xf32>
    %cst_276 = arith.constant 0.000000e+00 : f32
    %530 = vector.broadcast %cst_276 : f32 to vector<32x32xf32>
    %531 = arith.maximumf %529, %530 : vector<32x32xf32>
    %532 = math.absf %529 : vector<32x32xf32>
    %cst_277 = arith.constant 0.000000e+00 : f32
    %533 = vector.broadcast %cst_277 : f32 to vector<32x32xf32>
    %534 = arith.subf %533, %532 : vector<32x32xf32>
    %535 = math.exp %534 : vector<32x32xf32>
    %cst_278 = arith.constant 1.000000e+00 : f32
    %536 = vector.broadcast %cst_278 : f32 to vector<32x32xf32>
    %537 = arith.addf %536, %535 : vector<32x32xf32>
    %538 = math.log %537 : vector<32x32xf32>
    %539 = arith.addf %531, %538 : vector<32x32xf32>
    %cst_279 = arith.constant 1.000000e+00 : f32
    %540 = vector.broadcast %cst_279 : f32 to vector<32x32xf32>
    %541 = arith.addf %539, %540 : vector<32x32xf32>
    %c0_280 = arith.constant 0 : index
    %c1_281 = arith.constant 1 : index
    %542 = memref.load %arg7[%c0_280, %c1_281] : memref<1x2xf32, #tpu.memory_space<smem>>
    %543 = vector.broadcast %542 : f32 to vector<32x32xf32>
    %544 = arith.addf %526, %543 : vector<32x32xf32>
    %cst_282 = arith.constant 0.000000e+00 : f32
    %545 = vector.broadcast %cst_282 : f32 to vector<32x32xf32>
    %546 = arith.maximumf %544, %545 : vector<32x32xf32>
    %547 = math.absf %544 : vector<32x32xf32>
    %cst_283 = arith.constant 0.000000e+00 : f32
    %548 = vector.broadcast %cst_283 : f32 to vector<32x32xf32>
    %549 = arith.subf %548, %547 : vector<32x32xf32>
    %550 = math.exp %549 : vector<32x32xf32>
    %cst_284 = arith.constant 1.000000e+00 : f32
    %551 = vector.broadcast %cst_284 : f32 to vector<32x32xf32>
    %552 = arith.addf %551, %550 : vector<32x32xf32>
    %553 = math.log %552 : vector<32x32xf32>
    %554 = arith.addf %546, %553 : vector<32x32xf32>
    %cst_285 = arith.constant 1.000000e+00 : f32
    %555 = vector.broadcast %cst_285 : f32 to vector<32x32xf32>
    %556 = arith.addf %554, %555 : vector<32x32xf32>
    %557 = arith.addf %541, %556 : vector<32x32xf32>
    %558 = arith.divf %556, %557 : vector<32x32xf32>
    %c0_286 = arith.constant 0 : index
    %c0_287 = arith.constant 0 : index
    %c0_288 = arith.constant 0 : index
    %559 = vector.load %arg17[%c0_286, %c0_287, %c0_288] : memref<1x32x32xf32, #tpu.memory_space<vmem>>, vector<1x32x32xf32>
    %560 = vector.shape_cast %559 : vector<1x32x32xf32> to vector<32x32xf32>
    %561 = vector.shape_cast %558 : vector<32x32xf32> to vector<1x32x32xf32>
    tpu.vector_store %arg17[%c0_286, %c0_287, %c0_288], %561 {strides = array<i32>} : memref<1x32x32xf32, #tpu.memory_space<vmem>>, vector<1x32x32xf32>,
    %c0_289 = arith.constant 0 : index
    %c0_290 = arith.constant 0 : index
    %c0_291 = arith.constant 0 : index
    %c0_292 = arith.constant 0 : index
    %562 = vector.load %arg18[%c0_289, %c0_290, %c0_291, %c0_292] : memref<1x2x32x32xf32, #tpu.memory_space<vmem>>, vector<1x1x32x32xf32>
    %563 = vector.shape_cast %562 : vector<1x1x32x32xf32> to vector<32x32xf32>
    %564 = vector.shape_cast %541 : vector<32x32xf32> to vector<1x1x32x32xf32>
    tpu.vector_store %arg18[%c0_289, %c0_290, %c0_291, %c0_292], %564 {strides = array<i32>} : memref<1x2x32x32xf32, #tpu.memory_space<vmem>>, vector<1x1x32x32xf32>,
    %c0_293 = arith.constant 0 : index
    %c1_294 = arith.constant 1 : index
    %c0_295 = arith.constant 0 : index
    %c0_296 = arith.constant 0 : index
    %565 = vector.load %arg18[%c0_293, %c1_294, %c0_295, %c0_296] : memref<1x2x32x32xf32, #tpu.memory_space<vmem>>, vector<1x1x32x32xf32>
    %566 = vector.shape_cast %565 : vector<1x1x32x32xf32> to vector<32x32xf32>
    %567 = vector.shape_cast %556 : vector<32x32xf32> to vector<1x1x32x32xf32>
    tpu.vector_store %arg18[%c0_293, %c1_294, %c0_295, %c0_296], %567 {strides = array<i32>} : memref<1x2x32x32xf32, #tpu.memory_space<vmem>>, vector<1x1x32x32xf32>,
    %cst_297 = arith.constant dense<0.000000e+00> : vector<32xf32>
    %568 = vector.multi_reduction <add>, %558, %cst_297 [1] : vector<32x32xf32> to vector<32xf32>
    %569 = vector.shape_cast %568 : vector<32xf32> to vector<32x1xf32>
    %cst_298 = arith.constant dense<0.000000e+00> : vector<1xf32>
    %570 = vector.multi_reduction <add>, %569, %cst_298 [0] : vector<32x1xf32> to vector<1xf32>
    %571 = vector.shape_cast %570 : vector<1xf32> to vector<1x1xf32>
    %cst_299 = arith.constant 9.765625E-4 : f32
    %572 = vector.broadcast %cst_299 : f32 to vector<1x1xf32>
    %573 = arith.mulf %571, %572 : vector<1x1xf32>
    %cst_300 = arith.constant dense<0.000000e+00> : vector<4x32xf32>
    %574 = tpu.matmul %4, %558, %cst_300 {dimension_numbers = #tpu.dot_dimension_numbers<[1], [0], [0], [1], [0, 0, 1, 1], [], []>} : vector<4x32xf32>, vector<32x32xf32>, vector<4x32xf32> -> vector<4x32xf32>
    %cst_301 = arith.constant dense<0.000000e+00> : vector<4x4xf32>
    %575 = tpu.matmul %574, %5, %cst_301 {dimension_numbers = #tpu.dot_dimension_numbers<[1], [0], [0], [1], [0, 0, 1, 1], [], []>} : vector<4x32xf32>, vector<32x4xf32>, vector<4x4xf32> -> vector<4x4xf32>
    %cst_302 = arith.constant 1.562500e-02 : f32
    %576 = vector.broadcast %cst_302 : f32 to vector<4x4xf32>
    %577 = arith.mulf %575, %576 : vector<4x4xf32>
    %cst_303 = arith.constant dense<0xFF800000> : vector<4xf32>
    %578 = vector.multi_reduction <maximumf>, %577, %cst_303 [1] : vector<4x4xf32> to vector<4xf32>
    %579 = vector.shape_cast %578 : vector<4xf32> to vector<4x1xf32>
    %cst_304 = arith.constant dense<0xFF800000> : vector<1xf32>
    %580 = vector.multi_reduction <maximumf>, %579, %cst_304 [0] : vector<4x1xf32> to vector<1xf32>
    %581 = vector.shape_cast %580 : vector<1xf32> to vector<1x1xf32>
    %582 = vector.broadcast %581 : vector<1x1xf32> to vector<4x4xf32>
    %583 = arith.cmpf oge, %577, %582 : vector<4x4xf32>
    %cst_305 = arith.constant 1.000000e+09 : f32
    %584 = vector.broadcast %cst_305 : f32 to vector<4x4xf32>
    %585 = arith.select %583, %11, %584 : vector<4x4xi1>, vector<4x4xf32>
    %cst_306 = arith.constant dense<0x7F800000> : vector<4xf32>
    %586 = vector.multi_reduction <minimumf>, %585, %cst_306 [1] : vector<4x4xf32> to vector<4xf32>
    %587 = vector.shape_cast %586 : vector<4xf32> to vector<4x1xf32>
    %cst_307 = arith.constant dense<0x7F800000> : vector<1xf32>
    %588 = vector.multi_reduction <minimumf>, %587, %cst_307 [0] : vector<4x1xf32> to vector<1xf32>
    %589 = vector.shape_cast %588 : vector<1xf32> to vector<1x1xf32>
    %590 = vector.broadcast %589 : vector<1x1xf32> to vector<4x4xf32>
    %591 = arith.cmpf ole, %585, %590 : vector<4x4xf32>
    %592 = arith.extui %591 : vector<4x4xi1> to vector<4x4xi32>
    %593 = arith.sitofp %592 : vector<4x4xi32> to vector<4x4xf32>
    %cst_308 = arith.constant -1.000000e+30 : f32
    %594 = vector.broadcast %cst_308 : f32 to vector<4x4xf32>
    %595 = arith.select %591, %594, %577 : vector<4x4xi1>, vector<4x4xf32>
    %cst_309 = arith.constant dense<0xFF800000> : vector<4xf32>
    %596 = vector.multi_reduction <maximumf>, %595, %cst_309 [1] : vector<4x4xf32> to vector<4xf32>
    %597 = vector.shape_cast %596 : vector<4xf32> to vector<4x1xf32>
    %cst_310 = arith.constant dense<0xFF800000> : vector<1xf32>
    %598 = vector.multi_reduction <maximumf>, %597, %cst_310 [0] : vector<4x1xf32> to vector<1xf32>
    %599 = vector.shape_cast %598 : vector<1xf32> to vector<1x1xf32>
    %600 = vector.broadcast %599 : vector<1x1xf32> to vector<4x4xf32>
    %601 = arith.cmpf oge, %595, %600 : vector<4x4xf32>
    %cst_311 = arith.constant 1.000000e+09 : f32
    %602 = vector.broadcast %cst_311 : f32 to vector<4x4xf32>
    %603 = arith.select %601, %11, %602 : vector<4x4xi1>, vector<4x4xf32>
    %cst_312 = arith.constant dense<0x7F800000> : vector<4xf32>
    %604 = vector.multi_reduction <minimumf>, %603, %cst_312 [1] : vector<4x4xf32> to vector<4xf32>
    %605 = vector.shape_cast %604 : vector<4xf32> to vector<4x1xf32>
    %cst_313 = arith.constant dense<0x7F800000> : vector<1xf32>
    %606 = vector.multi_reduction <minimumf>, %605, %cst_313 [0] : vector<4x1xf32> to vector<1xf32>
    %607 = vector.shape_cast %606 : vector<1xf32> to vector<1x1xf32>
    %608 = vector.broadcast %607 : vector<1x1xf32> to vector<4x4xf32>
    %609 = arith.cmpf ole, %603, %608 : vector<4x4xf32>
    %610 = arith.extui %609 : vector<4x4xi1> to vector<4x4xi32>
    %611 = arith.sitofp %610 : vector<4x4xi32> to vector<4x4xf32>
    %c0_314 = arith.constant 0 : index
    %c0_315 = arith.constant 0 : index
    %c0_316 = arith.constant 0 : index
    %c0_317 = arith.constant 0 : index
    %612 = vector.load %arg1[%c0_314, %c0_315, %c0_316, %c0_317] : memref<1x1x34x34xf32, #tpu.memory_space<vmem>>, vector<1x1x10x10xf32>
    %613 = vector.shape_cast %612 : vector<1x1x10x10xf32> to vector<10x10xf32>
    %c0_318 = arith.constant 0 : index
    %c0_319 = arith.constant 0 : index
    %c0_320 = arith.constant 0 : index
    %c8_321 = arith.constant 8 : index
    %614 = vector.load %arg1[%c0_318, %c0_319, %c0_320, %c8_321] : memref<1x1x34x34xf32, #tpu.memory_space<vmem>>, vector<1x1x10x10xf32>
    %615 = vector.shape_cast %614 : vector<1x1x10x10xf32> to vector<10x10xf32>
    %c0_322 = arith.constant 0 : index
    %c0_323 = arith.constant 0 : index
    %c0_324 = arith.constant 0 : index
    %c16 = arith.constant 16 : index
    %616 = vector.load %arg1[%c0_322, %c0_323, %c0_324, %c16] : memref<1x1x34x34xf32, #tpu.memory_space<vmem>>, vector<1x1x10x10xf32>
    %617 = vector.shape_cast %616 : vector<1x1x10x10xf32> to vector<10x10xf32>
    %c0_325 = arith.constant 0 : index
    %c0_326 = arith.constant 0 : index
    %c0_327 = arith.constant 0 : index
    %c24 = arith.constant 24 : index
    %618 = vector.load %arg1[%c0_325, %c0_326, %c0_327, %c24] : memref<1x1x34x34xf32, #tpu.memory_space<vmem>>, vector<1x1x10x10xf32>
    %619 = vector.shape_cast %618 : vector<1x1x10x10xf32> to vector<10x10xf32>
    %c0_328 = arith.constant 0 : index
    %c0_329 = arith.constant 0 : index
    %c8_330 = arith.constant 8 : index
    %c0_331 = arith.constant 0 : index
    %620 = vector.load %arg1[%c0_328, %c0_329, %c8_330, %c0_331] : memref<1x1x34x34xf32, #tpu.memory_space<vmem>>, vector<1x1x10x10xf32>
    %621 = vector.shape_cast %620 : vector<1x1x10x10xf32> to vector<10x10xf32>
    %c0_332 = arith.constant 0 : index
    %c0_333 = arith.constant 0 : index
    %c8_334 = arith.constant 8 : index
    %c8_335 = arith.constant 8 : index
    %622 = vector.load %arg1[%c0_332, %c0_333, %c8_334, %c8_335] : memref<1x1x34x34xf32, #tpu.memory_space<vmem>>, vector<1x1x10x10xf32>
    %623 = vector.shape_cast %622 : vector<1x1x10x10xf32> to vector<10x10xf32>
    %c0_336 = arith.constant 0 : index
    %c0_337 = arith.constant 0 : index
    %c8_338 = arith.constant 8 : index
    %c16_339 = arith.constant 16 : index
    %624 = vector.load %arg1[%c0_336, %c0_337, %c8_338, %c16_339] : memref<1x1x34x34xf32, #tpu.memory_space<vmem>>, vector<1x1x10x10xf32>
    %625 = vector.shape_cast %624 : vector<1x1x10x10xf32> to vector<10x10xf32>
    %c0_340 = arith.constant 0 : index
    %c0_341 = arith.constant 0 : index
    %c8_342 = arith.constant 8 : index
    %c24_343 = arith.constant 24 : index
    %626 = vector.load %arg1[%c0_340, %c0_341, %c8_342, %c24_343] : memref<1x1x34x34xf32, #tpu.memory_space<vmem>>, vector<1x1x10x10xf32>
    %627 = vector.shape_cast %626 : vector<1x1x10x10xf32> to vector<10x10xf32>
    %c0_344 = arith.constant 0 : index
    %c0_345 = arith.constant 0 : index
    %c16_346 = arith.constant 16 : index
    %c0_347 = arith.constant 0 : index
    %628 = vector.load %arg1[%c0_344, %c0_345, %c16_346, %c0_347] : memref<1x1x34x34xf32, #tpu.memory_space<vmem>>, vector<1x1x10x10xf32>
    %629 = vector.shape_cast %628 : vector<1x1x10x10xf32> to vector<10x10xf32>
    %c0_348 = arith.constant 0 : index
    %c0_349 = arith.constant 0 : index
    %c16_350 = arith.constant 16 : index
    %c8_351 = arith.constant 8 : index
    %630 = vector.load %arg1[%c0_348, %c0_349, %c16_350, %c8_351] : memref<1x1x34x34xf32, #tpu.memory_space<vmem>>, vector<1x1x10x10xf32>
    %631 = vector.shape_cast %630 : vector<1x1x10x10xf32> to vector<10x10xf32>
    %c0_352 = arith.constant 0 : index
    %c0_353 = arith.constant 0 : index
    %c16_354 = arith.constant 16 : index
    %c16_355 = arith.constant 16 : index
    %632 = vector.load %arg1[%c0_352, %c0_353, %c16_354, %c16_355] : memref<1x1x34x34xf32, #tpu.memory_space<vmem>>, vector<1x1x10x10xf32>
    %633 = vector.shape_cast %632 : vector<1x1x10x10xf32> to vector<10x10xf32>
    %c0_356 = arith.constant 0 : index
    %c0_357 = arith.constant 0 : index
    %c16_358 = arith.constant 16 : index
    %c24_359 = arith.constant 24 : index
    %634 = vector.load %arg1[%c0_356, %c0_357, %c16_358, %c24_359] : memref<1x1x34x34xf32, #tpu.memory_space<vmem>>, vector<1x1x10x10xf32>
    %635 = vector.shape_cast %634 : vector<1x1x10x10xf32> to vector<10x10xf32>
    %c0_360 = arith.constant 0 : index
    %c0_361 = arith.constant 0 : index
    %c24_362 = arith.constant 24 : index
    %c0_363 = arith.constant 0 : index
    %636 = vector.load %arg1[%c0_360, %c0_361, %c24_362, %c0_363] : memref<1x1x34x34xf32, #tpu.memory_space<vmem>>, vector<1x1x10x10xf32>
    %637 = vector.shape_cast %636 : vector<1x1x10x10xf32> to vector<10x10xf32>
    %c0_364 = arith.constant 0 : index
    %c0_365 = arith.constant 0 : index
    %c24_366 = arith.constant 24 : index
    %c8_367 = arith.constant 8 : index
    %638 = vector.load %arg1[%c0_364, %c0_365, %c24_366, %c8_367] : memref<1x1x34x34xf32, #tpu.memory_space<vmem>>, vector<1x1x10x10xf32>
    %639 = vector.shape_cast %638 : vector<1x1x10x10xf32> to vector<10x10xf32>
    %c0_368 = arith.constant 0 : index
    %c0_369 = arith.constant 0 : index
    %c24_370 = arith.constant 24 : index
    %c16_371 = arith.constant 16 : index
    %640 = vector.load %arg1[%c0_368, %c0_369, %c24_370, %c16_371] : memref<1x1x34x34xf32, #tpu.memory_space<vmem>>, vector<1x1x10x10xf32>
    %641 = vector.shape_cast %640 : vector<1x1x10x10xf32> to vector<10x10xf32>
    %c0_372 = arith.constant 0 : index
    %c0_373 = arith.constant 0 : index
    %c24_374 = arith.constant 24 : index
    %c24_375 = arith.constant 24 : index
    %642 = vector.load %arg1[%c0_372, %c0_373, %c24_374, %c24_375] : memref<1x1x34x34xf32, #tpu.memory_space<vmem>>, vector<1x1x10x10xf32>
    %643 = vector.shape_cast %642 : vector<1x1x10x10xf32> to vector<10x10xf32>
    %cst_376 = arith.constant 0.000000e+00 : f32
    %644 = vector.broadcast %cst_376 : f32 to vector<10x10xf32>
    %645 = vector.extract_strided_slice %593 {offsets = [0, 0], sizes = [1, 1], strides = [1, 1]} : vector<4x4xf32> to vector<1x1xf32>
    %646 = vector.broadcast %645 : vector<1x1xf32> to vector<10x10xf32>
    %647 = arith.mulf %646, %613 : vector<10x10xf32>
    %648 = arith.addf %644, %647 : vector<10x10xf32>
    %649 = vector.extract_strided_slice %593 {offsets = [0, 1], sizes = [1, 1], strides = [1, 1]} : vector<4x4xf32> to vector<1x1xf32>
    %650 = vector.broadcast %649 : vector<1x1xf32> to vector<10x10xf32>
    %651 = arith.mulf %650, %615 : vector<10x10xf32>
    %652 = arith.addf %648, %651 : vector<10x10xf32>
    %653 = vector.extract_strided_slice %593 {offsets = [0, 2], sizes = [1, 1], strides = [1, 1]} : vector<4x4xf32> to vector<1x1xf32>
    %654 = vector.broadcast %653 : vector<1x1xf32> to vector<10x10xf32>
    %655 = arith.mulf %654, %617 : vector<10x10xf32>
    %656 = arith.addf %652, %655 : vector<10x10xf32>
    %657 = vector.extract_strided_slice %593 {offsets = [0, 3], sizes = [1, 1], strides = [1, 1]} : vector<4x4xf32> to vector<1x1xf32>
    %658 = vector.broadcast %657 : vector<1x1xf32> to vector<10x10xf32>
    %659 = arith.mulf %658, %619 : vector<10x10xf32>
    %660 = arith.addf %656, %659 : vector<10x10xf32>
    %661 = vector.extract_strided_slice %593 {offsets = [1, 0], sizes = [1, 1], strides = [1, 1]} : vector<4x4xf32> to vector<1x1xf32>
    %662 = vector.broadcast %661 : vector<1x1xf32> to vector<10x10xf32>
    %663 = arith.mulf %662, %621 : vector<10x10xf32>
    %664 = arith.addf %660, %663 : vector<10x10xf32>
    %665 = vector.extract_strided_slice %593 {offsets = [1, 1], sizes = [1, 1], strides = [1, 1]} : vector<4x4xf32> to vector<1x1xf32>
    %666 = vector.broadcast %665 : vector<1x1xf32> to vector<10x10xf32>
    %667 = arith.mulf %666, %623 : vector<10x10xf32>
    %668 = arith.addf %664, %667 : vector<10x10xf32>
    %669 = vector.extract_strided_slice %593 {offsets = [1, 2], sizes = [1, 1], strides = [1, 1]} : vector<4x4xf32> to vector<1x1xf32>
    %670 = vector.broadcast %669 : vector<1x1xf32> to vector<10x10xf32>
    %671 = arith.mulf %670, %625 : vector<10x10xf32>
    %672 = arith.addf %668, %671 : vector<10x10xf32>
    %673 = vector.extract_strided_slice %593 {offsets = [1, 3], sizes = [1, 1], strides = [1, 1]} : vector<4x4xf32> to vector<1x1xf32>
    %674 = vector.broadcast %673 : vector<1x1xf32> to vector<10x10xf32>
    %675 = arith.mulf %674, %627 : vector<10x10xf32>
    %676 = arith.addf %672, %675 : vector<10x10xf32>
    %677 = vector.extract_strided_slice %593 {offsets = [2, 0], sizes = [1, 1], strides = [1, 1]} : vector<4x4xf32> to vector<1x1xf32>
    %678 = vector.broadcast %677 : vector<1x1xf32> to vector<10x10xf32>
    %679 = arith.mulf %678, %629 : vector<10x10xf32>
    %680 = arith.addf %676, %679 : vector<10x10xf32>
    %681 = vector.extract_strided_slice %593 {offsets = [2, 1], sizes = [1, 1], strides = [1, 1]} : vector<4x4xf32> to vector<1x1xf32>
    %682 = vector.broadcast %681 : vector<1x1xf32> to vector<10x10xf32>
    %683 = arith.mulf %682, %631 : vector<10x10xf32>
    %684 = arith.addf %680, %683 : vector<10x10xf32>
    %685 = vector.extract_strided_slice %593 {offsets = [2, 2], sizes = [1, 1], strides = [1, 1]} : vector<4x4xf32> to vector<1x1xf32>
    %686 = vector.broadcast %685 : vector<1x1xf32> to vector<10x10xf32>
    %687 = arith.mulf %686, %633 : vector<10x10xf32>
    %688 = arith.addf %684, %687 : vector<10x10xf32>
    %689 = vector.extract_strided_slice %593 {offsets = [2, 3], sizes = [1, 1], strides = [1, 1]} : vector<4x4xf32> to vector<1x1xf32>
    %690 = vector.broadcast %689 : vector<1x1xf32> to vector<10x10xf32>
    %691 = arith.mulf %690, %635 : vector<10x10xf32>
    %692 = arith.addf %688, %691 : vector<10x10xf32>
    %693 = vector.extract_strided_slice %593 {offsets = [3, 0], sizes = [1, 1], strides = [1, 1]} : vector<4x4xf32> to vector<1x1xf32>
    %694 = vector.broadcast %693 : vector<1x1xf32> to vector<10x10xf32>
    %695 = arith.mulf %694, %637 : vector<10x10xf32>
    %696 = arith.addf %692, %695 : vector<10x10xf32>
    %697 = vector.extract_strided_slice %593 {offsets = [3, 1], sizes = [1, 1], strides = [1, 1]} : vector<4x4xf32> to vector<1x1xf32>
    %698 = vector.broadcast %697 : vector<1x1xf32> to vector<10x10xf32>
    %699 = arith.mulf %698, %639 : vector<10x10xf32>
    %700 = arith.addf %696, %699 : vector<10x10xf32>
    %701 = vector.extract_strided_slice %593 {offsets = [3, 2], sizes = [1, 1], strides = [1, 1]} : vector<4x4xf32> to vector<1x1xf32>
    %702 = vector.broadcast %701 : vector<1x1xf32> to vector<10x10xf32>
    %703 = arith.mulf %702, %641 : vector<10x10xf32>
    %704 = arith.addf %700, %703 : vector<10x10xf32>
    %705 = vector.extract_strided_slice %593 {offsets = [3, 3], sizes = [1, 1], strides = [1, 1]} : vector<4x4xf32> to vector<1x1xf32>
    %706 = vector.broadcast %705 : vector<1x1xf32> to vector<10x10xf32>
    %707 = arith.mulf %706, %643 : vector<10x10xf32>
    %708 = arith.addf %704, %707 : vector<10x10xf32>
    %709 = arith.mulf %708, %26 : vector<10x10xf32>
    %710 = vector.extract_strided_slice %708 {offsets = [1, 1], sizes = [8, 8], strides = [1, 1]} : vector<10x10xf32> to vector<8x8xf32>
    %c0_377 = arith.constant 0 : index
    %c0_378 = arith.constant 0 : index
    %c0_379 = arith.constant 0 : index
    %c0_380 = arith.constant 0 : index
    %c0_381 = arith.constant 0 : index
    %711 = vector.load %arg19[%c0_377, %c0_378, %c0_379, %c0_380, %c0_381] : memref<1x2x1x8x8xf32, #tpu.memory_space<vmem>>, vector<1x1x1x8x8xf32>
    %712 = vector.shape_cast %711 : vector<1x1x1x8x8xf32> to vector<8x8xf32>
    %713 = vector.shape_cast %710 : vector<8x8xf32> to vector<1x1x1x8x8xf32>
    tpu.vector_store %arg19[%c0_377, %c0_378, %c0_379, %c0_380, %c0_381], %713 {strides = array<i32>} : memref<1x2x1x8x8xf32, #tpu.memory_space<vmem>>, vector<1x1x1x8x8xf32>,
    %714 = vector.extract_strided_slice %709 {offsets = [0, 0], sizes = [8, 8], strides = [1, 1]} : vector<10x10xf32> to vector<8x8xf32>
    %715 = vector.extract_strided_slice %709 {offsets = [0, 1], sizes = [8, 8], strides = [1, 1]} : vector<10x10xf32> to vector<8x8xf32>
    %716 = vector.extract_strided_slice %709 {offsets = [0, 2], sizes = [8, 8], strides = [1, 1]} : vector<10x10xf32> to vector<8x8xf32>
    %717 = vector.extract_strided_slice %709 {offsets = [1, 0], sizes = [8, 8], strides = [1, 1]} : vector<10x10xf32> to vector<8x8xf32>
    %718 = vector.extract_strided_slice %709 {offsets = [1, 1], sizes = [8, 8], strides = [1, 1]} : vector<10x10xf32> to vector<8x8xf32>
    %719 = vector.extract_strided_slice %709 {offsets = [1, 2], sizes = [8, 8], strides = [1, 1]} : vector<10x10xf32> to vector<8x8xf32>
    %720 = vector.extract_strided_slice %709 {offsets = [2, 0], sizes = [8, 8], strides = [1, 1]} : vector<10x10xf32> to vector<8x8xf32>
    %721 = vector.extract_strided_slice %709 {offsets = [2, 1], sizes = [8, 8], strides = [1, 1]} : vector<10x10xf32> to vector<8x8xf32>
    %722 = vector.extract_strided_slice %709 {offsets = [2, 2], sizes = [8, 8], strides = [1, 1]} : vector<10x10xf32> to vector<8x8xf32>
    %cst_382 = arith.constant 0.000000e+00 : f32
    %723 = vector.broadcast %cst_382 : f32 to vector<1x1xf32>
    %c0_383 = arith.constant 0 : index
    %c0_384 = arith.constant 0 : index
    %724 = memref.load %arg15[%c0_383, %c0_384] : memref<1x1xf32, #tpu.memory_space<smem>>
    %725 = vector.broadcast %724 : f32 to vector<1x1xf32>
    %726 = arith.addf %723, %725 : vector<1x1xf32>
    %cst_385 = arith.constant 0.000000e+00 : f32
    %727 = vector.broadcast %cst_385 : f32 to vector<8x8xf32>
    %c0_386 = arith.constant 0 : index
    %c0_387 = arith.constant 0 : index
    %728 = memref.load %arg10[%c0_386, %c0_387] : memref<9x8xf32, #tpu.memory_space<smem>>
    %729 = vector.broadcast %728 : f32 to vector<8x8xf32>
    %730 = arith.mulf %714, %729 : vector<8x8xf32>
    %731 = arith.addf %727, %730 : vector<8x8xf32>
    %c1_388 = arith.constant 1 : index
    %c0_389 = arith.constant 0 : index
    %732 = memref.load %arg10[%c1_388, %c0_389] : memref<9x8xf32, #tpu.memory_space<smem>>
    %733 = vector.broadcast %732 : f32 to vector<8x8xf32>
    %734 = arith.mulf %715, %733 : vector<8x8xf32>
    %735 = arith.addf %731, %734 : vector<8x8xf32>
    %c2_390 = arith.constant 2 : index
    %c0_391 = arith.constant 0 : index
    %736 = memref.load %arg10[%c2_390, %c0_391] : memref<9x8xf32, #tpu.memory_space<smem>>
    %737 = vector.broadcast %736 : f32 to vector<8x8xf32>
    %738 = arith.mulf %716, %737 : vector<8x8xf32>
    %739 = arith.addf %735, %738 : vector<8x8xf32>
    %c3_392 = arith.constant 3 : index
    %c0_393 = arith.constant 0 : index
    %740 = memref.load %arg10[%c3_392, %c0_393] : memref<9x8xf32, #tpu.memory_space<smem>>
    %741 = vector.broadcast %740 : f32 to vector<8x8xf32>
    %742 = arith.mulf %717, %741 : vector<8x8xf32>
    %743 = arith.addf %739, %742 : vector<8x8xf32>
    %c4_394 = arith.constant 4 : index
    %c0_395 = arith.constant 0 : index
    %744 = memref.load %arg10[%c4_394, %c0_395] : memref<9x8xf32, #tpu.memory_space<smem>>
    %745 = vector.broadcast %744 : f32 to vector<8x8xf32>
    %746 = arith.mulf %718, %745 : vector<8x8xf32>
    %747 = arith.addf %743, %746 : vector<8x8xf32>
    %c5_396 = arith.constant 5 : index
    %c0_397 = arith.constant 0 : index
    %748 = memref.load %arg10[%c5_396, %c0_397] : memref<9x8xf32, #tpu.memory_space<smem>>
    %749 = vector.broadcast %748 : f32 to vector<8x8xf32>
    %750 = arith.mulf %719, %749 : vector<8x8xf32>
    %751 = arith.addf %747, %750 : vector<8x8xf32>
    %c6_398 = arith.constant 6 : index
    %c0_399 = arith.constant 0 : index
    %752 = memref.load %arg10[%c6_398, %c0_399] : memref<9x8xf32, #tpu.memory_space<smem>>
    %753 = vector.broadcast %752 : f32 to vector<8x8xf32>
    %754 = arith.mulf %720, %753 : vector<8x8xf32>
    %755 = arith.addf %751, %754 : vector<8x8xf32>
    %c7_400 = arith.constant 7 : index
    %c0_401 = arith.constant 0 : index
    %756 = memref.load %arg10[%c7_400, %c0_401] : memref<9x8xf32, #tpu.memory_space<smem>>
    %757 = vector.broadcast %756 : f32 to vector<8x8xf32>
    %758 = arith.mulf %721, %757 : vector<8x8xf32>
    %759 = arith.addf %755, %758 : vector<8x8xf32>
    %c8_402 = arith.constant 8 : index
    %c0_403 = arith.constant 0 : index
    %760 = memref.load %arg10[%c8_402, %c0_403] : memref<9x8xf32, #tpu.memory_space<smem>>
    %761 = vector.broadcast %760 : f32 to vector<8x8xf32>
    %762 = arith.mulf %722, %761 : vector<8x8xf32>
    %763 = arith.addf %759, %762 : vector<8x8xf32>
    %c0_404 = arith.constant 0 : index
    %c0_405 = arith.constant 0 : index
    %764 = memref.load %arg11[%c0_404, %c0_405] : memref<1x8xf32, #tpu.memory_space<smem>>
    %765 = vector.broadcast %764 : f32 to vector<8x8xf32>
    %766 = arith.addf %763, %765 : vector<8x8xf32>
    %cst_406 = arith.constant 0.000000e+00 : f32
    %767 = vector.broadcast %cst_406 : f32 to vector<8x8xf32>
    %768 = arith.maximumf %766, %767 : vector<8x8xf32>
    %cst_407 = arith.constant dense<0.000000e+00> : vector<8xf32>
    %769 = vector.multi_reduction <add>, %768, %cst_407 [1] : vector<8x8xf32> to vector<8xf32>
    %770 = vector.shape_cast %769 : vector<8xf32> to vector<8x1xf32>
    %cst_408 = arith.constant dense<0.000000e+00> : vector<1xf32>
    %771 = vector.multi_reduction <add>, %770, %cst_408 [0] : vector<8x1xf32> to vector<1xf32>
    %772 = vector.shape_cast %771 : vector<1xf32> to vector<1x1xf32>
    %cst_409 = arith.constant 1.562500e-02 : f32
    %773 = vector.broadcast %cst_409 : f32 to vector<1x1xf32>
    %774 = arith.mulf %772, %773 : vector<1x1xf32>
    %775 = vector.extract_strided_slice %2 {offsets = [0, 0], sizes = [1, 3], strides = [1, 1]} : vector<8x3xf32> to vector<1x3xf32>
    %776 = vector.broadcast %774 : vector<1x1xf32> to vector<1x3xf32>
    %777 = arith.mulf %776, %775 : vector<1x3xf32>
    %778 = arith.addf %3, %777 : vector<1x3xf32>
    %c0_410 = arith.constant 0 : index
    %c0_411 = arith.constant 0 : index
    %779 = memref.load %arg14[%c0_410, %c0_411] : memref<8x1xf32, #tpu.memory_space<smem>>
    %780 = vector.broadcast %779 : f32 to vector<1x1xf32>
    %781 = arith.mulf %774, %780 : vector<1x1xf32>
    %782 = arith.addf %726, %781 : vector<1x1xf32>
    %cst_412 = arith.constant 0.000000e+00 : f32
    %783 = vector.broadcast %cst_412 : f32 to vector<8x8xf32>
    %c0_413 = arith.constant 0 : index
    %c1_414 = arith.constant 1 : index
    %784 = memref.load %arg10[%c0_413, %c1_414] : memref<9x8xf32, #tpu.memory_space<smem>>
    %785 = vector.broadcast %784 : f32 to vector<8x8xf32>
    %786 = arith.mulf %714, %785 : vector<8x8xf32>
    %787 = arith.addf %783, %786 : vector<8x8xf32>
    %c1_415 = arith.constant 1 : index
    %c1_416 = arith.constant 1 : index
    %788 = memref.load %arg10[%c1_415, %c1_416] : memref<9x8xf32, #tpu.memory_space<smem>>
    %789 = vector.broadcast %788 : f32 to vector<8x8xf32>
    %790 = arith.mulf %715, %789 : vector<8x8xf32>
    %791 = arith.addf %787, %790 : vector<8x8xf32>
    %c2_417 = arith.constant 2 : index
    %c1_418 = arith.constant 1 : index
    %792 = memref.load %arg10[%c2_417, %c1_418] : memref<9x8xf32, #tpu.memory_space<smem>>
    %793 = vector.broadcast %792 : f32 to vector<8x8xf32>
    %794 = arith.mulf %716, %793 : vector<8x8xf32>
    %795 = arith.addf %791, %794 : vector<8x8xf32>
    %c3_419 = arith.constant 3 : index
    %c1_420 = arith.constant 1 : index
    %796 = memref.load %arg10[%c3_419, %c1_420] : memref<9x8xf32, #tpu.memory_space<smem>>
    %797 = vector.broadcast %796 : f32 to vector<8x8xf32>
    %798 = arith.mulf %717, %797 : vector<8x8xf32>
    %799 = arith.addf %795, %798 : vector<8x8xf32>
    %c4_421 = arith.constant 4 : index
    %c1_422 = arith.constant 1 : index
    %800 = memref.load %arg10[%c4_421, %c1_422] : memref<9x8xf32, #tpu.memory_space<smem>>
    %801 = vector.broadcast %800 : f32 to vector<8x8xf32>
    %802 = arith.mulf %718, %801 : vector<8x8xf32>
    %803 = arith.addf %799, %802 : vector<8x8xf32>
    %c5_423 = arith.constant 5 : index
    %c1_424 = arith.constant 1 : index
    %804 = memref.load %arg10[%c5_423, %c1_424] : memref<9x8xf32, #tpu.memory_space<smem>>
    %805 = vector.broadcast %804 : f32 to vector<8x8xf32>
    %806 = arith.mulf %719, %805 : vector<8x8xf32>
    %807 = arith.addf %803, %806 : vector<8x8xf32>
    %c6_425 = arith.constant 6 : index
    %c1_426 = arith.constant 1 : index
    %808 = memref.load %arg10[%c6_425, %c1_426] : memref<9x8xf32, #tpu.memory_space<smem>>
    %809 = vector.broadcast %808 : f32 to vector<8x8xf32>
    %810 = arith.mulf %720, %809 : vector<8x8xf32>
    %811 = arith.addf %807, %810 : vector<8x8xf32>
    %c7_427 = arith.constant 7 : index
    %c1_428 = arith.constant 1 : index
    %812 = memref.load %arg10[%c7_427, %c1_428] : memref<9x8xf32, #tpu.memory_space<smem>>
    %813 = vector.broadcast %812 : f32 to vector<8x8xf32>
    %814 = arith.mulf %721, %813 : vector<8x8xf32>
    %815 = arith.addf %811, %814 : vector<8x8xf32>
    %c8_429 = arith.constant 8 : index
    %c1_430 = arith.constant 1 : index
    %816 = memref.load %arg10[%c8_429, %c1_430] : memref<9x8xf32, #tpu.memory_space<smem>>
    %817 = vector.broadcast %816 : f32 to vector<8x8xf32>
    %818 = arith.mulf %722, %817 : vector<8x8xf32>
    %819 = arith.addf %815, %818 : vector<8x8xf32>
    %c0_431 = arith.constant 0 : index
    %c1_432 = arith.constant 1 : index
    %820 = memref.load %arg11[%c0_431, %c1_432] : memref<1x8xf32, #tpu.memory_space<smem>>
    %821 = vector.broadcast %820 : f32 to vector<8x8xf32>
    %822 = arith.addf %819, %821 : vector<8x8xf32>
    %cst_433 = arith.constant 0.000000e+00 : f32
    %823 = vector.broadcast %cst_433 : f32 to vector<8x8xf32>
    %824 = arith.maximumf %822, %823 : vector<8x8xf32>
    %cst_434 = arith.constant dense<0.000000e+00> : vector<8xf32>
    %825 = vector.multi_reduction <add>, %824, %cst_434 [1] : vector<8x8xf32> to vector<8xf32>
    %826 = vector.shape_cast %825 : vector<8xf32> to vector<8x1xf32>
    %cst_435 = arith.constant dense<0.000000e+00> : vector<1xf32>
    %827 = vector.multi_reduction <add>, %826, %cst_435 [0] : vector<8x1xf32> to vector<1xf32>
    %828 = vector.shape_cast %827 : vector<1xf32> to vector<1x1xf32>
    %cst_436 = arith.constant 1.562500e-02 : f32
    %829 = vector.broadcast %cst_436 : f32 to vector<1x1xf32>
    %830 = arith.mulf %828, %829 : vector<1x1xf32>
    %831 = vector.extract_strided_slice %2 {offsets = [1, 0], sizes = [1, 3], strides = [1, 1]} : vector<8x3xf32> to vector<1x3xf32>
    %832 = vector.broadcast %830 : vector<1x1xf32> to vector<1x3xf32>
    %833 = arith.mulf %832, %831 : vector<1x3xf32>
    %834 = arith.addf %778, %833 : vector<1x3xf32>
    %c1_437 = arith.constant 1 : index
    %c0_438 = arith.constant 0 : index
    %835 = memref.load %arg14[%c1_437, %c0_438] : memref<8x1xf32, #tpu.memory_space<smem>>
    %836 = vector.broadcast %835 : f32 to vector<1x1xf32>
    %837 = arith.mulf %830, %836 : vector<1x1xf32>
    %838 = arith.addf %782, %837 : vector<1x1xf32>
    %cst_439 = arith.constant 0.000000e+00 : f32
    %839 = vector.broadcast %cst_439 : f32 to vector<8x8xf32>
    %c0_440 = arith.constant 0 : index
    %c2_441 = arith.constant 2 : index
    %840 = memref.load %arg10[%c0_440, %c2_441] : memref<9x8xf32, #tpu.memory_space<smem>>
    %841 = vector.broadcast %840 : f32 to vector<8x8xf32>
    %842 = arith.mulf %714, %841 : vector<8x8xf32>
    %843 = arith.addf %839, %842 : vector<8x8xf32>
    %c1_442 = arith.constant 1 : index
    %c2_443 = arith.constant 2 : index
    %844 = memref.load %arg10[%c1_442, %c2_443] : memref<9x8xf32, #tpu.memory_space<smem>>
    %845 = vector.broadcast %844 : f32 to vector<8x8xf32>
    %846 = arith.mulf %715, %845 : vector<8x8xf32>
    %847 = arith.addf %843, %846 : vector<8x8xf32>
    %c2_444 = arith.constant 2 : index
    %c2_445 = arith.constant 2 : index
    %848 = memref.load %arg10[%c2_444, %c2_445] : memref<9x8xf32, #tpu.memory_space<smem>>
    %849 = vector.broadcast %848 : f32 to vector<8x8xf32>
    %850 = arith.mulf %716, %849 : vector<8x8xf32>
    %851 = arith.addf %847, %850 : vector<8x8xf32>
    %c3_446 = arith.constant 3 : index
    %c2_447 = arith.constant 2 : index
    %852 = memref.load %arg10[%c3_446, %c2_447] : memref<9x8xf32, #tpu.memory_space<smem>>
    %853 = vector.broadcast %852 : f32 to vector<8x8xf32>
    %854 = arith.mulf %717, %853 : vector<8x8xf32>
    %855 = arith.addf %851, %854 : vector<8x8xf32>
    %c4_448 = arith.constant 4 : index
    %c2_449 = arith.constant 2 : index
    %856 = memref.load %arg10[%c4_448, %c2_449] : memref<9x8xf32, #tpu.memory_space<smem>>
    %857 = vector.broadcast %856 : f32 to vector<8x8xf32>
    %858 = arith.mulf %718, %857 : vector<8x8xf32>
    %859 = arith.addf %855, %858 : vector<8x8xf32>
    %c5_450 = arith.constant 5 : index
    %c2_451 = arith.constant 2 : index
    %860 = memref.load %arg10[%c5_450, %c2_451] : memref<9x8xf32, #tpu.memory_space<smem>>
    %861 = vector.broadcast %860 : f32 to vector<8x8xf32>
    %862 = arith.mulf %719, %861 : vector<8x8xf32>
    %863 = arith.addf %859, %862 : vector<8x8xf32>
    %c6_452 = arith.constant 6 : index
    %c2_453 = arith.constant 2 : index
    %864 = memref.load %arg10[%c6_452, %c2_453] : memref<9x8xf32, #tpu.memory_space<smem>>
    %865 = vector.broadcast %864 : f32 to vector<8x8xf32>
    %866 = arith.mulf %720, %865 : vector<8x8xf32>
    %867 = arith.addf %863, %866 : vector<8x8xf32>
    %c7_454 = arith.constant 7 : index
    %c2_455 = arith.constant 2 : index
    %868 = memref.load %arg10[%c7_454, %c2_455] : memref<9x8xf32, #tpu.memory_space<smem>>
    %869 = vector.broadcast %868 : f32 to vector<8x8xf32>
    %870 = arith.mulf %721, %869 : vector<8x8xf32>
    %871 = arith.addf %867, %870 : vector<8x8xf32>
    %c8_456 = arith.constant 8 : index
    %c2_457 = arith.constant 2 : index
    %872 = memref.load %arg10[%c8_456, %c2_457] : memref<9x8xf32, #tpu.memory_space<smem>>
    %873 = vector.broadcast %872 : f32 to vector<8x8xf32>
    %874 = arith.mulf %722, %873 : vector<8x8xf32>
    %875 = arith.addf %871, %874 : vector<8x8xf32>
    %c0_458 = arith.constant 0 : index
    %c2_459 = arith.constant 2 : index
    %876 = memref.load %arg11[%c0_458, %c2_459] : memref<1x8xf32, #tpu.memory_space<smem>>
    %877 = vector.broadcast %876 : f32 to vector<8x8xf32>
    %878 = arith.addf %875, %877 : vector<8x8xf32>
    %cst_460 = arith.constant 0.000000e+00 : f32
    %879 = vector.broadcast %cst_460 : f32 to vector<8x8xf32>
    %880 = arith.maximumf %878, %879 : vector<8x8xf32>
    %cst_461 = arith.constant dense<0.000000e+00> : vector<8xf32>
    %881 = vector.multi_reduction <add>, %880, %cst_461 [1] : vector<8x8xf32> to vector<8xf32>
    %882 = vector.shape_cast %881 : vector<8xf32> to vector<8x1xf32>
    %cst_462 = arith.constant dense<0.000000e+00> : vector<1xf32>
    %883 = vector.multi_reduction <add>, %882, %cst_462 [0] : vector<8x1xf32> to vector<1xf32>
    %884 = vector.shape_cast %883 : vector<1xf32> to vector<1x1xf32>
    %cst_463 = arith.constant 1.562500e-02 : f32
    %885 = vector.broadcast %cst_463 : f32 to vector<1x1xf32>
    %886 = arith.mulf %884, %885 : vector<1x1xf32>
    %887 = vector.extract_strided_slice %2 {offsets = [2, 0], sizes = [1, 3], strides = [1, 1]} : vector<8x3xf32> to vector<1x3xf32>
    %888 = vector.broadcast %886 : vector<1x1xf32> to vector<1x3xf32>
    %889 = arith.mulf %888, %887 : vector<1x3xf32>
    %890 = arith.addf %834, %889 : vector<1x3xf32>
    %c2_464 = arith.constant 2 : index
    %c0_465 = arith.constant 0 : index
    %891 = memref.load %arg14[%c2_464, %c0_465] : memref<8x1xf32, #tpu.memory_space<smem>>
    %892 = vector.broadcast %891 : f32 to vector<1x1xf32>
    %893 = arith.mulf %886, %892 : vector<1x1xf32>
    %894 = arith.addf %838, %893 : vector<1x1xf32>
    %cst_466 = arith.constant 0.000000e+00 : f32
    %895 = vector.broadcast %cst_466 : f32 to vector<8x8xf32>
    %c0_467 = arith.constant 0 : index
    %c3_468 = arith.constant 3 : index
    %896 = memref.load %arg10[%c0_467, %c3_468] : memref<9x8xf32, #tpu.memory_space<smem>>
    %897 = vector.broadcast %896 : f32 to vector<8x8xf32>
    %898 = arith.mulf %714, %897 : vector<8x8xf32>
    %899 = arith.addf %895, %898 : vector<8x8xf32>
    %c1_469 = arith.constant 1 : index
    %c3_470 = arith.constant 3 : index
    %900 = memref.load %arg10[%c1_469, %c3_470] : memref<9x8xf32, #tpu.memory_space<smem>>
    %901 = vector.broadcast %900 : f32 to vector<8x8xf32>
    %902 = arith.mulf %715, %901 : vector<8x8xf32>
    %903 = arith.addf %899, %902 : vector<8x8xf32>
    %c2_471 = arith.constant 2 : index
    %c3_472 = arith.constant 3 : index
    %904 = memref.load %arg10[%c2_471, %c3_472] : memref<9x8xf32, #tpu.memory_space<smem>>
    %905 = vector.broadcast %904 : f32 to vector<8x8xf32>
    %906 = arith.mulf %716, %905 : vector<8x8xf32>
    %907 = arith.addf %903, %906 : vector<8x8xf32>
    %c3_473 = arith.constant 3 : index
    %c3_474 = arith.constant 3 : index
    %908 = memref.load %arg10[%c3_473, %c3_474] : memref<9x8xf32, #tpu.memory_space<smem>>
    %909 = vector.broadcast %908 : f32 to vector<8x8xf32>
    %910 = arith.mulf %717, %909 : vector<8x8xf32>
    %911 = arith.addf %907, %910 : vector<8x8xf32>
    %c4_475 = arith.constant 4 : index
    %c3_476 = arith.constant 3 : index
    %912 = memref.load %arg10[%c4_475, %c3_476] : memref<9x8xf32, #tpu.memory_space<smem>>
    %913 = vector.broadcast %912 : f32 to vector<8x8xf32>
    %914 = arith.mulf %718, %913 : vector<8x8xf32>
    %915 = arith.addf %911, %914 : vector<8x8xf32>
    %c5_477 = arith.constant 5 : index
    %c3_478 = arith.constant 3 : index
    %916 = memref.load %arg10[%c5_477, %c3_478] : memref<9x8xf32, #tpu.memory_space<smem>>
    %917 = vector.broadcast %916 : f32 to vector<8x8xf32>
    %918 = arith.mulf %719, %917 : vector<8x8xf32>
    %919 = arith.addf %915, %918 : vector<8x8xf32>
    %c6_479 = arith.constant 6 : index
    %c3_480 = arith.constant 3 : index
    %920 = memref.load %arg10[%c6_479, %c3_480] : memref<9x8xf32, #tpu.memory_space<smem>>
    %921 = vector.broadcast %920 : f32 to vector<8x8xf32>
    %922 = arith.mulf %720, %921 : vector<8x8xf32>
    %923 = arith.addf %919, %922 : vector<8x8xf32>
    %c7_481 = arith.constant 7 : index
    %c3_482 = arith.constant 3 : index
    %924 = memref.load %arg10[%c7_481, %c3_482] : memref<9x8xf32, #tpu.memory_space<smem>>
    %925 = vector.broadcast %924 : f32 to vector<8x8xf32>
    %926 = arith.mulf %721, %925 : vector<8x8xf32>
    %927 = arith.addf %923, %926 : vector<8x8xf32>
    %c8_483 = arith.constant 8 : index
    %c3_484 = arith.constant 3 : index
    %928 = memref.load %arg10[%c8_483, %c3_484] : memref<9x8xf32, #tpu.memory_space<smem>>
    %929 = vector.broadcast %928 : f32 to vector<8x8xf32>
    %930 = arith.mulf %722, %929 : vector<8x8xf32>
    %931 = arith.addf %927, %930 : vector<8x8xf32>
    %c0_485 = arith.constant 0 : index
    %c3_486 = arith.constant 3 : index
    %932 = memref.load %arg11[%c0_485, %c3_486] : memref<1x8xf32, #tpu.memory_space<smem>>
    %933 = vector.broadcast %932 : f32 to vector<8x8xf32>
    %934 = arith.addf %931, %933 : vector<8x8xf32>
    %cst_487 = arith.constant 0.000000e+00 : f32
    %935 = vector.broadcast %cst_487 : f32 to vector<8x8xf32>
    %936 = arith.maximumf %934, %935 : vector<8x8xf32>
    %cst_488 = arith.constant dense<0.000000e+00> : vector<8xf32>
    %937 = vector.multi_reduction <add>, %936, %cst_488 [1] : vector<8x8xf32> to vector<8xf32>
    %938 = vector.shape_cast %937 : vector<8xf32> to vector<8x1xf32>
    %cst_489 = arith.constant dense<0.000000e+00> : vector<1xf32>
    %939 = vector.multi_reduction <add>, %938, %cst_489 [0] : vector<8x1xf32> to vector<1xf32>
    %940 = vector.shape_cast %939 : vector<1xf32> to vector<1x1xf32>
    %cst_490 = arith.constant 1.562500e-02 : f32
    %941 = vector.broadcast %cst_490 : f32 to vector<1x1xf32>
    %942 = arith.mulf %940, %941 : vector<1x1xf32>
    %943 = vector.extract_strided_slice %2 {offsets = [3, 0], sizes = [1, 3], strides = [1, 1]} : vector<8x3xf32> to vector<1x3xf32>
    %944 = vector.broadcast %942 : vector<1x1xf32> to vector<1x3xf32>
    %945 = arith.mulf %944, %943 : vector<1x3xf32>
    %946 = arith.addf %890, %945 : vector<1x3xf32>
    %c3_491 = arith.constant 3 : index
    %c0_492 = arith.constant 0 : index
    %947 = memref.load %arg14[%c3_491, %c0_492] : memref<8x1xf32, #tpu.memory_space<smem>>
    %948 = vector.broadcast %947 : f32 to vector<1x1xf32>
    %949 = arith.mulf %942, %948 : vector<1x1xf32>
    %950 = arith.addf %894, %949 : vector<1x1xf32>
    %cst_493 = arith.constant 0.000000e+00 : f32
    %951 = vector.broadcast %cst_493 : f32 to vector<8x8xf32>
    %c0_494 = arith.constant 0 : index
    %c4_495 = arith.constant 4 : index
    %952 = memref.load %arg10[%c0_494, %c4_495] : memref<9x8xf32, #tpu.memory_space<smem>>
    %953 = vector.broadcast %952 : f32 to vector<8x8xf32>
    %954 = arith.mulf %714, %953 : vector<8x8xf32>
    %955 = arith.addf %951, %954 : vector<8x8xf32>
    %c1_496 = arith.constant 1 : index
    %c4_497 = arith.constant 4 : index
    %956 = memref.load %arg10[%c1_496, %c4_497] : memref<9x8xf32, #tpu.memory_space<smem>>
    %957 = vector.broadcast %956 : f32 to vector<8x8xf32>
    %958 = arith.mulf %715, %957 : vector<8x8xf32>
    %959 = arith.addf %955, %958 : vector<8x8xf32>
    %c2_498 = arith.constant 2 : index
    %c4_499 = arith.constant 4 : index
    %960 = memref.load %arg10[%c2_498, %c4_499] : memref<9x8xf32, #tpu.memory_space<smem>>
    %961 = vector.broadcast %960 : f32 to vector<8x8xf32>
    %962 = arith.mulf %716, %961 : vector<8x8xf32>
    %963 = arith.addf %959, %962 : vector<8x8xf32>
    %c3_500 = arith.constant 3 : index
    %c4_501 = arith.constant 4 : index
    %964 = memref.load %arg10[%c3_500, %c4_501] : memref<9x8xf32, #tpu.memory_space<smem>>
    %965 = vector.broadcast %964 : f32 to vector<8x8xf32>
    %966 = arith.mulf %717, %965 : vector<8x8xf32>
    %967 = arith.addf %963, %966 : vector<8x8xf32>
    %c4_502 = arith.constant 4 : index
    %c4_503 = arith.constant 4 : index
    %968 = memref.load %arg10[%c4_502, %c4_503] : memref<9x8xf32, #tpu.memory_space<smem>>
    %969 = vector.broadcast %968 : f32 to vector<8x8xf32>
    %970 = arith.mulf %718, %969 : vector<8x8xf32>
    %971 = arith.addf %967, %970 : vector<8x8xf32>
    %c5_504 = arith.constant 5 : index
    %c4_505 = arith.constant 4 : index
    %972 = memref.load %arg10[%c5_504, %c4_505] : memref<9x8xf32, #tpu.memory_space<smem>>
    %973 = vector.broadcast %972 : f32 to vector<8x8xf32>
    %974 = arith.mulf %719, %973 : vector<8x8xf32>
    %975 = arith.addf %971, %974 : vector<8x8xf32>
    %c6_506 = arith.constant 6 : index
    %c4_507 = arith.constant 4 : index
    %976 = memref.load %arg10[%c6_506, %c4_507] : memref<9x8xf32, #tpu.memory_space<smem>>
    %977 = vector.broadcast %976 : f32 to vector<8x8xf32>
    %978 = arith.mulf %720, %977 : vector<8x8xf32>
    %979 = arith.addf %975, %978 : vector<8x8xf32>
    %c7_508 = arith.constant 7 : index
    %c4_509 = arith.constant 4 : index
    %980 = memref.load %arg10[%c7_508, %c4_509] : memref<9x8xf32, #tpu.memory_space<smem>>
    %981 = vector.broadcast %980 : f32 to vector<8x8xf32>
    %982 = arith.mulf %721, %981 : vector<8x8xf32>
    %983 = arith.addf %979, %982 : vector<8x8xf32>
    %c8_510 = arith.constant 8 : index
    %c4_511 = arith.constant 4 : index
    %984 = memref.load %arg10[%c8_510, %c4_511] : memref<9x8xf32, #tpu.memory_space<smem>>
    %985 = vector.broadcast %984 : f32 to vector<8x8xf32>
    %986 = arith.mulf %722, %985 : vector<8x8xf32>
    %987 = arith.addf %983, %986 : vector<8x8xf32>
    %c0_512 = arith.constant 0 : index
    %c4_513 = arith.constant 4 : index
    %988 = memref.load %arg11[%c0_512, %c4_513] : memref<1x8xf32, #tpu.memory_space<smem>>
    %989 = vector.broadcast %988 : f32 to vector<8x8xf32>
    %990 = arith.addf %987, %989 : vector<8x8xf32>
    %cst_514 = arith.constant 0.000000e+00 : f32
    %991 = vector.broadcast %cst_514 : f32 to vector<8x8xf32>
    %992 = arith.maximumf %990, %991 : vector<8x8xf32>
    %cst_515 = arith.constant dense<0.000000e+00> : vector<8xf32>
    %993 = vector.multi_reduction <add>, %992, %cst_515 [1] : vector<8x8xf32> to vector<8xf32>
    %994 = vector.shape_cast %993 : vector<8xf32> to vector<8x1xf32>
    %cst_516 = arith.constant dense<0.000000e+00> : vector<1xf32>
    %995 = vector.multi_reduction <add>, %994, %cst_516 [0] : vector<8x1xf32> to vector<1xf32>
    %996 = vector.shape_cast %995 : vector<1xf32> to vector<1x1xf32>
    %cst_517 = arith.constant 1.562500e-02 : f32
    %997 = vector.broadcast %cst_517 : f32 to vector<1x1xf32>
    %998 = arith.mulf %996, %997 : vector<1x1xf32>
    %999 = vector.extract_strided_slice %2 {offsets = [4, 0], sizes = [1, 3], strides = [1, 1]} : vector<8x3xf32> to vector<1x3xf32>
    %1000 = vector.broadcast %998 : vector<1x1xf32> to vector<1x3xf32>
    %1001 = arith.mulf %1000, %999 : vector<1x3xf32>
    %1002 = arith.addf %946, %1001 : vector<1x3xf32>
    %c4_518 = arith.constant 4 : index
    %c0_519 = arith.constant 0 : index
    %1003 = memref.load %arg14[%c4_518, %c0_519] : memref<8x1xf32, #tpu.memory_space<smem>>
    %1004 = vector.broadcast %1003 : f32 to vector<1x1xf32>
    %1005 = arith.mulf %998, %1004 : vector<1x1xf32>
    %1006 = arith.addf %950, %1005 : vector<1x1xf32>
    %cst_520 = arith.constant 0.000000e+00 : f32
    %1007 = vector.broadcast %cst_520 : f32 to vector<8x8xf32>
    %c0_521 = arith.constant 0 : index
    %c5_522 = arith.constant 5 : index
    %1008 = memref.load %arg10[%c0_521, %c5_522] : memref<9x8xf32, #tpu.memory_space<smem>>
    %1009 = vector.broadcast %1008 : f32 to vector<8x8xf32>
    %1010 = arith.mulf %714, %1009 : vector<8x8xf32>
    %1011 = arith.addf %1007, %1010 : vector<8x8xf32>
    %c1_523 = arith.constant 1 : index
    %c5_524 = arith.constant 5 : index
    %1012 = memref.load %arg10[%c1_523, %c5_524] : memref<9x8xf32, #tpu.memory_space<smem>>
    %1013 = vector.broadcast %1012 : f32 to vector<8x8xf32>
    %1014 = arith.mulf %715, %1013 : vector<8x8xf32>
    %1015 = arith.addf %1011, %1014 : vector<8x8xf32>
    %c2_525 = arith.constant 2 : index
    %c5_526 = arith.constant 5 : index
    %1016 = memref.load %arg10[%c2_525, %c5_526] : memref<9x8xf32, #tpu.memory_space<smem>>
    %1017 = vector.broadcast %1016 : f32 to vector<8x8xf32>
    %1018 = arith.mulf %716, %1017 : vector<8x8xf32>
    %1019 = arith.addf %1015, %1018 : vector<8x8xf32>
    %c3_527 = arith.constant 3 : index
    %c5_528 = arith.constant 5 : index
    %1020 = memref.load %arg10[%c3_527, %c5_528] : memref<9x8xf32, #tpu.memory_space<smem>>
    %1021 = vector.broadcast %1020 : f32 to vector<8x8xf32>
    %1022 = arith.mulf %717, %1021 : vector<8x8xf32>
    %1023 = arith.addf %1019, %1022 : vector<8x8xf32>
    %c4_529 = arith.constant 4 : index
    %c5_530 = arith.constant 5 : index
    %1024 = memref.load %arg10[%c4_529, %c5_530] : memref<9x8xf32, #tpu.memory_space<smem>>
    %1025 = vector.broadcast %1024 : f32 to vector<8x8xf32>
    %1026 = arith.mulf %718, %1025 : vector<8x8xf32>
    %1027 = arith.addf %1023, %1026 : vector<8x8xf32>
    %c5_531 = arith.constant 5 : index
    %c5_532 = arith.constant 5 : index
    %1028 = memref.load %arg10[%c5_531, %c5_532] : memref<9x8xf32, #tpu.memory_space<smem>>
    %1029 = vector.broadcast %1028 : f32 to vector<8x8xf32>
    %1030 = arith.mulf %719, %1029 : vector<8x8xf32>
    %1031 = arith.addf %1027, %1030 : vector<8x8xf32>
    %c6_533 = arith.constant 6 : index
    %c5_534 = arith.constant 5 : index
    %1032 = memref.load %arg10[%c6_533, %c5_534] : memref<9x8xf32, #tpu.memory_space<smem>>
    %1033 = vector.broadcast %1032 : f32 to vector<8x8xf32>
    %1034 = arith.mulf %720, %1033 : vector<8x8xf32>
    %1035 = arith.addf %1031, %1034 : vector<8x8xf32>
    %c7_535 = arith.constant 7 : index
    %c5_536 = arith.constant 5 : index
    %1036 = memref.load %arg10[%c7_535, %c5_536] : memref<9x8xf32, #tpu.memory_space<smem>>
    %1037 = vector.broadcast %1036 : f32 to vector<8x8xf32>
    %1038 = arith.mulf %721, %1037 : vector<8x8xf32>
    %1039 = arith.addf %1035, %1038 : vector<8x8xf32>
    %c8_537 = arith.constant 8 : index
    %c5_538 = arith.constant 5 : index
    %1040 = memref.load %arg10[%c8_537, %c5_538] : memref<9x8xf32, #tpu.memory_space<smem>>
    %1041 = vector.broadcast %1040 : f32 to vector<8x8xf32>
    %1042 = arith.mulf %722, %1041 : vector<8x8xf32>
    %1043 = arith.addf %1039, %1042 : vector<8x8xf32>
    %c0_539 = arith.constant 0 : index
    %c5_540 = arith.constant 5 : index
    %1044 = memref.load %arg11[%c0_539, %c5_540] : memref<1x8xf32, #tpu.memory_space<smem>>
    %1045 = vector.broadcast %1044 : f32 to vector<8x8xf32>
    %1046 = arith.addf %1043, %1045 : vector<8x8xf32>
    %cst_541 = arith.constant 0.000000e+00 : f32
    %1047 = vector.broadcast %cst_541 : f32 to vector<8x8xf32>
    %1048 = arith.maximumf %1046, %1047 : vector<8x8xf32>
    %cst_542 = arith.constant dense<0.000000e+00> : vector<8xf32>
    %1049 = vector.multi_reduction <add>, %1048, %cst_542 [1] : vector<8x8xf32> to vector<8xf32>
    %1050 = vector.shape_cast %1049 : vector<8xf32> to vector<8x1xf32>
    %cst_543 = arith.constant dense<0.000000e+00> : vector<1xf32>
    %1051 = vector.multi_reduction <add>, %1050, %cst_543 [0] : vector<8x1xf32> to vector<1xf32>
    %1052 = vector.shape_cast %1051 : vector<1xf32> to vector<1x1xf32>
    %cst_544 = arith.constant 1.562500e-02 : f32
    %1053 = vector.broadcast %cst_544 : f32 to vector<1x1xf32>
    %1054 = arith.mulf %1052, %1053 : vector<1x1xf32>
    %1055 = vector.extract_strided_slice %2 {offsets = [5, 0], sizes = [1, 3], strides = [1, 1]} : vector<8x3xf32> to vector<1x3xf32>
    %1056 = vector.broadcast %1054 : vector<1x1xf32> to vector<1x3xf32>
    %1057 = arith.mulf %1056, %1055 : vector<1x3xf32>
    %1058 = arith.addf %1002, %1057 : vector<1x3xf32>
    %c5_545 = arith.constant 5 : index
    %c0_546 = arith.constant 0 : index
    %1059 = memref.load %arg14[%c5_545, %c0_546] : memref<8x1xf32, #tpu.memory_space<smem>>
    %1060 = vector.broadcast %1059 : f32 to vector<1x1xf32>
    %1061 = arith.mulf %1054, %1060 : vector<1x1xf32>
    %1062 = arith.addf %1006, %1061 : vector<1x1xf32>
    %cst_547 = arith.constant 0.000000e+00 : f32
    %1063 = vector.broadcast %cst_547 : f32 to vector<8x8xf32>
    %c0_548 = arith.constant 0 : index
    %c6_549 = arith.constant 6 : index
    %1064 = memref.load %arg10[%c0_548, %c6_549] : memref<9x8xf32, #tpu.memory_space<smem>>
    %1065 = vector.broadcast %1064 : f32 to vector<8x8xf32>
    %1066 = arith.mulf %714, %1065 : vector<8x8xf32>
    %1067 = arith.addf %1063, %1066 : vector<8x8xf32>
    %c1_550 = arith.constant 1 : index
    %c6_551 = arith.constant 6 : index
    %1068 = memref.load %arg10[%c1_550, %c6_551] : memref<9x8xf32, #tpu.memory_space<smem>>
    %1069 = vector.broadcast %1068 : f32 to vector<8x8xf32>
    %1070 = arith.mulf %715, %1069 : vector<8x8xf32>
    %1071 = arith.addf %1067, %1070 : vector<8x8xf32>
    %c2_552 = arith.constant 2 : index
    %c6_553 = arith.constant 6 : index
    %1072 = memref.load %arg10[%c2_552, %c6_553] : memref<9x8xf32, #tpu.memory_space<smem>>
    %1073 = vector.broadcast %1072 : f32 to vector<8x8xf32>
    %1074 = arith.mulf %716, %1073 : vector<8x8xf32>
    %1075 = arith.addf %1071, %1074 : vector<8x8xf32>
    %c3_554 = arith.constant 3 : index
    %c6_555 = arith.constant 6 : index
    %1076 = memref.load %arg10[%c3_554, %c6_555] : memref<9x8xf32, #tpu.memory_space<smem>>
    %1077 = vector.broadcast %1076 : f32 to vector<8x8xf32>
    %1078 = arith.mulf %717, %1077 : vector<8x8xf32>
    %1079 = arith.addf %1075, %1078 : vector<8x8xf32>
    %c4_556 = arith.constant 4 : index
    %c6_557 = arith.constant 6 : index
    %1080 = memref.load %arg10[%c4_556, %c6_557] : memref<9x8xf32, #tpu.memory_space<smem>>
    %1081 = vector.broadcast %1080 : f32 to vector<8x8xf32>
    %1082 = arith.mulf %718, %1081 : vector<8x8xf32>
    %1083 = arith.addf %1079, %1082 : vector<8x8xf32>
    %c5_558 = arith.constant 5 : index
    %c6_559 = arith.constant 6 : index
    %1084 = memref.load %arg10[%c5_558, %c6_559] : memref<9x8xf32, #tpu.memory_space<smem>>
    %1085 = vector.broadcast %1084 : f32 to vector<8x8xf32>
    %1086 = arith.mulf %719, %1085 : vector<8x8xf32>
    %1087 = arith.addf %1083, %1086 : vector<8x8xf32>
    %c6_560 = arith.constant 6 : index
    %c6_561 = arith.constant 6 : index
    %1088 = memref.load %arg10[%c6_560, %c6_561] : memref<9x8xf32, #tpu.memory_space<smem>>
    %1089 = vector.broadcast %1088 : f32 to vector<8x8xf32>
    %1090 = arith.mulf %720, %1089 : vector<8x8xf32>
    %1091 = arith.addf %1087, %1090 : vector<8x8xf32>
    %c7_562 = arith.constant 7 : index
    %c6_563 = arith.constant 6 : index
    %1092 = memref.load %arg10[%c7_562, %c6_563] : memref<9x8xf32, #tpu.memory_space<smem>>
    %1093 = vector.broadcast %1092 : f32 to vector<8x8xf32>
    %1094 = arith.mulf %721, %1093 : vector<8x8xf32>
    %1095 = arith.addf %1091, %1094 : vector<8x8xf32>
    %c8_564 = arith.constant 8 : index
    %c6_565 = arith.constant 6 : index
    %1096 = memref.load %arg10[%c8_564, %c6_565] : memref<9x8xf32, #tpu.memory_space<smem>>
    %1097 = vector.broadcast %1096 : f32 to vector<8x8xf32>
    %1098 = arith.mulf %722, %1097 : vector<8x8xf32>
    %1099 = arith.addf %1095, %1098 : vector<8x8xf32>
    %c0_566 = arith.constant 0 : index
    %c6_567 = arith.constant 6 : index
    %1100 = memref.load %arg11[%c0_566, %c6_567] : memref<1x8xf32, #tpu.memory_space<smem>>
    %1101 = vector.broadcast %1100 : f32 to vector<8x8xf32>
    %1102 = arith.addf %1099, %1101 : vector<8x8xf32>
    %cst_568 = arith.constant 0.000000e+00 : f32
    %1103 = vector.broadcast %cst_568 : f32 to vector<8x8xf32>
    %1104 = arith.maximumf %1102, %1103 : vector<8x8xf32>
    %cst_569 = arith.constant dense<0.000000e+00> : vector<8xf32>
    %1105 = vector.multi_reduction <add>, %1104, %cst_569 [1] : vector<8x8xf32> to vector<8xf32>
    %1106 = vector.shape_cast %1105 : vector<8xf32> to vector<8x1xf32>
    %cst_570 = arith.constant dense<0.000000e+00> : vector<1xf32>
    %1107 = vector.multi_reduction <add>, %1106, %cst_570 [0] : vector<8x1xf32> to vector<1xf32>
    %1108 = vector.shape_cast %1107 : vector<1xf32> to vector<1x1xf32>
    %cst_571 = arith.constant 1.562500e-02 : f32
    %1109 = vector.broadcast %cst_571 : f32 to vector<1x1xf32>
    %1110 = arith.mulf %1108, %1109 : vector<1x1xf32>
    %1111 = vector.extract_strided_slice %2 {offsets = [6, 0], sizes = [1, 3], strides = [1, 1]} : vector<8x3xf32> to vector<1x3xf32>
    %1112 = vector.broadcast %1110 : vector<1x1xf32> to vector<1x3xf32>
    %1113 = arith.mulf %1112, %1111 : vector<1x3xf32>
    %1114 = arith.addf %1058, %1113 : vector<1x3xf32>
    %c6_572 = arith.constant 6 : index
    %c0_573 = arith.constant 0 : index
    %1115 = memref.load %arg14[%c6_572, %c0_573] : memref<8x1xf32, #tpu.memory_space<smem>>
    %1116 = vector.broadcast %1115 : f32 to vector<1x1xf32>
    %1117 = arith.mulf %1110, %1116 : vector<1x1xf32>
    %1118 = arith.addf %1062, %1117 : vector<1x1xf32>
    %cst_574 = arith.constant 0.000000e+00 : f32
    %1119 = vector.broadcast %cst_574 : f32 to vector<8x8xf32>
    %c0_575 = arith.constant 0 : index
    %c7_576 = arith.constant 7 : index
    %1120 = memref.load %arg10[%c0_575, %c7_576] : memref<9x8xf32, #tpu.memory_space<smem>>
    %1121 = vector.broadcast %1120 : f32 to vector<8x8xf32>
    %1122 = arith.mulf %714, %1121 : vector<8x8xf32>
    %1123 = arith.addf %1119, %1122 : vector<8x8xf32>
    %c1_577 = arith.constant 1 : index
    %c7_578 = arith.constant 7 : index
    %1124 = memref.load %arg10[%c1_577, %c7_578] : memref<9x8xf32, #tpu.memory_space<smem>>
    %1125 = vector.broadcast %1124 : f32 to vector<8x8xf32>
    %1126 = arith.mulf %715, %1125 : vector<8x8xf32>
    %1127 = arith.addf %1123, %1126 : vector<8x8xf32>
    %c2_579 = arith.constant 2 : index
    %c7_580 = arith.constant 7 : index
    %1128 = memref.load %arg10[%c2_579, %c7_580] : memref<9x8xf32, #tpu.memory_space<smem>>
    %1129 = vector.broadcast %1128 : f32 to vector<8x8xf32>
    %1130 = arith.mulf %716, %1129 : vector<8x8xf32>
    %1131 = arith.addf %1127, %1130 : vector<8x8xf32>
    %c3_581 = arith.constant 3 : index
    %c7_582 = arith.constant 7 : index
    %1132 = memref.load %arg10[%c3_581, %c7_582] : memref<9x8xf32, #tpu.memory_space<smem>>
    %1133 = vector.broadcast %1132 : f32 to vector<8x8xf32>
    %1134 = arith.mulf %717, %1133 : vector<8x8xf32>
    %1135 = arith.addf %1131, %1134 : vector<8x8xf32>
    %c4_583 = arith.constant 4 : index
    %c7_584 = arith.constant 7 : index
    %1136 = memref.load %arg10[%c4_583, %c7_584] : memref<9x8xf32, #tpu.memory_space<smem>>
    %1137 = vector.broadcast %1136 : f32 to vector<8x8xf32>
    %1138 = arith.mulf %718, %1137 : vector<8x8xf32>
    %1139 = arith.addf %1135, %1138 : vector<8x8xf32>
    %c5_585 = arith.constant 5 : index
    %c7_586 = arith.constant 7 : index
    %1140 = memref.load %arg10[%c5_585, %c7_586] : memref<9x8xf32, #tpu.memory_space<smem>>
    %1141 = vector.broadcast %1140 : f32 to vector<8x8xf32>
    %1142 = arith.mulf %719, %1141 : vector<8x8xf32>
    %1143 = arith.addf %1139, %1142 : vector<8x8xf32>
    %c6_587 = arith.constant 6 : index
    %c7_588 = arith.constant 7 : index
    %1144 = memref.load %arg10[%c6_587, %c7_588] : memref<9x8xf32, #tpu.memory_space<smem>>
    %1145 = vector.broadcast %1144 : f32 to vector<8x8xf32>
    %1146 = arith.mulf %720, %1145 : vector<8x8xf32>
    %1147 = arith.addf %1143, %1146 : vector<8x8xf32>
    %c7_589 = arith.constant 7 : index
    %c7_590 = arith.constant 7 : index
    %1148 = memref.load %arg10[%c7_589, %c7_590] : memref<9x8xf32, #tpu.memory_space<smem>>
    %1149 = vector.broadcast %1148 : f32 to vector<8x8xf32>
    %1150 = arith.mulf %721, %1149 : vector<8x8xf32>
    %1151 = arith.addf %1147, %1150 : vector<8x8xf32>
    %c8_591 = arith.constant 8 : index
    %c7_592 = arith.constant 7 : index
    %1152 = memref.load %arg10[%c8_591, %c7_592] : memref<9x8xf32, #tpu.memory_space<smem>>
    %1153 = vector.broadcast %1152 : f32 to vector<8x8xf32>
    %1154 = arith.mulf %722, %1153 : vector<8x8xf32>
    %1155 = arith.addf %1151, %1154 : vector<8x8xf32>
    %c0_593 = arith.constant 0 : index
    %c7_594 = arith.constant 7 : index
    %1156 = memref.load %arg11[%c0_593, %c7_594] : memref<1x8xf32, #tpu.memory_space<smem>>
    %1157 = vector.broadcast %1156 : f32 to vector<8x8xf32>
    %1158 = arith.addf %1155, %1157 : vector<8x8xf32>
    %cst_595 = arith.constant 0.000000e+00 : f32
    %1159 = vector.broadcast %cst_595 : f32 to vector<8x8xf32>
    %1160 = arith.maximumf %1158, %1159 : vector<8x8xf32>
    %cst_596 = arith.constant dense<0.000000e+00> : vector<8xf32>
    %1161 = vector.multi_reduction <add>, %1160, %cst_596 [1] : vector<8x8xf32> to vector<8xf32>
    %1162 = vector.shape_cast %1161 : vector<8xf32> to vector<8x1xf32>
    %cst_597 = arith.constant dense<0.000000e+00> : vector<1xf32>
    %1163 = vector.multi_reduction <add>, %1162, %cst_597 [0] : vector<8x1xf32> to vector<1xf32>
    %1164 = vector.shape_cast %1163 : vector<1xf32> to vector<1x1xf32>
    %cst_598 = arith.constant 1.562500e-02 : f32
    %1165 = vector.broadcast %cst_598 : f32 to vector<1x1xf32>
    %1166 = arith.mulf %1164, %1165 : vector<1x1xf32>
    %1167 = vector.extract_strided_slice %2 {offsets = [7, 0], sizes = [1, 3], strides = [1, 1]} : vector<8x3xf32> to vector<1x3xf32>
    %1168 = vector.broadcast %1166 : vector<1x1xf32> to vector<1x3xf32>
    %1169 = arith.mulf %1168, %1167 : vector<1x3xf32>
    %1170 = arith.addf %1114, %1169 : vector<1x3xf32>
    %c7_599 = arith.constant 7 : index
    %c0_600 = arith.constant 0 : index
    %1171 = memref.load %arg14[%c7_599, %c0_600] : memref<8x1xf32, #tpu.memory_space<smem>>
    %1172 = vector.broadcast %1171 : f32 to vector<1x1xf32>
    %1173 = arith.mulf %1166, %1172 : vector<1x1xf32>
    %1174 = arith.addf %1118, %1173 : vector<1x1xf32>
    %cst_601 = arith.constant 0.000000e+00 : f32
    %1175 = vector.broadcast %cst_601 : f32 to vector<1x1xf32>
    %1176 = arith.subf %1175, %1174 : vector<1x1xf32>
    %1177 = math.exp %1176 : vector<1x1xf32>
    %cst_602 = arith.constant 1.000000e+00 : f32
    %1178 = vector.broadcast %cst_602 : f32 to vector<1x1xf32>
    %1179 = arith.addf %1178, %1177 : vector<1x1xf32>
    %cst_603 = arith.constant 1.000000e+00 : f32
    %1180 = vector.broadcast %cst_603 : f32 to vector<1x1xf32>
    %1181 = arith.divf %1180, %1179 : vector<1x1xf32>
    %cst_604 = arith.constant 0.000000e+00 : f32
    %1182 = vector.broadcast %cst_604 : f32 to vector<10x10xf32>
    %1183 = vector.extract_strided_slice %611 {offsets = [0, 0], sizes = [1, 1], strides = [1, 1]} : vector<4x4xf32> to vector<1x1xf32>
    %1184 = vector.broadcast %1183 : vector<1x1xf32> to vector<10x10xf32>
    %1185 = arith.mulf %1184, %613 : vector<10x10xf32>
    %1186 = arith.addf %1182, %1185 : vector<10x10xf32>
    %1187 = vector.extract_strided_slice %611 {offsets = [0, 1], sizes = [1, 1], strides = [1, 1]} : vector<4x4xf32> to vector<1x1xf32>
    %1188 = vector.broadcast %1187 : vector<1x1xf32> to vector<10x10xf32>
    %1189 = arith.mulf %1188, %615 : vector<10x10xf32>
    %1190 = arith.addf %1186, %1189 : vector<10x10xf32>
    %1191 = vector.extract_strided_slice %611 {offsets = [0, 2], sizes = [1, 1], strides = [1, 1]} : vector<4x4xf32> to vector<1x1xf32>
    %1192 = vector.broadcast %1191 : vector<1x1xf32> to vector<10x10xf32>
    %1193 = arith.mulf %1192, %617 : vector<10x10xf32>
    %1194 = arith.addf %1190, %1193 : vector<10x10xf32>
    %1195 = vector.extract_strided_slice %611 {offsets = [0, 3], sizes = [1, 1], strides = [1, 1]} : vector<4x4xf32> to vector<1x1xf32>
    %1196 = vector.broadcast %1195 : vector<1x1xf32> to vector<10x10xf32>
    %1197 = arith.mulf %1196, %619 : vector<10x10xf32>
    %1198 = arith.addf %1194, %1197 : vector<10x10xf32>
    %1199 = vector.extract_strided_slice %611 {offsets = [1, 0], sizes = [1, 1], strides = [1, 1]} : vector<4x4xf32> to vector<1x1xf32>
    %1200 = vector.broadcast %1199 : vector<1x1xf32> to vector<10x10xf32>
    %1201 = arith.mulf %1200, %621 : vector<10x10xf32>
    %1202 = arith.addf %1198, %1201 : vector<10x10xf32>
    %1203 = vector.extract_strided_slice %611 {offsets = [1, 1], sizes = [1, 1], strides = [1, 1]} : vector<4x4xf32> to vector<1x1xf32>
    %1204 = vector.broadcast %1203 : vector<1x1xf32> to vector<10x10xf32>
    %1205 = arith.mulf %1204, %623 : vector<10x10xf32>
    %1206 = arith.addf %1202, %1205 : vector<10x10xf32>
    %1207 = vector.extract_strided_slice %611 {offsets = [1, 2], sizes = [1, 1], strides = [1, 1]} : vector<4x4xf32> to vector<1x1xf32>
    %1208 = vector.broadcast %1207 : vector<1x1xf32> to vector<10x10xf32>
    %1209 = arith.mulf %1208, %625 : vector<10x10xf32>
    %1210 = arith.addf %1206, %1209 : vector<10x10xf32>
    %1211 = vector.extract_strided_slice %611 {offsets = [1, 3], sizes = [1, 1], strides = [1, 1]} : vector<4x4xf32> to vector<1x1xf32>
    %1212 = vector.broadcast %1211 : vector<1x1xf32> to vector<10x10xf32>
    %1213 = arith.mulf %1212, %627 : vector<10x10xf32>
    %1214 = arith.addf %1210, %1213 : vector<10x10xf32>
    %1215 = vector.extract_strided_slice %611 {offsets = [2, 0], sizes = [1, 1], strides = [1, 1]} : vector<4x4xf32> to vector<1x1xf32>
    %1216 = vector.broadcast %1215 : vector<1x1xf32> to vector<10x10xf32>
    %1217 = arith.mulf %1216, %629 : vector<10x10xf32>
    %1218 = arith.addf %1214, %1217 : vector<10x10xf32>
    %1219 = vector.extract_strided_slice %611 {offsets = [2, 1], sizes = [1, 1], strides = [1, 1]} : vector<4x4xf32> to vector<1x1xf32>
    %1220 = vector.broadcast %1219 : vector<1x1xf32> to vector<10x10xf32>
    %1221 = arith.mulf %1220, %631 : vector<10x10xf32>
    %1222 = arith.addf %1218, %1221 : vector<10x10xf32>
    %1223 = vector.extract_strided_slice %611 {offsets = [2, 2], sizes = [1, 1], strides = [1, 1]} : vector<4x4xf32> to vector<1x1xf32>
    %1224 = vector.broadcast %1223 : vector<1x1xf32> to vector<10x10xf32>
    %1225 = arith.mulf %1224, %633 : vector<10x10xf32>
    %1226 = arith.addf %1222, %1225 : vector<10x10xf32>
    %1227 = vector.extract_strided_slice %611 {offsets = [2, 3], sizes = [1, 1], strides = [1, 1]} : vector<4x4xf32> to vector<1x1xf32>
    %1228 = vector.broadcast %1227 : vector<1x1xf32> to vector<10x10xf32>
    %1229 = arith.mulf %1228, %635 : vector<10x10xf32>
    %1230 = arith.addf %1226, %1229 : vector<10x10xf32>
    %1231 = vector.extract_strided_slice %611 {offsets = [3, 0], sizes = [1, 1], strides = [1, 1]} : vector<4x4xf32> to vector<1x1xf32>
    %1232 = vector.broadcast %1231 : vector<1x1xf32> to vector<10x10xf32>
    %1233 = arith.mulf %1232, %637 : vector<10x10xf32>
    %1234 = arith.addf %1230, %1233 : vector<10x10xf32>
    %1235 = vector.extract_strided_slice %611 {offsets = [3, 1], sizes = [1, 1], strides = [1, 1]} : vector<4x4xf32> to vector<1x1xf32>
    %1236 = vector.broadcast %1235 : vector<1x1xf32> to vector<10x10xf32>
    %1237 = arith.mulf %1236, %639 : vector<10x10xf32>
    %1238 = arith.addf %1234, %1237 : vector<10x10xf32>
    %1239 = vector.extract_strided_slice %611 {offsets = [3, 2], sizes = [1, 1], strides = [1, 1]} : vector<4x4xf32> to vector<1x1xf32>
    %1240 = vector.broadcast %1239 : vector<1x1xf32> to vector<10x10xf32>
    %1241 = arith.mulf %1240, %641 : vector<10x10xf32>
    %1242 = arith.addf %1238, %1241 : vector<10x10xf32>
    %1243 = vector.extract_strided_slice %611 {offsets = [3, 3], sizes = [1, 1], strides = [1, 1]} : vector<4x4xf32> to vector<1x1xf32>
    %1244 = vector.broadcast %1243 : vector<1x1xf32> to vector<10x10xf32>
    %1245 = arith.mulf %1244, %643 : vector<10x10xf32>
    %1246 = arith.addf %1242, %1245 : vector<10x10xf32>
    %1247 = arith.mulf %1246, %26 : vector<10x10xf32>
    %1248 = vector.extract_strided_slice %1246 {offsets = [1, 1], sizes = [8, 8], strides = [1, 1]} : vector<10x10xf32> to vector<8x8xf32>
    %c0_605 = arith.constant 0 : index
    %c1_606 = arith.constant 1 : index
    %c0_607 = arith.constant 0 : index
    %c0_608 = arith.constant 0 : index
    %c0_609 = arith.constant 0 : index
    %1249 = vector.load %arg19[%c0_605, %c1_606, %c0_607, %c0_608, %c0_609] : memref<1x2x1x8x8xf32, #tpu.memory_space<vmem>>, vector<1x1x1x8x8xf32>
    %1250 = vector.shape_cast %1249 : vector<1x1x1x8x8xf32> to vector<8x8xf32>
    %1251 = vector.shape_cast %1248 : vector<8x8xf32> to vector<1x1x1x8x8xf32>
    tpu.vector_store %arg19[%c0_605, %c1_606, %c0_607, %c0_608, %c0_609], %1251 {strides = array<i32>} : memref<1x2x1x8x8xf32, #tpu.memory_space<vmem>>, vector<1x1x1x8x8xf32>,
    %1252 = vector.extract_strided_slice %1247 {offsets = [0, 0], sizes = [8, 8], strides = [1, 1]} : vector<10x10xf32> to vector<8x8xf32>
    %1253 = vector.extract_strided_slice %1247 {offsets = [0, 1], sizes = [8, 8], strides = [1, 1]} : vector<10x10xf32> to vector<8x8xf32>
    %1254 = vector.extract_strided_slice %1247 {offsets = [0, 2], sizes = [8, 8], strides = [1, 1]} : vector<10x10xf32> to vector<8x8xf32>
    %1255 = vector.extract_strided_slice %1247 {offsets = [1, 0], sizes = [8, 8], strides = [1, 1]} : vector<10x10xf32> to vector<8x8xf32>
    %1256 = vector.extract_strided_slice %1247 {offsets = [1, 1], sizes = [8, 8], strides = [1, 1]} : vector<10x10xf32> to vector<8x8xf32>
    %1257 = vector.extract_strided_slice %1247 {offsets = [1, 2], sizes = [8, 8], strides = [1, 1]} : vector<10x10xf32> to vector<8x8xf32>
    %1258 = vector.extract_strided_slice %1247 {offsets = [2, 0], sizes = [8, 8], strides = [1, 1]} : vector<10x10xf32> to vector<8x8xf32>
    %1259 = vector.extract_strided_slice %1247 {offsets = [2, 1], sizes = [8, 8], strides = [1, 1]} : vector<10x10xf32> to vector<8x8xf32>
    %1260 = vector.extract_strided_slice %1247 {offsets = [2, 2], sizes = [8, 8], strides = [1, 1]} : vector<10x10xf32> to vector<8x8xf32>
    %cst_610 = arith.constant 0.000000e+00 : f32
    %1261 = vector.broadcast %cst_610 : f32 to vector<1x1xf32>
    %c0_611 = arith.constant 0 : index
    %c0_612 = arith.constant 0 : index
    %1262 = memref.load %arg15[%c0_611, %c0_612] : memref<1x1xf32, #tpu.memory_space<smem>>
    %1263 = vector.broadcast %1262 : f32 to vector<1x1xf32>
    %1264 = arith.addf %1261, %1263 : vector<1x1xf32>
    %cst_613 = arith.constant 0.000000e+00 : f32
    %1265 = vector.broadcast %cst_613 : f32 to vector<8x8xf32>
    %c0_614 = arith.constant 0 : index
    %c0_615 = arith.constant 0 : index
    %1266 = memref.load %arg10[%c0_614, %c0_615] : memref<9x8xf32, #tpu.memory_space<smem>>
    %1267 = vector.broadcast %1266 : f32 to vector<8x8xf32>
    %1268 = arith.mulf %1252, %1267 : vector<8x8xf32>
    %1269 = arith.addf %1265, %1268 : vector<8x8xf32>
    %c1_616 = arith.constant 1 : index
    %c0_617 = arith.constant 0 : index
    %1270 = memref.load %arg10[%c1_616, %c0_617] : memref<9x8xf32, #tpu.memory_space<smem>>
    %1271 = vector.broadcast %1270 : f32 to vector<8x8xf32>
    %1272 = arith.mulf %1253, %1271 : vector<8x8xf32>
    %1273 = arith.addf %1269, %1272 : vector<8x8xf32>
    %c2_618 = arith.constant 2 : index
    %c0_619 = arith.constant 0 : index
    %1274 = memref.load %arg10[%c2_618, %c0_619] : memref<9x8xf32, #tpu.memory_space<smem>>
    %1275 = vector.broadcast %1274 : f32 to vector<8x8xf32>
    %1276 = arith.mulf %1254, %1275 : vector<8x8xf32>
    %1277 = arith.addf %1273, %1276 : vector<8x8xf32>
    %c3_620 = arith.constant 3 : index
    %c0_621 = arith.constant 0 : index
    %1278 = memref.load %arg10[%c3_620, %c0_621] : memref<9x8xf32, #tpu.memory_space<smem>>
    %1279 = vector.broadcast %1278 : f32 to vector<8x8xf32>
    %1280 = arith.mulf %1255, %1279 : vector<8x8xf32>
    %1281 = arith.addf %1277, %1280 : vector<8x8xf32>
    %c4_622 = arith.constant 4 : index
    %c0_623 = arith.constant 0 : index
    %1282 = memref.load %arg10[%c4_622, %c0_623] : memref<9x8xf32, #tpu.memory_space<smem>>
    %1283 = vector.broadcast %1282 : f32 to vector<8x8xf32>
    %1284 = arith.mulf %1256, %1283 : vector<8x8xf32>
    %1285 = arith.addf %1281, %1284 : vector<8x8xf32>
    %c5_624 = arith.constant 5 : index
    %c0_625 = arith.constant 0 : index
    %1286 = memref.load %arg10[%c5_624, %c0_625] : memref<9x8xf32, #tpu.memory_space<smem>>
    %1287 = vector.broadcast %1286 : f32 to vector<8x8xf32>
    %1288 = arith.mulf %1257, %1287 : vector<8x8xf32>
    %1289 = arith.addf %1285, %1288 : vector<8x8xf32>
    %c6_626 = arith.constant 6 : index
    %c0_627 = arith.constant 0 : index
    %1290 = memref.load %arg10[%c6_626, %c0_627] : memref<9x8xf32, #tpu.memory_space<smem>>
    %1291 = vector.broadcast %1290 : f32 to vector<8x8xf32>
    %1292 = arith.mulf %1258, %1291 : vector<8x8xf32>
    %1293 = arith.addf %1289, %1292 : vector<8x8xf32>
    %c7_628 = arith.constant 7 : index
    %c0_629 = arith.constant 0 : index
    %1294 = memref.load %arg10[%c7_628, %c0_629] : memref<9x8xf32, #tpu.memory_space<smem>>
    %1295 = vector.broadcast %1294 : f32 to vector<8x8xf32>
    %1296 = arith.mulf %1259, %1295 : vector<8x8xf32>
    %1297 = arith.addf %1293, %1296 : vector<8x8xf32>
    %c8_630 = arith.constant 8 : index
    %c0_631 = arith.constant 0 : index
    %1298 = memref.load %arg10[%c8_630, %c0_631] : memref<9x8xf32, #tpu.memory_space<smem>>
    %1299 = vector.broadcast %1298 : f32 to vector<8x8xf32>
    %1300 = arith.mulf %1260, %1299 : vector<8x8xf32>
    %1301 = arith.addf %1297, %1300 : vector<8x8xf32>
    %c0_632 = arith.constant 0 : index
    %c0_633 = arith.constant 0 : index
    %1302 = memref.load %arg11[%c0_632, %c0_633] : memref<1x8xf32, #tpu.memory_space<smem>>
    %1303 = vector.broadcast %1302 : f32 to vector<8x8xf32>
    %1304 = arith.addf %1301, %1303 : vector<8x8xf32>
    %cst_634 = arith.constant 0.000000e+00 : f32
    %1305 = vector.broadcast %cst_634 : f32 to vector<8x8xf32>
    %1306 = arith.maximumf %1304, %1305 : vector<8x8xf32>
    %cst_635 = arith.constant dense<0.000000e+00> : vector<8xf32>
    %1307 = vector.multi_reduction <add>, %1306, %cst_635 [1] : vector<8x8xf32> to vector<8xf32>
    %1308 = vector.shape_cast %1307 : vector<8xf32> to vector<8x1xf32>
    %cst_636 = arith.constant dense<0.000000e+00> : vector<1xf32>
    %1309 = vector.multi_reduction <add>, %1308, %cst_636 [0] : vector<8x1xf32> to vector<1xf32>
    %1310 = vector.shape_cast %1309 : vector<1xf32> to vector<1x1xf32>
    %cst_637 = arith.constant 1.562500e-02 : f32
    %1311 = vector.broadcast %cst_637 : f32 to vector<1x1xf32>
    %1312 = arith.mulf %1310, %1311 : vector<1x1xf32>
    %1313 = vector.extract_strided_slice %2 {offsets = [0, 0], sizes = [1, 3], strides = [1, 1]} : vector<8x3xf32> to vector<1x3xf32>
    %1314 = vector.broadcast %1312 : vector<1x1xf32> to vector<1x3xf32>
    %1315 = arith.mulf %1314, %1313 : vector<1x3xf32>
    %1316 = arith.addf %3, %1315 : vector<1x3xf32>
    %c0_638 = arith.constant 0 : index
    %c0_639 = arith.constant 0 : index
    %1317 = memref.load %arg14[%c0_638, %c0_639] : memref<8x1xf32, #tpu.memory_space<smem>>
    %1318 = vector.broadcast %1317 : f32 to vector<1x1xf32>
    %1319 = arith.mulf %1312, %1318 : vector<1x1xf32>
    %1320 = arith.addf %1264, %1319 : vector<1x1xf32>
    %cst_640 = arith.constant 0.000000e+00 : f32
    %1321 = vector.broadcast %cst_640 : f32 to vector<8x8xf32>
    %c0_641 = arith.constant 0 : index
    %c1_642 = arith.constant 1 : index
    %1322 = memref.load %arg10[%c0_641, %c1_642] : memref<9x8xf32, #tpu.memory_space<smem>>
    %1323 = vector.broadcast %1322 : f32 to vector<8x8xf32>
    %1324 = arith.mulf %1252, %1323 : vector<8x8xf32>
    %1325 = arith.addf %1321, %1324 : vector<8x8xf32>
    %c1_643 = arith.constant 1 : index
    %c1_644 = arith.constant 1 : index
    %1326 = memref.load %arg10[%c1_643, %c1_644] : memref<9x8xf32, #tpu.memory_space<smem>>
    %1327 = vector.broadcast %1326 : f32 to vector<8x8xf32>
    %1328 = arith.mulf %1253, %1327 : vector<8x8xf32>
    %1329 = arith.addf %1325, %1328 : vector<8x8xf32>
    %c2_645 = arith.constant 2 : index
    %c1_646 = arith.constant 1 : index
    %1330 = memref.load %arg10[%c2_645, %c1_646] : memref<9x8xf32, #tpu.memory_space<smem>>
    %1331 = vector.broadcast %1330 : f32 to vector<8x8xf32>
    %1332 = arith.mulf %1254, %1331 : vector<8x8xf32>
    %1333 = arith.addf %1329, %1332 : vector<8x8xf32>
    %c3_647 = arith.constant 3 : index
    %c1_648 = arith.constant 1 : index
    %1334 = memref.load %arg10[%c3_647, %c1_648] : memref<9x8xf32, #tpu.memory_space<smem>>
    %1335 = vector.broadcast %1334 : f32 to vector<8x8xf32>
    %1336 = arith.mulf %1255, %1335 : vector<8x8xf32>
    %1337 = arith.addf %1333, %1336 : vector<8x8xf32>
    %c4_649 = arith.constant 4 : index
    %c1_650 = arith.constant 1 : index
    %1338 = memref.load %arg10[%c4_649, %c1_650] : memref<9x8xf32, #tpu.memory_space<smem>>
    %1339 = vector.broadcast %1338 : f32 to vector<8x8xf32>
    %1340 = arith.mulf %1256, %1339 : vector<8x8xf32>
    %1341 = arith.addf %1337, %1340 : vector<8x8xf32>
    %c5_651 = arith.constant 5 : index
    %c1_652 = arith.constant 1 : index
    %1342 = memref.load %arg10[%c5_651, %c1_652] : memref<9x8xf32, #tpu.memory_space<smem>>
    %1343 = vector.broadcast %1342 : f32 to vector<8x8xf32>
    %1344 = arith.mulf %1257, %1343 : vector<8x8xf32>
    %1345 = arith.addf %1341, %1344 : vector<8x8xf32>
    %c6_653 = arith.constant 6 : index
    %c1_654 = arith.constant 1 : index
    %1346 = memref.load %arg10[%c6_653, %c1_654] : memref<9x8xf32, #tpu.memory_space<smem>>
    %1347 = vector.broadcast %1346 : f32 to vector<8x8xf32>
    %1348 = arith.mulf %1258, %1347 : vector<8x8xf32>
    %1349 = arith.addf %1345, %1348 : vector<8x8xf32>
    %c7_655 = arith.constant 7 : index
    %c1_656 = arith.constant 1 : index
    %1350 = memref.load %arg10[%c7_655, %c1_656] : memref<9x8xf32, #tpu.memory_space<smem>>
    %1351 = vector.broadcast %1350 : f32 to vector<8x8xf32>
    %1352 = arith.mulf %1259, %1351 : vector<8x8xf32>
    %1353 = arith.addf %1349, %1352 : vector<8x8xf32>
    %c8_657 = arith.constant 8 : index
    %c1_658 = arith.constant 1 : index
    %1354 = memref.load %arg10[%c8_657, %c1_658] : memref<9x8xf32, #tpu.memory_space<smem>>
    %1355 = vector.broadcast %1354 : f32 to vector<8x8xf32>
    %1356 = arith.mulf %1260, %1355 : vector<8x8xf32>
    %1357 = arith.addf %1353, %1356 : vector<8x8xf32>
    %c0_659 = arith.constant 0 : index
    %c1_660 = arith.constant 1 : index
    %1358 = memref.load %arg11[%c0_659, %c1_660] : memref<1x8xf32, #tpu.memory_space<smem>>
    %1359 = vector.broadcast %1358 : f32 to vector<8x8xf32>
    %1360 = arith.addf %1357, %1359 : vector<8x8xf32>
    %cst_661 = arith.constant 0.000000e+00 : f32
    %1361 = vector.broadcast %cst_661 : f32 to vector<8x8xf32>
    %1362 = arith.maximumf %1360, %1361 : vector<8x8xf32>
    %cst_662 = arith.constant dense<0.000000e+00> : vector<8xf32>
    %1363 = vector.multi_reduction <add>, %1362, %cst_662 [1] : vector<8x8xf32> to vector<8xf32>
    %1364 = vector.shape_cast %1363 : vector<8xf32> to vector<8x1xf32>
    %cst_663 = arith.constant dense<0.000000e+00> : vector<1xf32>
    %1365 = vector.multi_reduction <add>, %1364, %cst_663 [0] : vector<8x1xf32> to vector<1xf32>
    %1366 = vector.shape_cast %1365 : vector<1xf32> to vector<1x1xf32>
    %cst_664 = arith.constant 1.562500e-02 : f32
    %1367 = vector.broadcast %cst_664 : f32 to vector<1x1xf32>
    %1368 = arith.mulf %1366, %1367 : vector<1x1xf32>
    %1369 = vector.extract_strided_slice %2 {offsets = [1, 0], sizes = [1, 3], strides = [1, 1]} : vector<8x3xf32> to vector<1x3xf32>
    %1370 = vector.broadcast %1368 : vector<1x1xf32> to vector<1x3xf32>
    %1371 = arith.mulf %1370, %1369 : vector<1x3xf32>
    %1372 = arith.addf %1316, %1371 : vector<1x3xf32>
    %c1_665 = arith.constant 1 : index
    %c0_666 = arith.constant 0 : index
    %1373 = memref.load %arg14[%c1_665, %c0_666] : memref<8x1xf32, #tpu.memory_space<smem>>
    %1374 = vector.broadcast %1373 : f32 to vector<1x1xf32>
    %1375 = arith.mulf %1368, %1374 : vector<1x1xf32>
    %1376 = arith.addf %1320, %1375 : vector<1x1xf32>
    %cst_667 = arith.constant 0.000000e+00 : f32
    %1377 = vector.broadcast %cst_667 : f32 to vector<8x8xf32>
    %c0_668 = arith.constant 0 : index
    %c2_669 = arith.constant 2 : index
    %1378 = memref.load %arg10[%c0_668, %c2_669] : memref<9x8xf32, #tpu.memory_space<smem>>
    %1379 = vector.broadcast %1378 : f32 to vector<8x8xf32>
    %1380 = arith.mulf %1252, %1379 : vector<8x8xf32>
    %1381 = arith.addf %1377, %1380 : vector<8x8xf32>
    %c1_670 = arith.constant 1 : index
    %c2_671 = arith.constant 2 : index
    %1382 = memref.load %arg10[%c1_670, %c2_671] : memref<9x8xf32, #tpu.memory_space<smem>>
    %1383 = vector.broadcast %1382 : f32 to vector<8x8xf32>
    %1384 = arith.mulf %1253, %1383 : vector<8x8xf32>
    %1385 = arith.addf %1381, %1384 : vector<8x8xf32>
    %c2_672 = arith.constant 2 : index
    %c2_673 = arith.constant 2 : index
    %1386 = memref.load %arg10[%c2_672, %c2_673] : memref<9x8xf32, #tpu.memory_space<smem>>
    %1387 = vector.broadcast %1386 : f32 to vector<8x8xf32>
    %1388 = arith.mulf %1254, %1387 : vector<8x8xf32>
    %1389 = arith.addf %1385, %1388 : vector<8x8xf32>
    %c3_674 = arith.constant 3 : index
    %c2_675 = arith.constant 2 : index
    %1390 = memref.load %arg10[%c3_674, %c2_675] : memref<9x8xf32, #tpu.memory_space<smem>>
    %1391 = vector.broadcast %1390 : f32 to vector<8x8xf32>
    %1392 = arith.mulf %1255, %1391 : vector<8x8xf32>
    %1393 = arith.addf %1389, %1392 : vector<8x8xf32>
    %c4_676 = arith.constant 4 : index
    %c2_677 = arith.constant 2 : index
    %1394 = memref.load %arg10[%c4_676, %c2_677] : memref<9x8xf32, #tpu.memory_space<smem>>
    %1395 = vector.broadcast %1394 : f32 to vector<8x8xf32>
    %1396 = arith.mulf %1256, %1395 : vector<8x8xf32>
    %1397 = arith.addf %1393, %1396 : vector<8x8xf32>
    %c5_678 = arith.constant 5 : index
    %c2_679 = arith.constant 2 : index
    %1398 = memref.load %arg10[%c5_678, %c2_679] : memref<9x8xf32, #tpu.memory_space<smem>>
    %1399 = vector.broadcast %1398 : f32 to vector<8x8xf32>
    %1400 = arith.mulf %1257, %1399 : vector<8x8xf32>
    %1401 = arith.addf %1397, %1400 : vector<8x8xf32>
    %c6_680 = arith.constant 6 : index
    %c2_681 = arith.constant 2 : index
    %1402 = memref.load %arg10[%c6_680, %c2_681] : memref<9x8xf32, #tpu.memory_space<smem>>
    %1403 = vector.broadcast %1402 : f32 to vector<8x8xf32>
    %1404 = arith.mulf %1258, %1403 : vector<8x8xf32>
    %1405 = arith.addf %1401, %1404 : vector<8x8xf32>
    %c7_682 = arith.constant 7 : index
    %c2_683 = arith.constant 2 : index
    %1406 = memref.load %arg10[%c7_682, %c2_683] : memref<9x8xf32, #tpu.memory_space<smem>>
    %1407 = vector.broadcast %1406 : f32 to vector<8x8xf32>
    %1408 = arith.mulf %1259, %1407 : vector<8x8xf32>
    %1409 = arith.addf %1405, %1408 : vector<8x8xf32>
    %c8_684 = arith.constant 8 : index
    %c2_685 = arith.constant 2 : index
    %1410 = memref.load %arg10[%c8_684, %c2_685] : memref<9x8xf32, #tpu.memory_space<smem>>
    %1411 = vector.broadcast %1410 : f32 to vector<8x8xf32>
    %1412 = arith.mulf %1260, %1411 : vector<8x8xf32>
    %1413 = arith.addf %1409, %1412 : vector<8x8xf32>
    %c0_686 = arith.constant 0 : index
    %c2_687 = arith.constant 2 : index
    %1414 = memref.load %arg11[%c0_686, %c2_687] : memref<1x8xf32, #tpu.memory_space<smem>>
    %1415 = vector.broadcast %1414 : f32 to vector<8x8xf32>
    %1416 = arith.addf %1413, %1415 : vector<8x8xf32>
    %cst_688 = arith.constant 0.000000e+00 : f32
    %1417 = vector.broadcast %cst_688 : f32 to vector<8x8xf32>
    %1418 = arith.maximumf %1416, %1417 : vector<8x8xf32>
    %cst_689 = arith.constant dense<0.000000e+00> : vector<8xf32>
    %1419 = vector.multi_reduction <add>, %1418, %cst_689 [1] : vector<8x8xf32> to vector<8xf32>
    %1420 = vector.shape_cast %1419 : vector<8xf32> to vector<8x1xf32>
    %cst_690 = arith.constant dense<0.000000e+00> : vector<1xf32>
    %1421 = vector.multi_reduction <add>, %1420, %cst_690 [0] : vector<8x1xf32> to vector<1xf32>
    %1422 = vector.shape_cast %1421 : vector<1xf32> to vector<1x1xf32>
    %cst_691 = arith.constant 1.562500e-02 : f32
    %1423 = vector.broadcast %cst_691 : f32 to vector<1x1xf32>
    %1424 = arith.mulf %1422, %1423 : vector<1x1xf32>
    %1425 = vector.extract_strided_slice %2 {offsets = [2, 0], sizes = [1, 3], strides = [1, 1]} : vector<8x3xf32> to vector<1x3xf32>
    %1426 = vector.broadcast %1424 : vector<1x1xf32> to vector<1x3xf32>
    %1427 = arith.mulf %1426, %1425 : vector<1x3xf32>
    %1428 = arith.addf %1372, %1427 : vector<1x3xf32>
    %c2_692 = arith.constant 2 : index
    %c0_693 = arith.constant 0 : index
    %1429 = memref.load %arg14[%c2_692, %c0_693] : memref<8x1xf32, #tpu.memory_space<smem>>
    %1430 = vector.broadcast %1429 : f32 to vector<1x1xf32>
    %1431 = arith.mulf %1424, %1430 : vector<1x1xf32>
    %1432 = arith.addf %1376, %1431 : vector<1x1xf32>
    %cst_694 = arith.constant 0.000000e+00 : f32
    %1433 = vector.broadcast %cst_694 : f32 to vector<8x8xf32>
    %c0_695 = arith.constant 0 : index
    %c3_696 = arith.constant 3 : index
    %1434 = memref.load %arg10[%c0_695, %c3_696] : memref<9x8xf32, #tpu.memory_space<smem>>
    %1435 = vector.broadcast %1434 : f32 to vector<8x8xf32>
    %1436 = arith.mulf %1252, %1435 : vector<8x8xf32>
    %1437 = arith.addf %1433, %1436 : vector<8x8xf32>
    %c1_697 = arith.constant 1 : index
    %c3_698 = arith.constant 3 : index
    %1438 = memref.load %arg10[%c1_697, %c3_698] : memref<9x8xf32, #tpu.memory_space<smem>>
    %1439 = vector.broadcast %1438 : f32 to vector<8x8xf32>
    %1440 = arith.mulf %1253, %1439 : vector<8x8xf32>
    %1441 = arith.addf %1437, %1440 : vector<8x8xf32>
    %c2_699 = arith.constant 2 : index
    %c3_700 = arith.constant 3 : index
    %1442 = memref.load %arg10[%c2_699, %c3_700] : memref<9x8xf32, #tpu.memory_space<smem>>
    %1443 = vector.broadcast %1442 : f32 to vector<8x8xf32>
    %1444 = arith.mulf %1254, %1443 : vector<8x8xf32>
    %1445 = arith.addf %1441, %1444 : vector<8x8xf32>
    %c3_701 = arith.constant 3 : index
    %c3_702 = arith.constant 3 : index
    %1446 = memref.load %arg10[%c3_701, %c3_702] : memref<9x8xf32, #tpu.memory_space<smem>>
    %1447 = vector.broadcast %1446 : f32 to vector<8x8xf32>
    %1448 = arith.mulf %1255, %1447 : vector<8x8xf32>
    %1449 = arith.addf %1445, %1448 : vector<8x8xf32>
    %c4_703 = arith.constant 4 : index
    %c3_704 = arith.constant 3 : index
    %1450 = memref.load %arg10[%c4_703, %c3_704] : memref<9x8xf32, #tpu.memory_space<smem>>
    %1451 = vector.broadcast %1450 : f32 to vector<8x8xf32>
    %1452 = arith.mulf %1256, %1451 : vector<8x8xf32>
    %1453 = arith.addf %1449, %1452 : vector<8x8xf32>
    %c5_705 = arith.constant 5 : index
    %c3_706 = arith.constant 3 : index
    %1454 = memref.load %arg10[%c5_705, %c3_706] : memref<9x8xf32, #tpu.memory_space<smem>>
    %1455 = vector.broadcast %1454 : f32 to vector<8x8xf32>
    %1456 = arith.mulf %1257, %1455 : vector<8x8xf32>
    %1457 = arith.addf %1453, %1456 : vector<8x8xf32>
    %c6_707 = arith.constant 6 : index
    %c3_708 = arith.constant 3 : index
    %1458 = memref.load %arg10[%c6_707, %c3_708] : memref<9x8xf32, #tpu.memory_space<smem>>
    %1459 = vector.broadcast %1458 : f32 to vector<8x8xf32>
    %1460 = arith.mulf %1258, %1459 : vector<8x8xf32>
    %1461 = arith.addf %1457, %1460 : vector<8x8xf32>
    %c7_709 = arith.constant 7 : index
    %c3_710 = arith.constant 3 : index
    %1462 = memref.load %arg10[%c7_709, %c3_710] : memref<9x8xf32, #tpu.memory_space<smem>>
    %1463 = vector.broadcast %1462 : f32 to vector<8x8xf32>
    %1464 = arith.mulf %1259, %1463 : vector<8x8xf32>
    %1465 = arith.addf %1461, %1464 : vector<8x8xf32>
    %c8_711 = arith.constant 8 : index
    %c3_712 = arith.constant 3 : index
    %1466 = memref.load %arg10[%c8_711, %c3_712] : memref<9x8xf32, #tpu.memory_space<smem>>
    %1467 = vector.broadcast %1466 : f32 to vector<8x8xf32>
    %1468 = arith.mulf %1260, %1467 : vector<8x8xf32>
    %1469 = arith.addf %1465, %1468 : vector<8x8xf32>
    %c0_713 = arith.constant 0 : index
    %c3_714 = arith.constant 3 : index
    %1470 = memref.load %arg11[%c0_713, %c3_714] : memref<1x8xf32, #tpu.memory_space<smem>>
    %1471 = vector.broadcast %1470 : f32 to vector<8x8xf32>
    %1472 = arith.addf %1469, %1471 : vector<8x8xf32>
    %cst_715 = arith.constant 0.000000e+00 : f32
    %1473 = vector.broadcast %cst_715 : f32 to vector<8x8xf32>
    %1474 = arith.maximumf %1472, %1473 : vector<8x8xf32>
    %cst_716 = arith.constant dense<0.000000e+00> : vector<8xf32>
    %1475 = vector.multi_reduction <add>, %1474, %cst_716 [1] : vector<8x8xf32> to vector<8xf32>
    %1476 = vector.shape_cast %1475 : vector<8xf32> to vector<8x1xf32>
    %cst_717 = arith.constant dense<0.000000e+00> : vector<1xf32>
    %1477 = vector.multi_reduction <add>, %1476, %cst_717 [0] : vector<8x1xf32> to vector<1xf32>
    %1478 = vector.shape_cast %1477 : vector<1xf32> to vector<1x1xf32>
    %cst_718 = arith.constant 1.562500e-02 : f32
    %1479 = vector.broadcast %cst_718 : f32 to vector<1x1xf32>
    %1480 = arith.mulf %1478, %1479 : vector<1x1xf32>
    %1481 = vector.extract_strided_slice %2 {offsets = [3, 0], sizes = [1, 3], strides = [1, 1]} : vector<8x3xf32> to vector<1x3xf32>
    %1482 = vector.broadcast %1480 : vector<1x1xf32> to vector<1x3xf32>
    %1483 = arith.mulf %1482, %1481 : vector<1x3xf32>
    %1484 = arith.addf %1428, %1483 : vector<1x3xf32>
    %c3_719 = arith.constant 3 : index
    %c0_720 = arith.constant 0 : index
    %1485 = memref.load %arg14[%c3_719, %c0_720] : memref<8x1xf32, #tpu.memory_space<smem>>
    %1486 = vector.broadcast %1485 : f32 to vector<1x1xf32>
    %1487 = arith.mulf %1480, %1486 : vector<1x1xf32>
    %1488 = arith.addf %1432, %1487 : vector<1x1xf32>
    %cst_721 = arith.constant 0.000000e+00 : f32
    %1489 = vector.broadcast %cst_721 : f32 to vector<8x8xf32>
    %c0_722 = arith.constant 0 : index
    %c4_723 = arith.constant 4 : index
    %1490 = memref.load %arg10[%c0_722, %c4_723] : memref<9x8xf32, #tpu.memory_space<smem>>
    %1491 = vector.broadcast %1490 : f32 to vector<8x8xf32>
    %1492 = arith.mulf %1252, %1491 : vector<8x8xf32>
    %1493 = arith.addf %1489, %1492 : vector<8x8xf32>
    %c1_724 = arith.constant 1 : index
    %c4_725 = arith.constant 4 : index
    %1494 = memref.load %arg10[%c1_724, %c4_725] : memref<9x8xf32, #tpu.memory_space<smem>>
    %1495 = vector.broadcast %1494 : f32 to vector<8x8xf32>
    %1496 = arith.mulf %1253, %1495 : vector<8x8xf32>
    %1497 = arith.addf %1493, %1496 : vector<8x8xf32>
    %c2_726 = arith.constant 2 : index
    %c4_727 = arith.constant 4 : index
    %1498 = memref.load %arg10[%c2_726, %c4_727] : memref<9x8xf32, #tpu.memory_space<smem>>
    %1499 = vector.broadcast %1498 : f32 to vector<8x8xf32>
    %1500 = arith.mulf %1254, %1499 : vector<8x8xf32>
    %1501 = arith.addf %1497, %1500 : vector<8x8xf32>
    %c3_728 = arith.constant 3 : index
    %c4_729 = arith.constant 4 : index
    %1502 = memref.load %arg10[%c3_728, %c4_729] : memref<9x8xf32, #tpu.memory_space<smem>>
    %1503 = vector.broadcast %1502 : f32 to vector<8x8xf32>
    %1504 = arith.mulf %1255, %1503 : vector<8x8xf32>
    %1505 = arith.addf %1501, %1504 : vector<8x8xf32>
    %c4_730 = arith.constant 4 : index
    %c4_731 = arith.constant 4 : index
    %1506 = memref.load %arg10[%c4_730, %c4_731] : memref<9x8xf32, #tpu.memory_space<smem>>
    %1507 = vector.broadcast %1506 : f32 to vector<8x8xf32>
    %1508 = arith.mulf %1256, %1507 : vector<8x8xf32>
    %1509 = arith.addf %1505, %1508 : vector<8x8xf32>
    %c5_732 = arith.constant 5 : index
    %c4_733 = arith.constant 4 : index
    %1510 = memref.load %arg10[%c5_732, %c4_733] : memref<9x8xf32, #tpu.memory_space<smem>>
    %1511 = vector.broadcast %1510 : f32 to vector<8x8xf32>
    %1512 = arith.mulf %1257, %1511 : vector<8x8xf32>
    %1513 = arith.addf %1509, %1512 : vector<8x8xf32>
    %c6_734 = arith.constant 6 : index
    %c4_735 = arith.constant 4 : index
    %1514 = memref.load %arg10[%c6_734, %c4_735] : memref<9x8xf32, #tpu.memory_space<smem>>
    %1515 = vector.broadcast %1514 : f32 to vector<8x8xf32>
    %1516 = arith.mulf %1258, %1515 : vector<8x8xf32>
    %1517 = arith.addf %1513, %1516 : vector<8x8xf32>
    %c7_736 = arith.constant 7 : index
    %c4_737 = arith.constant 4 : index
    %1518 = memref.load %arg10[%c7_736, %c4_737] : memref<9x8xf32, #tpu.memory_space<smem>>
    %1519 = vector.broadcast %1518 : f32 to vector<8x8xf32>
    %1520 = arith.mulf %1259, %1519 : vector<8x8xf32>
    %1521 = arith.addf %1517, %1520 : vector<8x8xf32>
    %c8_738 = arith.constant 8 : index
    %c4_739 = arith.constant 4 : index
    %1522 = memref.load %arg10[%c8_738, %c4_739] : memref<9x8xf32, #tpu.memory_space<smem>>
    %1523 = vector.broadcast %1522 : f32 to vector<8x8xf32>
    %1524 = arith.mulf %1260, %1523 : vector<8x8xf32>
    %1525 = arith.addf %1521, %1524 : vector<8x8xf32>
    %c0_740 = arith.constant 0 : index
    %c4_741 = arith.constant 4 : index
    %1526 = memref.load %arg11[%c0_740, %c4_741] : memref<1x8xf32, #tpu.memory_space<smem>>
    %1527 = vector.broadcast %1526 : f32 to vector<8x8xf32>
    %1528 = arith.addf %1525, %1527 : vector<8x8xf32>
    %cst_742 = arith.constant 0.000000e+00 : f32
    %1529 = vector.broadcast %cst_742 : f32 to vector<8x8xf32>
    %1530 = arith.maximumf %1528, %1529 : vector<8x8xf32>
    %cst_743 = arith.constant dense<0.000000e+00> : vector<8xf32>
    %1531 = vector.multi_reduction <add>, %1530, %cst_743 [1] : vector<8x8xf32> to vector<8xf32>
    %1532 = vector.shape_cast %1531 : vector<8xf32> to vector<8x1xf32>
    %cst_744 = arith.constant dense<0.000000e+00> : vector<1xf32>
    %1533 = vector.multi_reduction <add>, %1532, %cst_744 [0] : vector<8x1xf32> to vector<1xf32>
    %1534 = vector.shape_cast %1533 : vector<1xf32> to vector<1x1xf32>
    %cst_745 = arith.constant 1.562500e-02 : f32
    %1535 = vector.broadcast %cst_745 : f32 to vector<1x1xf32>
    %1536 = arith.mulf %1534, %1535 : vector<1x1xf32>
    %1537 = vector.extract_strided_slice %2 {offsets = [4, 0], sizes = [1, 3], strides = [1, 1]} : vector<8x3xf32> to vector<1x3xf32>
    %1538 = vector.broadcast %1536 : vector<1x1xf32> to vector<1x3xf32>
    %1539 = arith.mulf %1538, %1537 : vector<1x3xf32>
    %1540 = arith.addf %1484, %1539 : vector<1x3xf32>
    %c4_746 = arith.constant 4 : index
    %c0_747 = arith.constant 0 : index
    %1541 = memref.load %arg14[%c4_746, %c0_747] : memref<8x1xf32, #tpu.memory_space<smem>>
    %1542 = vector.broadcast %1541 : f32 to vector<1x1xf32>
    %1543 = arith.mulf %1536, %1542 : vector<1x1xf32>
    %1544 = arith.addf %1488, %1543 : vector<1x1xf32>
    %cst_748 = arith.constant 0.000000e+00 : f32
    %1545 = vector.broadcast %cst_748 : f32 to vector<8x8xf32>
    %c0_749 = arith.constant 0 : index
    %c5_750 = arith.constant 5 : index
    %1546 = memref.load %arg10[%c0_749, %c5_750] : memref<9x8xf32, #tpu.memory_space<smem>>
    %1547 = vector.broadcast %1546 : f32 to vector<8x8xf32>
    %1548 = arith.mulf %1252, %1547 : vector<8x8xf32>
    %1549 = arith.addf %1545, %1548 : vector<8x8xf32>
    %c1_751 = arith.constant 1 : index
    %c5_752 = arith.constant 5 : index
    %1550 = memref.load %arg10[%c1_751, %c5_752] : memref<9x8xf32, #tpu.memory_space<smem>>
    %1551 = vector.broadcast %1550 : f32 to vector<8x8xf32>
    %1552 = arith.mulf %1253, %1551 : vector<8x8xf32>
    %1553 = arith.addf %1549, %1552 : vector<8x8xf32>
    %c2_753 = arith.constant 2 : index
    %c5_754 = arith.constant 5 : index
    %1554 = memref.load %arg10[%c2_753, %c5_754] : memref<9x8xf32, #tpu.memory_space<smem>>
    %1555 = vector.broadcast %1554 : f32 to vector<8x8xf32>
    %1556 = arith.mulf %1254, %1555 : vector<8x8xf32>
    %1557 = arith.addf %1553, %1556 : vector<8x8xf32>
    %c3_755 = arith.constant 3 : index
    %c5_756 = arith.constant 5 : index
    %1558 = memref.load %arg10[%c3_755, %c5_756] : memref<9x8xf32, #tpu.memory_space<smem>>
    %1559 = vector.broadcast %1558 : f32 to vector<8x8xf32>
    %1560 = arith.mulf %1255, %1559 : vector<8x8xf32>
    %1561 = arith.addf %1557, %1560 : vector<8x8xf32>
    %c4_757 = arith.constant 4 : index
    %c5_758 = arith.constant 5 : index
    %1562 = memref.load %arg10[%c4_757, %c5_758] : memref<9x8xf32, #tpu.memory_space<smem>>
    %1563 = vector.broadcast %1562 : f32 to vector<8x8xf32>
    %1564 = arith.mulf %1256, %1563 : vector<8x8xf32>
    %1565 = arith.addf %1561, %1564 : vector<8x8xf32>
    %c5_759 = arith.constant 5 : index
    %c5_760 = arith.constant 5 : index
    %1566 = memref.load %arg10[%c5_759, %c5_760] : memref<9x8xf32, #tpu.memory_space<smem>>
    %1567 = vector.broadcast %1566 : f32 to vector<8x8xf32>
    %1568 = arith.mulf %1257, %1567 : vector<8x8xf32>
    %1569 = arith.addf %1565, %1568 : vector<8x8xf32>
    %c6_761 = arith.constant 6 : index
    %c5_762 = arith.constant 5 : index
    %1570 = memref.load %arg10[%c6_761, %c5_762] : memref<9x8xf32, #tpu.memory_space<smem>>
    %1571 = vector.broadcast %1570 : f32 to vector<8x8xf32>
    %1572 = arith.mulf %1258, %1571 : vector<8x8xf32>
    %1573 = arith.addf %1569, %1572 : vector<8x8xf32>
    %c7_763 = arith.constant 7 : index
    %c5_764 = arith.constant 5 : index
    %1574 = memref.load %arg10[%c7_763, %c5_764] : memref<9x8xf32, #tpu.memory_space<smem>>
    %1575 = vector.broadcast %1574 : f32 to vector<8x8xf32>
    %1576 = arith.mulf %1259, %1575 : vector<8x8xf32>
    %1577 = arith.addf %1573, %1576 : vector<8x8xf32>
    %c8_765 = arith.constant 8 : index
    %c5_766 = arith.constant 5 : index
    %1578 = memref.load %arg10[%c8_765, %c5_766] : memref<9x8xf32, #tpu.memory_space<smem>>
    %1579 = vector.broadcast %1578 : f32 to vector<8x8xf32>
    %1580 = arith.mulf %1260, %1579 : vector<8x8xf32>
    %1581 = arith.addf %1577, %1580 : vector<8x8xf32>
    %c0_767 = arith.constant 0 : index
    %c5_768 = arith.constant 5 : index
    %1582 = memref.load %arg11[%c0_767, %c5_768] : memref<1x8xf32, #tpu.memory_space<smem>>
    %1583 = vector.broadcast %1582 : f32 to vector<8x8xf32>
    %1584 = arith.addf %1581, %1583 : vector<8x8xf32>
    %cst_769 = arith.constant 0.000000e+00 : f32
    %1585 = vector.broadcast %cst_769 : f32 to vector<8x8xf32>
    %1586 = arith.maximumf %1584, %1585 : vector<8x8xf32>
    %cst_770 = arith.constant dense<0.000000e+00> : vector<8xf32>
    %1587 = vector.multi_reduction <add>, %1586, %cst_770 [1] : vector<8x8xf32> to vector<8xf32>
    %1588 = vector.shape_cast %1587 : vector<8xf32> to vector<8x1xf32>
    %cst_771 = arith.constant dense<0.000000e+00> : vector<1xf32>
    %1589 = vector.multi_reduction <add>, %1588, %cst_771 [0] : vector<8x1xf32> to vector<1xf32>
    %1590 = vector.shape_cast %1589 : vector<1xf32> to vector<1x1xf32>
    %cst_772 = arith.constant 1.562500e-02 : f32
    %1591 = vector.broadcast %cst_772 : f32 to vector<1x1xf32>
    %1592 = arith.mulf %1590, %1591 : vector<1x1xf32>
    %1593 = vector.extract_strided_slice %2 {offsets = [5, 0], sizes = [1, 3], strides = [1, 1]} : vector<8x3xf32> to vector<1x3xf32>
    %1594 = vector.broadcast %1592 : vector<1x1xf32> to vector<1x3xf32>
    %1595 = arith.mulf %1594, %1593 : vector<1x3xf32>
    %1596 = arith.addf %1540, %1595 : vector<1x3xf32>
    %c5_773 = arith.constant 5 : index
    %c0_774 = arith.constant 0 : index
    %1597 = memref.load %arg14[%c5_773, %c0_774] : memref<8x1xf32, #tpu.memory_space<smem>>
    %1598 = vector.broadcast %1597 : f32 to vector<1x1xf32>
    %1599 = arith.mulf %1592, %1598 : vector<1x1xf32>
    %1600 = arith.addf %1544, %1599 : vector<1x1xf32>
    %cst_775 = arith.constant 0.000000e+00 : f32
    %1601 = vector.broadcast %cst_775 : f32 to vector<8x8xf32>
    %c0_776 = arith.constant 0 : index
    %c6_777 = arith.constant 6 : index
    %1602 = memref.load %arg10[%c0_776, %c6_777] : memref<9x8xf32, #tpu.memory_space<smem>>
    %1603 = vector.broadcast %1602 : f32 to vector<8x8xf32>
    %1604 = arith.mulf %1252, %1603 : vector<8x8xf32>
    %1605 = arith.addf %1601, %1604 : vector<8x8xf32>
    %c1_778 = arith.constant 1 : index
    %c6_779 = arith.constant 6 : index
    %1606 = memref.load %arg10[%c1_778, %c6_779] : memref<9x8xf32, #tpu.memory_space<smem>>
    %1607 = vector.broadcast %1606 : f32 to vector<8x8xf32>
    %1608 = arith.mulf %1253, %1607 : vector<8x8xf32>
    %1609 = arith.addf %1605, %1608 : vector<8x8xf32>
    %c2_780 = arith.constant 2 : index
    %c6_781 = arith.constant 6 : index
    %1610 = memref.load %arg10[%c2_780, %c6_781] : memref<9x8xf32, #tpu.memory_space<smem>>
    %1611 = vector.broadcast %1610 : f32 to vector<8x8xf32>
    %1612 = arith.mulf %1254, %1611 : vector<8x8xf32>
    %1613 = arith.addf %1609, %1612 : vector<8x8xf32>
    %c3_782 = arith.constant 3 : index
    %c6_783 = arith.constant 6 : index
    %1614 = memref.load %arg10[%c3_782, %c6_783] : memref<9x8xf32, #tpu.memory_space<smem>>
    %1615 = vector.broadcast %1614 : f32 to vector<8x8xf32>
    %1616 = arith.mulf %1255, %1615 : vector<8x8xf32>
    %1617 = arith.addf %1613, %1616 : vector<8x8xf32>
    %c4_784 = arith.constant 4 : index
    %c6_785 = arith.constant 6 : index
    %1618 = memref.load %arg10[%c4_784, %c6_785] : memref<9x8xf32, #tpu.memory_space<smem>>
    %1619 = vector.broadcast %1618 : f32 to vector<8x8xf32>
    %1620 = arith.mulf %1256, %1619 : vector<8x8xf32>
    %1621 = arith.addf %1617, %1620 : vector<8x8xf32>
    %c5_786 = arith.constant 5 : index
    %c6_787 = arith.constant 6 : index
    %1622 = memref.load %arg10[%c5_786, %c6_787] : memref<9x8xf32, #tpu.memory_space<smem>>
    %1623 = vector.broadcast %1622 : f32 to vector<8x8xf32>
    %1624 = arith.mulf %1257, %1623 : vector<8x8xf32>
    %1625 = arith.addf %1621, %1624 : vector<8x8xf32>
    %c6_788 = arith.constant 6 : index
    %c6_789 = arith.constant 6 : index
    %1626 = memref.load %arg10[%c6_788, %c6_789] : memref<9x8xf32, #tpu.memory_space<smem>>
    %1627 = vector.broadcast %1626 : f32 to vector<8x8xf32>
    %1628 = arith.mulf %1258, %1627 : vector<8x8xf32>
    %1629 = arith.addf %1625, %1628 : vector<8x8xf32>
    %c7_790 = arith.constant 7 : index
    %c6_791 = arith.constant 6 : index
    %1630 = memref.load %arg10[%c7_790, %c6_791] : memref<9x8xf32, #tpu.memory_space<smem>>
    %1631 = vector.broadcast %1630 : f32 to vector<8x8xf32>
    %1632 = arith.mulf %1259, %1631 : vector<8x8xf32>
    %1633 = arith.addf %1629, %1632 : vector<8x8xf32>
    %c8_792 = arith.constant 8 : index
    %c6_793 = arith.constant 6 : index
    %1634 = memref.load %arg10[%c8_792, %c6_793] : memref<9x8xf32, #tpu.memory_space<smem>>
    %1635 = vector.broadcast %1634 : f32 to vector<8x8xf32>
    %1636 = arith.mulf %1260, %1635 : vector<8x8xf32>
    %1637 = arith.addf %1633, %1636 : vector<8x8xf32>
    %c0_794 = arith.constant 0 : index
    %c6_795 = arith.constant 6 : index
    %1638 = memref.load %arg11[%c0_794, %c6_795] : memref<1x8xf32, #tpu.memory_space<smem>>
    %1639 = vector.broadcast %1638 : f32 to vector<8x8xf32>
    %1640 = arith.addf %1637, %1639 : vector<8x8xf32>
    %cst_796 = arith.constant 0.000000e+00 : f32
    %1641 = vector.broadcast %cst_796 : f32 to vector<8x8xf32>
    %1642 = arith.maximumf %1640, %1641 : vector<8x8xf32>
    %cst_797 = arith.constant dense<0.000000e+00> : vector<8xf32>
    %1643 = vector.multi_reduction <add>, %1642, %cst_797 [1] : vector<8x8xf32> to vector<8xf32>
    %1644 = vector.shape_cast %1643 : vector<8xf32> to vector<8x1xf32>
    %cst_798 = arith.constant dense<0.000000e+00> : vector<1xf32>
    %1645 = vector.multi_reduction <add>, %1644, %cst_798 [0] : vector<8x1xf32> to vector<1xf32>
    %1646 = vector.shape_cast %1645 : vector<1xf32> to vector<1x1xf32>
    %cst_799 = arith.constant 1.562500e-02 : f32
    %1647 = vector.broadcast %cst_799 : f32 to vector<1x1xf32>
    %1648 = arith.mulf %1646, %1647 : vector<1x1xf32>
    %1649 = vector.extract_strided_slice %2 {offsets = [6, 0], sizes = [1, 3], strides = [1, 1]} : vector<8x3xf32> to vector<1x3xf32>
    %1650 = vector.broadcast %1648 : vector<1x1xf32> to vector<1x3xf32>
    %1651 = arith.mulf %1650, %1649 : vector<1x3xf32>
    %1652 = arith.addf %1596, %1651 : vector<1x3xf32>
    %c6_800 = arith.constant 6 : index
    %c0_801 = arith.constant 0 : index
    %1653 = memref.load %arg14[%c6_800, %c0_801] : memref<8x1xf32, #tpu.memory_space<smem>>
    %1654 = vector.broadcast %1653 : f32 to vector<1x1xf32>
    %1655 = arith.mulf %1648, %1654 : vector<1x1xf32>
    %1656 = arith.addf %1600, %1655 : vector<1x1xf32>
    %cst_802 = arith.constant 0.000000e+00 : f32
    %1657 = vector.broadcast %cst_802 : f32 to vector<8x8xf32>
    %c0_803 = arith.constant 0 : index
    %c7_804 = arith.constant 7 : index
    %1658 = memref.load %arg10[%c0_803, %c7_804] : memref<9x8xf32, #tpu.memory_space<smem>>
    %1659 = vector.broadcast %1658 : f32 to vector<8x8xf32>
    %1660 = arith.mulf %1252, %1659 : vector<8x8xf32>
    %1661 = arith.addf %1657, %1660 : vector<8x8xf32>
    %c1_805 = arith.constant 1 : index
    %c7_806 = arith.constant 7 : index
    %1662 = memref.load %arg10[%c1_805, %c7_806] : memref<9x8xf32, #tpu.memory_space<smem>>
    %1663 = vector.broadcast %1662 : f32 to vector<8x8xf32>
    %1664 = arith.mulf %1253, %1663 : vector<8x8xf32>
    %1665 = arith.addf %1661, %1664 : vector<8x8xf32>
    %c2_807 = arith.constant 2 : index
    %c7_808 = arith.constant 7 : index
    %1666 = memref.load %arg10[%c2_807, %c7_808] : memref<9x8xf32, #tpu.memory_space<smem>>
    %1667 = vector.broadcast %1666 : f32 to vector<8x8xf32>
    %1668 = arith.mulf %1254, %1667 : vector<8x8xf32>
    %1669 = arith.addf %1665, %1668 : vector<8x8xf32>
    %c3_809 = arith.constant 3 : index
    %c7_810 = arith.constant 7 : index
    %1670 = memref.load %arg10[%c3_809, %c7_810] : memref<9x8xf32, #tpu.memory_space<smem>>
    %1671 = vector.broadcast %1670 : f32 to vector<8x8xf32>
    %1672 = arith.mulf %1255, %1671 : vector<8x8xf32>
    %1673 = arith.addf %1669, %1672 : vector<8x8xf32>
    %c4_811 = arith.constant 4 : index
    %c7_812 = arith.constant 7 : index
    %1674 = memref.load %arg10[%c4_811, %c7_812] : memref<9x8xf32, #tpu.memory_space<smem>>
    %1675 = vector.broadcast %1674 : f32 to vector<8x8xf32>
    %1676 = arith.mulf %1256, %1675 : vector<8x8xf32>
    %1677 = arith.addf %1673, %1676 : vector<8x8xf32>
    %c5_813 = arith.constant 5 : index
    %c7_814 = arith.constant 7 : index
    %1678 = memref.load %arg10[%c5_813, %c7_814] : memref<9x8xf32, #tpu.memory_space<smem>>
    %1679 = vector.broadcast %1678 : f32 to vector<8x8xf32>
    %1680 = arith.mulf %1257, %1679 : vector<8x8xf32>
    %1681 = arith.addf %1677, %1680 : vector<8x8xf32>
    %c6_815 = arith.constant 6 : index
    %c7_816 = arith.constant 7 : index
    %1682 = memref.load %arg10[%c6_815, %c7_816] : memref<9x8xf32, #tpu.memory_space<smem>>
    %1683 = vector.broadcast %1682 : f32 to vector<8x8xf32>
    %1684 = arith.mulf %1258, %1683 : vector<8x8xf32>
    %1685 = arith.addf %1681, %1684 : vector<8x8xf32>
    %c7_817 = arith.constant 7 : index
    %c7_818 = arith.constant 7 : index
    %1686 = memref.load %arg10[%c7_817, %c7_818] : memref<9x8xf32, #tpu.memory_space<smem>>
    %1687 = vector.broadcast %1686 : f32 to vector<8x8xf32>
    %1688 = arith.mulf %1259, %1687 : vector<8x8xf32>
    %1689 = arith.addf %1685, %1688 : vector<8x8xf32>
    %c8_819 = arith.constant 8 : index
    %c7_820 = arith.constant 7 : index
    %1690 = memref.load %arg10[%c8_819, %c7_820] : memref<9x8xf32, #tpu.memory_space<smem>>
    %1691 = vector.broadcast %1690 : f32 to vector<8x8xf32>
    %1692 = arith.mulf %1260, %1691 : vector<8x8xf32>
    %1693 = arith.addf %1689, %1692 : vector<8x8xf32>
    %c0_821 = arith.constant 0 : index
    %c7_822 = arith.constant 7 : index
    %1694 = memref.load %arg11[%c0_821, %c7_822] : memref<1x8xf32, #tpu.memory_space<smem>>
    %1695 = vector.broadcast %1694 : f32 to vector<8x8xf32>
    %1696 = arith.addf %1693, %1695 : vector<8x8xf32>
    %cst_823 = arith.constant 0.000000e+00 : f32
    %1697 = vector.broadcast %cst_823 : f32 to vector<8x8xf32>
    %1698 = arith.maximumf %1696, %1697 : vector<8x8xf32>
    %cst_824 = arith.constant dense<0.000000e+00> : vector<8xf32>
    %1699 = vector.multi_reduction <add>, %1698, %cst_824 [1] : vector<8x8xf32> to vector<8xf32>
    %1700 = vector.shape_cast %1699 : vector<8xf32> to vector<8x1xf32>
    %cst_825 = arith.constant dense<0.000000e+00> : vector<1xf32>
    %1701 = vector.multi_reduction <add>, %1700, %cst_825 [0] : vector<8x1xf32> to vector<1xf32>
    %1702 = vector.shape_cast %1701 : vector<1xf32> to vector<1x1xf32>
    %cst_826 = arith.constant 1.562500e-02 : f32
    %1703 = vector.broadcast %cst_826 : f32 to vector<1x1xf32>
    %1704 = arith.mulf %1702, %1703 : vector<1x1xf32>
    %1705 = vector.extract_strided_slice %2 {offsets = [7, 0], sizes = [1, 3], strides = [1, 1]} : vector<8x3xf32> to vector<1x3xf32>
    %1706 = vector.broadcast %1704 : vector<1x1xf32> to vector<1x3xf32>
    %1707 = arith.mulf %1706, %1705 : vector<1x3xf32>
    %1708 = arith.addf %1652, %1707 : vector<1x3xf32>
    %c7_827 = arith.constant 7 : index
    %c0_828 = arith.constant 0 : index
    %1709 = memref.load %arg14[%c7_827, %c0_828] : memref<8x1xf32, #tpu.memory_space<smem>>
    %1710 = vector.broadcast %1709 : f32 to vector<1x1xf32>
    %1711 = arith.mulf %1704, %1710 : vector<1x1xf32>
    %1712 = arith.addf %1656, %1711 : vector<1x1xf32>
    %cst_829 = arith.constant 0.000000e+00 : f32
    %1713 = vector.broadcast %cst_829 : f32 to vector<1x1xf32>
    %1714 = arith.subf %1713, %1712 : vector<1x1xf32>
    %1715 = math.exp %1714 : vector<1x1xf32>
    %cst_830 = arith.constant 1.000000e+00 : f32
    %1716 = vector.broadcast %cst_830 : f32 to vector<1x1xf32>
    %1717 = arith.addf %1716, %1715 : vector<1x1xf32>
    %cst_831 = arith.constant 1.000000e+00 : f32
    %1718 = vector.broadcast %cst_831 : f32 to vector<1x1xf32>
    %1719 = arith.divf %1718, %1717 : vector<1x1xf32>
    %cst_832 = arith.constant 1.000000e+00 : f32
    %1720 = vector.broadcast %cst_832 : f32 to vector<1x1xf32>
    %1721 = arith.subf %1720, %573 : vector<1x1xf32>
    %1722 = arith.addf %1181, %1719 : vector<1x1xf32>
    %cst_833 = arith.constant 9.99999993E-9 : f32
    %1723 = vector.broadcast %cst_833 : f32 to vector<1x1xf32>
    %1724 = arith.addf %1722, %1723 : vector<1x1xf32>
    %cst_834 = arith.constant 1.000000e+00 : f32
    %1725 = vector.broadcast %cst_834 : f32 to vector<1x1xf32>
    %1726 = arith.divf %1725, %1724 : vector<1x1xf32>
    %cst_835 = arith.constant 0.000000e+00 : f32
    %1727 = vector.broadcast %cst_835 : f32 to vector<1x3xf32>
    %1728 = arith.mulf %1181, %1726 : vector<1x1xf32>
    %1729 = vector.broadcast %1728 : vector<1x1xf32> to vector<1x3xf32>
    %1730 = arith.mulf %1729, %1170 : vector<1x3xf32>
    %1731 = arith.addf %1727, %1730 : vector<1x3xf32>
    %1732 = arith.mulf %1719, %1726 : vector<1x1xf32>
    %1733 = vector.broadcast %1732 : vector<1x1xf32> to vector<1x3xf32>
    %1734 = arith.mulf %1733, %1708 : vector<1x3xf32>
    %1735 = arith.addf %1731, %1734 : vector<1x3xf32>
    %1736 = vector.broadcast %1721 : vector<1x1xf32> to vector<1x3xf32>
    %1737 = arith.mulf %1736, %518 : vector<1x3xf32>
    %cst_836 = arith.constant 1.000000e+00 : f32
    %1738 = vector.broadcast %cst_836 : f32 to vector<1x1xf32>
    %1739 = arith.subf %1738, %1721 : vector<1x1xf32>
    %1740 = vector.broadcast %1739 : vector<1x1xf32> to vector<1x3xf32>
    %1741 = arith.mulf %1740, %1735 : vector<1x3xf32>
    %1742 = arith.addf %1737, %1741 : vector<1x3xf32>
    %cst_837 = arith.constant 0.000000e+00 : f32
    %1743 = vector.broadcast %cst_837 : f32 to vector<1x110xf32>
    %1744 = tpu.concatenate %1742, %518, %1170, %1708, %1181, %1719, %1721, %573, %589, %607, %1743 in 1 : vector<1x3xf32>, vector<1x3xf32>, vector<1x3xf32>, vector<1x3xf32>, vector<1x1xf32>, vector<1x1xf32>, vector<1x1xf32>, vector<1x1xf32>, vector<1x1xf32>, vector<1x1xf32>, vector<1x110xf32> -> vector<1x128xf32>
    %c0_838 = arith.constant 0 : index
    %c0_839 = arith.constant 0 : index
    %c0_840 = arith.constant 0 : index
    %1745 = vector.load %arg16[%c0_838, %c0_839, %c0_840] : memref<1x1x128xf32, #tpu.memory_space<vmem>>, vector<1x1x128xf32>
    %1746 = vector.shape_cast %1745 : vector<1x1x128xf32> to vector<1x128xf32>
    %1747 = vector.shape_cast %1744 : vector<1x128xf32> to vector<1x1x128xf32>
    tpu.vector_store %arg16[%c0_838, %c0_839, %c0_840], %1747 {strides = array<i32>} : memref<1x1x128xf32, #tpu.memory_space<vmem>>, vector<1x1x128xf32>,
    return
  }
  func.func @transform_0(%arg0: i32) -> (i32, i32, i32, i32) {
    %c0_i32 = arith.constant 0 : i32
    %c0_i32_0 = arith.constant 0 : i32
    %c0_i32_1 = arith.constant 0 : i32
    %c0_i32_2 = arith.constant 0 : i32
    return %arg0, %c0_i32, %c0_i32_0, %c0_i32_1 : i32, i32, i32, i32
  }
  func.func @transform_1(%arg0: i32) -> (i32, i32) {
    %c0_i32 = arith.constant 0 : i32
    %c0_i32_0 = arith.constant 0 : i32
    %c0_i32_1 = arith.constant 0 : i32
    return %c0_i32, %c0_i32_0 : i32, i32
  }
  func.func @transform_2(%arg0: i32) -> (i32, i32) {
    %c0_i32 = arith.constant 0 : i32
    %c0_i32_0 = arith.constant 0 : i32
    %c0_i32_1 = arith.constant 0 : i32
    return %c0_i32, %c0_i32_0 : i32, i32
  }
  func.func @transform_3(%arg0: i32) -> (i32, i32) {
    %c0_i32 = arith.constant 0 : i32
    %c0_i32_0 = arith.constant 0 : i32
    %c0_i32_1 = arith.constant 0 : i32
    return %c0_i32, %c0_i32_0 : i32, i32
  }
  func.func @transform_4(%arg0: i32) -> (i32, i32) {
    %c0_i32 = arith.constant 0 : i32
    %c0_i32_0 = arith.constant 0 : i32
    %c0_i32_1 = arith.constant 0 : i32
    return %c0_i32, %c0_i32_0 : i32, i32
  }
  func.func @transform_5(%arg0: i32) -> (i32, i32) {
    %c0_i32 = arith.constant 0 : i32
    %c0_i32_0 = arith.constant 0 : i32
    %c0_i32_1 = arith.constant 0 : i32
    return %c0_i32, %c0_i32_0 : i32, i32
  }
  func.func @transform_6(%arg0: i32) -> (i32, i32) {
    %c0_i32 = arith.constant 0 : i32
    %c0_i32_0 = arith.constant 0 : i32
    %c0_i32_1 = arith.constant 0 : i32
    return %c0_i32, %c0_i32_0 : i32, i32
  }
  func.func @transform_7(%arg0: i32) -> (i32, i32) {
    %c0_i32 = arith.constant 0 : i32
    %c0_i32_0 = arith.constant 0 : i32
    %c0_i32_1 = arith.constant 0 : i32
    return %c0_i32, %c0_i32_0 : i32, i32
  }
  func.func @transform_8(%arg0: i32) -> (i32, i32) {
    %c0_i32 = arith.constant 0 : i32
    %c0_i32_0 = arith.constant 0 : i32
    %c0_i32_1 = arith.constant 0 : i32
    return %c0_i32, %c0_i32_0 : i32, i32
  }
  func.func @transform_9(%arg0: i32) -> (i32, i32) {
    %c0_i32 = arith.constant 0 : i32
    %c0_i32_0 = arith.constant 0 : i32
    %c0_i32_1 = arith.constant 0 : i32
    return %c0_i32, %c0_i32_0 : i32, i32
  }
  func.func @transform_10(%arg0: i32) -> (i32, i32) {
    %c0_i32 = arith.constant 0 : i32
    %c0_i32_0 = arith.constant 0 : i32
    %c0_i32_1 = arith.constant 0 : i32
    return %c0_i32, %c0_i32_0 : i32, i32
  }
  func.func @transform_11(%arg0: i32) -> (i32, i32) {
    %c0_i32 = arith.constant 0 : i32
    %c0_i32_0 = arith.constant 0 : i32
    %c0_i32_1 = arith.constant 0 : i32
    return %c0_i32, %c0_i32_0 : i32, i32
  }
  func.func @transform_12(%arg0: i32) -> (i32, i32) {
    %c0_i32 = arith.constant 0 : i32
    %c0_i32_0 = arith.constant 0 : i32
    %c0_i32_1 = arith.constant 0 : i32
    return %c0_i32, %c0_i32_0 : i32, i32
  }
  func.func @transform_13(%arg0: i32) -> (i32, i32) {
    %c0_i32 = arith.constant 0 : i32
    %c0_i32_0 = arith.constant 0 : i32
    %c0_i32_1 = arith.constant 0 : i32
    return %c0_i32, %c0_i32_0 : i32, i32
  }
  func.func @transform_14(%arg0: i32) -> (i32, i32) {
    %c0_i32 = arith.constant 0 : i32
    %c0_i32_0 = arith.constant 0 : i32
    %c0_i32_1 = arith.constant 0 : i32
    return %c0_i32, %c0_i32_0 : i32, i32
  }
  func.func @transform_15(%arg0: i32) -> (i32, i32, i32) {
    %c0_i32 = arith.constant 0 : i32
    %c0_i32_0 = arith.constant 0 : i32
    %c0_i32_1 = arith.constant 0 : i32
    return %arg0, %c0_i32, %c0_i32_0 : i32, i32, i32
  }
  func.func @transform_16(%arg0: i32) -> (i32, i32, i32) {
    %c0_i32 = arith.constant 0 : i32
    %c0_i32_0 = arith.constant 0 : i32
    %c0_i32_1 = arith.constant 0 : i32
    return %arg0, %c0_i32, %c0_i32_0 : i32, i32, i32
  }
  func.func @transform_17(%arg0: i32) -> (i32, i32, i32, i32) {
    %c0_i32 = arith.constant 0 : i32
    %c0_i32_0 = arith.constant 0 : i32
    %c0_i32_1 = arith.constant 0 : i32
    %c0_i32_2 = arith.constant 0 : i32
    return %arg0, %c0_i32, %c0_i32_0, %c0_i32_1 : i32, i32, i32, i32
  }
  func.func @transform_18(%arg0: i32) -> (i32, i32, i32, i32, i32) {
    %c0_i32 = arith.constant 0 : i32
    %c0_i32_0 = arith.constant 0 : i32
    %c0_i32_1 = arith.constant 0 : i32
    %c0_i32_2 = arith.constant 0 : i32
    %c0_i32_3 = arith.constant 0 : i32
    return %arg0, %c0_i32, %c0_i32_0, %c0_i32_1, %c0_i32_2 : i32, i32, i32, i32, i32
  }
}

</mosaic_0001>

<llo_original>
// kernel: ugpl_forward.1
$region0: #{ugpl_forward.1}
  #allocation0 [shape = 'u32[]', space=smem, size = 0x4, offset = 0x4, fixed_abs, tag = 'smem constant byte address 0x4 - core index']
  #allocation1 [shape = 'u32[144,128]{1,0:T(1,128)}', space=vmem, size = 0x12000, scoped, tag = 'internal scratch']
  #allocation2 [shape = 'f32[1,1]{1,0:T(1,128)S(6)}', space=smem, size = 0x200, scoped, tag = 'scoped memory for ugpl_forward.1']
  %s0 = inlined_call_operand.vmem [shape: f32[2,1,34,34], index: 0, kind: input, shape index: {}]
  %s1 = inlined_call_operand.vmem [shape: f32[9,8], index: 1, kind: input, shape index: {}]
  %s2 = inlined_call_operand.vmem [shape: f32[1,8], index: 2, kind: input, shape index: {}]
  %s3 = inlined_call_operand.vmem [shape: f32[8,3], index: 3, kind: input, shape index: {}]
  %s4 = inlined_call_operand.vmem [shape: f32[1,3], index: 4, kind: input, shape index: {}]
  %s5 = inlined_call_operand.vmem [shape: f32[8,2], index: 5, kind: input, shape index: {}]
  %s6 = inlined_call_operand.vmem [shape: f32[1,2], index: 6, kind: input, shape index: {}]
  %s7 = inlined_call_operand.vmem [shape: f32[4,32], index: 7, kind: input, shape index: {}]
  %s8 = inlined_call_operand.vmem [shape: f32[32,4], index: 8, kind: input, shape index: {}]
  %s9 = inlined_call_operand.vmem [shape: f32[9,8], index: 9, kind: input, shape index: {}]
  %s10 = inlined_call_operand.vmem [shape: f32[1,8], index: 10, kind: input, shape index: {}]
  %s11 = inlined_call_operand.vmem [shape: f32[8,3], index: 11, kind: input, shape index: {}]
  %s12 = inlined_call_operand.vmem [shape: f32[1,3], index: 12, kind: input, shape index: {}]
  %s13 = inlined_call_operand.vmem [shape: f32[8,1], index: 13, kind: input, shape index: {}]
  %s14 = inlined_call_operand.<no memory space> [shape: f32[1,1], index: 14, kind: input, shape index: {}]
  %s15 = inlined_call_operand.vmem [shape: f32[2,1,128], index: 15, kind: output, shape index: {0}]
  %s16 = inlined_call_operand.hbm [shape: f32[2,32,32], index: 16, kind: output, shape index: {1}]
  %s17 = inlined_call_operand.hbm [shape: f32[2,2,32,32], index: 17, kind: output, shape index: {2}]
  %s18 = inlined_call_operand.hbm [shape: f32[2,2,1,8,8], index: 18, kind: output, shape index: {3}]
  %19 = xla_tuple %s15, %s16, %s17, %s18
  %s20 = sld [smem:[#allocation0]]
  $region145: #{ugpl_forward.1} parent=0
    _
  %s22 = ssub.s32 1, %s20
  %s23 = scalar_select 0, %s22, %s20
  %24 = sst [smem:[#allocation2]] %s14
  $region1: #{ugpl_forward.1} parent=0
    #allocation3 [shape = 'u8[8192]{0}', space=smem, size = 0x2000, scoped, tag = 'input window, operand 1, single buffered']
    #allocation4 [shape = 's32[2]{0}', space=sflag, size = 0x8, scoped, tag = 'scoped memory for ugpl_forward.1']
    #allocation5 [shape = 's32[2]{0}', space=sflag, size = 0x8, scoped, tag = 'scoped memory for ugpl_forward.1']
    #allocation6 [shape = 'u8[512]{0}', space=smem, size = 0x200, scoped, tag = 'input window, operand 2, single buffered']
    #allocation7 [shape = 's32[1]{0}', space=sflag, size = 0x4, scoped, tag = 'scoped memory for ugpl_forward.1']
    #allocation8 [shape = 'u8[4096]{0}', space=smem, size = 0x1000, scoped, tag = 'input window, operand 5, single buffered']
    #allocation9 [shape = 'u8[512]{0}', space=smem, size = 0x200, scoped, tag = 'input window, operand 6, single buffered']
    #allocation10 [shape = 's32[1]{0}', space=sflag, size = 0x4, scoped, tag = 'scoped memory for ugpl_forward.1']
    #allocation11 [shape = 'u8[8192]{0}', space=smem, size = 0x2000, scoped, tag = 'input window, operand 9, single buffered']
    #allocation12 [shape = 'u8[512]{0}', space=smem, size = 0x200, scoped, tag = 'input window, operand 10, single buffered']
    #allocation13 [shape = 's32[1]{0}', space=sflag, size = 0x4, scoped, tag = 'scoped memory for ugpl_forward.1']
    #allocation14 [shape = 'u8[4096]{0}', space=smem, size = 0x1000, scoped, tag = 'input window, operand 13, single buffered']
    #allocation15 [shape = 'u8[32768]{0}', space=vmem, size = 0x8000, scoped, tag = 'output window, operand 1']
    #allocation16 [shape = 'u8[65536]{0}', space=vmem, size = 0x10000, scoped, tag = 'output window, operand 2']
    #allocation17 [shape = 's32[2]{0}', space=sflag, size = 0x8, scoped, tag = 'scoped memory for ugpl_forward.1']
    #allocation18 [shape = 'u8[16384]{0}', space=vmem, size = 0x4000, scoped, tag = 'output window, operand 3']
    %25 = vsyncpa [#allocation5], 0
    %26 = vsyncpa [#allocation7], 0
    %27 = vsyncpa [#allocation10], 0
    %28 = vsyncpa [#allocation13], 0
    %29 = vsyncpa [#allocation4], 0
    %s30 = scalar_lea.sflag [#allocation4], 1
    %31 = vsyncpa %s30, 0
    %32 = vsyncpa [#allocation17], 0
    %s33 = scalar_lea.sflag [#allocation17], 1
    %34 = vsyncpa %s33, 0
    loop: start=0, step=1, limit=4
    $region2: #{ugpl_forward.1} parent=1 // loop_pre_header
      _
    $region3: #{ugpl_forward.1} parent=1 // loop_header
      %s36 = sphi 0, %s40
      %p37 = scmp.ge.s32.totalorder %s36, 4
      %s46 = sphi 0, %s48
      %s49 = sphi 0, %s46
      %s50 = sphi 0, %s49
      %s66 = sphi 0, %s50
      %s70 = sphi 0, %s70
      %s72 = sphi 0, %s70
      %s73 = sphi 0, %s72
      %s87 = sphi 0, %s73
      %s91 = sphi 0, %s91
      %s93 = sphi 0, %s91
      %s94 = sphi 0, %s93
      %s108 = sphi 0, %s94
      %s112 = sphi 0, %s112
      %s114 = sphi 0, %s112
      %s115 = sphi 0, %s114
      %s129 = sphi 0, %s115
      %s133 = sphi 0, %s133
      %s135 = sphi 0, %s133
      %s136 = sphi 0, %s135
      %s150 = sphi 0, %s136
      %s154 = sphi 0, %s154
      %s156 = sphi 0, %s154
      %s157 = sphi 0, %s156
      %s171 = sphi 0, %s157
      %s175 = sphi 0, %s175
      %s177 = sphi 0, %s175
      %s178 = sphi 0, %s177
      %s192 = sphi 0, %s178
      %s196 = sphi 0, %s196
      %s198 = sphi 0, %s196
      %s199 = sphi 0, %s198
      %s213 = sphi 0, %s199
      %s217 = sphi 0, %s217
      %s219 = sphi 0, %s217
      %s220 = sphi 0, %s219
      %s234 = sphi 0, %s220
      %s238 = sphi 0, %s238
      %s240 = sphi 0, %s238
      %s241 = sphi 0, %s240
      %s255 = sphi 0, %s241
      %s259 = sphi 0, %s259
      %s261 = sphi 0, %s259
      %s262 = sphi 0, %s261
      %s276 = sphi 0, %s262
      %s280 = sphi 0, %s280
      %s282 = sphi 0, %s280
      %s283 = sphi 0, %s282
      %s297 = sphi 0, %s283
      %s301 = sphi 0, %s301
      %s303 = sphi 0, %s301
      %s304 = sphi 0, %s303
      %s318 = sphi 0, %s304
      %s322 = sphi 0, %s322
      %s324 = sphi 0, %s322
      %s325 = sphi 0, %s324
      %s339 = sphi 0, %s325
      %s343 = sphi 0, %s343
      %s345 = sphi 0, %s343
      %s346 = sphi 0, %s345
      %s360 = sphi 0, %s346
      %s366 = sphi 0, %s368
      %s369 = sphi 0, %s366
      %s370 = sphi 0, %s369
      %s386 = sphi 0, %s370
      %s392 = sphi 0, %s394
      %s395 = sphi 0, %s392
      %s396 = sphi 0, %s395
      %s412 = sphi 0, %s396
      %s418 = sphi 0, %s420
      %s421 = sphi 0, %s418
      %s422 = sphi 0, %s421
      %s438 = sphi 0, %s422
      %s444 = sphi 0, %s446
      %s447 = sphi 0, %s444
      %s448 = sphi 0, %s447
      %s464 = sphi 0, %s448
    $region4: #{ugpl_forward.1} parent=1 // loop_header_branch
      %39 = sbr.rel (%p37) target = $region8
    $region5: #{ugpl_forward.1} parent=1 // loop_body
      %s41 = ssub.s32 %s36, 1
      %s42 = ssub.s32 %s36, 2
      %s43 = sadd.s32 %s36, 1
      %s44 = ssub.s32 %s36, %s43
      %p45 = scmp.eq.s32.totalorder %s44, 0
      %s47 = sadd.s32 %s46, 1
      %s48 = scalar_select %p45, %s46, %s47
      %p51 = pneg %p45
      %p52 = scmp.eq.s32.totalorder %s36, 1
      %p53 = por %p51, %p52
      %p54 = scmp.ne.s32.totalorder %s46, %s49
      %p55 = scmp.eq.s32.totalorder %s36, 0
      %p56 = por %p54, %p55
      %p57 = scmp.ne.s32.totalorder %s46, %s49
      %p58 = scmp.eq.s32.totalorder %s41, 1
      %p59 = por %p57, %p58
      %p60 = scmp.ne.s32.totalorder %s49, %s50
      %p61 = scmp.eq.s32.totalorder %s41, 0
      %p62 = por %p60, %p61
      %p63 = scmp.ne.s32.totalorder %s49, %s50
      %p64 = scmp.eq.s32.totalorder %s42, 1
      %p65 = por %p63, %p64
      %p67 = scmp.ne.s32.totalorder %s50, %s66
      %p68 = scmp.eq.s32.totalorder %s42, 0
      %p69 = por %p67, %p68
      %s71 = sadd.s32 %s70, 1
      %p74 = scmp.eq.s32.totalorder %s36, 1
      %p75 = scmp.ne.s32.totalorder %s70, %s72
      %p76 = scmp.eq.s32.totalorder %s36, 0
      %p77 = por %p75, %p76
      %p78 = scmp.ne.s32.totalorder %s70, %s72
      %p79 = scmp.eq.s32.totalorder %s41, 1
      %p80 = por %p78, %p79
      %p81 = scmp.ne.s32.totalorder %s72, %s73
      %p82 = scmp.eq.s32.totalorder %s41, 0
      %p83 = por %p81, %p82
      %p84 = scmp.ne.s32.totalorder %s72, %s73
      %p85 = scmp.eq.s32.totalorder %s42, 1
      %p86 = por %p84, %p85
      %p88 = scmp.ne.s32.totalorder %s73, %s87
      %p89 = scmp.eq.s32.totalorder %s42, 0
      %p90 = por %p88, %p89
      %s92 = sadd.s32 %s91, 1
      %p95 = scmp.eq.s32.totalorder %s36, 1
      %p96 = scmp.ne.s32.totalorder %s91, %s93
      %p97 = scmp.eq.s32.totalorder %s36, 0
      %p98 = por %p96, %p97
      %p99 = scmp.ne.s32.totalorder %s91, %s93
      %p100 = scmp.eq.s32.totalorder %s41, 1
      %p101 = por %p99, %p100
      %p102 = scmp.ne.s32.totalorder %s93, %s94
      %p103 = scmp.eq.s32.totalorder %s41, 0
      %p104 = por %p102, %p103
      %p105 = scmp.ne.s32.totalorder %s93, %s94
      %p106 = scmp.eq.s32.totalorder %s42, 1
      %p107 = por %p105, %p106
      %p109 = scmp.ne.s32.totalorder %s94, %s108
      %p110 = scmp.eq.s32.totalorder %s42, 0
      %p111 = por %p109, %p110
      %s113 = sadd.s32 %s112, 1
      %p116 = scmp.eq.s32.totalorder %s36, 1
      %p117 = scmp.ne.s32.totalorder %s112, %s114
      %p118 = scmp.eq.s32.totalorder %s36, 0
      %p119 = por %p117, %p118
      %p120 = scmp.ne.s32.totalorder %s112, %s114
      %p121 = scmp.eq.s32.totalorder %s41, 1
      %p122 = por %p120, %p121
      %p123 = scmp.ne.s32.totalorder %s114, %s115
      %p124 = scmp.eq.s32.totalorder %s41, 0
      %p125 = por %p123, %p124
      %p126 = scmp.ne.s32.totalorder %s114, %s115
      %p127 = scmp.eq.s32.totalorder %s42, 1
      %p128 = por %p126, %p127
      %p130 = scmp.ne.s32.totalorder %s115, %s129
      %p131 = scmp.eq.s32.totalorder %s42, 0
      %p132 = por %p130, %p131
      %s134 = sadd.s32 %s133, 1
      %p137 = scmp.eq.s32.totalorder %s36, 1
      %p138 = scmp.ne.s32.totalorder %s133, %s135
      %p139 = scmp.eq.s32.totalorder %s36, 0
      %p140 = por %p138, %p139
      %p141 = scmp.ne.s32.totalorder %s133, %s135
      %p142 = scmp.eq.s32.totalorder %s41, 1
      %p143 = por %p141, %p142
      %p144 = scmp.ne.s32.totalorder %s135, %s136
      %p145 = scmp.eq.s32.totalorder %s41, 0
      %p146 = por %p144, %p145
      %p147 = scmp.ne.s32.totalorder %s135, %s136
      %p148 = scmp.eq.s32.totalorder %s42, 1
      %p149 = por %p147, %p148
      %p151 = scmp.ne.s32.totalorder %s136, %s150
      %p152 = scmp.eq.s32.totalorder %s42, 0
      %p153 = por %p151, %p152
      %s155 = sadd.s32 %s154, 1
      %p158 = scmp.eq.s32.totalorder %s36, 1
      %p159 = scmp.ne.s32.totalorder %s154, %s156
      %p160 = scmp.eq.s32.totalorder %s36, 0
      %p161 = por %p159, %p160
      %p162 = scmp.ne.s32.totalorder %s154, %s156
      %p163 = scmp.eq.s32.totalorder %s41, 1
      %p164 = por %p162, %p163
      %p165 = scmp.ne.s32.totalorder %s156, %s157
      %p166 = scmp.eq.s32.totalorder %s41, 0
      %p167 = por %p165, %p166
      %p168 = scmp.ne.s32.totalorder %s156, %s157
      %p169 = scmp.eq.s32.totalorder %s42, 1
      %p170 = por %p168, %p169
      %p172 = scmp.ne.s32.totalorder %s157, %s171
      %p173 = scmp.eq.s32.totalorder %s42, 0
      %p174 = por %p172, %p173
      %s176 = sadd.s32 %s175, 1
      %p179 = scmp.eq.s32.totalorder %s36, 1
      %p180 = scmp.ne.s32.totalorder %s175, %s177
      %p181 = scmp.eq.s32.totalorder %s36, 0
      %p182 = por %p180, %p181
      %p183 = scmp.ne.s32.totalorder %s175, %s177
      %p184 = scmp.eq.s32.totalorder %s41, 1
      %p185 = por %p183, %p184
      %p186 = scmp.ne.s32.totalorder %s177, %s178
      %p187 = scmp.eq.s32.totalorder %s41, 0
      %p188 = por %p186, %p187
      %p189 = scmp.ne.s32.totalorder %s177, %s178
      %p190 = scmp.eq.s32.totalorder %s42, 1
      %p191 = por %p189, %p190
      %p193 = scmp.ne.s32.totalorder %s178, %s192
      %p194 = scmp.eq.s32.totalorder %s42, 0
      %p195 = por %p193, %p194
      %s197 = sadd.s32 %s196, 1
      %p200 = scmp.eq.s32.totalorder %s36, 1
      %p201 = scmp.ne.s32.totalorder %s196, %s198
      %p202 = scmp.eq.s32.totalorder %s36, 0
      %p203 = por %p201, %p202
      %p204 = scmp.ne.s32.totalorder %s196, %s198
      %p205 = scmp.eq.s32.totalorder %s41, 1
      %p206 = por %p204, %p205
      %p207 = scmp.ne.s32.totalorder %s198, %s199
      %p208 = scmp.eq.s32.totalorder %s41, 0
      %p209 = por %p207, %p208
      %p210 = scmp.ne.s32.totalorder %s198, %s199
      %p211 = scmp.eq.s32.totalorder %s42, 1
      %p212 = por %p210, %p211
      %p214 = scmp.ne.s32.totalorder %s199, %s213
      %p215 = scmp.eq.s32.totalorder %s42, 0
      %p216 = por %p214, %p215
      %s218 = sadd.s32 %s217, 1
      %p221 = scmp.eq.s32.totalorder %s36, 1
      %p222 = scmp.ne.s32.totalorder %s217, %s219
      %p223 = scmp.eq.s32.totalorder %s36, 0
      %p224 = por %p222, %p223
      %p225 = scmp.ne.s32.totalorder %s217, %s219
      %p226 = scmp.eq.s32.totalorder %s41, 1
      %p227 = por %p225, %p226
      %p228 = scmp.ne.s32.totalorder %s219, %s220
      %p229 = scmp.eq.s32.totalorder %s41, 0
      %p230 = por %p228, %p229
      %p231 = scmp.ne.s32.totalorder %s219, %s220
      %p232 = scmp.eq.s32.totalorder %s42, 1
      %p233 = por %p231, %p232
      %p235 = scmp.ne.s32.totalorder %s220, %s234
      %p236 = scmp.eq.s32.totalorder %s42, 0
      %p237 = por %p235, %p236
      %s239 = sadd.s32 %s238, 1
      %p242 = scmp.eq.s32.totalorder %s36, 1
      %p243 = scmp.ne.s32.totalorder %s238, %s240
      %p244 = scmp.eq.s32.totalorder %s36, 0
      %p245 = por %p243, %p244
      %p246 = scmp.ne.s32.totalorder %s238, %s240
      %p247 = scmp.eq.s32.totalorder %s41, 1
      %p248 = por %p246, %p247
      %p249 = scmp.ne.s32.totalorder %s240, %s241
      %p250 = scmp.eq.s32.totalorder %s41, 0
      %p251 = por %p249, %p250
      %p252 = scmp.ne.s32.totalorder %s240, %s241
      %p253 = scmp.eq.s32.totalorder %s42, 1
      %p254 = por %p252, %p253
      %p256 = scmp.ne.s32.totalorder %s241, %s255
      %p257 = scmp.eq.s32.totalorder %s42, 0
      %p258 = por %p256, %p257
      %s260 = sadd.s32 %s259, 1
      %p263 = scmp.eq.s32.totalorder %s36, 1
      %p264 = scmp.ne.s32.totalorder %s259, %s261
      %p265 = scmp.eq.s32.totalorder %s36, 0
      %p266 = por %p264, %p265
      %p267 = scmp.ne.s32.totalorder %s259, %s261
      %p268 = scmp.eq.s32.totalorder %s41, 1
      %p269 = por %p267, %p268
      %p270 = scmp.ne.s32.totalorder %s261, %s262
      %p271 = scmp.eq.s32.totalorder %s41, 0
      %p272 = por %p270, %p271
      %p273 = scmp.ne.s32.totalorder %s261, %s262
      %p274 = scmp.eq.s32.totalorder %s42, 1
      %p275 = por %p273, %p274
      %p277 = scmp.ne.s32.totalorder %s262, %s276
      %p278 = scmp.eq.s32.totalorder %s42, 0
      %p279 = por %p277, %p278
      %s281 = sadd.s32 %s280, 1
      %p284 = scmp.eq.s32.totalorder %s36, 1
      %p285 = scmp.ne.s32.totalorder %s280, %s282
      %p286 = scmp.eq.s32.totalorder %s36, 0
      %p287 = por %p285, %p286
      %p288 = scmp.ne.s32.totalorder %s280, %s282
      %p289 = scmp.eq.s32.totalorder %s41, 1
      %p290 = por %p288, %p289
      %p291 = scmp.ne.s32.totalorder %s282, %s283
      %p292 = scmp.eq.s32.totalorder %s41, 0
      %p293 = por %p291, %p292
      %p294 = scmp.ne.s32.totalorder %s282, %s283
      %p295 = scmp.eq.s32.totalorder %s42, 1
      %p296 = por %p294, %p295
      %p298 = scmp.ne.s32.totalorder %s283, %s297
      %p299 = scmp.eq.s32.totalorder %s42, 0
      %p300 = por %p298, %p299
      %s302 = sadd.s32 %s301, 1
      %p305 = scmp.eq.s32.totalorder %s36, 1
      %p306 = scmp.ne.s32.totalorder %s301, %s303
      %p307 = scmp.eq.s32.totalorder %s36, 0
      %p308 = por %p306, %p307
      %p309 = scmp.ne.s32.totalorder %s301, %s303
      %p310 = scmp.eq.s32.totalorder %s41, 1
      %p311 = por %p309, %p310
      %p312 = scmp.ne.s32.totalorder %s303, %s304
      %p313 = scmp.eq.s32.totalorder %s41, 0
      %p314 = por %p312, %p313
      %p315 = scmp.ne.s32.totalorder %s303, %s304
      %p316 = scmp.eq.s32.totalorder %s42, 1
      %p317 = por %p315, %p316
      %p319 = scmp.ne.s32.totalorder %s304, %s318
      %p320 = scmp.eq.s32.totalorder %s42, 0
      %p321 = por %p319, %p320
      %s323 = sadd.s32 %s322, 1
      %p326 = scmp.eq.s32.totalorder %s36, 1
      %p327 = scmp.ne.s32.totalorder %s322, %s324
      %p328 = scmp.eq.s32.totalorder %s36, 0
      %p329 = por %p327, %p328
      %p330 = scmp.ne.s32.totalorder %s322, %s324
      %p331 = scmp.eq.s32.totalorder %s41, 1
      %p332 = por %p330, %p331
      %p333 = scmp.ne.s32.totalorder %s324, %s325
      %p334 = scmp.eq.s32.totalorder %s41, 0
      %p335 = por %p333, %p334
      %p336 = scmp.ne.s32.totalorder %s324, %s325
      %p337 = scmp.eq.s32.totalorder %s42, 1
      %p338 = por %p336, %p337
      %p340 = scmp.ne.s32.totalorder %s325, %s339
      %p341 = scmp.eq.s32.totalorder %s42, 0
      %p342 = por %p340, %p341
      %s344 = sadd.s32 %s343, 1
      %p347 = scmp.eq.s32.totalorder %s36, 1
      %p348 = scmp.ne.s32.totalorder %s343, %s345
      %p349 = scmp.eq.s32.totalorder %s36, 0
      %p350 = por %p348, %p349
      %p351 = scmp.ne.s32.totalorder %s343, %s345
      %p352 = scmp.eq.s32.totalorder %s41, 1
      %p353 = por %p351, %p352
      %p354 = scmp.ne.s32.totalorder %s345, %s346
      %p355 = scmp.eq.s32.totalorder %s41, 0
      %p356 = por %p354, %p355
      %p357 = scmp.ne.s32.totalorder %s345, %s346
      %p358 = scmp.eq.s32.totalorder %s42, 1
      %p359 = por %p357, %p358
      %p361 = scmp.ne.s32.totalorder %s346, %s360
      %p362 = scmp.eq.s32.totalorder %s42, 0
      %p363 = por %p361, %p362
      %s364 = ssub.s32 %s36, %s43
      %p365 = scmp.eq.s32.totalorder %s364, 0
      %s367 = sadd.s32 %s366, 1
      %s368 = scalar_select %p365, %s366, %s367
      %p371 = pneg %p365
      %p372 = scmp.eq.s32.totalorder %s36, 1
      %p373 = por %p371, %p372
      %p374 = scmp.ne.s32.totalorder %s366, %s369
      %p375 = scmp.eq.s32.totalorder %s36, 0
      %p376 = por %p374, %p375
      %p377 = scmp.ne.s32.totalorder %s366, %s369
      %p378 = scmp.eq.s32.totalorder %s41, 1
      %p379 = por %p377, %p378
      %p380 = scmp.ne.s32.totalorder %s369, %s370
      %p381 = scmp.eq.s32.totalorder %s41, 0
      %p382 = por %p380, %p381
      %p383 = scmp.ne.s32.totalorder %s369, %s370
      %p384 = scmp.eq.s32.totalorder %s42, 1
      %p385 = por %p383, %p384
      %p387 = scmp.ne.s32.totalorder %s370, %s386
      %p388 = scmp.eq.s32.totalorder %s42, 0
      %p389 = por %p387, %p388
      %s390 = ssub.s32 %s36, %s43
      %p391 = scmp.eq.s32.totalorder %s390, 0
      %s393 = sadd.s32 %s392, 1
      %s394 = scalar_select %p391, %s392, %s393
      %p397 = pneg %p391
      %p398 = scmp.eq.s32.totalorder %s36, 1
      %p399 = por %p397, %p398
      %p400 = scmp.ne.s32.totalorder %s392, %s395
      %p401 = scmp.eq.s32.totalorder %s36, 0
      %p402 = por %p400, %p401
      %p403 = scmp.ne.s32.totalorder %s392, %s395
      %p404 = scmp.eq.s32.totalorder %s41, 1
      %p405 = por %p403, %p404
      %p406 = scmp.ne.s32.totalorder %s395, %s396
      %p407 = scmp.eq.s32.totalorder %s41, 0
      %p408 = por %p406, %p407
      %p409 = scmp.ne.s32.totalorder %s395, %s396
      %p410 = scmp.eq.s32.totalorder %s42, 1
      %p411 = por %p409, %p410
      %p413 = scmp.ne.s32.totalorder %s396, %s412
      %p414 = scmp.eq.s32.totalorder %s42, 0
      %p415 = por %p413, %p414
      %s416 = ssub.s32 %s36, %s43
      %p417 = scmp.eq.s32.totalorder %s416, 0
      %s419 = sadd.s32 %s418, 1
      %s420 = scalar_select %p417, %s418, %s419
      %p423 = pneg %p417
      %p424 = scmp.eq.s32.totalorder %s36, 1
      %p425 = por %p423, %p424
      %p426 = scmp.ne.s32.totalorder %s418, %s421
      %p427 = scmp.eq.s32.totalorder %s36, 0
      %p428 = por %p426, %p427
      %p429 = scmp.ne.s32.totalorder %s418, %s421
      %p430 = scmp.eq.s32.totalorder %s41, 1
      %p431 = por %p429, %p430
      %p432 = scmp.ne.s32.totalorder %s421, %s422
      %p433 = scmp.eq.s32.totalorder %s41, 0
      %p434 = por %p432, %p433
      %p435 = scmp.ne.s32.totalorder %s421, %s422
      %p436 = scmp.eq.s32.totalorder %s42, 1
      %p437 = por %p435, %p436
      %p439 = scmp.ne.s32.totalorder %s422, %s438
      %p440 = scmp.eq.s32.totalorder %s42, 0
      %p441 = por %p439, %p440
      %s442 = ssub.s32 %s36, %s43
      %p443 = scmp.eq.s32.totalorder %s442, 0
      %s445 = sadd.s32 %s444, 1
      %s446 = scalar_select %p443, %s444, %s445
      %p449 = pneg %p443
      %p450 = scmp.eq.s32.totalorder %s36, 1
      %p451 = por %p449, %p450
      %p452 = scmp.ne.s32.totalorder %s444, %s447
      %p453 = scmp.eq.s32.totalorder %s36, 0
      %p454 = por %p452, %p453
      %p455 = scmp.ne.s32.totalorder %s444, %s447
      %p456 = scmp.eq.s32.totalorder %s41, 1
      %p457 = por %p455, %p456
      %p458 = scmp.ne.s32.totalorder %s447, %s448
      %p459 = scmp.eq.s32.totalorder %s41, 0
      %p460 = por %p458, %p459
      %p461 = scmp.ne.s32.totalorder %s447, %s448
      %p462 = scmp.eq.s32.totalorder %s42, 1
      %p463 = por %p461, %p462
      %p465 = scmp.ne.s32.totalorder %s448, %s464
      %p466 = scmp.eq.s32.totalorder %s42, 0
      %p467 = por %p465, %p466
      %p468 = scmp.le.s32.totalorder 1, %s36
      %p469 = scmp.lt.s32.totalorder %s36, 3
      %p470 = pnand %p468, %p469
      %p471 = pneg %p470
      // Predicated region
      $region9: #{ugpl_forward.1} parent=5 // pred_check
        _
      $region10: #{ugpl_forward.1} parent=5 // pred_check_branch
        %473 = sbr.rel (%p470) target = $region12
      $region11: #{ugpl_forward.1} parent=5 // pred_region
        %s474 = ssub.s32 %s36, 1
        // Predicated region
        $region13: #{ugpl_forward.1} parent=11 // pred_check
          %p475 = pneg %p83
        $region14: #{ugpl_forward.1} parent=11 // pred_check_branch
          %477 = sbr.rel (%p475) target = $region16
        $region15: #{ugpl_forward.1} parent=11 // pred_region
          %s479 = ssub.s32 256, 256
          %480 = vsyncadd [#allocation5], %s479
          %s481 = sshll.u32 %s1, 4
          %s482 = int_to_ptr.vmem [resolvable:$true] %s481
          %487 = dma.vmem_to_smem %s482, 256, [#allocation3], [#allocation5], 128, 128, 8
        $region16: #{ugpl_forward.1} parent=11 // pred_fallthru
          _
        // Predicated region
        $region17: #{ugpl_forward.1} parent=11 // pred_check
          %p488 = pneg %p104
        $region18: #{ugpl_forward.1} parent=11 // pred_check_branch
          %490 = sbr.rel (%p488) target = $region20
        $region19: #{ugpl_forward.1} parent=11 // pred_region
          %s492 = ssub.s32 16, 16
          %493 = vsyncadd [#allocation7], %s492
          %s495 = sshll.u32 %s2, 4
          %s496 = int_to_ptr.vmem [resolvable:$true] %s495
          %498 = dma.vmem_to_smem %s496, 16, [#allocation6], [#allocation7]
        $region20: #{ugpl_forward.1} parent=11 // pred_fallthru
          _
        // Predicated region
        $region21: #{ugpl_forward.1} parent=11 // pred_check
          %p499 = pneg %p125
        $region22: #{ugpl_forward.1} parent=11 // pred_check_branch
          %501 = sbr.rel (%p499) target = $region24
        $region23: #{ugpl_forward.1} parent=11 // pred_region
          _
        $region24: #{ugpl_forward.1} parent=11 // pred_fallthru
          _
        // Predicated region
        $region25: #{ugpl_forward.1} parent=11 // pred_check
          %p502 = pneg %p146
        $region26: #{ugpl_forward.1} parent=11 // pred_check_branch
          %504 = sbr.rel (%p502) target = $region28
        $region27: #{ugpl_forward.1} parent=11 // pred_region
          _
        $region28: #{ugpl_forward.1} parent=11 // pred_fallthru
          _
        // Predicated region
        $region29: #{ugpl_forward.1} parent=11 // pred_check
          %p505 = pneg %p167
        $region30: #{ugpl_forward.1} parent=11 // pred_check_branch
          %507 = sbr.rel (%p505) target = $region32
        $region31: #{ugpl_forward.1} parent=11 // pred_region
          %s509 = ssub.s32 128, 128
          %510 = vsyncadd [#allocation7], %s509
          %s512 = sshll.u32 %s5, 4
          %s513 = int_to_ptr.vmem [resolvable:$true] %s512
          %515 = dma.vmem_to_smem %s513, 128, [#allocation8], [#allocation7]
        $region32: #{ugpl_forward.1} parent=11 // pred_fallthru
          _
        // Predicated region
        $region33: #{ugpl_forward.1} parent=11 // pred_check
          %p516 = pneg %p188
        $region34: #{ugpl_forward.1} parent=11 // pred_check_branch
          %518 = sbr.rel (%p516) target = $region36
        $region35: #{ugpl_forward.1} parent=11 // pred_region
          %s520 = ssub.s32 16, 16
          %521 = vsyncadd [#allocation10], %s520
          %s523 = sshll.u32 %s6, 4
          %s524 = int_to_ptr.vmem [resolvable:$true] %s523
          %526 = dma.vmem_to_smem %s524, 16, [#allocation9], [#allocation10]
        $region36: #{ugpl_forward.1} parent=11 // pred_fallthru
          _
        // Predicated region
        $region37: #{ugpl_forward.1} parent=11 // pred_check
          %p527 = pneg %p209
        $region38: #{ugpl_forward.1} parent=11 // pred_check_branch
          %529 = sbr.rel (%p527) target = $region40
        $region39: #{ugpl_forward.1} parent=11 // pred_region
          _
        $region40: #{ugpl_forward.1} parent=11 // pred_fallthru
          _
        // Predicated region
        $region41: #{ugpl_forward.1} parent=11 // pred_check
          %p530 = pneg %p230
        $region42: #{ugpl_forward.1} parent=11 // pred_check_branch
          %532 = sbr.rel (%p530) target = $region44
        $region43: #{ugpl_forward.1} parent=11 // pred_region
          _
        $region44: #{ugpl_forward.1} parent=11 // pred_fallthru
          _
        // Predicated region
        $region45: #{ugpl_forward.1} parent=11 // pred_check
          %p533 = pneg %p251
        $region46: #{ugpl_forward.1} parent=11 // pred_check_branch
          %535 = sbr.rel (%p533) target = $region48
        $region47: #{ugpl_forward.1} parent=11 // pred_region
          %s537 = ssub.s32 256, 256
          %538 = vsyncadd [#allocation10], %s537
          %s539 = sshll.u32 %s9, 4
          %s540 = int_to_ptr.vmem [resolvable:$true] %s539
          %545 = dma.vmem_to_smem %s540, 256, [#allocation11], [#allocation10], 128, 128, 8
        $region48: #{ugpl_forward.1} parent=11 // pred_fallthru
          _
        // Predicated region
        $region49: #{ugpl_forward.1} parent=11 // pred_check
          %p546 = pneg %p272
        $region50: #{ugpl_forward.1} parent=11 // pred_check_branch
          %548 = sbr.rel (%p546) target = $region52
        $region51: #{ugpl_forward.1} parent=11 // pred_region
          %s550 = ssub.s32 16, 16
          %551 = vsyncadd [#allocation13], %s550
          %s553 = sshll.u32 %s10, 4
          %s554 = int_to_ptr.vmem [resolvable:$true] %s553
          %556 = dma.vmem_to_smem %s554, 16, [#allocation12], [#allocation13]
        $region52: #{ugpl_forward.1} parent=11 // pred_fallthru
          _
        // Predicated region
        $region53: #{ugpl_forward.1} parent=11 // pred_check
          %p557 = pneg %p293
        $region54: #{ugpl_forward.1} parent=11 // pred_check_branch
          %559 = sbr.rel (%p557) target = $region56
        $region55: #{ugpl_forward.1} parent=11 // pred_region
          _
        $region56: #{ugpl_forward.1} parent=11 // pred_fallthru
          _
        // Predicated region
        $region57: #{ugpl_forward.1} parent=11 // pred_check
          %p560 = pneg %p314
        $region58: #{ugpl_forward.1} parent=11 // pred_check_branch
          %562 = sbr.rel (%p560) target = $region60
        $region59: #{ugpl_forward.1} parent=11 // pred_region
          _
        $region60: #{ugpl_forward.1} parent=11 // pred_fallthru
          _
        // Predicated region
        $region61: #{ugpl_forward.1} parent=11 // pred_check
          %p563 = pneg %p335
        $region62: #{ugpl_forward.1} parent=11 // pred_check_branch
          %565 = sbr.rel (%p563) target = $region64
        $region63: #{ugpl_forward.1} parent=11 // pred_region
          %s567 = ssub.s32 128, 128
          %568 = vsyncadd [#allocation13], %s567
          %s570 = sshll.u32 %s13, 4
          %s571 = int_to_ptr.vmem [resolvable:$true] %s570
          %573 = dma.vmem_to_smem %s571, 128, [#allocation14], [#allocation13]
        $region64: #{ugpl_forward.1} parent=11 // pred_fallthru
          _
        // Predicated region
        $region65: #{ugpl_forward.1} parent=11 // pred_check
          %p574 = pneg %p356
        $region66: #{ugpl_forward.1} parent=11 // pred_check_branch
          %576 = sbr.rel (%p574) target = $region68
        $region67: #{ugpl_forward.1} parent=11 // pred_region
          _
        $region68: #{ugpl_forward.1} parent=11 // pred_fallthru
          _
      $region12: #{ugpl_forward.1} parent=5 // pred_fallthru
        _
      %p577 = scmp.lt.s32.totalorder %s36, 2
      // Predicated region
      $region69: #{ugpl_forward.1} parent=5 // pred_check
        %p578 = pneg %p577
      $region70: #{ugpl_forward.1} parent=5 // pred_check_branch
        %580 = sbr.rel (%p578) target = $region72
      $region71: #{ugpl_forward.1} parent=5 // pred_region
        // Predicated region
        $region73: #{ugpl_forward.1} parent=71 // pred_check
          %p581 = pneg %p56
        $region74: #{ugpl_forward.1} parent=71 // pred_check_branch
          %583 = sbr.rel (%p581) target = $region76
        $region75: #{ugpl_forward.1} parent=71 // pred_region
          %p584 = scmp.lt.s32.totalorder %s36, 1
          %s585 = scalar_select %p584, %s36, 1
          %s586 = smul.addr %s585, 5
          %s587 = smul.addr %s586, 8
          %s588 = scalar_lea.vmem %s0, %s587
        $region76: #{ugpl_forward.1} parent=71 // pred_fallthru
          _
      $region72: #{ugpl_forward.1} parent=5 // pred_fallthru
        _
      %p589 = scmp.le.s32.totalorder 1, %s36
      %p590 = scmp.lt.s32.totalorder %s36, 3
      %p591 = pnand %p589, %p590
      %p592 = pneg %p591
      // Predicated region
      $region77: #{ugpl_forward.1} parent=5 // pred_check
        _
      $region78: #{ugpl_forward.1} parent=5 // pred_check_branch
        %594 = sbr.rel (%p591) target = $region80
      $region79: #{ugpl_forward.1} parent=5 // pred_region
        %s595 = ssub.s32 %s36, 1
        // Predicated region
        $region81: #{ugpl_forward.1} parent=79 // pred_check
          %p596 = pneg %p83
        $region82: #{ugpl_forward.1} parent=79 // pred_check_branch
          %598 = sbr.rel (%p596) target = $region84
        $region83: #{ugpl_forward.1} parent=79 // pred_region
          %599 = dma.done [#allocation5], 256
        $region84: #{ugpl_forward.1} parent=79 // pred_fallthru
          _
        // Predicated region
        $region85: #{ugpl_forward.1} parent=79 // pred_check
          %p600 = pneg %p104
        $region86: #{ugpl_forward.1} parent=79 // pred_check_branch
          %602 = sbr.rel (%p600) target = $region88
        $region87: #{ugpl_forward.1} parent=79 // pred_region
          %603 = dma.done [#allocation7], 16
        $region88: #{ugpl_forward.1} parent=79 // pred_fallthru
          _
        // Predicated region
        $region89: #{ugpl_forward.1} parent=79 // pred_check
          %p604 = pneg %p167
        $region90: #{ugpl_forward.1} parent=79 // pred_check_branch
          %606 = sbr.rel (%p604) target = $region92
        $region91: #{ugpl_forward.1} parent=79 // pred_region
          %607 = dma.done [#allocation7], 128
        $region92: #{ugpl_forward.1} parent=79 // pred_fallthru
          _
        // Predicated region
        $region93: #{ugpl_forward.1} parent=79 // pred_check
          %p608 = pneg %p188
        $region94: #{ugpl_forward.1} parent=79 // pred_check_branch
          %610 = sbr.rel (%p608) target = $region96
        $region95: #{ugpl_forward.1} parent=79 // pred_region
          %611 = dma.done [#allocation10], 16
        $region96: #{ugpl_forward.1} parent=79 // pred_fallthru
          _
        // Predicated region
        $region97: #{ugpl_forward.1} parent=79 // pred_check
          %p612 = pneg %p251
        $region98: #{ugpl_forward.1} parent=79 // pred_check_branch
          %614 = sbr.rel (%p612) target = $region100
        $region99: #{ugpl_forward.1} parent=79 // pred_region
          %615 = dma.done [#allocation10], 256
        $region100: #{ugpl_forward.1} parent=79 // pred_fallthru
          _
        // Predicated region
        $region101: #{ugpl_forward.1} parent=79 // pred_check
          %p616 = pneg %p272
        $region102: #{ugpl_forward.1} parent=79 // pred_check_branch
          %618 = sbr.rel (%p616) target = $region104
        $region103: #{ugpl_forward.1} parent=79 // pred_region
          %619 = dma.done [#allocation13], 16
        $region104: #{ugpl_forward.1} parent=79 // pred_fallthru
          _
        // Predicated region
        $region105: #{ugpl_forward.1} parent=79 // pred_check
          %p620 = pneg %p335
        $region106: #{ugpl_forward.1} parent=79 // pred_check_branch
          %622 = sbr.rel (%p620) target = $region108
        $region107: #{ugpl_forward.1} parent=79 // pred_region
          %623 = dma.done [#allocation13], 128
        $region108: #{ugpl_forward.1} parent=79 // pred_fallthru
          _
        %624 = sfence
        %p625 = scmp.lt.s32.totalorder %s41, 1
        %s626 = scalar_select %p625, %s41, 1
        %s627 = smul.addr %s626, 5
        %s628 = smul.addr %s627, 8
        %s629 = scalar_lea.vmem %s0, %s628
        %p630 = pneg %p62
        %p631 = pneg %p59
        %p632 = pneg %p83
        %p633 = pneg %p80
        %p634 = pneg %p104
        %p635 = pneg %p101
        %p636 = pneg %p125
        %p637 = pneg %p122
        %p638 = pneg %p146
        %p639 = pneg %p143
        %p640 = pneg %p167
        %p641 = pneg %p164
        %p642 = pneg %p188
        %p643 = pneg %p185
        %p644 = pneg %p209
        %p645 = pneg %p206
        %p646 = pneg %p230
        %p647 = pneg %p227
        %p648 = pneg %p251
        %p649 = pneg %p248
        %p650 = pneg %p272
        %p651 = pneg %p269
        %p652 = pneg %p293
        %p653 = pneg %p290
        %p654 = pneg %p314
        %p655 = pneg %p311
        %p656 = pneg %p335
        %p657 = pneg %p332
        %p658 = pneg %p356
        %p659 = pneg %p353
        %p660 = pneg %p382
        %p661 = pneg %p379
        %p662 = scmp.lt.s32.totalorder %s41, 1
        %s663 = scalar_select %p662, %s41, 1
        %s664 = scalar_lea.vmem %s15, %s663
        %p665 = pneg %p408
        %p666 = pneg %p405
        %s667 = sand.u32 %s395, 1
        %s668 = scalar_lea.sflag [#allocation4], %s667
        %s669 = sand.u32 %s395, 1
        %s670 = smul.addr %s669, 32
        %s671 = scalar_lea.vmem [#allocation15], %s670
        %p672 = pneg %p434
        %p673 = pneg %p431
        %s674 = sand.u32 %s41, 1
        %s675 = scalar_lea.sflag [#allocation17], %s674
        %s676 = sand.u32 %s421, 1
        %s677 = smul.addr %s676, 64
        %s678 = scalar_lea.vmem [#allocation16], %s677
        %p679 = pneg %p460
        %p680 = pneg %p457
        %s681 = sand.u32 %s41, 1
        %s682 = scalar_lea.sflag [#allocation17], %s681
        %s683 = sand.u32 %s447, 1
        %s684 = smul.addr %s683, 16
        %s685 = scalar_lea.vmem [#allocation18], %s684
        %p686 = scmp.lt.s32.totalorder %s41, 1
        %s687 = scalar_select %p686, %s41, 1
        %s688 = smul.addr %s687, 5
        %s689 = smul.addr %s688, 8
        %s690 = scalar_lea.vmem %s0, %s689
        %p691 = scmp.lt.s32.totalorder %s41, 1
        %s692 = scalar_select %p691, %s41, 1
        %s693 = scalar_lea.vmem %s15, %s692
        %v694 = vld [vmem:[%s3] sm:$0xff]
        %v695 = vld [vmem:[%s4] sm:$0x1]
        %v696 = vld [vmem:[%s11] sm:$0xff]
        %v697 = vld [vmem:[%s12] sm:$0x1]
        %v698 = vld [vmem:[%s7] sm:$0xf]
        %v699 = vld [vmem:[%s8] sm:$0xff]
        %v700 = vld [vmem:[%s8 + $0x8] sm:$0xff]
        %v701 = vld [vmem:[%s8 + $0x10] sm:$0xff]
        %v702 = vld [vmem:[%s8 + $0x18] sm:$0xff]
        %v703 = vlaneseq
        %v704 = vshrl.u32 %v703, 7
        %v705 = vmul.u32 %v704, 4
        %v706 = vlaneseq
        %v707 = vand.u32 %v706, 127
        %v708 = vadd.s32 %v705, %v707
        %v709 = vcvt.s32.f32 %v708
        %v710 = vadd.s32 %v704, 8
        %vm711 = vcmp.ge.s32.totalorder %v704, 1
        %vm712 = vcmp.ge.s32.totalorder %v710, 1
        %vm713 = vcmp.le.s32.totalorder %v704, 8
        %vm714 = vcmp.le.s32.totalorder %v710, 8
        %vm715 = vmand %vm711, %vm713
        %vm716 = vmand %vm712, %vm714
        %vm717 = vcmp.ge.s32.totalorder %v707, 1
        %vm718 = vcmp.le.s32.totalorder %v707, 8
        %vm719 = vmand %vm717, %vm718
        %vm720 = vmand %vm715, %vm719
        %vm721 = vmand %vm716, %vm719
        %v722 = vsel %vm720, 1, 0
        %v723 = vsel %vm721, 1, 0
        %v724 = vcvt.s32.f32 %v722
        %v725 = vcvt.s32.f32 %v723
        %v726 = vld [vmem:[%s690] sm:$0xff]
        %v727 = vld [vmem:[%s690 + $0x8] sm:$0xff]
        %v728 = vld [vmem:[%s690 + $0x10] sm:$0xff]
        %v729 = vld [vmem:[%s690 + $0x18] sm:$0xff]
        %v730 = vld [vmem:[%s690 + $0x1] sm:$0xff]
        %v731 = vld [vmem:[%s690 + $0x9] sm:$0xff]
        %v732 = vld [vmem:[%s690 + $0x11] sm:$0xff]
        %v733 = vld [vmem:[%s690 + $0x19] sm:$0xff]
        %v734 = vld [vmem:[%s690 + $0x2] sm:$0xff]
        %v735 = vld [vmem:[%s690 + $0xa] sm:$0xff]
        %v736 = vld [vmem:[%s690 + $0x12] sm:$0xff]
        %v737 = vld [vmem:[%s690 + $0x1a] sm:$0xff]
        %s738 = sld [smem:[#allocation3]]
        %v739 = vstv %s738
        %v740 = vmul.f32 %v726, %v739
        %v741 = vmul.f32 %v727, %v739
        %v742 = vmul.f32 %v728, %v739
        %v743 = vmul.f32 %v729, %v739
        %v744 = vadd.f32 %v740, 0.0
        %v745 = vadd.f32 %v741, 0.0
        %v746 = vadd.f32 %v742, 0.0
        %v747 = vadd.f32 %v743, 0.0
        %s748 = sld [smem:[#allocation3 + $0x80]]
        %v749 = vstv %s748
        %v750 = vmul.f32 %v726, %v749
        %v751 = vmul.f32 %v727, %v749
        %v752 = vmul.f32 %v728, %v749
        %v753 = vmul.f32 %v729, %v749
        %758 = vrot.lane.b32.xlu0 %v750, 127
        %v759 = vpop.permute.xlu0 %758
        %760 = vrot.lane.b32.xlu0 %v751, 127
        %v761 = vpop.permute.xlu0 %760
        %762 = vrot.lane.b32.xlu0 %v752, 127
        %v763 = vpop.permute.xlu0 %762
        %764 = vrot.lane.b32.xlu0 %v753, 127
        %v765 = vpop.permute.xlu0 %764
        %v770 = vadd.f32 %v744, %v759
        %v771 = vadd.f32 %v745, %v761
        %v772 = vadd.f32 %v746, %v763
        %v773 = vadd.f32 %v747, %v765
        %s774 = sld [smem:[#allocation3 + $0x100]]
        %v775 = vstv %s774
        %v776 = vmul.f32 %v726, %v775
        %v777 = vmul.f32 %v727, %v775
        %v778 = vmul.f32 %v728, %v775
        %v779 = vmul.f32 %v729, %v775
        %784 = vrot.lane.b32.xlu0 %v776, 126
        %v785 = vpop.permute.xlu0 %784
        %786 = vrot.lane.b32.xlu0 %v777, 126
        %v787 = vpop.permute.xlu0 %786
        %788 = vrot.lane.b32.xlu0 %v778, 126
        %v789 = vpop.permute.xlu0 %788
        %790 = vrot.lane.b32.xlu0 %v779, 126
        %v791 = vpop.permute.xlu0 %790
        %v796 = vadd.f32 %v770, %v785
        %v797 = vadd.f32 %v771, %v787
        %v798 = vadd.f32 %v772, %v789
        %v799 = vadd.f32 %v773, %v791
        %s800 = sld [smem:[#allocation3 + $0x180]]
        %v801 = vstv %s800
        %v802 = vmul.f32 %v730, %v801
        %v803 = vmul.f32 %v731, %v801
        %v804 = vmul.f32 %v732, %v801
        %v805 = vmul.f32 %v733, %v801
        %v806 = vadd.f32 %v796, %v802
        %v807 = vadd.f32 %v797, %v803
        %v808 = vadd.f32 %v798, %v804
        %v809 = vadd.f32 %v799, %v805
        %s810 = sld [smem:[#allocation3 + $0x200]]
        %v811 = vstv %s810
        %v812 = vmul.f32 %v730, %v811
        %v813 = vmul.f32 %v731, %v811
        %v814 = vmul.f32 %v732, %v811
        %v815 = vmul.f32 %v733, %v811
        %820 = vrot.lane.b32.xlu0 %v812, 127
        %v821 = vpop.permute.xlu0 %820
        %822 = vrot.lane.b32.xlu0 %v813, 127
        %v823 = vpop.permute.xlu0 %822
        %824 = vrot.lane.b32.xlu0 %v814, 127
        %v825 = vpop.permute.xlu0 %824
        %826 = vrot.lane.b32.xlu0 %v815, 127
        %v827 = vpop.permute.xlu0 %826
        %v832 = vadd.f32 %v806, %v821
        %v833 = vadd.f32 %v807, %v823
        %v834 = vadd.f32 %v808, %v825
        %v835 = vadd.f32 %v809, %v827
        %s836 = sld [smem:[#allocation3 + $0x280]]
        %v837 = vstv %s836
        %v838 = vmul.f32 %v730, %v837
        %v839 = vmul.f32 %v731, %v837
        %v840 = vmul.f32 %v732, %v837
        %v841 = vmul.f32 %v733, %v837
        %846 = vrot.lane.b32.xlu0 %v838, 126
        %v847 = vpop.permute.xlu0 %846
        %848 = vrot.lane.b32.xlu0 %v839, 126
        %v849 = vpop.permute.xlu0 %848
        %850 = vrot.lane.b32.xlu0 %v840, 126
        %v851 = vpop.permute.xlu0 %850
        %852 = vrot.lane.b32.xlu0 %v841, 126
        %v853 = vpop.permute.xlu0 %852
        %v858 = vadd.f32 %v832, %v847
        %v859 = vadd.f32 %v833, %v849
        %v860 = vadd.f32 %v834, %v851
        %v861 = vadd.f32 %v835, %v853
        %s862 = sld [smem:[#allocation3 + $0x300]]
        %v863 = vstv %s862
        %v864 = vmul.f32 %v734, %v863
        %v865 = vmul.f32 %v735, %v863
        %v866 = vmul.f32 %v736, %v863
        %v867 = vmul.f32 %v737, %v863
        %v868 = vadd.f32 %v858, %v864
        %v869 = vadd.f32 %v859, %v865
        %v870 = vadd.f32 %v860, %v866
        %v871 = vadd.f32 %v861, %v867
        %s872 = sld [smem:[#allocation3 + $0x380]]
        %v873 = vstv %s872
        %v874 = vmul.f32 %v734, %v873
        %v875 = vmul.f32 %v735, %v873
        %v876 = vmul.f32 %v736, %v873
        %v877 = vmul.f32 %v737, %v873
        %882 = vrot.lane.b32.xlu0 %v874, 127
        %v883 = vpop.permute.xlu0 %882
        %884 = vrot.lane.b32.xlu0 %v875, 127
        %v885 = vpop.permute.xlu0 %884
        %886 = vrot.lane.b32.xlu0 %v876, 127
        %v887 = vpop.permute.xlu0 %886
        %888 = vrot.lane.b32.xlu0 %v877, 127
        %v889 = vpop.permute.xlu0 %888
        %v894 = vadd.f32 %v868, %v883
        %v895 = vadd.f32 %v869, %v885
        %v896 = vadd.f32 %v870, %v887
        %v897 = vadd.f32 %v871, %v889
        %s898 = sld [smem:[#allocation3 + $0x400]]
        %v899 = vstv %s898
        %v900 = vmul.f32 %v734, %v899
        %v901 = vmul.f32 %v735, %v899
        %v902 = vmul.f32 %v736, %v899
        %v903 = vmul.f32 %v737, %v899
        %908 = vrot.lane.b32.xlu0 %v900, 126
        %v909 = vpop.permute.xlu0 %908
        %910 = vrot.lane.b32.xlu0 %v901, 126
        %v911 = vpop.permute.xlu0 %910
        %912 = vrot.lane.b32.xlu0 %v902, 126
        %v913 = vpop.permute.xlu0 %912
        %914 = vrot.lane.b32.xlu0 %v903, 126
        %v915 = vpop.permute.xlu0 %914
        %v920 = vadd.f32 %v894, %v909
        %v921 = vadd.f32 %v895, %v911
        %v922 = vadd.f32 %v896, %v913
        %v923 = vadd.f32 %v897, %v915
        %s924 = sld [smem:[#allocation6]]
        %v925 = vstv %s924
        %v926 = vadd.f32 %v920, %v925
        %v927 = vadd.f32 %v921, %v925
        %v928 = vadd.f32 %v922, %v925
        %v929 = vadd.f32 %v923, %v925
        %v930 = vmax.f32 %v926, 0.0
        %v931 = vmax.f32 %v927, 0.0
        %v932 = vmax.f32 %v928, 0.0
        %v933 = vmax.f32 %v929, 0.0
        %vm934 = vcmask 261120
        %v935 = vsel %vm934, %v930, 0.0
        %936 = vadd.xlane.f32.xlu0 %v935
        %v937 = vpop.xlane.xlu0 %936
        %v938 = vsel %vm934, %v931, 0.0
        %939 = vadd.xlane.f32.xlu0 %v938
        %v940 = vpop.xlane.xlu0 %939
        %v941 = vsel %vm934, %v932, 0.0
        %942 = vadd.xlane.f32.xlu0 %v941
        %v943 = vpop.xlane.xlu0 %942
        %v944 = vsel %vm934, %v933, 0.0
        %945 = vadd.xlane.f32.xlu0 %v944
        %v946 = vpop.xlane.xlu0 %945
        %v947 = vadd.f32 %v937, %v940
        %v948 = vadd.f32 %v947, %v943
        %v949 = vadd.f32 %v948, %v946
        %v950 = vrot.slane %v949, 4
        %v951 = vadd.f32 %v949, %v950
        %v952 = vrot.slane %v951, 2
        %v953 = vadd.f32 %v951, %v952
        %v954 = vrot.slane %v953, 1
        %v955 = vadd.f32 %v953, %v954
        %v956 = vmul.f32 %v955, 0.0009765625
        %v957 = vmul.f32 %v956, %v694
        %v958 = vadd.f32 %v695, %v957
        %s959 = sld [smem:[#allocation8]]
        %v960 = vstv %s959
        %v961 = vmul.f32 %v930, %v960
        %v962 = vmul.f32 %v931, %v960
        %v963 = vmul.f32 %v932, %v960
        %v964 = vmul.f32 %v933, %v960
        %v965 = vadd.f32 %v961, 0.0
        %v966 = vadd.f32 %v962, 0.0
        %v967 = vadd.f32 %v963, 0.0
        %v968 = vadd.f32 %v964, 0.0
        %s969 = sld [smem:[#allocation8 + $0x1]]
        %v970 = vstv %s969
        %v971 = vmul.f32 %v930, %v970
        %v972 = vmul.f32 %v931, %v970
        %v973 = vmul.f32 %v932, %v970
        %v974 = vmul.f32 %v933, %v970
        %v975 = vadd.f32 %v971, 0.0
        %v976 = vadd.f32 %v972, 0.0
        %v977 = vadd.f32 %v973, 0.0
        %v978 = vadd.f32 %v974, 0.0
        %s979 = sld [smem:[#allocation3 + $0x1]]
        %v980 = vstv %s979
        %v981 = vmul.f32 %v726, %v980
        %v982 = vmul.f32 %v727, %v980
        %v983 = vmul.f32 %v728, %v980
        %v984 = vmul.f32 %v729, %v980
        %v985 = vadd.f32 %v981, 0.0
        %v986 = vadd.f32 %v982, 0.0
        %v987 = vadd.f32 %v983, 0.0
        %v988 = vadd.f32 %v984, 0.0
        %s989 = sld [smem:[#allocation3 + $0x81]]
        %v990 = vstv %s989
        %v991 = vmul.f32 %v726, %v990
        %v992 = vmul.f32 %v727, %v990
        %v993 = vmul.f32 %v728, %v990
        %v994 = vmul.f32 %v729, %v990
        %999 = vrot.lane.b32.xlu0 %v991, 127
        %v1000 = vpop.permute.xlu0 %999
        %1001 = vrot.lane.b32.xlu0 %v992, 127
        %v1002 = vpop.permute.xlu0 %1001
        %1003 = vrot.lane.b32.xlu0 %v993, 127
        %v1004 = vpop.permute.xlu0 %1003
        %1005 = vrot.lane.b32.xlu0 %v994, 127
        %v1006 = vpop.permute.xlu0 %1005
        %v1011 = vadd.f32 %v985, %v1000
        %v1012 = vadd.f32 %v986, %v1002
        %v1013 = vadd.f32 %v987, %v1004
        %v1014 = vadd.f32 %v988, %v1006
        %s1015 = sld [smem:[#allocation3 + $0x101]]
        %v1016 = vstv %s1015
        %v1017 = vmul.f32 %v726, %v1016
        %v1018 = vmul.f32 %v727, %v1016
        %v1019 = vmul.f32 %v728, %v1016
        %v1020 = vmul.f32 %v729, %v1016
        %1025 = vrot.lane.b32.xlu0 %v1017, 126
        %v1026 = vpop.permute.xlu0 %1025
        %1027 = vrot.lane.b32.xlu0 %v1018, 126
        %v1028 = vpop.permute.xlu0 %1027
        %1029 = vrot.lane.b32.xlu0 %v1019, 126
        %v1030 = vpop.permute.xlu0 %1029
        %1031 = vrot.lane.b32.xlu0 %v1020, 126
        %v1032 = vpop.permute.xlu0 %1031
        %v1037 = vadd.f32 %v1011, %v1026
        %v1038 = vadd.f32 %v1012, %v1028
        %v1039 = vadd.f32 %v1013, %v1030
        %v1040 = vadd.f32 %v1014, %v1032
        %s1041 = sld [smem:[#allocation3 + $0x181]]
        %v1042 = vstv %s1041
        %v1043 = vmul.f32 %v730, %v1042
        %v1044 = vmul.f32 %v731, %v1042
        %v1045 = vmul.f32 %v732, %v1042
        %v1046 = vmul.f32 %v733, %v1042
        %v1047 = vadd.f32 %v1037, %v1043
        %v1048 = vadd.f32 %v1038, %v1044
        %v1049 = vadd.f32 %v1039, %v1045
        %v1050 = vadd.f32 %v1040, %v1046
        %s1051 = sld [smem:[#allocation3 + $0x201]]
        %v1052 = vstv %s1051
        %v1053 = vmul.f32 %v730, %v1052
        %v1054 = vmul.f32 %v731, %v1052
        %v1055 = vmul.f32 %v732, %v1052
        %v1056 = vmul.f32 %v733, %v1052
        %1061 = vrot.lane.b32.xlu0 %v1053, 127
        %v1062 = vpop.permute.xlu0 %1061
        %1063 = vrot.lane.b32.xlu0 %v1054, 127
        %v1064 = vpop.permute.xlu0 %1063
        %1065 = vrot.lane.b32.xlu0 %v1055, 127
        %v1066 = vpop.permute.xlu0 %1065
        %1067 = vrot.lane.b32.xlu0 %v1056, 127
        %v1068 = vpop.permute.xlu0 %1067
        %v1073 = vadd.f32 %v1047, %v1062
        %v1074 = vadd.f32 %v1048, %v1064
        %v1075 = vadd.f32 %v1049, %v1066
        %v1076 = vadd.f32 %v1050, %v1068
        %s1077 = sld [smem:[#allocation3 + $0x281]]
        %v1078 = vstv %s1077
        %v1079 = vmul.f32 %v730, %v1078
        %v1080 = vmul.f32 %v731, %v1078
        %v1081 = vmul.f32 %v732, %v1078
        %v1082 = vmul.f32 %v733, %v1078
        %1087 = vrot.lane.b32.xlu0 %v1079, 126
        %v1088 = vpop.permute.xlu0 %1087
        %1089 = vrot.lane.b32.xlu0 %v1080, 126
        %v1090 = vpop.permute.xlu0 %1089
        %1091 = vrot.lane.b32.xlu0 %v1081, 126
        %v1092 = vpop.permute.xlu0 %1091
        %1093 = vrot.lane.b32.xlu0 %v1082, 126
        %v1094 = vpop.permute.xlu0 %1093
        %v1099 = vadd.f32 %v1073, %v1088
        %v1100 = vadd.f32 %v1074, %v1090
        %v1101 = vadd.f32 %v1075, %v1092
        %v1102 = vadd.f32 %v1076, %v1094
        %s1103 = sld [smem:[#allocation3 + $0x301]]
        %v1104 = vstv %s1103
        %v1105 = vmul.f32 %v734, %v1104
        %v1106 = vmul.f32 %v735, %v1104
        %v1107 = vmul.f32 %v736, %v1104
        %v1108 = vmul.f32 %v737, %v1104
        %v1109 = vadd.f32 %v1099, %v1105
        %v1110 = vadd.f32 %v1100, %v1106
        %v1111 = vadd.f32 %v1101, %v1107
        %v1112 = vadd.f32 %v1102, %v1108
        %s1113 = sld [smem:[#allocation3 + $0x381]]
        %v1114 = vstv %s1113
        %v1115 = vmul.f32 %v734, %v1114
        %v1116 = vmul.f32 %v735, %v1114
        %v1117 = vmul.f32 %v736, %v1114
        %v1118 = vmul.f32 %v737, %v1114
        %1123 = vrot.lane.b32.xlu0 %v1115, 127
        %v1124 = vpop.permute.xlu0 %1123
        %1125 = vrot.lane.b32.xlu0 %v1116, 127
        %v1126 = vpop.permute.xlu0 %1125
        %1127 = vrot.lane.b32.xlu0 %v1117, 127
        %v1128 = vpop.permute.xlu0 %1127
        %1129 = vrot.lane.b32.xlu0 %v1118, 127
        %v1130 = vpop.permute.xlu0 %1129
        %v1135 = vadd.f32 %v1109, %v1124
        %v1136 = vadd.f32 %v1110, %v1126
        %v1137 = vadd.f32 %v1111, %v1128
        %v1138 = vadd.f32 %v1112, %v1130
        %s1139 = sld [smem:[#allocation3 + $0x401]]
        %v1140 = vstv %s1139
        %v1141 = vmul.f32 %v734, %v1140
        %v1142 = vmul.f32 %v735, %v1140
        %v1143 = vmul.f32 %v736, %v1140
        %v1144 = vmul.f32 %v737, %v1140
        %1149 = vrot.lane.b32.xlu0 %v1141, 126
        %v1150 = vpop.permute.xlu0 %1149
        %1151 = vrot.lane.b32.xlu0 %v1142, 126
        %v1152 = vpop.permute.xlu0 %1151
        %1153 = vrot.lane.b32.xlu0 %v1143, 126
        %v1154 = vpop.permute.xlu0 %1153
        %1155 = vrot.lane.b32.xlu0 %v1144, 126
        %v1156 = vpop.permute.xlu0 %1155
        %v1161 = vadd.f32 %v1135, %v1150
        %v1162 = vadd.f32 %v1136, %v1152
        %v1163 = vadd.f32 %v1137, %v1154
        %v1164 = vadd.f32 %v1138, %v1156
        %s1165 = sld [smem:[#allocation6 + $0x1]]
        %v1166 = vstv %s1165
        %v1167 = vadd.f32 %v1161, %v1166
        %v1168 = vadd.f32 %v1162, %v1166
        %v1169 = vadd.f32 %v1163, %v1166
        %v1170 = vadd.f32 %v1164, %v1166
        %v1171 = vmax.f32 %v1167, 0.0
        %v1172 = vmax.f32 %v1168, 0.0
        %v1173 = vmax.f32 %v1169, 0.0
        %v1174 = vmax.f32 %v1170, 0.0
        %v1175 = vsel %vm934, %v1171, 0.0
        %1176 = vadd.xlane.f32.xlu0 %v1175
        %v1177 = vpop.xlane.xlu0 %1176
        %v1178 = vsel %vm934, %v1172, 0.0
        %1179 = vadd.xlane.f32.xlu0 %v1178
        %v1180 = vpop.xlane.xlu0 %1179
        %v1181 = vsel %vm934, %v1173, 0.0
        %1182 = vadd.xlane.f32.xlu0 %v1181
        %v1183 = vpop.xlane.xlu0 %1182
        %v1184 = vsel %vm934, %v1174, 0.0
        %1185 = vadd.xlane.f32.xlu0 %v1184
        %v1186 = vpop.xlane.xlu0 %1185
        %v1187 = vadd.f32 %v1177, %v1180
        %v1188 = vadd.f32 %v1187, %v1183
        %v1189 = vadd.f32 %v1188, %v1186
        %v1190 = vrot.slane %v1189, 4
        %v1191 = vadd.f32 %v1189, %v1190
        %v1192 = vrot.slane %v1191, 2
        %v1193 = vadd.f32 %v1191, %v1192
        %v1194 = vrot.slane %v1193, 1
        %v1195 = vadd.f32 %v1193, %v1194
        %v1196 = vmul.f32 %v1195, 0.0009765625
        %v1197 = vmul.f32 %v1196, %v694
        %v1200 = vunpack.c.l.s4 1966171168
        %v1201 = vunpack.c.0.s8 %v1200
        %v1202 = vlaneseq
        %v1203 = vshrl.u32 %v1202, 7
        %v1204 = vsub.s32 %v1201, %v1203
        %v1205 = vrot.slane %v1197, %v1204
        %v1206 = vcombine.high %v1205, %v1205
        %v1208 = vunpack.c.l.s4 1966171168
        %v1209 = vunpack.c.0.s8 %v1208
        %v1210 = vlaneseq
        %v1211 = vshrl.u32 %v1210, 7
        %v1212 = vsub.s32 %v1209, %v1211
        %v1213 = vrot.slane %v1206, %v1212
        %v1215 = vadd.f32 %v958, %v1213
        %s1216 = sld [smem:[#allocation8 + $0x80]]
        %v1217 = vstv %s1216
        %v1218 = vmul.f32 %v1171, %v1217
        %v1219 = vmul.f32 %v1172, %v1217
        %v1220 = vmul.f32 %v1173, %v1217
        %v1221 = vmul.f32 %v1174, %v1217
        %v1222 = vadd.f32 %v965, %v1218
        %v1223 = vadd.f32 %v966, %v1219
        %v1224 = vadd.f32 %v967, %v1220
        %v1225 = vadd.f32 %v968, %v1221
        %s1226 = sld [smem:[#allocation8 + $0x81]]
        %v1227 = vstv %s1226
        %v1228 = vmul.f32 %v1171, %v1227
        %v1229 = vmul.f32 %v1172, %v1227
        %v1230 = vmul.f32 %v1173, %v1227
        %v1231 = vmul.f32 %v1174, %v1227
        %v1232 = vadd.f32 %v975, %v1228
        %v1233 = vadd.f32 %v976, %v1229
        %v1234 = vadd.f32 %v977, %v1230
        %v1235 = vadd.f32 %v978, %v1231
        %s1236 = sld [smem:[#allocation3 + $0x2]]
        %v1237 = vstv %s1236
        %v1238 = vmul.f32 %v726, %v1237
        %v1239 = vmul.f32 %v727, %v1237
        %v1240 = vmul.f32 %v728, %v1237
        %v1241 = vmul.f32 %v729, %v1237
        %v1242 = vadd.f32 %v1238, 0.0
        %v1243 = vadd.f32 %v1239, 0.0
        %v1244 = vadd.f32 %v1240, 0.0
        %v1245 = vadd.f32 %v1241, 0.0
        %s1246 = sld [smem:[#allocation3 + $0x82]]
        %v1247 = vstv %s1246
        %v1248 = vmul.f32 %v726, %v1247
        %v1249 = vmul.f32 %v727, %v1247
        %v1250 = vmul.f32 %v728, %v1247
        %v1251 = vmul.f32 %v729, %v1247
        %1256 = vrot.lane.b32.xlu0 %v1248, 127
        %v1257 = vpop.permute.xlu0 %1256
        %1258 = vrot.lane.b32.xlu0 %v1249, 127
        %v1259 = vpop.permute.xlu0 %1258
        %1260 = vrot.lane.b32.xlu0 %v1250, 127
        %v1261 = vpop.permute.xlu0 %1260
        %1262 = vrot.lane.b32.xlu0 %v1251, 127
        %v1263 = vpop.permute.xlu0 %1262
        %v1268 = vadd.f32 %v1242, %v1257
        %v1269 = vadd.f32 %v1243, %v1259
        %v1270 = vadd.f32 %v1244, %v1261
        %v1271 = vadd.f32 %v1245, %v1263
        %s1272 = sld [smem:[#allocation3 + $0x102]]
        %v1273 = vstv %s1272
        %v1274 = vmul.f32 %v726, %v1273
        %v1275 = vmul.f32 %v727, %v1273
        %v1276 = vmul.f32 %v728, %v1273
        %v1277 = vmul.f32 %v729, %v1273
        %1282 = vrot.lane.b32.xlu0 %v1274, 126
        %v1283 = vpop.permute.xlu0 %1282
        %1284 = vrot.lane.b32.xlu0 %v1275, 126
        %v1285 = vpop.permute.xlu0 %1284
        %1286 = vrot.lane.b32.xlu0 %v1276, 126
        %v1287 = vpop.permute.xlu0 %1286
        %1288 = vrot.lane.b32.xlu0 %v1277, 126
        %v1289 = vpop.permute.xlu0 %1288
        %v1294 = vadd.f32 %v1268, %v1283
        %v1295 = vadd.f32 %v1269, %v1285
        %v1296 = vadd.f32 %v1270, %v1287
        %v1297 = vadd.f32 %v1271, %v1289
        %s1298 = sld [smem:[#allocation3 + $0x182]]
        %v1299 = vstv %s1298
        %v1300 = vmul.f32 %v730, %v1299
        %v1301 = vmul.f32 %v731, %v1299
        %v1302 = vmul.f32 %v732, %v1299
        %v1303 = vmul.f32 %v733, %v1299
        %v1304 = vadd.f32 %v1294, %v1300
        %v1305 = vadd.f32 %v1295, %v1301
        %v1306 = vadd.f32 %v1296, %v1302
        %v1307 = vadd.f32 %v1297, %v1303
        %s1308 = sld [smem:[#allocation3 + $0x202]]
        %v1309 = vstv %s1308
        %v1310 = vmul.f32 %v730, %v1309
        %v1311 = vmul.f32 %v731, %v1309
        %v1312 = vmul.f32 %v732, %v1309
        %v1313 = vmul.f32 %v733, %v1309
        %1318 = vrot.lane.b32.xlu0 %v1310, 127
        %v1319 = vpop.permute.xlu0 %1318
        %1320 = vrot.lane.b32.xlu0 %v1311, 127
        %v1321 = vpop.permute.xlu0 %1320
        %1322 = vrot.lane.b32.xlu0 %v1312, 127
        %v1323 = vpop.permute.xlu0 %1322
        %1324 = vrot.lane.b32.xlu0 %v1313, 127
        %v1325 = vpop.permute.xlu0 %1324
        %v1330 = vadd.f32 %v1304, %v1319
        %v1331 = vadd.f32 %v1305, %v1321
        %v1332 = vadd.f32 %v1306, %v1323
        %v1333 = vadd.f32 %v1307, %v1325
        %s1334 = sld [smem:[#allocation3 + $0x282]]
        %v1335 = vstv %s1334
        %v1336 = vmul.f32 %v730, %v1335
        %v1337 = vmul.f32 %v731, %v1335
        %v1338 = vmul.f32 %v732, %v1335
        %v1339 = vmul.f32 %v733, %v1335
        %1344 = vrot.lane.b32.xlu0 %v1336, 126
        %v1345 = vpop.permute.xlu0 %1344
        %1346 = vrot.lane.b32.xlu0 %v1337, 126
        %v1347 = vpop.permute.xlu0 %1346
        %1348 = vrot.lane.b32.xlu0 %v1338, 126
        %v1349 = vpop.permute.xlu0 %1348
        %1350 = vrot.lane.b32.xlu0 %v1339, 126
        %v1351 = vpop.permute.xlu0 %1350
        %v1356 = vadd.f32 %v1330, %v1345
        %v1357 = vadd.f32 %v1331, %v1347
        %v1358 = vadd.f32 %v1332, %v1349
        %v1359 = vadd.f32 %v1333, %v1351
        %s1360 = sld [smem:[#allocation3 + $0x302]]
        %v1361 = vstv %s1360
        %v1362 = vmul.f32 %v734, %v1361
        %v1363 = vmul.f32 %v735, %v1361
        %v1364 = vmul.f32 %v736, %v1361
        %v1365 = vmul.f32 %v737, %v1361
        %v1366 = vadd.f32 %v1356, %v1362
        %v1367 = vadd.f32 %v1357, %v1363
        %v1368 = vadd.f32 %v1358, %v1364
        %v1369 = vadd.f32 %v1359, %v1365
        %s1370 = sld [smem:[#allocation3 + $0x382]]
        %v1371 = vstv %s1370
        %v1372 = vmul.f32 %v734, %v1371
        %v1373 = vmul.f32 %v735, %v1371
        %v1374 = vmul.f32 %v736, %v1371
        %v1375 = vmul.f32 %v737, %v1371
        %1380 = vrot.lane.b32.xlu0 %v1372, 127
        %v1381 = vpop.permute.xlu0 %1380
        %1382 = vrot.lane.b32.xlu0 %v1373, 127
        %v1383 = vpop.permute.xlu0 %1382
        %1384 = vrot.lane.b32.xlu0 %v1374, 127
        %v1385 = vpop.permute.xlu0 %1384
        %1386 = vrot.lane.b32.xlu0 %v1375, 127
        %v1387 = vpop.permute.xlu0 %1386
        %v1392 = vadd.f32 %v1366, %v1381
        %v1393 = vadd.f32 %v1367, %v1383
        %v1394 = vadd.f32 %v1368, %v1385
        %v1395 = vadd.f32 %v1369, %v1387
        %s1396 = sld [smem:[#allocation3 + $0x402]]
        %v1397 = vstv %s1396
        %v1398 = vmul.f32 %v734, %v1397
        %v1399 = vmul.f32 %v735, %v1397
        %v1400 = vmul.f32 %v736, %v1397
        %v1401 = vmul.f32 %v737, %v1397
        %1406 = vrot.lane.b32.xlu0 %v1398, 126
        %v1407 = vpop.permute.xlu0 %1406
        %1408 = vrot.lane.b32.xlu0 %v1399, 126
        %v1409 = vpop.permute.xlu0 %1408
        %1410 = vrot.lane.b32.xlu0 %v1400, 126
        %v1411 = vpop.permute.xlu0 %1410
        %1412 = vrot.lane.b32.xlu0 %v1401, 126
        %v1413 = vpop.permute.xlu0 %1412
        %v1418 = vadd.f32 %v1392, %v1407
        %v1419 = vadd.f32 %v1393, %v1409
        %v1420 = vadd.f32 %v1394, %v1411
        %v1421 = vadd.f32 %v1395, %v1413
        %s1422 = sld [smem:[#allocation6 + $0x2]]
        %v1423 = vstv %s1422
        %v1424 = vadd.f32 %v1418, %v1423
        %v1425 = vadd.f32 %v1419, %v1423
        %v1426 = vadd.f32 %v1420, %v1423
        %v1427 = vadd.f32 %v1421, %v1423
        %v1428 = vmax.f32 %v1424, 0.0
        %v1429 = vmax.f32 %v1425, 0.0
        %v1430 = vmax.f32 %v1426, 0.0
        %v1431 = vmax.f32 %v1427, 0.0
        %v1432 = vsel %vm934, %v1428, 0.0
        %1433 = vadd.xlane.f32.xlu0 %v1432
        %v1434 = vpop.xlane.xlu0 %1433
        %v1435 = vsel %vm934, %v1429, 0.0
        %1436 = vadd.xlane.f32.xlu0 %v1435
        %v1437 = vpop.xlane.xlu0 %1436
        %v1438 = vsel %vm934, %v1430, 0.0
        %1439 = vadd.xlane.f32.xlu0 %v1438
        %v1440 = vpop.xlane.xlu0 %1439
        %v1441 = vsel %vm934, %v1431, 0.0
        %1442 = vadd.xlane.f32.xlu0 %v1441
        %v1443 = vpop.xlane.xlu0 %1442
        %v1444 = vadd.f32 %v1434, %v1437
        %v1445 = vadd.f32 %v1444, %v1440
        %v1446 = vadd.f32 %v1445, %v1443
        %v1447 = vrot.slane %v1446, 4
        %v1448 = vadd.f32 %v1446, %v1447
        %v1449 = vrot.slane %v1448, 2
        %v1450 = vadd.f32 %v1448, %v1449
        %v1451 = vrot.slane %v1450, 1
        %v1452 = vadd.f32 %v1450, %v1451
        %v1453 = vmul.f32 %v1452, 0.0009765625
        %v1454 = vmul.f32 %v1453, %v694
        %v1457 = vunpack.c.l.s4 1966171168
        %v1458 = vunpack.c.0.s8 %v1457
        %v1459 = vlaneseq
        %v1460 = vshrl.u32 %v1459, 7
        %v1461 = vsub.s32 %v1458, %v1460
        %v1462 = vrot.slane %v1454, %v1461
        %v1464 = vunpack.c.l.s4 1966171168
        %v1465 = vunpack.c.0.s8 %v1464
        %v1466 = vlaneseq
        %v1467 = vshrl.u32 %v1466, 7
        %v1468 = vsub.s32 %v1465, %v1467
        %v1469 = vrot.slane %v1462, %v1468
        %v1470 = vcombine.high %v1469, %v1469
        %v1472 = vadd.f32 %v1215, %v1470
        %s1473 = sld [smem:[#allocation8 + $0x100]]
        %v1474 = vstv %s1473
        %v1475 = vmul.f32 %v1428, %v1474
        %v1476 = vmul.f32 %v1429, %v1474
        %v1477 = vmul.f32 %v1430, %v1474
        %v1478 = vmul.f32 %v1431, %v1474
        %v1479 = vadd.f32 %v1222, %v1475
        %v1480 = vadd.f32 %v1223, %v1476
        %v1481 = vadd.f32 %v1224, %v1477
        %v1482 = vadd.f32 %v1225, %v1478
        %s1483 = sld [smem:[#allocation8 + $0x101]]
        %v1484 = vstv %s1483
        %v1485 = vmul.f32 %v1428, %v1484
        %v1486 = vmul.f32 %v1429, %v1484
        %v1487 = vmul.f32 %v1430, %v1484
        %v1488 = vmul.f32 %v1431, %v1484
        %v1489 = vadd.f32 %v1232, %v1485
        %v1490 = vadd.f32 %v1233, %v1486
        %v1491 = vadd.f32 %v1234, %v1487
        %v1492 = vadd.f32 %v1235, %v1488
        %s1493 = sld [smem:[#allocation3 + $0x3]]
        %v1494 = vstv %s1493
        %v1495 = vmul.f32 %v726, %v1494
        %v1496 = vmul.f32 %v727, %v1494
        %v1497 = vmul.f32 %v728, %v1494
        %v1498 = vmul.f32 %v729, %v1494
        %v1499 = vadd.f32 %v1495, 0.0
        %v1500 = vadd.f32 %v1496, 0.0
        %v1501 = vadd.f32 %v1497, 0.0
        %v1502 = vadd.f32 %v1498, 0.0
        %s1503 = sld [smem:[#allocation3 + $0x83]]
        %v1504 = vstv %s1503
        %v1505 = vmul.f32 %v726, %v1504
        %v1506 = vmul.f32 %v727, %v1504
        %v1507 = vmul.f32 %v728, %v1504
        %v1508 = vmul.f32 %v729, %v1504
        %1513 = vrot.lane.b32.xlu0 %v1505, 127
        %v1514 = vpop.permute.xlu0 %1513
        %1515 = vrot.lane.b32.xlu0 %v1506, 127
        %v1516 = vpop.permute.xlu0 %1515
        %1517 = vrot.lane.b32.xlu0 %v1507, 127
        %v1518 = vpop.permute.xlu0 %1517
        %1519 = vrot.lane.b32.xlu0 %v1508, 127
        %v1520 = vpop.permute.xlu0 %1519
        %v1525 = vadd.f32 %v1499, %v1514
        %v1526 = vadd.f32 %v1500, %v1516
        %v1527 = vadd.f32 %v1501, %v1518
        %v1528 = vadd.f32 %v1502, %v1520
        %s1529 = sld [smem:[#allocation3 + $0x103]]
        %v1530 = vstv %s1529
        %v1531 = vmul.f32 %v726, %v1530
        %v1532 = vmul.f32 %v727, %v1530
        %v1533 = vmul.f32 %v728, %v1530
        %v1534 = vmul.f32 %v729, %v1530
        %1539 = vrot.lane.b32.xlu0 %v1531, 126
        %v1540 = vpop.permute.xlu0 %1539
        %1541 = vrot.lane.b32.xlu0 %v1532, 126
        %v1542 = vpop.permute.xlu0 %1541
        %1543 = vrot.lane.b32.xlu0 %v1533, 126
        %v1544 = vpop.permute.xlu0 %1543
        %1545 = vrot.lane.b32.xlu0 %v1534, 126
        %v1546 = vpop.permute.xlu0 %1545
        %v1551 = vadd.f32 %v1525, %v1540
        %v1552 = vadd.f32 %v1526, %v1542
        %v1553 = vadd.f32 %v1527, %v1544
        %v1554 = vadd.f32 %v1528, %v1546
        %s1555 = sld [smem:[#allocation3 + $0x183]]
        %v1556 = vstv %s1555
        %v1557 = vmul.f32 %v730, %v1556
        %v1558 = vmul.f32 %v731, %v1556
        %v1559 = vmul.f32 %v732, %v1556
        %v1560 = vmul.f32 %v733, %v1556
        %v1561 = vadd.f32 %v1551, %v1557
        %v1562 = vadd.f32 %v1552, %v1558
        %v1563 = vadd.f32 %v1553, %v1559
        %v1564 = vadd.f32 %v1554, %v1560
        %s1565 = sld [smem:[#allocation3 + $0x203]]
        %v1566 = vstv %s1565
        %v1567 = vmul.f32 %v730, %v1566
        %v1568 = vmul.f32 %v731, %v1566
        %v1569 = vmul.f32 %v732, %v1566
        %v1570 = vmul.f32 %v733, %v1566
        %1575 = vrot.lane.b32.xlu0 %v1567, 127
        %v1576 = vpop.permute.xlu0 %1575
        %1577 = vrot.lane.b32.xlu0 %v1568, 127
        %v1578 = vpop.permute.xlu0 %1577
        %1579 = vrot.lane.b32.xlu0 %v1569, 127
        %v1580 = vpop.permute.xlu0 %1579
        %1581 = vrot.lane.b32.xlu0 %v1570, 127
        %v1582 = vpop.permute.xlu0 %1581
        %v1587 = vadd.f32 %v1561, %v1576
        %v1588 = vadd.f32 %v1562, %v1578
        %v1589 = vadd.f32 %v1563, %v1580
        %v1590 = vadd.f32 %v1564, %v1582
        %s1591 = sld [smem:[#allocation3 + $0x283]]
        %v1592 = vstv %s1591
        %v1593 = vmul.f32 %v730, %v1592
        %v1594 = vmul.f32 %v731, %v1592
        %v1595 = vmul.f32 %v732, %v1592
        %v1596 = vmul.f32 %v733, %v1592
        %1601 = vrot.lane.b32.xlu0 %v1593, 126
        %v1602 = vpop.permute.xlu0 %1601
        %1603 = vrot.lane.b32.xlu0 %v1594, 126
        %v1604 = vpop.permute.xlu0 %1603
        %1605 = vrot.lane.b32.xlu0 %v1595, 126
        %v1606 = vpop.permute.xlu0 %1605
        %1607 = vrot.lane.b32.xlu0 %v1596, 126
        %v1608 = vpop.permute.xlu0 %1607
        %v1613 = vadd.f32 %v1587, %v1602
        %v1614 = vadd.f32 %v1588, %v1604
        %v1615 = vadd.f32 %v1589, %v1606
        %v1616 = vadd.f32 %v1590, %v1608
        %s1617 = sld [smem:[#allocation3 + $0x303]]
        %v1618 = vstv %s1617
        %v1619 = vmul.f32 %v734, %v1618
        %v1620 = vmul.f32 %v735, %v1618
        %v1621 = vmul.f32 %v736, %v1618
        %v1622 = vmul.f32 %v737, %v1618
        %v1623 = vadd.f32 %v1613, %v1619
        %v1624 = vadd.f32 %v1614, %v1620
        %v1625 = vadd.f32 %v1615, %v1621
        %v1626 = vadd.f32 %v1616, %v1622
        %s1627 = sld [smem:[#allocation3 + $0x383]]
        %v1628 = vstv %s1627
        %v1629 = vmul.f32 %v734, %v1628
        %v1630 = vmul.f32 %v735, %v1628
        %v1631 = vmul.f32 %v736, %v1628
        %v1632 = vmul.f32 %v737, %v1628
        %1637 = vrot.lane.b32.xlu0 %v1629, 127
        %v1638 = vpop.permute.xlu0 %1637
        %1639 = vrot.lane.b32.xlu0 %v1630, 127
        %v1640 = vpop.permute.xlu0 %1639
        %1641 = vrot.lane.b32.xlu0 %v1631, 127
        %v1642 = vpop.permute.xlu0 %1641
        %1643 = vrot.lane.b32.xlu0 %v1632, 127
        %v1644 = vpop.permute.xlu0 %1643
        %v1649 = vadd.f32 %v1623, %v1638
        %v1650 = vadd.f32 %v1624, %v1640
        %v1651 = vadd.f32 %v1625, %v1642
        %v1652 = vadd.f32 %v1626, %v1644
        %s1653 = sld [smem:[#allocation3 + $0x403]]
        %v1654 = vstv %s1653
        %v1655 = vmul.f32 %v734, %v1654
        %v1656 = vmul.f32 %v735, %v1654
        %v1657 = vmul.f32 %v736, %v1654
        %v1658 = vmul.f32 %v737, %v1654
        %1663 = vrot.lane.b32.xlu0 %v1655, 126
        %v1664 = vpop.permute.xlu0 %1663
        %1665 = vrot.lane.b32.xlu0 %v1656, 126
        %v1666 = vpop.permute.xlu0 %1665
        %1667 = vrot.lane.b32.xlu0 %v1657, 126
        %v1668 = vpop.permute.xlu0 %1667
        %1669 = vrot.lane.b32.xlu0 %v1658, 126
        %v1670 = vpop.permute.xlu0 %1669
        %v1675 = vadd.f32 %v1649, %v1664
        %v1676 = vadd.f32 %v1650, %v1666
        %v1677 = vadd.f32 %v1651, %v1668
        %v1678 = vadd.f32 %v1652, %v1670
        %s1679 = sld [smem:[#allocation6 + $0x3]]
        %v1680 = vstv %s1679
        %v1681 = vadd.f32 %v1675, %v1680
        %v1682 = vadd.f32 %v1676, %v1680
        %v1683 = vadd.f32 %v1677, %v1680
        %v1684 = vadd.f32 %v1678, %v1680
        %v1685 = vmax.f32 %v1681, 0.0
        %v1686 = vmax.f32 %v1682, 0.0
        %v1687 = vmax.f32 %v1683, 0.0
        %v1688 = vmax.f32 %v1684, 0.0
        %v1689 = vsel %vm934, %v1685, 0.0
        %1690 = vadd.xlane.f32.xlu0 %v1689
        %v1691 = vpop.xlane.xlu0 %1690
        %v1692 = vsel %vm934, %v1686, 0.0
        %1693 = vadd.xlane.f32.xlu0 %v1692
        %v1694 = vpop.xlane.xlu0 %1693
        %v1695 = vsel %vm934, %v1687, 0.0
        %1696 = vadd.xlane.f32.xlu0 %v1695
        %v1697 = vpop.xlane.xlu0 %1696
        %v1698 = vsel %vm934, %v1688, 0.0
        %1699 = vadd.xlane.f32.xlu0 %v1698
        %v1700 = vpop.xlane.xlu0 %1699
        %v1701 = vadd.f32 %v1691, %v1694
        %v1702 = vadd.f32 %v1701, %v1697
        %v1703 = vadd.f32 %v1702, %v1700
        %v1704 = vrot.slane %v1703, 4
        %v1705 = vadd.f32 %v1703, %v1704
        %v1706 = vrot.slane %v1705, 2
        %v1707 = vadd.f32 %v1705, %v1706
        %v1708 = vrot.slane %v1707, 1
        %v1709 = vadd.f32 %v1707, %v1708
        %v1710 = vmul.f32 %v1709, 0.0009765625
        %v1711 = vmul.f32 %v1710, %v694
        %v1714 = vunpack.c.l.s4 1966171168
        %v1715 = vunpack.c.0.s8 %v1714
        %v1716 = vlaneseq
        %v1717 = vshrl.u32 %v1716, 7
        %v1718 = vsub.s32 %v1715, %v1717
        %v1719 = vrot.slane %v1711, %v1718
        %v1720 = vcombine.high %v1719, %v1719
        %v1722 = vunpack.c.l.s4 1966171168
        %v1723 = vunpack.c.0.s8 %v1722
        %v1724 = vlaneseq
        %v1725 = vshrl.u32 %v1724, 7
        %v1726 = vsub.s32 %v1723, %v1725
        %v1727 = vrot.slane %v1720, %v1726
        %v1728 = vcombine.high %v1727, %v1727
        %v1730 = vadd.f32 %v1472, %v1728
        %s1731 = sld [smem:[#allocation8 + $0x180]]
        %v1732 = vstv %s1731
        %v1733 = vmul.f32 %v1685, %v1732
        %v1734 = vmul.f32 %v1686, %v1732
        %v1735 = vmul.f32 %v1687, %v1732
        %v1736 = vmul.f32 %v1688, %v1732
        %v1737 = vadd.f32 %v1479, %v1733
        %v1738 = vadd.f32 %v1480, %v1734
        %v1739 = vadd.f32 %v1481, %v1735
        %v1740 = vadd.f32 %v1482, %v1736
        %s1741 = sld [smem:[#allocation8 + $0x181]]
        %v1742 = vstv %s1741
        %v1743 = vmul.f32 %v1685, %v1742
        %v1744 = vmul.f32 %v1686, %v1742
        %v1745 = vmul.f32 %v1687, %v1742
        %v1746 = vmul.f32 %v1688, %v1742
        %v1747 = vadd.f32 %v1489, %v1743
        %v1748 = vadd.f32 %v1490, %v1744
        %v1749 = vadd.f32 %v1491, %v1745
        %v1750 = vadd.f32 %v1492, %v1746
        %s1751 = sld [smem:[#allocation3 + $0x4]]
        %v1752 = vstv %s1751
        %v1753 = vmul.f32 %v726, %v1752
        %v1754 = vmul.f32 %v727, %v1752
        %v1755 = vmul.f32 %v728, %v1752
        %v1756 = vmul.f32 %v729, %v1752
        %v1757 = vadd.f32 %v1753, 0.0
        %v1758 = vadd.f32 %v1754, 0.0
        %v1759 = vadd.f32 %v1755, 0.0
        %v1760 = vadd.f32 %v1756, 0.0
        %s1761 = sld [smem:[#allocation3 + $0x84]]
        %v1762 = vstv %s1761
        %v1763 = vmul.f32 %v726, %v1762
        %v1764 = vmul.f32 %v727, %v1762
        %v1765 = vmul.f32 %v728, %v1762
        %v1766 = vmul.f32 %v729, %v1762
        %1771 = vrot.lane.b32.xlu0 %v1763, 127
        %v1772 = vpop.permute.xlu0 %1771
        %1773 = vrot.lane.b32.xlu0 %v1764, 127
        %v1774 = vpop.permute.xlu0 %1773
        %1775 = vrot.lane.b32.xlu0 %v1765, 127
        %v1776 = vpop.permute.xlu0 %1775
        %1777 = vrot.lane.b32.xlu0 %v1766, 127
        %v1778 = vpop.permute.xlu0 %1777
        %v1783 = vadd.f32 %v1757, %v1772
        %v1784 = vadd.f32 %v1758, %v1774
        %v1785 = vadd.f32 %v1759, %v1776
        %v1786 = vadd.f32 %v1760, %v1778
        %s1787 = sld [smem:[#allocation3 + $0x104]]
        %v1788 = vstv %s1787
        %v1789 = vmul.f32 %v726, %v1788
        %v1790 = vmul.f32 %v727, %v1788
        %v1791 = vmul.f32 %v728, %v1788
        %v1792 = vmul.f32 %v729, %v1788
        %1797 = vrot.lane.b32.xlu0 %v1789, 126
        %v1798 = vpop.permute.xlu0 %1797
        %1799 = vrot.lane.b32.xlu0 %v1790, 126
        %v1800 = vpop.permute.xlu0 %1799
        %1801 = vrot.lane.b32.xlu0 %v1791, 126
        %v1802 = vpop.permute.xlu0 %1801
        %1803 = vrot.lane.b32.xlu0 %v1792, 126
        %v1804 = vpop.permute.xlu0 %1803
        %v1809 = vadd.f32 %v1783, %v1798
        %v1810 = vadd.f32 %v1784, %v1800
        %v1811 = vadd.f32 %v1785, %v1802
        %v1812 = vadd.f32 %v1786, %v1804
        %s1813 = sld [smem:[#allocation3 + $0x184]]
        %v1814 = vstv %s1813
        %v1815 = vmul.f32 %v730, %v1814
        %v1816 = vmul.f32 %v731, %v1814
        %v1817 = vmul.f32 %v732, %v1814
        %v1818 = vmul.f32 %v733, %v1814
        %v1819 = vadd.f32 %v1809, %v1815
        %v1820 = vadd.f32 %v1810, %v1816
        %v1821 = vadd.f32 %v1811, %v1817
        %v1822 = vadd.f32 %v1812, %v1818
        %s1823 = sld [smem:[#allocation3 + $0x204]]
        %v1824 = vstv %s1823
        %v1825 = vmul.f32 %v730, %v1824
        %v1826 = vmul.f32 %v731, %v1824
        %v1827 = vmul.f32 %v732, %v1824
        %v1828 = vmul.f32 %v733, %v1824
        %1833 = vrot.lane.b32.xlu0 %v1825, 127
        %v1834 = vpop.permute.xlu0 %1833
        %1835 = vrot.lane.b32.xlu0 %v1826, 127
        %v1836 = vpop.permute.xlu0 %1835
        %1837 = vrot.lane.b32.xlu0 %v1827, 127
        %v1838 = vpop.permute.xlu0 %1837
        %1839 = vrot.lane.b32.xlu0 %v1828, 127
        %v1840 = vpop.permute.xlu0 %1839
        %v1845 = vadd.f32 %v1819, %v1834
        %v1846 = vadd.f32 %v1820, %v1836
        %v1847 = vadd.f32 %v1821, %v1838
        %v1848 = vadd.f32 %v1822, %v1840
        %s1849 = sld [smem:[#allocation3 + $0x284]]
        %v1850 = vstv %s1849
        %v1851 = vmul.f32 %v730, %v1850
        %v1852 = vmul.f32 %v731, %v1850
        %v1853 = vmul.f32 %v732, %v1850
        %v1854 = vmul.f32 %v733, %v1850
        %1859 = vrot.lane.b32.xlu0 %v1851, 126
        %v1860 = vpop.permute.xlu0 %1859
        %1861 = vrot.lane.b32.xlu0 %v1852, 126
        %v1862 = vpop.permute.xlu0 %1861
        %1863 = vrot.lane.b32.xlu0 %v1853, 126
        %v1864 = vpop.permute.xlu0 %1863
        %1865 = vrot.lane.b32.xlu0 %v1854, 126
        %v1866 = vpop.permute.xlu0 %1865
        %v1871 = vadd.f32 %v1845, %v1860
        %v1872 = vadd.f32 %v1846, %v1862
        %v1873 = vadd.f32 %v1847, %v1864
        %v1874 = vadd.f32 %v1848, %v1866
        %s1875 = sld [smem:[#allocation3 + $0x304]]
        %v1876 = vstv %s1875
        %v1877 = vmul.f32 %v734, %v1876
        %v1878 = vmul.f32 %v735, %v1876
        %v1879 = vmul.f32 %v736, %v1876
        %v1880 = vmul.f32 %v737, %v1876
        %v1881 = vadd.f32 %v1871, %v1877
        %v1882 = vadd.f32 %v1872, %v1878
        %v1883 = vadd.f32 %v1873, %v1879
        %v1884 = vadd.f32 %v1874, %v1880
        %s1885 = sld [smem:[#allocation3 + $0x384]]
        %v1886 = vstv %s1885
        %v1887 = vmul.f32 %v734, %v1886
        %v1888 = vmul.f32 %v735, %v1886
        %v1889 = vmul.f32 %v736, %v1886
        %v1890 = vmul.f32 %v737, %v1886
        %1895 = vrot.lane.b32.xlu0 %v1887, 127
        %v1896 = vpop.permute.xlu0 %1895
        %1897 = vrot.lane.b32.xlu0 %v1888, 127
        %v1898 = vpop.permute.xlu0 %1897
        %1899 = vrot.lane.b32.xlu0 %v1889, 127
        %v1900 = vpop.permute.xlu0 %1899
        %1901 = vrot.lane.b32.xlu0 %v1890, 127
        %v1902 = vpop.permute.xlu0 %1901
        %v1907 = vadd.f32 %v1881, %v1896
        %v1908 = vadd.f32 %v1882, %v1898
        %v1909 = vadd.f32 %v1883, %v1900
        %v1910 = vadd.f32 %v1884, %v1902
        %s1911 = sld [smem:[#allocation3 + $0x404]]
        %v1912 = vstv %s1911
        %v1913 = vmul.f32 %v734, %v1912
        %v1914 = vmul.f32 %v735, %v1912
        %v1915 = vmul.f32 %v736, %v1912
        %v1916 = vmul.f32 %v737, %v1912
        %1921 = vrot.lane.b32.xlu0 %v1913, 126
        %v1922 = vpop.permute.xlu0 %1921
        %1923 = vrot.lane.b32.xlu0 %v1914, 126
        %v1924 = vpop.permute.xlu0 %1923
        %1925 = vrot.lane.b32.xlu0 %v1915, 126
        %v1926 = vpop.permute.xlu0 %1925
        %1927 = vrot.lane.b32.xlu0 %v1916, 126
        %v1928 = vpop.permute.xlu0 %1927
        %v1933 = vadd.f32 %v1907, %v1922
        %v1934 = vadd.f32 %v1908, %v1924
        %v1935 = vadd.f32 %v1909, %v1926
        %v1936 = vadd.f32 %v1910, %v1928
        %s1937 = sld [smem:[#allocation6 + $0x4]]
        %v1938 = vstv %s1937
        %v1939 = vadd.f32 %v1933, %v1938
        %v1940 = vadd.f32 %v1934, %v1938
        %v1941 = vadd.f32 %v1935, %v1938
        %v1942 = vadd.f32 %v1936, %v1938
        %v1943 = vmax.f32 %v1939, 0.0
        %v1944 = vmax.f32 %v1940, 0.0
        %v1945 = vmax.f32 %v1941, 0.0
        %v1946 = vmax.f32 %v1942, 0.0
        %v1947 = vsel %vm934, %v1943, 0.0
        %1948 = vadd.xlane.f32.xlu0 %v1947
        %v1949 = vpop.xlane.xlu0 %1948
        %v1950 = vsel %vm934, %v1944, 0.0
        %1951 = vadd.xlane.f32.xlu0 %v1950
        %v1952 = vpop.xlane.xlu0 %1951
        %v1953 = vsel %vm934, %v1945, 0.0
        %1954 = vadd.xlane.f32.xlu0 %v1953
        %v1955 = vpop.xlane.xlu0 %1954
        %v1956 = vsel %vm934, %v1946, 0.0
        %1957 = vadd.xlane.f32.xlu0 %v1956
        %v1958 = vpop.xlane.xlu0 %1957
        %v1959 = vadd.f32 %v1949, %v1952
        %v1960 = vadd.f32 %v1959, %v1955
        %v1961 = vadd.f32 %v1960, %v1958
        %v1962 = vrot.slane %v1961, 4
        %v1963 = vadd.f32 %v1961, %v1962
        %v1964 = vrot.slane %v1963, 2
        %v1965 = vadd.f32 %v1963, %v1964
        %v1966 = vrot.slane %v1965, 1
        %v1967 = vadd.f32 %v1965, %v1966
        %v1968 = vmul.f32 %v1967, 0.0009765625
        %v1969 = vmul.f32 %v1968, %v694
        %v1971 = vcombine.high %v1969, %v1969
        %v1973 = vunpack.c.l.s4 1966171168
        %v1974 = vunpack.c.0.s8 %v1973
        %v1975 = vlaneseq
        %v1976 = vshrl.u32 %v1975, 7
        %v1977 = vsub.s32 %v1974, %v1976
        %v1978 = vrot.slane %v1971, %v1977
        %v1980 = vunpack.c.l.s4 1966171168
        %v1981 = vunpack.c.0.s8 %v1980
        %v1982 = vlaneseq
        %v1983 = vshrl.u32 %v1982, 7
        %v1984 = vsub.s32 %v1981, %v1983
        %v1985 = vrot.slane %v1978, %v1984
        %v1987 = vadd.f32 %v1730, %v1985
        %s1988 = sld [smem:[#allocation8 + $0x200]]
        %v1989 = vstv %s1988
        %v1990 = vmul.f32 %v1943, %v1989
        %v1991 = vmul.f32 %v1944, %v1989
        %v1992 = vmul.f32 %v1945, %v1989
        %v1993 = vmul.f32 %v1946, %v1989
        %v1994 = vadd.f32 %v1737, %v1990
        %v1995 = vadd.f32 %v1738, %v1991
        %v1996 = vadd.f32 %v1739, %v1992
        %v1997 = vadd.f32 %v1740, %v1993
        %s1998 = sld [smem:[#allocation8 + $0x201]]
        %v1999 = vstv %s1998
        %v2000 = vmul.f32 %v1943, %v1999
        %v2001 = vmul.f32 %v1944, %v1999
        %v2002 = vmul.f32 %v1945, %v1999
        %v2003 = vmul.f32 %v1946, %v1999
        %v2004 = vadd.f32 %v1747, %v2000
        %v2005 = vadd.f32 %v1748, %v2001
        %v2006 = vadd.f32 %v1749, %v2002
        %v2007 = vadd.f32 %v1750, %v2003
        %s2008 = sld [smem:[#allocation3 + $0x5]]
        %v2009 = vstv %s2008
        %v2010 = vmul.f32 %v726, %v2009
        %v2011 = vmul.f32 %v727, %v2009
        %v2012 = vmul.f32 %v728, %v2009
        %v2013 = vmul.f32 %v729, %v2009
        %v2014 = vadd.f32 %v2010, 0.0
        %v2015 = vadd.f32 %v2011, 0.0
        %v2016 = vadd.f32 %v2012, 0.0
        %v2017 = vadd.f32 %v2013, 0.0
        %s2018 = sld [smem:[#allocation3 + $0x85]]
        %v2019 = vstv %s2018
        %v2020 = vmul.f32 %v726, %v2019
        %v2021 = vmul.f32 %v727, %v2019
        %v2022 = vmul.f32 %v728, %v2019
        %v2023 = vmul.f32 %v729, %v2019
        %2028 = vrot.lane.b32.xlu0 %v2020, 127
        %v2029 = vpop.permute.xlu0 %2028
        %2030 = vrot.lane.b32.xlu0 %v2021, 127
        %v2031 = vpop.permute.xlu0 %2030
        %2032 = vrot.lane.b32.xlu0 %v2022, 127
        %v2033 = vpop.permute.xlu0 %2032
        %2034 = vrot.lane.b32.xlu0 %v2023, 127
        %v2035 = vpop.permute.xlu0 %2034
        %v2040 = vadd.f32 %v2014, %v2029
        %v2041 = vadd.f32 %v2015, %v2031
        %v2042 = vadd.f32 %v2016, %v2033
        %v2043 = vadd.f32 %v2017, %v2035
        %s2044 = sld [smem:[#allocation3 + $0x105]]
        %v2045 = vstv %s2044
        %v2046 = vmul.f32 %v726, %v2045
        %v2047 = vmul.f32 %v727, %v2045
        %v2048 = vmul.f32 %v728, %v2045
        %v2049 = vmul.f32 %v729, %v2045
        %2054 = vrot.lane.b32.xlu0 %v2046, 126
        %v2055 = vpop.permute.xlu0 %2054
        %2056 = vrot.lane.b32.xlu0 %v2047, 126
        %v2057 = vpop.permute.xlu0 %2056
        %2058 = vrot.lane.b32.xlu0 %v2048, 126
        %v2059 = vpop.permute.xlu0 %2058
        %2060 = vrot.lane.b32.xlu0 %v2049, 126
        %v2061 = vpop.permute.xlu0 %2060
        %v2066 = vadd.f32 %v2040, %v2055
        %v2067 = vadd.f32 %v2041, %v2057
        %v2068 = vadd.f32 %v2042, %v2059
        %v2069 = vadd.f32 %v2043, %v2061
        %s2070 = sld [smem:[#allocation3 + $0x185]]
        %v2071 = vstv %s2070
        %v2072 = vmul.f32 %v730, %v2071
        %v2073 = vmul.f32 %v731, %v2071
        %v2074 = vmul.f32 %v732, %v2071
        %v2075 = vmul.f32 %v733, %v2071
        %v2076 = vadd.f32 %v2066, %v2072
        %v2077 = vadd.f32 %v2067, %v2073
        %v2078 = vadd.f32 %v2068, %v2074
        %v2079 = vadd.f32 %v2069, %v2075
        %s2080 = sld [smem:[#allocation3 + $0x205]]
        %v2081 = vstv %s2080
        %v2082 = vmul.f32 %v730, %v2081
        %v2083 = vmul.f32 %v731, %v2081
        %v2084 = vmul.f32 %v732, %v2081
        %v2085 = vmul.f32 %v733, %v2081
        %2090 = vrot.lane.b32.xlu0 %v2082, 127
        %v2091 = vpop.permute.xlu0 %2090
        %2092 = vrot.lane.b32.xlu0 %v2083, 127
        %v2093 = vpop.permute.xlu0 %2092
        %2094 = vrot.lane.b32.xlu0 %v2084, 127
        %v2095 = vpop.permute.xlu0 %2094
        %2096 = vrot.lane.b32.xlu0 %v2085, 127
        %v2097 = vpop.permute.xlu0 %2096
        %v2102 = vadd.f32 %v2076, %v2091
        %v2103 = vadd.f32 %v2077, %v2093
        %v2104 = vadd.f32 %v2078, %v2095
        %v2105 = vadd.f32 %v2079, %v2097
        %s2106 = sld [smem:[#allocation3 + $0x285]]
        %v2107 = vstv %s2106
        %v2108 = vmul.f32 %v730, %v2107
        %v2109 = vmul.f32 %v731, %v2107
        %v2110 = vmul.f32 %v732, %v2107
        %v2111 = vmul.f32 %v733, %v2107
        %2116 = vrot.lane.b32.xlu0 %v2108, 126
        %v2117 = vpop.permute.xlu0 %2116
        %2118 = vrot.lane.b32.xlu0 %v2109, 126
        %v2119 = vpop.permute.xlu0 %2118
        %2120 = vrot.lane.b32.xlu0 %v2110, 126
        %v2121 = vpop.permute.xlu0 %2120
        %2122 = vrot.lane.b32.xlu0 %v2111, 126
        %v2123 = vpop.permute.xlu0 %2122
        %v2128 = vadd.f32 %v2102, %v2117
        %v2129 = vadd.f32 %v2103, %v2119
        %v2130 = vadd.f32 %v2104, %v2121
        %v2131 = vadd.f32 %v2105, %v2123
        %s2132 = sld [smem:[#allocation3 + $0x305]]
        %v2133 = vstv %s2132
        %v2134 = vmul.f32 %v734, %v2133
        %v2135 = vmul.f32 %v735, %v2133
        %v2136 = vmul.f32 %v736, %v2133
        %v2137 = vmul.f32 %v737, %v2133
        %v2138 = vadd.f32 %v2128, %v2134
        %v2139 = vadd.f32 %v2129, %v2135
        %v2140 = vadd.f32 %v2130, %v2136
        %v2141 = vadd.f32 %v2131, %v2137
        %s2142 = sld [smem:[#allocation3 + $0x385]]
        %v2143 = vstv %s2142
        %v2144 = vmul.f32 %v734, %v2143
        %v2145 = vmul.f32 %v735, %v2143
        %v2146 = vmul.f32 %v736, %v2143
        %v2147 = vmul.f32 %v737, %v2143
        %2152 = vrot.lane.b32.xlu0 %v2144, 127
        %v2153 = vpop.permute.xlu0 %2152
        %2154 = vrot.lane.b32.xlu0 %v2145, 127
        %v2155 = vpop.permute.xlu0 %2154
        %2156 = vrot.lane.b32.xlu0 %v2146, 127
        %v2157 = vpop.permute.xlu0 %2156
        %2158 = vrot.lane.b32.xlu0 %v2147, 127
        %v2159 = vpop.permute.xlu0 %2158
        %v2164 = vadd.f32 %v2138, %v2153
        %v2165 = vadd.f32 %v2139, %v2155
        %v2166 = vadd.f32 %v2140, %v2157
        %v2167 = vadd.f32 %v2141, %v2159
        %s2168 = sld [smem:[#allocation3 + $0x405]]
        %v2169 = vstv %s2168
        %v2170 = vmul.f32 %v734, %v2169
        %v2171 = vmul.f32 %v735, %v2169
        %v2172 = vmul.f32 %v736, %v2169
        %v2173 = vmul.f32 %v737, %v2169
        %2178 = vrot.lane.b32.xlu0 %v2170, 126
        %v2179 = vpop.permute.xlu0 %2178
        %2180 = vrot.lane.b32.xlu0 %v2171, 126
        %v2181 = vpop.permute.xlu0 %2180
        %2182 = vrot.lane.b32.xlu0 %v2172, 126
        %v2183 = vpop.permute.xlu0 %2182
        %2184 = vrot.lane.b32.xlu0 %v2173, 126
        %v2185 = vpop.permute.xlu0 %2184
        %v2190 = vadd.f32 %v2164, %v2179
        %v2191 = vadd.f32 %v2165, %v2181
        %v2192 = vadd.f32 %v2166, %v2183
        %v2193 = vadd.f32 %v2167, %v2185
        %s2194 = sld [smem:[#allocation6 + $0x5]]
        %v2195 = vstv %s2194
        %v2196 = vadd.f32 %v2190, %v2195
        %v2197 = vadd.f32 %v2191, %v2195
        %v2198 = vadd.f32 %v2192, %v2195
        %v2199 = vadd.f32 %v2193, %v2195
        %v2200 = vmax.f32 %v2196, 0.0
        %v2201 = vmax.f32 %v2197, 0.0
        %v2202 = vmax.f32 %v2198, 0.0
        %v2203 = vmax.f32 %v2199, 0.0
        %v2204 = vsel %vm934, %v2200, 0.0
        %2205 = vadd.xlane.f32.xlu0 %v2204
        %v2206 = vpop.xlane.xlu0 %2205
        %v2207 = vsel %vm934, %v2201, 0.0
        %2208 = vadd.xlane.f32.xlu0 %v2207
        %v2209 = vpop.xlane.xlu0 %2208
        %v2210 = vsel %vm934, %v2202, 0.0
        %2211 = vadd.xlane.f32.xlu0 %v2210
        %v2212 = vpop.xlane.xlu0 %2211
        %v2213 = vsel %vm934, %v2203, 0.0
        %2214 = vadd.xlane.f32.xlu0 %v2213
        %v2215 = vpop.xlane.xlu0 %2214
        %v2216 = vadd.f32 %v2206, %v2209
        %v2217 = vadd.f32 %v2216, %v2212
        %v2218 = vadd.f32 %v2217, %v2215
        %v2219 = vrot.slane %v2218, 4
        %v2220 = vadd.f32 %v2218, %v2219
        %v2221 = vrot.slane %v2220, 2
        %v2222 = vadd.f32 %v2220, %v2221
        %v2223 = vrot.slane %v2222, 1
        %v2224 = vadd.f32 %v2222, %v2223
        %v2225 = vmul.f32 %v2224, 0.0009765625
        %v2226 = vmul.f32 %v2225, %v694
        %v2228 = vcombine.high %v2226, %v2226
        %v2230 = vunpack.c.l.s4 1966171168
        %v2231 = vunpack.c.0.s8 %v2230
        %v2232 = vlaneseq
        %v2233 = vshrl.u32 %v2232, 7
        %v2234 = vsub.s32 %v2231, %v2233
        %v2235 = vrot.slane %v2228, %v2234
        %v2236 = vcombine.high %v2235, %v2235
        %v2238 = vunpack.c.l.s4 1966171168
        %v2239 = vunpack.c.0.s8 %v2238
        %v2240 = vlaneseq
        %v2241 = vshrl.u32 %v2240, 7
        %v2242 = vsub.s32 %v2239, %v2241
        %v2243 = vrot.slane %v2236, %v2242
        %v2245 = vadd.f32 %v1987, %v2243
        %s2246 = sld [smem:[#allocation8 + $0x280]]
        %v2247 = vstv %s2246
        %v2248 = vmul.f32 %v2200, %v2247
        %v2249 = vmul.f32 %v2201, %v2247
        %v2250 = vmul.f32 %v2202, %v2247
        %v2251 = vmul.f32 %v2203, %v2247
        %v2252 = vadd.f32 %v1994, %v2248
        %v2253 = vadd.f32 %v1995, %v2249
        %v2254 = vadd.f32 %v1996, %v2250
        %v2255 = vadd.f32 %v1997, %v2251
        %s2256 = sld [smem:[#allocation8 + $0x281]]
        %v2257 = vstv %s2256
        %v2258 = vmul.f32 %v2200, %v2257
        %v2259 = vmul.f32 %v2201, %v2257
        %v2260 = vmul.f32 %v2202, %v2257
        %v2261 = vmul.f32 %v2203, %v2257
        %v2262 = vadd.f32 %v2004, %v2258
        %v2263 = vadd.f32 %v2005, %v2259
        %v2264 = vadd.f32 %v2006, %v2260
        %v2265 = vadd.f32 %v2007, %v2261
        %s2266 = sld [smem:[#allocation3 + $0x6]]
        %v2267 = vstv %s2266
        %v2268 = vmul.f32 %v726, %v2267
        %v2269 = vmul.f32 %v727, %v2267
        %v2270 = vmul.f32 %v728, %v2267
        %v2271 = vmul.f32 %v729, %v2267
        %v2272 = vadd.f32 %v2268, 0.0
        %v2273 = vadd.f32 %v2269, 0.0
        %v2274 = vadd.f32 %v2270, 0.0
        %v2275 = vadd.f32 %v2271, 0.0
        %s2276 = sld [smem:[#allocation3 + $0x86]]
        %v2277 = vstv %s2276
        %v2278 = vmul.f32 %v726, %v2277
        %v2279 = vmul.f32 %v727, %v2277
        %v2280 = vmul.f32 %v728, %v2277
        %v2281 = vmul.f32 %v729, %v2277
        %2286 = vrot.lane.b32.xlu0 %v2278, 127
        %v2287 = vpop.permute.xlu0 %2286
        %2288 = vrot.lane.b32.xlu0 %v2279, 127
        %v2289 = vpop.permute.xlu0 %2288
        %2290 = vrot.lane.b32.xlu0 %v2280, 127
        %v2291 = vpop.permute.xlu0 %2290
        %2292 = vrot.lane.b32.xlu0 %v2281, 127
        %v2293 = vpop.permute.xlu0 %2292
        %v2298 = vadd.f32 %v2272, %v2287
        %v2299 = vadd.f32 %v2273, %v2289
        %v2300 = vadd.f32 %v2274, %v2291
        %v2301 = vadd.f32 %v2275, %v2293
        %s2302 = sld [smem:[#allocation3 + $0x106]]
        %v2303 = vstv %s2302
        %v2304 = vmul.f32 %v726, %v2303
        %v2305 = vmul.f32 %v727, %v2303
        %v2306 = vmul.f32 %v728, %v2303
        %v2307 = vmul.f32 %v729, %v2303
        %2312 = vrot.lane.b32.xlu0 %v2304, 126
        %v2313 = vpop.permute.xlu0 %2312
        %2314 = vrot.lane.b32.xlu0 %v2305, 126
        %v2315 = vpop.permute.xlu0 %2314
        %2316 = vrot.lane.b32.xlu0 %v2306, 126
        %v2317 = vpop.permute.xlu0 %2316
        %2318 = vrot.lane.b32.xlu0 %v2307, 126
        %v2319 = vpop.permute.xlu0 %2318
        %v2324 = vadd.f32 %v2298, %v2313
        %v2325 = vadd.f32 %v2299, %v2315
        %v2326 = vadd.f32 %v2300, %v2317
        %v2327 = vadd.f32 %v2301, %v2319
        %s2328 = sld [smem:[#allocation3 + $0x186]]
        %v2329 = vstv %s2328
        %v2330 = vmul.f32 %v730, %v2329
        %v2331 = vmul.f32 %v731, %v2329
        %v2332 = vmul.f32 %v732, %v2329
        %v2333 = vmul.f32 %v733, %v2329
        %v2334 = vadd.f32 %v2324, %v2330
        %v2335 = vadd.f32 %v2325, %v2331
        %v2336 = vadd.f32 %v2326, %v2332
        %v2337 = vadd.f32 %v2327, %v2333
        %s2338 = sld [smem:[#allocation3 + $0x206]]
        %v2339 = vstv %s2338
        %v2340 = vmul.f32 %v730, %v2339
        %v2341 = vmul.f32 %v731, %v2339
        %v2342 = vmul.f32 %v732, %v2339
        %v2343 = vmul.f32 %v733, %v2339
        %2348 = vrot.lane.b32.xlu0 %v2340, 127
        %v2349 = vpop.permute.xlu0 %2348
        %2350 = vrot.lane.b32.xlu0 %v2341, 127
        %v2351 = vpop.permute.xlu0 %2350
        %2352 = vrot.lane.b32.xlu0 %v2342, 127
        %v2353 = vpop.permute.xlu0 %2352
        %2354 = vrot.lane.b32.xlu0 %v2343, 127
        %v2355 = vpop.permute.xlu0 %2354
        %v2360 = vadd.f32 %v2334, %v2349
        %v2361 = vadd.f32 %v2335, %v2351
        %v2362 = vadd.f32 %v2336, %v2353
        %v2363 = vadd.f32 %v2337, %v2355
        %s2364 = sld [smem:[#allocation3 + $0x286]]
        %v2365 = vstv %s2364
        %v2366 = vmul.f32 %v730, %v2365
        %v2367 = vmul.f32 %v731, %v2365
        %v2368 = vmul.f32 %v732, %v2365
        %v2369 = vmul.f32 %v733, %v2365
        %2374 = vrot.lane.b32.xlu0 %v2366, 126
        %v2375 = vpop.permute.xlu0 %2374
        %2376 = vrot.lane.b32.xlu0 %v2367, 126
        %v2377 = vpop.permute.xlu0 %2376
        %2378 = vrot.lane.b32.xlu0 %v2368, 126
        %v2379 = vpop.permute.xlu0 %2378
        %2380 = vrot.lane.b32.xlu0 %v2369, 126
        %v2381 = vpop.permute.xlu0 %2380
        %v2386 = vadd.f32 %v2360, %v2375
        %v2387 = vadd.f32 %v2361, %v2377
        %v2388 = vadd.f32 %v2362, %v2379
        %v2389 = vadd.f32 %v2363, %v2381
        %s2390 = sld [smem:[#allocation3 + $0x306]]
        %v2391 = vstv %s2390
        %v2392 = vmul.f32 %v734, %v2391
        %v2393 = vmul.f32 %v735, %v2391
        %v2394 = vmul.f32 %v736, %v2391
        %v2395 = vmul.f32 %v737, %v2391
        %v2396 = vadd.f32 %v2386, %v2392
        %v2397 = vadd.f32 %v2387, %v2393
        %v2398 = vadd.f32 %v2388, %v2394
        %v2399 = vadd.f32 %v2389, %v2395
        %s2400 = sld [smem:[#allocation3 + $0x386]]
        %v2401 = vstv %s2400
        %v2402 = vmul.f32 %v734, %v2401
        %v2403 = vmul.f32 %v735, %v2401
        %v2404 = vmul.f32 %v736, %v2401
        %v2405 = vmul.f32 %v737, %v2401
        %2410 = vrot.lane.b32.xlu0 %v2402, 127
        %v2411 = vpop.permute.xlu0 %2410
        %2412 = vrot.lane.b32.xlu0 %v2403, 127
        %v2413 = vpop.permute.xlu0 %2412
        %2414 = vrot.lane.b32.xlu0 %v2404, 127
        %v2415 = vpop.permute.xlu0 %2414
        %2416 = vrot.lane.b32.xlu0 %v2405, 127
        %v2417 = vpop.permute.xlu0 %2416
        %v2422 = vadd.f32 %v2396, %v2411
        %v2423 = vadd.f32 %v2397, %v2413
        %v2424 = vadd.f32 %v2398, %v2415
        %v2425 = vadd.f32 %v2399, %v2417
        %s2426 = sld [smem:[#allocation3 + $0x406]]
        %v2427 = vstv %s2426
        %v2428 = vmul.f32 %v734, %v2427
        %v2429 = vmul.f32 %v735, %v2427
        %v2430 = vmul.f32 %v736, %v2427
        %v2431 = vmul.f32 %v737, %v2427
        %2436 = vrot.lane.b32.xlu0 %v2428, 126
        %v2437 = vpop.permute.xlu0 %2436
        %2438 = vrot.lane.b32.xlu0 %v2429, 126
        %v2439 = vpop.permute.xlu0 %2438
        %2440 = vrot.lane.b32.xlu0 %v2430, 126
        %v2441 = vpop.permute.xlu0 %2440
        %2442 = vrot.lane.b32.xlu0 %v2431, 126
        %v2443 = vpop.permute.xlu0 %2442
        %v2448 = vadd.f32 %v2422, %v2437
        %v2449 = vadd.f32 %v2423, %v2439
        %v2450 = vadd.f32 %v2424, %v2441
        %v2451 = vadd.f32 %v2425, %v2443
        %s2452 = sld [smem:[#allocation6 + $0x6]]
        %v2453 = vstv %s2452
        %v2454 = vadd.f32 %v2448, %v2453
        %v2455 = vadd.f32 %v2449, %v2453
        %v2456 = vadd.f32 %v2450, %v2453
        %v2457 = vadd.f32 %v2451, %v2453
        %v2458 = vmax.f32 %v2454, 0.0
        %v2459 = vmax.f32 %v2455, 0.0
        %v2460 = vmax.f32 %v2456, 0.0
        %v2461 = vmax.f32 %v2457, 0.0
        %v2462 = vsel %vm934, %v2458, 0.0
        %2463 = vadd.xlane.f32.xlu0 %v2462
        %v2464 = vpop.xlane.xlu0 %2463
        %v2465 = vsel %vm934, %v2459, 0.0
        %2466 = vadd.xlane.f32.xlu0 %v2465
        %v2467 = vpop.xlane.xlu0 %2466
        %v2468 = vsel %vm934, %v2460, 0.0
        %2469 = vadd.xlane.f32.xlu0 %v2468
        %v2470 = vpop.xlane.xlu0 %2469
        %v2471 = vsel %vm934, %v2461, 0.0
        %2472 = vadd.xlane.f32.xlu0 %v2471
        %v2473 = vpop.xlane.xlu0 %2472
        %v2474 = vadd.f32 %v2464, %v2467
        %v2475 = vadd.f32 %v2474, %v2470
        %v2476 = vadd.f32 %v2475, %v2473
        %v2477 = vrot.slane %v2476, 4
        %v2478 = vadd.f32 %v2476, %v2477
        %v2479 = vrot.slane %v2478, 2
        %v2480 = vadd.f32 %v2478, %v2479
        %v2481 = vrot.slane %v2480, 1
        %v2482 = vadd.f32 %v2480, %v2481
        %v2483 = vmul.f32 %v2482, 0.0009765625
        %v2484 = vmul.f32 %v2483, %v694
        %v2486 = vcombine.high %v2484, %v2484
        %v2488 = vunpack.c.l.s4 1966171168
        %v2489 = vunpack.c.0.s8 %v2488
        %v2490 = vlaneseq
        %v2491 = vshrl.u32 %v2490, 7
        %v2492 = vsub.s32 %v2489, %v2491
        %v2493 = vrot.slane %v2486, %v2492
        %v2495 = vunpack.c.l.s4 1966171168
        %v2496 = vunpack.c.0.s8 %v2495
        %v2497 = vlaneseq
        %v2498 = vshrl.u32 %v2497, 7
        %v2499 = vsub.s32 %v2496, %v2498
        %v2500 = vrot.slane %v2493, %v2499
        %v2501 = vcombine.high %v2500, %v2500
        %v2503 = vadd.f32 %v2245, %v2501
        %s2504 = sld [smem:[#allocation8 + $0x300]]
        %v2505 = vstv %s2504
        %v2506 = vmul.f32 %v2458, %v2505
        %v2507 = vmul.f32 %v2459, %v2505
        %v2508 = vmul.f32 %v2460, %v2505
        %v2509 = vmul.f32 %v2461, %v2505
        %v2510 = vadd.f32 %v2252, %v2506
        %v2511 = vadd.f32 %v2253, %v2507
        %v2512 = vadd.f32 %v2254, %v2508
        %v2513 = vadd.f32 %v2255, %v2509
        %s2514 = sld [smem:[#allocation8 + $0x301]]
        %v2515 = vstv %s2514
        %v2516 = vmul.f32 %v2458, %v2515
        %v2517 = vmul.f32 %v2459, %v2515
        %v2518 = vmul.f32 %v2460, %v2515
        %v2519 = vmul.f32 %v2461, %v2515
        %v2520 = vadd.f32 %v2262, %v2516
        %v2521 = vadd.f32 %v2263, %v2517
        %v2522 = vadd.f32 %v2264, %v2518
        %v2523 = vadd.f32 %v2265, %v2519
        %s2524 = sld [smem:[#allocation3 + $0x7]]
        %v2525 = vstv %s2524
        %v2526 = vmul.f32 %v726, %v2525
        %v2527 = vmul.f32 %v727, %v2525
        %v2528 = vmul.f32 %v728, %v2525
        %v2529 = vmul.f32 %v729, %v2525
        %v2530 = vadd.f32 %v2526, 0.0
        %v2531 = vadd.f32 %v2527, 0.0
        %v2532 = vadd.f32 %v2528, 0.0
        %v2533 = vadd.f32 %v2529, 0.0
        %s2534 = sld [smem:[#allocation3 + $0x87]]
        %v2535 = vstv %s2534
        %v2536 = vmul.f32 %v726, %v2535
        %v2537 = vmul.f32 %v727, %v2535
        %v2538 = vmul.f32 %v728, %v2535
        %v2539 = vmul.f32 %v729, %v2535
        %2544 = vrot.lane.b32.xlu0 %v2536, 127
        %v2545 = vpop.permute.xlu0 %2544
        %2546 = vrot.lane.b32.xlu0 %v2537, 127
        %v2547 = vpop.permute.xlu0 %2546
        %2548 = vrot.lane.b32.xlu0 %v2538, 127
        %v2549 = vpop.permute.xlu0 %2548
        %2550 = vrot.lane.b32.xlu0 %v2539, 127
        %v2551 = vpop.permute.xlu0 %2550
        %v2556 = vadd.f32 %v2530, %v2545
        %v2557 = vadd.f32 %v2531, %v2547
        %v2558 = vadd.f32 %v2532, %v2549
        %v2559 = vadd.f32 %v2533, %v2551
        %s2560 = sld [smem:[#allocation3 + $0x107]]
        %v2561 = vstv %s2560
        %v2562 = vmul.f32 %v726, %v2561
        %v2563 = vmul.f32 %v727, %v2561
        %v2564 = vmul.f32 %v728, %v2561
        %v2565 = vmul.f32 %v729, %v2561
        %2570 = vrot.lane.b32.xlu0 %v2562, 126
        %v2571 = vpop.permute.xlu0 %2570
        %2572 = vrot.lane.b32.xlu0 %v2563, 126
        %v2573 = vpop.permute.xlu0 %2572
        %2574 = vrot.lane.b32.xlu0 %v2564, 126
        %v2575 = vpop.permute.xlu0 %2574
        %2576 = vrot.lane.b32.xlu0 %v2565, 126
        %v2577 = vpop.permute.xlu0 %2576
        %v2582 = vadd.f32 %v2556, %v2571
        %v2583 = vadd.f32 %v2557, %v2573
        %v2584 = vadd.f32 %v2558, %v2575
        %v2585 = vadd.f32 %v2559, %v2577
        %s2586 = sld [smem:[#allocation3 + $0x187]]
        %v2587 = vstv %s2586
        %v2588 = vmul.f32 %v730, %v2587
        %v2589 = vmul.f32 %v731, %v2587
        %v2590 = vmul.f32 %v732, %v2587
        %v2591 = vmul.f32 %v733, %v2587
        %v2592 = vadd.f32 %v2582, %v2588
        %v2593 = vadd.f32 %v2583, %v2589
        %v2594 = vadd.f32 %v2584, %v2590
        %v2595 = vadd.f32 %v2585, %v2591
        %s2596 = sld [smem:[#allocation3 + $0x207]]
        %v2597 = vstv %s2596
        %v2598 = vmul.f32 %v730, %v2597
        %v2599 = vmul.f32 %v731, %v2597
        %v2600 = vmul.f32 %v732, %v2597
        %v2601 = vmul.f32 %v733, %v2597
        %2606 = vrot.lane.b32.xlu0 %v2598, 127
        %v2607 = vpop.permute.xlu0 %2606
        %2608 = vrot.lane.b32.xlu0 %v2599, 127
        %v2609 = vpop.permute.xlu0 %2608
        %2610 = vrot.lane.b32.xlu0 %v2600, 127
        %v2611 = vpop.permute.xlu0 %2610
        %2612 = vrot.lane.b32.xlu0 %v2601, 127
        %v2613 = vpop.permute.xlu0 %2612
        %v2618 = vadd.f32 %v2592, %v2607
        %v2619 = vadd.f32 %v2593, %v2609
        %v2620 = vadd.f32 %v2594, %v2611
        %v2621 = vadd.f32 %v2595, %v2613
        %s2622 = sld [smem:[#allocation3 + $0x287]]
        %v2623 = vstv %s2622
        %v2624 = vmul.f32 %v730, %v2623
        %v2625 = vmul.f32 %v731, %v2623
        %v2626 = vmul.f32 %v732, %v2623
        %v2627 = vmul.f32 %v733, %v2623
        %2632 = vrot.lane.b32.xlu0 %v2624, 126
        %v2633 = vpop.permute.xlu0 %2632
        %2634 = vrot.lane.b32.xlu0 %v2625, 126
        %v2635 = vpop.permute.xlu0 %2634
        %2636 = vrot.lane.b32.xlu0 %v2626, 126
        %v2637 = vpop.permute.xlu0 %2636
        %2638 = vrot.lane.b32.xlu0 %v2627, 126
        %v2639 = vpop.permute.xlu0 %2638
        %v2644 = vadd.f32 %v2618, %v2633
        %v2645 = vadd.f32 %v2619, %v2635
        %v2646 = vadd.f32 %v2620, %v2637
        %v2647 = vadd.f32 %v2621, %v2639
        %s2648 = sld [smem:[#allocation3 + $0x307]]
        %v2649 = vstv %s2648
        %v2650 = vmul.f32 %v734, %v2649
        %v2651 = vmul.f32 %v735, %v2649
        %v2652 = vmul.f32 %v736, %v2649
        %v2653 = vmul.f32 %v737, %v2649
        %v2654 = vadd.f32 %v2644, %v2650
        %v2655 = vadd.f32 %v2645, %v2651
        %v2656 = vadd.f32 %v2646, %v2652
        %v2657 = vadd.f32 %v2647, %v2653
        %s2658 = sld [smem:[#allocation3 + $0x387]]
        %v2659 = vstv %s2658
        %v2660 = vmul.f32 %v734, %v2659
        %v2661 = vmul.f32 %v735, %v2659
        %v2662 = vmul.f32 %v736, %v2659
        %v2663 = vmul.f32 %v737, %v2659
        %2668 = vrot.lane.b32.xlu0 %v2660, 127
        %v2669 = vpop.permute.xlu0 %2668
        %2670 = vrot.lane.b32.xlu0 %v2661, 127
        %v2671 = vpop.permute.xlu0 %2670
        %2672 = vrot.lane.b32.xlu0 %v2662, 127
        %v2673 = vpop.permute.xlu0 %2672
        %2674 = vrot.lane.b32.xlu0 %v2663, 127
        %v2675 = vpop.permute.xlu0 %2674
        %v2680 = vadd.f32 %v2654, %v2669
        %v2681 = vadd.f32 %v2655, %v2671
        %v2682 = vadd.f32 %v2656, %v2673
        %v2683 = vadd.f32 %v2657, %v2675
        %s2684 = sld [smem:[#allocation3 + $0x407]]
        %v2685 = vstv %s2684
        %v2686 = vmul.f32 %v734, %v2685
        %v2687 = vmul.f32 %v735, %v2685
        %v2688 = vmul.f32 %v736, %v2685
        %v2689 = vmul.f32 %v737, %v2685
        %2694 = vrot.lane.b32.xlu0 %v2686, 126
        %v2695 = vpop.permute.xlu0 %2694
        %2696 = vrot.lane.b32.xlu0 %v2687, 126
        %v2697 = vpop.permute.xlu0 %2696
        %2698 = vrot.lane.b32.xlu0 %v2688, 126
        %v2699 = vpop.permute.xlu0 %2698
        %2700 = vrot.lane.b32.xlu0 %v2689, 126
        %v2701 = vpop.permute.xlu0 %2700
        %v2706 = vadd.f32 %v2680, %v2695
        %v2707 = vadd.f32 %v2681, %v2697
        %v2708 = vadd.f32 %v2682, %v2699
        %v2709 = vadd.f32 %v2683, %v2701
        %s2710 = sld [smem:[#allocation6 + $0x7]]
        %v2711 = vstv %s2710
        %v2712 = vadd.f32 %v2706, %v2711
        %v2713 = vadd.f32 %v2707, %v2711
        %v2714 = vadd.f32 %v2708, %v2711
        %v2715 = vadd.f32 %v2709, %v2711
        %v2716 = vmax.f32 %v2712, 0.0
        %v2717 = vmax.f32 %v2713, 0.0
        %v2718 = vmax.f32 %v2714, 0.0
        %v2719 = vmax.f32 %v2715, 0.0
        %v2720 = vsel %vm934, %v2716, 0.0
        %2721 = vadd.xlane.f32.xlu0 %v2720
        %v2722 = vpop.xlane.xlu0 %2721
        %v2723 = vsel %vm934, %v2717, 0.0
        %2724 = vadd.xlane.f32.xlu0 %v2723
        %v2725 = vpop.xlane.xlu0 %2724
        %v2726 = vsel %vm934, %v2718, 0.0
        %2727 = vadd.xlane.f32.xlu0 %v2726
        %v2728 = vpop.xlane.xlu0 %2727
        %v2729 = vsel %vm934, %v2719, 0.0
        %2730 = vadd.xlane.f32.xlu0 %v2729
        %v2731 = vpop.xlane.xlu0 %2730
        %v2732 = vadd.f32 %v2722, %v2725
        %v2733 = vadd.f32 %v2732, %v2728
        %v2734 = vadd.f32 %v2733, %v2731
        %v2735 = vrot.slane %v2734, 4
        %v2736 = vadd.f32 %v2734, %v2735
        %v2737 = vrot.slane %v2736, 2
        %v2738 = vadd.f32 %v2736, %v2737
        %v2739 = vrot.slane %v2738, 1
        %v2740 = vadd.f32 %v2738, %v2739
        %v2741 = vmul.f32 %v2740, 0.0009765625
        %v2742 = vmul.f32 %v2741, %v694
        %v2744 = vcombine.high %v2742, %v2742
        %v2746 = vunpack.c.l.s4 1966171168
        %v2747 = vunpack.c.0.s8 %v2746
        %v2748 = vlaneseq
        %v2749 = vshrl.u32 %v2748, 7
        %v2750 = vsub.s32 %v2747, %v2749
        %v2751 = vrot.slane %v2744, %v2750
        %v2752 = vcombine.high %v2751, %v2751
        %v2754 = vunpack.c.l.s4 1966171168
        %v2755 = vunpack.c.0.s8 %v2754
        %v2756 = vlaneseq
        %v2757 = vshrl.u32 %v2756, 7
        %v2758 = vsub.s32 %v2755, %v2757
        %v2759 = vrot.slane %v2752, %v2758
        %v2760 = vcombine.high %v2759, %v2759
        %v2762 = vadd.f32 %v2503, %v2760
        %s2763 = sld [smem:[#allocation8 + $0x380]]
        %v2764 = vstv %s2763
        %v2765 = vmul.f32 %v2716, %v2764
        %v2766 = vmul.f32 %v2717, %v2764
        %v2767 = vmul.f32 %v2718, %v2764
        %v2768 = vmul.f32 %v2719, %v2764
        %v2769 = vadd.f32 %v2510, %v2765
        %v2770 = vadd.f32 %v2511, %v2766
        %v2771 = vadd.f32 %v2512, %v2767
        %v2772 = vadd.f32 %v2513, %v2768
        %s2773 = sld [smem:[#allocation8 + $0x381]]
        %v2774 = vstv %s2773
        %v2775 = vmul.f32 %v2716, %v2774
        %v2776 = vmul.f32 %v2717, %v2774
        %v2777 = vmul.f32 %v2718, %v2774
        %v2778 = vmul.f32 %v2719, %v2774
        %v2779 = vadd.f32 %v2520, %v2775
        %v2780 = vadd.f32 %v2521, %v2776
        %v2781 = vadd.f32 %v2522, %v2777
        %v2782 = vadd.f32 %v2523, %v2778
        %s2783 = sld [smem:[#allocation9]]
        %v2784 = vstv %s2783
        %v2785 = vadd.f32 %v2769, %v2784
        %v2786 = vadd.f32 %v2770, %v2784
        %v2787 = vadd.f32 %v2771, %v2784
        %v2788 = vadd.f32 %v2772, %v2784
        %v2789 = vmax.f32 %v2785, 0.0
        %v2790 = vmax.f32 %v2786, 0.0
        %v2791 = vmax.f32 %v2787, 0.0
        %v2792 = vmax.f32 %v2788, 0.0
        %v2793 = vand.u32 2147483647, %v2785
        %v2794 = vand.u32 2147483647, %v2786
        %v2795 = vand.u32 2147483647, %v2787
        %v2796 = vand.u32 2147483647, %v2788
        %v2797 = vsub.f32 0.0, %v2793
        %v2798 = vsub.f32 0.0, %v2794
        %v2799 = vsub.f32 0.0, %v2795
        %v2800 = vsub.f32 0.0, %v2796
        %v2801 = vmul.f32 %v2797, 1.442695
        %v2802 = vpow.pop %v2801
        %v2803 = vmul.f32 %v2798, 1.442695
        %v2804 = vpow.pop %v2803
        %v2805 = vmul.f32 %v2799, 1.442695
        %v2806 = vpow.pop %v2805
        %v2807 = vmul.f32 %v2800, 1.442695
        %v2808 = vpow.pop %v2807
        %v2809 = vadd.f32 %v2802, 1.0
        %v2810 = vadd.f32 %v2804, 1.0
        %v2811 = vadd.f32 %v2806, 1.0
        %v2812 = vadd.f32 %v2808, 1.0
        %v2813 = vlog2.pop %v2809
        %v2814 = vmul.f32 %v2813, 0.6931472
        %v2815 = vlog2.pop %v2810
        %v2816 = vmul.f32 %v2815, 0.6931472
        %v2817 = vlog2.pop %v2811
        %v2818 = vmul.f32 %v2817, 0.6931472
        %v2819 = vlog2.pop %v2812
        %v2820 = vmul.f32 %v2819, 0.6931472
        %v2821 = vadd.f32 %v2789, %v2814
        %v2822 = vadd.f32 %v2790, %v2816
        %v2823 = vadd.f32 %v2791, %v2818
        %v2824 = vadd.f32 %v2792, %v2820
        %v2825 = vadd.f32 %v2821, 1.0
        %v2826 = vadd.f32 %v2822, 1.0
        %v2827 = vadd.f32 %v2823, 1.0
        %v2828 = vadd.f32 %v2824, 1.0
        %s2829 = sld [smem:[#allocation9 + $0x1]]
        %v2830 = vstv %s2829
        %v2831 = vadd.f32 %v2779, %v2830
        %v2832 = vadd.f32 %v2780, %v2830
        %v2833 = vadd.f32 %v2781, %v2830
        %v2834 = vadd.f32 %v2782, %v2830
        %v2835 = vmax.f32 %v2831, 0.0
        %v2836 = vmax.f32 %v2832, 0.0
        %v2837 = vmax.f32 %v2833, 0.0
        %v2838 = vmax.f32 %v2834, 0.0
        %v2839 = vand.u32 2147483647, %v2831
        %v2840 = vand.u32 2147483647, %v2832
        %v2841 = vand.u32 2147483647, %v2833
        %v2842 = vand.u32 2147483647, %v2834
        %v2843 = vsub.f32 0.0, %v2839
        %v2844 = vsub.f32 0.0, %v2840
        %v2845 = vsub.f32 0.0, %v2841
        %v2846 = vsub.f32 0.0, %v2842
        %v2847 = vmul.f32 %v2843, 1.442695
        %v2848 = vpow.pop %v2847
        %v2849 = vmul.f32 %v2844, 1.442695
        %v2850 = vpow.pop %v2849
        %v2851 = vmul.f32 %v2845, 1.442695
        %v2852 = vpow.pop %v2851
        %v2853 = vmul.f32 %v2846, 1.442695
        %v2854 = vpow.pop %v2853
        %v2855 = vadd.f32 %v2848, 1.0
        %v2856 = vadd.f32 %v2850, 1.0
        %v2857 = vadd.f32 %v2852, 1.0
        %v2858 = vadd.f32 %v2854, 1.0
        %v2859 = vlog2.pop %v2855
        %v2860 = vmul.f32 %v2859, 0.6931472
        %v2861 = vlog2.pop %v2856
        %v2862 = vmul.f32 %v2861, 0.6931472
        %v2863 = vlog2.pop %v2857
        %v2864 = vmul.f32 %v2863, 0.6931472
        %v2865 = vlog2.pop %v2858
        %v2866 = vmul.f32 %v2865, 0.6931472
        %v2867 = vadd.f32 %v2835, %v2860
        %v2868 = vadd.f32 %v2836, %v2862
        %v2869 = vadd.f32 %v2837, %v2864
        %v2870 = vadd.f32 %v2838, %v2866
        %v2871 = vadd.f32 %v2867, 1.0
        %v2872 = vadd.f32 %v2868, 1.0
        %v2873 = vadd.f32 %v2869, 1.0
        %v2874 = vadd.f32 %v2870, 1.0
        %v2875 = vadd.f32 %v2825, %v2871
        %v2876 = vadd.f32 %v2826, %v2872
        %v2877 = vadd.f32 %v2827, %v2873
        %v2878 = vadd.f32 %v2828, %v2874
        %v2879 = vrcp.pop %v2875
        %v2880 = vmul.f32 %v2871, %v2879
        %v2881 = vrcp.pop %v2876
        %v2882 = vmul.f32 %v2872, %v2881
        %v2883 = vrcp.pop %v2877
        %v2884 = vmul.f32 %v2873, %v2883
        %v2885 = vrcp.pop %v2878
        %v2886 = vmul.f32 %v2874, %v2885
        %2887 = vst.msk [vmem:[%s671] sm:$0xff] %vm934, %v2880
        %2888 = vst.msk [vmem:[%s671 + $0x8] sm:$0xff] %vm934, %v2882
        %2889 = vst.msk [vmem:[%s671 + $0x10] sm:$0xff] %vm934, %v2884
        %2890 = vst.msk [vmem:[%s671 + $0x18] sm:$0xff] %vm934, %v2886
        %2891 = vst.msk [vmem:[%s678] sm:$0xff] %vm934, %v2825
        %2892 = vst.msk [vmem:[%s678 + $0x8] sm:$0xff] %vm934, %v2826
        %2893 = vst.msk [vmem:[%s678 + $0x10] sm:$0xff] %vm934, %v2827
        %2894 = vst.msk [vmem:[%s678 + $0x18] sm:$0xff] %vm934, %v2828
        %s2895 = scalar_lea.vmem %s678, 32 [#allocation16]
        %2896 = vst.msk [vmem:[%s2895] sm:$0xff] %vm934, %v2871
        %2897 = vst.msk [vmem:[%s2895 + $0x8] sm:$0xff] %vm934, %v2872
        %2898 = vst.msk [vmem:[%s2895 + $0x10] sm:$0xff] %vm934, %v2873
        %2899 = vst.msk [vmem:[%s2895 + $0x18] sm:$0xff] %vm934, %v2874
        %v2900 = vsel %vm934, %v2880, 0.0
        %2901 = vadd.xlane.f32.xlu0 %v2900
        %v2902 = vpop.xlane.xlu0 %2901
        %v2903 = vsel %vm934, %v2882, 0.0
        %2904 = vadd.xlane.f32.xlu0 %v2903
        %v2905 = vpop.xlane.xlu0 %2904
        %v2906 = vsel %vm934, %v2884, 0.0
        %2907 = vadd.xlane.f32.xlu0 %v2906
        %v2908 = vpop.xlane.xlu0 %2907
        %v2909 = vsel %vm934, %v2886, 0.0
        %2910 = vadd.xlane.f32.xlu0 %v2909
        %v2911 = vpop.xlane.xlu0 %2910
        %v2912 = vadd.f32 %v2902, %v2905
        %v2913 = vadd.f32 %v2912, %v2908
        %v2914 = vadd.f32 %v2913, %v2911
        %v2915 = vrot.slane %v2914, 4
        %v2916 = vadd.f32 %v2914, %v2915
        %v2917 = vrot.slane %v2916, 2
        %v2918 = vadd.f32 %v2916, %v2917
        %v2919 = vrot.slane %v2918, 1
        %v2920 = vadd.f32 %v2918, %v2919
        %v2921 = vmul.f32 %v2920, 0.0009765625
        %v2923 = vsel %vm934, %v698, 0
        %2925 = vmatprep.subr.mxu0 0.0
        %2926 = vmatpush1.msra.mxu0 %v2880
        %2927 = vmatprep.subr.mxu0 0.0
        %2928 = vmatpush1.msra.mxu0 %v2882
        %2929 = vmatprep.subr.mxu0 0.0
        %2930 = vmatpush1.msra.mxu0 %v2884
        %2931 = vmatprep.subr.mxu0 0.0
        %2932 = vmatpush1.msra.mxu0 %v2886
        %2933 = vmatprep.subr.mxu0 0.0
        %2934 = vmatpush1.msra.mxu0 0.0
        %2935 = vmatprep.subr.mxu0 0.0
        %2936 = vmatpush1.msra.mxu0 0.0
        %2937 = vmatprep.subr.mxu0 0.0
        %2938 = vmatpush1.msra.mxu0 0.0
        %2939 = vmatprep.subr.mxu0 0.0
        %2940 = vmatpush1.msra.mxu0 0.0
        %2941 = vmatprep.subr.mxu0 0.0
        %2942 = vmatpush1.msra.mxu0 0.0
        %2943 = vmatprep.subr.mxu0 0.0
        %2944 = vmatpush1.msra.mxu0 0.0
        %2945 = vmatprep.subr.mxu0 0.0
        %2946 = vmatpush1.msra.mxu0 0.0
        %2947 = vmatprep.subr.mxu0 0.0
        %2948 = vmatpush1.msra.mxu0 0.0
        %2949 = vmatprep.subr.mxu0 0.0
        %2950 = vmatpush1.msra.mxu0 0.0
        %2951 = vmatprep.subr.mxu0 0.0
        %2952 = vmatpush1.msra.mxu0 0.0
        %2953 = vmatprep.subr.mxu0 0.0
        %2954 = vmatpush1.msra.mxu0 0.0
        %2955 = vmatprep.subr.mxu0 0.0
        %2956 = vmatpush1.msra.mxu0 0.0
        %2957 = vmatprep.subr.mxu0 0.0
        %2958 = vmatpush1.msra.mxu0 0.0
        %2959 = vmatprep.subr.mxu0 0.0
        %2960 = vmatpush1.msra.mxu0 0.0
        %2961 = vmatprep.subr.mxu0 0.0
        %2962 = vmatpush1.msra.mxu0 0.0
        %2963 = vmatprep.subr.mxu0 0.0
        %2964 = vmatpush1.msra.mxu0 0.0
        %2965 = vmatprep.subr.mxu0 0.0
        %2966 = vmatpush1.msra.mxu0 0.0
        %2967 = vmatprep.subr.mxu0 0.0
        %2968 = vmatpush1.msra.mxu0 0.0
        %2969 = vmatprep.subr.mxu0 0.0
        %2970 = vmatpush1.msra.mxu0 0.0
        %2971 = vmatprep.subr.mxu0 0.0
        %2972 = vmatpush1.msra.mxu0 0.0
        %2973 = vmatprep.subr.mxu0 0.0
        %2974 = vmatpush1.msra.mxu0 0.0
        %2975 = vmatprep.subr.mxu0 0.0
        %2976 = vmatpush1.msra.mxu0 0.0
        %2977 = vmatprep.subr.mxu0 0.0
        %2978 = vmatpush1.msra.mxu0 0.0
        %2979 = vmatprep.subr.mxu0 0.0
        %2980 = vmatpush1.msra.mxu0 0.0
        %2981 = vmatprep.subr.mxu0 0.0
        %2982 = vmatpush1.msra.mxu0 0.0
        %2983 = vmatprep.subr.mxu0 0.0
        %2984 = vmatpush1.msra.mxu0 0.0
        %2985 = vmatprep.subr.mxu0 0.0
        %2986 = vmatpush1.msra.mxu0 0.0
        %2987 = vmatprep.subr.mxu0 0.0
        %2988 = vmatpush1.msra.mxu0 0.0
        %2989 = vmatprep.mubr.f32.mxu0 0.0
        %2990 = vmatmul.mubr.f32.gmra.mrb[0].mxu0 %v2923
        %v2991 = vpop.f32.mrb[0].mxu0
        %v2992 = vadd.f32 0.0, %v2991
        %v2993 = vpop.f32.mrb[0].mxu0
        %2994 = vdwg.mxu0
        %v2996 = vsel %vm934, %v2992, 0
        %2998 = vmatprep.subr.mxu0 0.0
        %2999 = vmatpush1.msra.mxu0 %v699
        %3000 = vmatprep.subr.mxu0 0.0
        %3001 = vmatpush1.msra.mxu0 %v700
        %3002 = vmatprep.subr.mxu0 0.0
        %3003 = vmatpush1.msra.mxu0 %v701
        %3004 = vmatprep.subr.mxu0 0.0
        %3005 = vmatpush1.msra.mxu0 %v702
        %3006 = vmatprep.subr.mxu0 0.0
        %3007 = vmatpush1.msra.mxu0 0.0
        %3008 = vmatprep.subr.mxu0 0.0
        %3009 = vmatpush1.msra.mxu0 0.0
        %3010 = vmatprep.subr.mxu0 0.0
        %3011 = vmatpush1.msra.mxu0 0.0
        %3012 = vmatprep.subr.mxu0 0.0
        %3013 = vmatpush1.msra.mxu0 0.0
        %3014 = vmatprep.subr.mxu0 0.0
        %3015 = vmatpush1.msra.mxu0 0.0
        %3016 = vmatprep.subr.mxu0 0.0
        %3017 = vmatpush1.msra.mxu0 0.0
        %3018 = vmatprep.subr.mxu0 0.0
        %3019 = vmatpush1.msra.mxu0 0.0
        %3020 = vmatprep.subr.mxu0 0.0
        %3021 = vmatpush1.msra.mxu0 0.0
        %3022 = vmatprep.subr.mxu0 0.0
        %3023 = vmatpush1.msra.mxu0 0.0
        %3024 = vmatprep.subr.mxu0 0.0
        %3025 = vmatpush1.msra.mxu0 0.0
        %3026 = vmatprep.subr.mxu0 0.0
        %3027 = vmatpush1.msra.mxu0 0.0
        %3028 = vmatprep.subr.mxu0 0.0
        %3029 = vmatpush1.msra.mxu0 0.0
        %3030 = vmatprep.subr.mxu0 0.0
        %3031 = vmatpush1.msra.mxu0 0.0
        %3032 = vmatprep.subr.mxu0 0.0
        %3033 = vmatpush1.msra.mxu0 0.0
        %3034 = vmatprep.subr.mxu0 0.0
        %3035 = vmatpush1.msra.mxu0 0.0
        %3036 = vmatprep.subr.mxu0 0.0
        %3037 = vmatpush1.msra.mxu0 0.0
        %3038 = vmatprep.subr.mxu0 0.0
        %3039 = vmatpush1.msra.mxu0 0.0
        %3040 = vmatprep.subr.mxu0 0.0
        %3041 = vmatpush1.msra.mxu0 0.0
        %3042 = vmatprep.subr.mxu0 0.0
        %3043 = vmatpush1.msra.mxu0 0.0
        %3044 = vmatprep.subr.mxu0 0.0
        %3045 = vmatpush1.msra.mxu0 0.0
        %3046 = vmatprep.subr.mxu0 0.0
        %3047 = vmatpush1.msra.mxu0 0.0
        %3048 = vmatprep.subr.mxu0 0.0
        %3049 = vmatpush1.msra.mxu0 0.0
        %3050 = vmatprep.subr.mxu0 0.0
        %3051 = vmatpush1.msra.mxu0 0.0
        %3052 = vmatprep.subr.mxu0 0.0
        %3053 = vmatpush1.msra.mxu0 0.0
        %3054 = vmatprep.subr.mxu0 0.0
        %3055 = vmatpush1.msra.mxu0 0.0
        %3056 = vmatprep.subr.mxu0 0.0
        %3057 = vmatpush1.msra.mxu0 0.0
        %3058 = vmatprep.subr.mxu0 0.0
        %3059 = vmatpush1.msra.mxu0 0.0
        %3060 = vmatprep.subr.mxu0 0.0
        %3061 = vmatpush1.msra.mxu0 0.0
        %3062 = vmatprep.mubr.f32.mxu0 0.0
        %3063 = vmatmul.mubr.f32.gmra.mrb[0].mxu0 %v2996
        %v3064 = vpop.f32.mrb[0].mxu0
        %v3065 = vadd.f32 0.0, %v3064
        %v3066 = vpop.f32.mrb[0].mxu0
        %3067 = vdwg.mxu0
        %v3068 = vmul.f32 %v3065, 0.015625
        %vm3069 = vcmask 27648
        %v3070 = vsel %vm3069, %v3068, -inf
        %3071 = vmax.xlane.f32.xlu0 %v3070
        %v3072 = vpop.xlane.xlu0 %3071
        %vm3073 = vcmask 1043456
        %v3074 = vsel %vm3073, %v3072, -inf
        %v3075 = vrot.slane %v3074, 4
        %v3076 = vmax.f32 %v3074, %v3075
        %v3077 = vrot.slane %v3076, 2
        %v3078 = vmax.f32 %v3076, %v3077
        %v3079 = vrot.slane %v3078, 1
        %v3080 = vmax.f32 %v3078, %v3079
        %vm3081 = vcmp.ge.f32.partialorder %v3068, %v3080
        %v3082 = vsel %vm3081, %v709, 1e+09
        %v3083 = vsel %vm3069, %v3082, inf
        %3084 = vmin.xlane.f32.xlu0 %v3083
        %v3085 = vpop.xlane.xlu0 %3084
        %v3086 = vsel %vm3073, %v3085, inf
        %v3087 = vrot.slane %v3086, 4
        %v3088 = vmin.f32 %v3086, %v3087
        %v3089 = vrot.slane %v3088, 2
        %v3090 = vmin.f32 %v3088, %v3089
        %v3091 = vrot.slane %v3090, 1
        %v3092 = vmin.f32 %v3090, %v3091
        %vm3093 = vcmp.le.f32.partialorder %v3082, %v3092
        %v3094 = vsel %vm3093, 1, 0
        %v3095 = vcvt.s32.f32 %v3094
        %v3096 = vsel %vm3093, -1e+30, %v3068
        %v3097 = vsel %vm3069, %v3096, -inf
        %3098 = vmax.xlane.f32.xlu0 %v3097
        %v3099 = vpop.xlane.xlu0 %3098
        %v3100 = vsel %vm3073, %v3099, -inf
        %v3101 = vrot.slane %v3100, 4
        %v3102 = vmax.f32 %v3100, %v3101
        %v3103 = vrot.slane %v3102, 2
        %v3104 = vmax.f32 %v3102, %v3103
        %v3105 = vrot.slane %v3104, 1
        %v3106 = vmax.f32 %v3104, %v3105
        %vm3107 = vcmp.ge.f32.partialorder %v3096, %v3106
        %v3108 = vsel %vm3107, %v709, 1e+09
        %v3109 = vsel %vm3069, %v3108, inf
        %3110 = vmin.xlane.f32.xlu0 %v3109
        %v3111 = vpop.xlane.xlu0 %3110
        %v3112 = vsel %vm3073, %v3111, inf
        %v3113 = vrot.slane %v3112, 4
        %v3114 = vmin.f32 %v3112, %v3113
        %v3115 = vrot.slane %v3114, 2
        %v3116 = vmin.f32 %v3114, %v3115
        %v3117 = vrot.slane %v3116, 1
        %v3118 = vmin.f32 %v3116, %v3117
        %vm3119 = vcmp.le.f32.partialorder %v3108, %v3118
        %v3120 = vsel %vm3119, 1, 0
        %v3121 = vcvt.s32.f32 %v3120
        %v3122 = vld [vmem:[%s690] sm:$0xff]
        %v3123 = vld [vmem:[%s690 + $0x8] sm:$0x3]
        %v3124 = vld [vmem:[%s690 + $0x8] sm:$0xff]
        %v3125 = vld [vmem:[%s690 + $0x10] sm:$0x3]
        %v3126 = vld [vmem:[%s690 + $0x10] sm:$0xff]
        %v3127 = vld [vmem:[%s690 + $0x18] sm:$0x3]
        %v3128 = vld [vmem:[%s690 + $0x18] sm:$0xff]
        %v3129 = vld [vmem:[%s690 + $0x20] sm:$0x3]
        %s3131 = vtos %v3095
        %v3132 = vstv %s3131
        %v3134 = vmul.f32 %v3132, %v3122
        %v3135 = vmul.f32 %v3132, %v3123
        %v3136 = vadd.f32 %v3134, 0.0
        %v3137 = vadd.f32 %v3135, 0.0
        %3138 = vrot.lane.b32.xlu0 %v3095, 127
        %v3139 = vpop.permute.xlu0 %3138
        %s3140 = vtos %v3139
        %v3141 = vstv %s3140
        %v3143 = vmul.f32 %v3141, %v3122
        %v3144 = vmul.f32 %v3141, %v3123
        %3147 = vrot.lane.b32.xlu0 %v3143, 120
        %v3148 = vpop.permute.xlu0 %3147
        %3149 = vrot.lane.b32.xlu0 %v3144, 120
        %v3150 = vpop.permute.xlu0 %3149
        %v3153 = vadd.f32 %v3136, %v3148
        %v3154 = vadd.f32 %v3137, %v3150
        %3155 = vrot.lane.b32.xlu0 %v3095, 126
        %v3156 = vpop.permute.xlu0 %3155
        %s3157 = vtos %v3156
        %v3158 = vstv %s3157
        %v3160 = vmul.f32 %v3158, %v3122
        %v3161 = vmul.f32 %v3158, %v3123
        %3164 = vrot.lane.b32.xlu0 %v3160, 112
        %v3165 = vpop.permute.xlu0 %3164
        %3166 = vrot.lane.b32.xlu0 %v3161, 112
        %v3167 = vpop.permute.xlu0 %3166
        %v3170 = vadd.f32 %v3153, %v3165
        %v3171 = vadd.f32 %v3154, %v3167
        %3172 = vrot.lane.b32.xlu0 %v3095, 125
        %v3173 = vpop.permute.xlu0 %3172
        %s3174 = vtos %v3173
        %v3175 = vstv %s3174
        %v3177 = vmul.f32 %v3175, %v3122
        %v3178 = vmul.f32 %v3175, %v3123
        %3181 = vrot.lane.b32.xlu0 %v3177, 104
        %v3182 = vpop.permute.xlu0 %3181
        %3183 = vrot.lane.b32.xlu0 %v3178, 104
        %v3184 = vpop.permute.xlu0 %3183
        %v3187 = vadd.f32 %v3170, %v3182
        %v3188 = vadd.f32 %v3171, %v3184
        %v3189 = vrot.slane %v3095, 1
        %s3190 = vtos %v3189
        %v3191 = vstv %s3190
        %v3193 = vmul.f32 %v3191, %v3124
        %v3194 = vmul.f32 %v3191, %v3125
        %v3195 = vadd.f32 %v3187, %v3193
        %v3196 = vadd.f32 %v3188, %v3194
        %3197 = vrot.lane.b32.xlu0 %v3189, 127
        %v3198 = vpop.permute.xlu0 %3197
        %s3199 = vtos %v3198
        %v3200 = vstv %s3199
        %v3202 = vmul.f32 %v3200, %v3124
        %v3203 = vmul.f32 %v3200, %v3125
        %3206 = vrot.lane.b32.xlu0 %v3202, 120
        %v3207 = vpop.permute.xlu0 %3206
        %3208 = vrot.lane.b32.xlu0 %v3203, 120
        %v3209 = vpop.permute.xlu0 %3208
        %v3212 = vadd.f32 %v3195, %v3207
        %v3213 = vadd.f32 %v3196, %v3209
        %3214 = vrot.lane.b32.xlu0 %v3189, 126
        %v3215 = vpop.permute.xlu0 %3214
        %s3216 = vtos %v3215
        %v3217 = vstv %s3216
        %v3219 = vmul.f32 %v3217, %v3124
        %v3220 = vmul.f32 %v3217, %v3125
        %3223 = vrot.lane.b32.xlu0 %v3219, 112
        %v3224 = vpop.permute.xlu0 %3223
        %3225 = vrot.lane.b32.xlu0 %v3220, 112
        %v3226 = vpop.permute.xlu0 %3225
        %v3229 = vadd.f32 %v3212, %v3224
        %v3230 = vadd.f32 %v3213, %v3226
        %3231 = vrot.lane.b32.xlu0 %v3189, 125
        %v3232 = vpop.permute.xlu0 %3231
        %s3233 = vtos %v3232
        %v3234 = vstv %s3233
        %v3236 = vmul.f32 %v3234, %v3124
        %v3237 = vmul.f32 %v3234, %v3125
        %3240 = vrot.lane.b32.xlu0 %v3236, 104
        %v3241 = vpop.permute.xlu0 %3240
        %3242 = vrot.lane.b32.xlu0 %v3237, 104
        %v3243 = vpop.permute.xlu0 %3242
        %v3246 = vadd.f32 %v3229, %v3241
        %v3247 = vadd.f32 %v3230, %v3243
        %v3248 = vrot.slane %v3095, 2
        %s3249 = vtos %v3248
        %v3250 = vstv %s3249
        %v3252 = vmul.f32 %v3250, %v3126
        %v3253 = vmul.f32 %v3250, %v3127
        %v3254 = vadd.f32 %v3246, %v3252
        %v3255 = vadd.f32 %v3247, %v3253
        %3256 = vrot.lane.b32.xlu0 %v3248, 127
        %v3257 = vpop.permute.xlu0 %3256
        %s3258 = vtos %v3257
        %v3259 = vstv %s3258
        %v3261 = vmul.f32 %v3259, %v3126
        %v3262 = vmul.f32 %v3259, %v3127
        %3265 = vrot.lane.b32.xlu0 %v3261, 120
        %v3266 = vpop.permute.xlu0 %3265
        %3267 = vrot.lane.b32.xlu0 %v3262, 120
        %v3268 = vpop.permute.xlu0 %3267
        %v3271 = vadd.f32 %v3254, %v3266
        %v3272 = vadd.f32 %v3255, %v3268
        %3273 = vrot.lane.b32.xlu0 %v3248, 126
        %v3274 = vpop.permute.xlu0 %3273
        %s3275 = vtos %v3274
        %v3276 = vstv %s3275
        %v3278 = vmul.f32 %v3276, %v3126
        %v3279 = vmul.f32 %v3276, %v3127
        %3282 = vrot.lane.b32.xlu0 %v3278, 112
        %v3283 = vpop.permute.xlu0 %3282
        %3284 = vrot.lane.b32.xlu0 %v3279, 112
        %v3285 = vpop.permute.xlu0 %3284
        %v3288 = vadd.f32 %v3271, %v3283
        %v3289 = vadd.f32 %v3272, %v3285
        %3290 = vrot.lane.b32.xlu0 %v3248, 125
        %v3291 = vpop.permute.xlu0 %3290
        %s3292 = vtos %v3291
        %v3293 = vstv %s3292
        %v3295 = vmul.f32 %v3293, %v3126
        %v3296 = vmul.f32 %v3293, %v3127
        %3299 = vrot.lane.b32.xlu0 %v3295, 104
        %v3300 = vpop.permute.xlu0 %3299
        %3301 = vrot.lane.b32.xlu0 %v3296, 104
        %v3302 = vpop.permute.xlu0 %3301
        %v3305 = vadd.f32 %v3288, %v3300
        %v3306 = vadd.f32 %v3289, %v3302
        %v3307 = vrot.slane %v3095, 3
        %s3308 = vtos %v3307
        %v3309 = vstv %s3308
        %v3311 = vmul.f32 %v3309, %v3128
        %v3312 = vmul.f32 %v3309, %v3129
        %v3313 = vadd.f32 %v3305, %v3311
        %v3314 = vadd.f32 %v3306, %v3312
        %3315 = vrot.lane.b32.xlu0 %v3307, 127
        %v3316 = vpop.permute.xlu0 %3315
        %s3317 = vtos %v3316
        %v3318 = vstv %s3317
        %v3320 = vmul.f32 %v3318, %v3128
        %v3321 = vmul.f32 %v3318, %v3129
        %3324 = vrot.lane.b32.xlu0 %v3320, 120
        %v3325 = vpop.permute.xlu0 %3324
        %3326 = vrot.lane.b32.xlu0 %v3321, 120
        %v3327 = vpop.permute.xlu0 %3326
        %v3330 = vadd.f32 %v3313, %v3325
        %v3331 = vadd.f32 %v3314, %v3327
        %3332 = vrot.lane.b32.xlu0 %v3307, 126
        %v3333 = vpop.permute.xlu0 %3332
        %s3334 = vtos %v3333
        %v3335 = vstv %s3334
        %v3337 = vmul.f32 %v3335, %v3128
        %v3338 = vmul.f32 %v3335, %v3129
        %3341 = vrot.lane.b32.xlu0 %v3337, 112
        %v3342 = vpop.permute.xlu0 %3341
        %3343 = vrot.lane.b32.xlu0 %v3338, 112
        %v3344 = vpop.permute.xlu0 %3343
        %v3347 = vadd.f32 %v3330, %v3342
        %v3348 = vadd.f32 %v3331, %v3344
        %3349 = vrot.lane.b32.xlu0 %v3307, 125
        %v3350 = vpop.permute.xlu0 %3349
        %s3351 = vtos %v3350
        %v3352 = vstv %s3351
        %v3354 = vmul.f32 %v3352, %v3128
        %v3355 = vmul.f32 %v3352, %v3129
        %3358 = vrot.lane.b32.xlu0 %v3354, 104
        %v3359 = vpop.permute.xlu0 %3358
        %3360 = vrot.lane.b32.xlu0 %v3355, 104
        %v3361 = vpop.permute.xlu0 %3360
        %v3364 = vadd.f32 %v3347, %v3359
        %v3365 = vadd.f32 %v3348, %v3361
        %v3366 = vmul.f32 %v3364, %v724
        %v3367 = vmul.f32 %v3365, %v725
        %3370 = vrot.lane.b32.xlu0 %v3364, 127
        %v3371 = vpop.permute.xlu0 %3370
        %3372 = vrot.lane.b32.xlu0 %v3365, 127
        %v3373 = vpop.permute.xlu0 %3372
        %vm3376 = vcmask 64513
        %3377 = vst.msk [vmem:[%s685 - $0x1] sm:$0xfe] %vm3376, %v3371
        %vm3378 = vcmask 57344
        %3379 = vst.msk [vmem:[%s685 + $0x7] sm:$0x1] %vm3378, %v3373
        %s3380 = sld [smem:[#allocation2]]
        %v3381 = vstv %s3380
        %v3382 = vadd.f32 %v3381, 0.0
        %s3383 = sld [smem:[#allocation11]]
        %v3384 = vstv %s3383
        %v3385 = vmul.f32 %v3366, %v3384
        %v3386 = vadd.f32 %v3385, 0.0
        %s3387 = sld [smem:[#allocation11 + $0x80]]
        %v3388 = vstv %s3387
        %v3389 = vmul.f32 %v3366, %v3388
        %3391 = vrot.lane.b32.xlu0 %v3389, 127
        %v3392 = vpop.permute.xlu0 %3391
        %v3394 = vadd.f32 %v3386, %v3392
        %s3395 = sld [smem:[#allocation11 + $0x100]]
        %v3396 = vstv %s3395
        %v3397 = vmul.f32 %v3366, %v3396
        %3399 = vrot.lane.b32.xlu0 %v3397, 126
        %v3400 = vpop.permute.xlu0 %3399
        %v3402 = vadd.f32 %v3394, %v3400
        %s3403 = sld [smem:[#allocation11 + $0x180]]
        %v3404 = vstv %s3403
        %v3405 = vmul.f32 %v3366, %v3404
        %v3406 = vmul.f32 %v3367, %v3404
        %vm3409 = vcmask 1046528
        %v3410 = vrot.slane %v3405, 1
        %v3411 = vrot.slane %v3406, 1
        %v3412 = vsel %vm3409, %v3410, %v3411
        %v3414 = vadd.f32 %v3402, %v3412
        %s3415 = sld [smem:[#allocation11 + $0x200]]
        %v3416 = vstv %s3415
        %v3417 = vmul.f32 %v3366, %v3416
        %v3418 = vmul.f32 %v3367, %v3416
        %v3421 = vrot.slane %v3417, 1
        %v3422 = vrot.slane %v3418, 1
        %v3423 = vsel %vm3409, %v3421, %v3422
        %3424 = vrot.lane.b32.xlu0 %v3423, 127
        %v3425 = vpop.permute.xlu0 %3424
        %v3427 = vadd.f32 %v3414, %v3425
        %s3428 = sld [smem:[#allocation11 + $0x280]]
        %v3429 = vstv %s3428
        %v3430 = vmul.f32 %v3366, %v3429
        %v3431 = vmul.f32 %v3367, %v3429
        %v3434 = vrot.slane %v3430, 1
        %v3435 = vrot.slane %v3431, 1
        %v3436 = vsel %vm3409, %v3434, %v3435
        %3437 = vrot.lane.b32.xlu0 %v3436, 126
        %v3438 = vpop.permute.xlu0 %3437
        %v3440 = vadd.f32 %v3427, %v3438
        %s3441 = sld [smem:[#allocation11 + $0x300]]
        %v3442 = vstv %s3441
        %v3443 = vmul.f32 %v3366, %v3442
        %v3444 = vmul.f32 %v3367, %v3442
        %vm3447 = vcmask 1045504
        %v3448 = vrot.slane %v3443, 2
        %v3449 = vrot.slane %v3444, 2
        %v3450 = vsel %vm3447, %v3448, %v3449
        %v3452 = vadd.f32 %v3440, %v3450
        %s3453 = sld [smem:[#allocation11 + $0x380]]
        %v3454 = vstv %s3453
        %v3455 = vmul.f32 %v3366, %v3454
        %v3456 = vmul.f32 %v3367, %v3454
        %v3459 = vrot.slane %v3455, 2
        %v3460 = vrot.slane %v3456, 2
        %v3461 = vsel %vm3447, %v3459, %v3460
        %3462 = vrot.lane.b32.xlu0 %v3461, 127
        %v3463 = vpop.permute.xlu0 %3462
        %v3465 = vadd.f32 %v3452, %v3463
        %s3466 = sld [smem:[#allocation11 + $0x400]]
        %v3467 = vstv %s3466
        %v3468 = vmul.f32 %v3366, %v3467
        %v3469 = vmul.f32 %v3367, %v3467
        %v3472 = vrot.slane %v3468, 2
        %v3473 = vrot.slane %v3469, 2
        %v3474 = vsel %vm3447, %v3472, %v3473
        %3475 = vrot.lane.b32.xlu0 %v3474, 126
        %v3476 = vpop.permute.xlu0 %3475
        %v3478 = vadd.f32 %v3465, %v3476
        %s3479 = sld [smem:[#allocation12]]
        %v3480 = vstv %s3479
        %v3481 = vadd.f32 %v3478, %v3480
        %v3482 = vmax.f32 %v3481, 0.0
        %vm3483 = vcmask 64512
        %v3484 = vsel %vm3483, %v3482, 0.0
        %3485 = vadd.xlane.f32.xlu0 %v3484
        %v3486 = vpop.xlane.xlu0 %3485
        %v3487 = vrot.slane %v3486, 4
        %v3488 = vadd.f32 %v3486, %v3487
        %v3489 = vrot.slane %v3488, 2
        %v3490 = vadd.f32 %v3488, %v3489
        %v3491 = vrot.slane %v3490, 1
        %v3492 = vadd.f32 %v3490, %v3491
        %v3493 = vmul.f32 %v3492, 0.015625
        %v3494 = vmul.f32 %v3493, %v696
        %v3495 = vadd.f32 %v697, %v3494
        %s3496 = sld [smem:[#allocation14]]
        %v3497 = vstv %s3496
        %v3498 = vmul.f32 %v3493, %v3497
        %v3499 = vadd.f32 %v3382, %v3498
        %s3500 = sld [smem:[#allocation11 + $0x1]]
        %v3501 = vstv %s3500
        %v3502 = vmul.f32 %v3366, %v3501
        %v3503 = vadd.f32 %v3502, 0.0
        %s3504 = sld [smem:[#allocation11 + $0x81]]
        %v3505 = vstv %s3504
        %v3506 = vmul.f32 %v3366, %v3505
        %3508 = vrot.lane.b32.xlu0 %v3506, 127
        %v3509 = vpop.permute.xlu0 %3508
        %v3511 = vadd.f32 %v3503, %v3509
        %s3512 = sld [smem:[#allocation11 + $0x101]]
        %v3513 = vstv %s3512
        %v3514 = vmul.f32 %v3366, %v3513
        %3516 = vrot.lane.b32.xlu0 %v3514, 126
        %v3517 = vpop.permute.xlu0 %3516
        %v3519 = vadd.f32 %v3511, %v3517
        %s3520 = sld [smem:[#allocation11 + $0x181]]
        %v3521 = vstv %s3520
        %v3522 = vmul.f32 %v3366, %v3521
        %v3523 = vmul.f32 %v3367, %v3521
        %v3526 = vrot.slane %v3522, 1
        %v3527 = vrot.slane %v3523, 1
        %v3528 = vsel %vm3409, %v3526, %v3527
        %v3530 = vadd.f32 %v3519, %v3528
        %s3531 = sld [smem:[#allocation11 + $0x201]]
        %v3532 = vstv %s3531
        %v3533 = vmul.f32 %v3366, %v3532
        %v3534 = vmul.f32 %v3367, %v3532
        %v3537 = vrot.slane %v3533, 1
        %v3538 = vrot.slane %v3534, 1
        %v3539 = vsel %vm3409, %v3537, %v3538
        %3540 = vrot.lane.b32.xlu0 %v3539, 127
        %v3541 = vpop.permute.xlu0 %3540
        %v3543 = vadd.f32 %v3530, %v3541
        %s3544 = sld [smem:[#allocation11 + $0x281]]
        %v3545 = vstv %s3544
        %v3546 = vmul.f32 %v3366, %v3545
        %v3547 = vmul.f32 %v3367, %v3545
        %v3550 = vrot.slane %v3546, 1
        %v3551 = vrot.slane %v3547, 1
        %v3552 = vsel %vm3409, %v3550, %v3551
        %3553 = vrot.lane.b32.xlu0 %v3552, 126
        %v3554 = vpop.permute.xlu0 %3553
        %v3556 = vadd.f32 %v3543, %v3554
        %s3557 = sld [smem:[#allocation11 + $0x301]]
        %v3558 = vstv %s3557
        %v3559 = vmul.f32 %v3366, %v3558
        %v3560 = vmul.f32 %v3367, %v3558
        %v3563 = vrot.slane %v3559, 2
        %v3564 = vrot.slane %v3560, 2
        %v3565 = vsel %vm3447, %v3563, %v3564
        %v3567 = vadd.f32 %v3556, %v3565
        %s3568 = sld [smem:[#allocation11 + $0x381]]
        %v3569 = vstv %s3568
        %v3570 = vmul.f32 %v3366, %v3569
        %v3571 = vmul.f32 %v3367, %v3569
        %v3574 = vrot.slane %v3570, 2
        %v3575 = vrot.slane %v3571, 2
        %v3576 = vsel %vm3447, %v3574, %v3575
        %3577 = vrot.lane.b32.xlu0 %v3576, 127
        %v3578 = vpop.permute.xlu0 %3577
        %v3580 = vadd.f32 %v3567, %v3578
        %s3581 = sld [smem:[#allocation11 + $0x401]]
        %v3582 = vstv %s3581
        %v3583 = vmul.f32 %v3366, %v3582
        %v3584 = vmul.f32 %v3367, %v3582
        %v3587 = vrot.slane %v3583, 2
        %v3588 = vrot.slane %v3584, 2
        %v3589 = vsel %vm3447, %v3587, %v3588
        %3590 = vrot.lane.b32.xlu0 %v3589, 126
        %v3591 = vpop.permute.xlu0 %3590
        %v3593 = vadd.f32 %v3580, %v3591
        %s3594 = sld [smem:[#allocation12 + $0x1]]
        %v3595 = vstv %s3594
        %v3596 = vadd.f32 %v3593, %v3595
        %v3597 = vmax.f32 %v3596, 0.0
        %v3598 = vsel %vm3483, %v3597, 0.0
        %3599 = vadd.xlane.f32.xlu0 %v3598
        %v3600 = vpop.xlane.xlu0 %3599
        %v3601 = vrot.slane %v3600, 4
        %v3602 = vadd.f32 %v3600, %v3601
        %v3603 = vrot.slane %v3602, 2
        %v3604 = vadd.f32 %v3602, %v3603
        %v3605 = vrot.slane %v3604, 1
        %v3606 = vadd.f32 %v3604, %v3605
        %v3607 = vmul.f32 %v3606, 0.015625
        %v3608 = vmul.f32 %v3607, %v696
        %v3611 = vunpack.c.l.s4 1966171168
        %v3612 = vunpack.c.0.s8 %v3611
        %v3613 = vlaneseq
        %v3614 = vshrl.u32 %v3613, 7
        %v3615 = vsub.s32 %v3612, %v3614
        %v3616 = vrot.slane %v3608, %v3615
        %v3617 = vcombine.high %v3616, %v3616
        %v3619 = vunpack.c.l.s4 1966171168
        %v3620 = vunpack.c.0.s8 %v3619
        %v3621 = vlaneseq
        %v3622 = vshrl.u32 %v3621, 7
        %v3623 = vsub.s32 %v3620, %v3622
        %v3624 = vrot.slane %v3617, %v3623
        %v3626 = vadd.f32 %v3495, %v3624
        %s3627 = sld [smem:[#allocation14 + $0x80]]
        %v3628 = vstv %s3627
        %v3629 = vmul.f32 %v3607, %v3628
        %v3630 = vadd.f32 %v3499, %v3629
        %s3631 = sld [smem:[#allocation11 + $0x2]]
        %v3632 = vstv %s3631
        %v3633 = vmul.f32 %v3366, %v3632
        %v3634 = vadd.f32 %v3633, 0.0
        %s3635 = sld [smem:[#allocation11 + $0x82]]
        %v3636 = vstv %s3635
        %v3637 = vmul.f32 %v3366, %v3636
        %3639 = vrot.lane.b32.xlu0 %v3637, 127
        %v3640 = vpop.permute.xlu0 %3639
        %v3642 = vadd.f32 %v3634, %v3640
        %s3643 = sld [smem:[#allocation11 + $0x102]]
        %v3644 = vstv %s3643
        %v3645 = vmul.f32 %v3366, %v3644
        %3647 = vrot.lane.b32.xlu0 %v3645, 126
        %v3648 = vpop.permute.xlu0 %3647
        %v3650 = vadd.f32 %v3642, %v3648
        %s3651 = sld [smem:[#allocation11 + $0x182]]
        %v3652 = vstv %s3651
        %v3653 = vmul.f32 %v3366, %v3652
        %v3654 = vmul.f32 %v3367, %v3652
        %v3657 = vrot.slane %v3653, 1
        %v3658 = vrot.slane %v3654, 1
        %v3659 = vsel %vm3409, %v3657, %v3658
        %v3661 = vadd.f32 %v3650, %v3659
        %s3662 = sld [smem:[#allocation11 + $0x202]]
        %v3663 = vstv %s3662
        %v3664 = vmul.f32 %v3366, %v3663
        %v3665 = vmul.f32 %v3367, %v3663
        %v3668 = vrot.slane %v3664, 1
        %v3669 = vrot.slane %v3665, 1
        %v3670 = vsel %vm3409, %v3668, %v3669
        %3671 = vrot.lane.b32.xlu0 %v3670, 127
        %v3672 = vpop.permute.xlu0 %3671
        %v3674 = vadd.f32 %v3661, %v3672
        %s3675 = sld [smem:[#allocation11 + $0x282]]
        %v3676 = vstv %s3675
        %v3677 = vmul.f32 %v3366, %v3676
        %v3678 = vmul.f32 %v3367, %v3676
        %v3681 = vrot.slane %v3677, 1
        %v3682 = vrot.slane %v3678, 1
        %v3683 = vsel %vm3409, %v3681, %v3682
        %3684 = vrot.lane.b32.xlu0 %v3683, 126
        %v3685 = vpop.permute.xlu0 %3684
        %v3687 = vadd.f32 %v3674, %v3685
        %s3688 = sld [smem:[#allocation11 + $0x302]]
        %v3689 = vstv %s3688
        %v3690 = vmul.f32 %v3366, %v3689
        %v3691 = vmul.f32 %v3367, %v3689
        %v3694 = vrot.slane %v3690, 2
        %v3695 = vrot.slane %v3691, 2
        %v3696 = vsel %vm3447, %v3694, %v3695
        %v3698 = vadd.f32 %v3687, %v3696
        %s3699 = sld [smem:[#allocation11 + $0x382]]
        %v3700 = vstv %s3699
        %v3701 = vmul.f32 %v3366, %v3700
        %v3702 = vmul.f32 %v3367, %v3700
        %v3705 = vrot.slane %v3701, 2
        %v3706 = vrot.slane %v3702, 2
        %v3707 = vsel %vm3447, %v3705, %v3706
        %3708 = vrot.lane.b32.xlu0 %v3707, 127
        %v3709 = vpop.permute.xlu0 %3708
        %v3711 = vadd.f32 %v3698, %v3709
        %s3712 = sld [smem:[#allocation11 + $0x402]]
        %v3713 = vstv %s3712
        %v3714 = vmul.f32 %v3366, %v3713
        %v3715 = vmul.f32 %v3367, %v3713
        %v3718 = vrot.slane %v3714, 2
        %v3719 = vrot.slane %v3715, 2
        %v3720 = vsel %vm3447, %v3718, %v3719
        %3721 = vrot.lane.b32.xlu0 %v3720, 126
        %v3722 = vpop.permute.xlu0 %3721
        %v3724 = vadd.f32 %v3711, %v3722
        %s3725 = sld [smem:[#allocation12 + $0x2]]
        %v3726 = vstv %s3725
        %v3727 = vadd.f32 %v3724, %v3726
        %v3728 = vmax.f32 %v3727, 0.0
        %v3729 = vsel %vm3483, %v3728, 0.0
        %3730 = vadd.xlane.f32.xlu0 %v3729
        %v3731 = vpop.xlane.xlu0 %3730
        %v3732 = vrot.slane %v3731, 4
        %v3733 = vadd.f32 %v3731, %v3732
        %v3734 = vrot.slane %v3733, 2
        %v3735 = vadd.f32 %v3733, %v3734
        %v3736 = vrot.slane %v3735, 1
        %v3737 = vadd.f32 %v3735, %v3736
        %v3738 = vmul.f32 %v3737, 0.015625
        %v3739 = vmul.f32 %v3738, %v696
        %v3742 = vunpack.c.l.s4 1966171168
        %v3743 = vunpack.c.0.s8 %v3742
        %v3744 = vlaneseq
        %v3745 = vshrl.u32 %v3744, 7
        %v3746 = vsub.s32 %v3743, %v3745
        %v3747 = vrot.slane %v3739, %v3746
        %v3749 = vunpack.c.l.s4 1966171168
        %v3750 = vunpack.c.0.s8 %v3749
        %v3751 = vlaneseq
        %v3752 = vshrl.u32 %v3751, 7
        %v3753 = vsub.s32 %v3750, %v3752
        %v3754 = vrot.slane %v3747, %v3753
        %v3755 = vcombine.high %v3754, %v3754
        %v3757 = vadd.f32 %v3626, %v3755
        %s3758 = sld [smem:[#allocation14 + $0x100]]
        %v3759 = vstv %s3758
        %v3760 = vmul.f32 %v3738, %v3759
        %v3761 = vadd.f32 %v3630, %v3760
        %s3762 = sld [smem:[#allocation11 + $0x3]]
        %v3763 = vstv %s3762
        %v3764 = vmul.f32 %v3366, %v3763
        %v3765 = vadd.f32 %v3764, 0.0
        %s3766 = sld [smem:[#allocation11 + $0x83]]
        %v3767 = vstv %s3766
        %v3768 = vmul.f32 %v3366, %v3767
        %3770 = vrot.lane.b32.xlu0 %v3768, 127
        %v3771 = vpop.permute.xlu0 %3770
        %v3773 = vadd.f32 %v3765, %v3771
        %s3774 = sld [smem:[#allocation11 + $0x103]]
        %v3775 = vstv %s3774
        %v3776 = vmul.f32 %v3366, %v3775
        %3778 = vrot.lane.b32.xlu0 %v3776, 126
        %v3779 = vpop.permute.xlu0 %3778
        %v3781 = vadd.f32 %v3773, %v3779
        %s3782 = sld [smem:[#allocation11 + $0x183]]
        %v3783 = vstv %s3782
        %v3784 = vmul.f32 %v3366, %v3783
        %v3785 = vmul.f32 %v3367, %v3783
        %v3788 = vrot.slane %v3784, 1
        %v3789 = vrot.slane %v3785, 1
        %v3790 = vsel %vm3409, %v3788, %v3789
        %v3792 = vadd.f32 %v3781, %v3790
        %s3793 = sld [smem:[#allocation11 + $0x203]]
        %v3794 = vstv %s3793
        %v3795 = vmul.f32 %v3366, %v3794
        %v3796 = vmul.f32 %v3367, %v3794
        %v3799 = vrot.slane %v3795, 1
        %v3800 = vrot.slane %v3796, 1
        %v3801 = vsel %vm3409, %v3799, %v3800
        %3802 = vrot.lane.b32.xlu0 %v3801, 127
        %v3803 = vpop.permute.xlu0 %3802
        %v3805 = vadd.f32 %v3792, %v3803
        %s3806 = sld [smem:[#allocation11 + $0x283]]
        %v3807 = vstv %s3806
        %v3808 = vmul.f32 %v3366, %v3807
        %v3809 = vmul.f32 %v3367, %v3807
        %v3812 = vrot.slane %v3808, 1
        %v3813 = vrot.slane %v3809, 1
        %v3814 = vsel %vm3409, %v3812, %v3813
        %3815 = vrot.lane.b32.xlu0 %v3814, 126
        %v3816 = vpop.permute.xlu0 %3815
        %v3818 = vadd.f32 %v3805, %v3816
        %s3819 = sld [smem:[#allocation11 + $0x303]]
        %v3820 = vstv %s3819
        %v3821 = vmul.f32 %v3366, %v3820
        %v3822 = vmul.f32 %v3367, %v3820
        %v3825 = vrot.slane %v3821, 2
        %v3826 = vrot.slane %v3822, 2
        %v3827 = vsel %vm3447, %v3825, %v3826
        %v3829 = vadd.f32 %v3818, %v3827
        %s3830 = sld [smem:[#allocation11 + $0x383]]
        %v3831 = vstv %s3830
        %v3832 = vmul.f32 %v3366, %v3831
        %v3833 = vmul.f32 %v3367, %v3831
        %v3836 = vrot.slane %v3832, 2
        %v3837 = vrot.slane %v3833, 2
        %v3838 = vsel %vm3447, %v3836, %v3837
        %3839 = vrot.lane.b32.xlu0 %v3838, 127
        %v3840 = vpop.permute.xlu0 %3839
        %v3842 = vadd.f32 %v3829, %v3840
        %s3843 = sld [smem:[#allocation11 + $0x403]]
        %v3844 = vstv %s3843
        %v3845 = vmul.f32 %v3366, %v3844
        %v3846 = vmul.f32 %v3367, %v3844
        %v3849 = vrot.slane %v3845, 2
        %v3850 = vrot.slane %v3846, 2
        %v3851 = vsel %vm3447, %v3849, %v3850
        %3852 = vrot.lane.b32.xlu0 %v3851, 126
        %v3853 = vpop.permute.xlu0 %3852
        %v3855 = vadd.f32 %v3842, %v3853
        %s3856 = sld [smem:[#allocation12 + $0x3]]
        %v3857 = vstv %s3856
        %v3858 = vadd.f32 %v3855, %v3857
        %v3859 = vmax.f32 %v3858, 0.0
        %v3860 = vsel %vm3483, %v3859, 0.0
        %3861 = vadd.xlane.f32.xlu0 %v3860
        %v3862 = vpop.xlane.xlu0 %3861
        %v3863 = vrot.slane %v3862, 4
        %v3864 = vadd.f32 %v3862, %v3863
        %v3865 = vrot.slane %v3864, 2
        %v3866 = vadd.f32 %v3864, %v3865
        %v3867 = vrot.slane %v3866, 1
        %v3868 = vadd.f32 %v3866, %v3867
        %v3869 = vmul.f32 %v3868, 0.015625
        %v3870 = vmul.f32 %v3869, %v696
        %v3873 = vunpack.c.l.s4 1966171168
        %v3874 = vunpack.c.0.s8 %v3873
        %v3875 = vlaneseq
        %v3876 = vshrl.u32 %v3875, 7
        %v3877 = vsub.s32 %v3874, %v3876
        %v3878 = vrot.slane %v3870, %v3877
        %v3879 = vcombine.high %v3878, %v3878
        %v3881 = vunpack.c.l.s4 1966171168
        %v3882 = vunpack.c.0.s8 %v3881
        %v3883 = vlaneseq
        %v3884 = vshrl.u32 %v3883, 7
        %v3885 = vsub.s32 %v3882, %v3884
        %v3886 = vrot.slane %v3879, %v3885
        %v3887 = vcombine.high %v3886, %v3886
        %v3889 = vadd.f32 %v3757, %v3887
        %s3890 = sld [smem:[#allocation14 + $0x180]]
        %v3891 = vstv %s3890
        %v3892 = vmul.f32 %v3869, %v3891
        %v3893 = vadd.f32 %v3761, %v3892
        %s3894 = sld [smem:[#allocation11 + $0x4]]
        %v3895 = vstv %s3894
        %v3896 = vmul.f32 %v3366, %v3895
        %v3897 = vadd.f32 %v3896, 0.0
        %s3898 = sld [smem:[#allocation11 + $0x84]]
        %v3899 = vstv %s3898
        %v3900 = vmul.f32 %v3366, %v3899
        %3902 = vrot.lane.b32.xlu0 %v3900, 127
        %v3903 = vpop.permute.xlu0 %3902
        %v3905 = vadd.f32 %v3897, %v3903
        %s3906 = sld [smem:[#allocation11 + $0x104]]
        %v3907 = vstv %s3906
        %v3908 = vmul.f32 %v3366, %v3907
        %3910 = vrot.lane.b32.xlu0 %v3908, 126
        %v3911 = vpop.permute.xlu0 %3910
        %v3913 = vadd.f32 %v3905, %v3911
        %s3914 = sld [smem:[#allocation11 + $0x184]]
        %v3915 = vstv %s3914
        %v3916 = vmul.f32 %v3366, %v3915
        %v3917 = vmul.f32 %v3367, %v3915
        %v3920 = vrot.slane %v3916, 1
        %v3921 = vrot.slane %v3917, 1
        %v3922 = vsel %vm3409, %v3920, %v3921
        %v3924 = vadd.f32 %v3913, %v3922
        %s3925 = sld [smem:[#allocation11 + $0x204]]
        %v3926 = vstv %s3925
        %v3927 = vmul.f32 %v3366, %v3926
        %v3928 = vmul.f32 %v3367, %v3926
        %v3931 = vrot.slane %v3927, 1
        %v3932 = vrot.slane %v3928, 1
        %v3933 = vsel %vm3409, %v3931, %v3932
        %3934 = vrot.lane.b32.xlu0 %v3933, 127
        %v3935 = vpop.permute.xlu0 %3934
        %v3937 = vadd.f32 %v3924, %v3935
        %s3938 = sld [smem:[#allocation11 + $0x284]]
        %v3939 = vstv %s3938
        %v3940 = vmul.f32 %v3366, %v3939
        %v3941 = vmul.f32 %v3367, %v3939
        %v3944 = vrot.slane %v3940, 1
        %v3945 = vrot.slane %v3941, 1
        %v3946 = vsel %vm3409, %v3944, %v3945
        %3947 = vrot.lane.b32.xlu0 %v3946, 126
        %v3948 = vpop.permute.xlu0 %3947
        %v3950 = vadd.f32 %v3937, %v3948
        %s3951 = sld [smem:[#allocation11 + $0x304]]
        %v3952 = vstv %s3951
        %v3953 = vmul.f32 %v3366, %v3952
        %v3954 = vmul.f32 %v3367, %v3952
        %v3957 = vrot.slane %v3953, 2
        %v3958 = vrot.slane %v3954, 2
        %v3959 = vsel %vm3447, %v3957, %v3958
        %v3961 = vadd.f32 %v3950, %v3959
        %s3962 = sld [smem:[#allocation11 + $0x384]]
        %v3963 = vstv %s3962
        %v3964 = vmul.f32 %v3366, %v3963
        %v3965 = vmul.f32 %v3367, %v3963
        %v3968 = vrot.slane %v3964, 2
        %v3969 = vrot.slane %v3965, 2
        %v3970 = vsel %vm3447, %v3968, %v3969
        %3971 = vrot.lane.b32.xlu0 %v3970, 127
        %v3972 = vpop.permute.xlu0 %3971
        %v3974 = vadd.f32 %v3961, %v3972
        %s3975 = sld [smem:[#allocation11 + $0x404]]
        %v3976 = vstv %s3975
        %v3977 = vmul.f32 %v3366, %v3976
        %v3978 = vmul.f32 %v3367, %v3976
        %v3981 = vrot.slane %v3977, 2
        %v3982 = vrot.slane %v3978, 2
        %v3983 = vsel %vm3447, %v3981, %v3982
        %3984 = vrot.lane.b32.xlu0 %v3983, 126
        %v3985 = vpop.permute.xlu0 %3984
        %v3987 = vadd.f32 %v3974, %v3985
        %s3988 = sld [smem:[#allocation12 + $0x4]]
        %v3989 = vstv %s3988
        %v3990 = vadd.f32 %v3987, %v3989
        %v3991 = vmax.f32 %v3990, 0.0
        %v3992 = vsel %vm3483, %v3991, 0.0
        %3993 = vadd.xlane.f32.xlu0 %v3992
        %v3994 = vpop.xlane.xlu0 %3993
        %v3995 = vrot.slane %v3994, 4
        %v3996 = vadd.f32 %v3994, %v3995
        %v3997 = vrot.slane %v3996, 2
        %v3998 = vadd.f32 %v3996, %v3997
        %v3999 = vrot.slane %v3998, 1
        %v4000 = vadd.f32 %v3998, %v3999
        %v4001 = vmul.f32 %v4000, 0.015625
        %v4002 = vmul.f32 %v4001, %v696
        %v4004 = vcombine.high %v4002, %v4002
        %v4006 = vunpack.c.l.s4 1966171168
        %v4007 = vunpack.c.0.s8 %v4006
        %v4008 = vlaneseq
        %v4009 = vshrl.u32 %v4008, 7
        %v4010 = vsub.s32 %v4007, %v4009
        %v4011 = vrot.slane %v4004, %v4010
        %v4013 = vunpack.c.l.s4 1966171168
        %v4014 = vunpack.c.0.s8 %v4013
        %v4015 = vlaneseq
        %v4016 = vshrl.u32 %v4015, 7
        %v4017 = vsub.s32 %v4014, %v4016
        %v4018 = vrot.slane %v4011, %v4017
        %v4020 = vadd.f32 %v3889, %v4018
        %s4021 = sld [smem:[#allocation14 + $0x200]]
        %v4022 = vstv %s4021
        %v4023 = vmul.f32 %v4001, %v4022
        %v4024 = vadd.f32 %v3893, %v4023
        %s4025 = sld [smem:[#allocation11 + $0x5]]
        %v4026 = vstv %s4025
        %v4027 = vmul.f32 %v3366, %v4026
        %v4028 = vadd.f32 %v4027, 0.0
        %s4029 = sld [smem:[#allocation11 + $0x85]]
        %v4030 = vstv %s4029
        %v4031 = vmul.f32 %v3366, %v4030
        %4033 = vrot.lane.b32.xlu0 %v4031, 127
        %v4034 = vpop.permute.xlu0 %4033
        %v4036 = vadd.f32 %v4028, %v4034
        %s4037 = sld [smem:[#allocation11 + $0x105]]
        %v4038 = vstv %s4037
        %v4039 = vmul.f32 %v3366, %v4038
        %4041 = vrot.lane.b32.xlu0 %v4039, 126
        %v4042 = vpop.permute.xlu0 %4041
        %v4044 = vadd.f32 %v4036, %v4042
        %s4045 = sld [smem:[#allocation11 + $0x185]]
        %v4046 = vstv %s4045
        %v4047 = vmul.f32 %v3366, %v4046
        %v4048 = vmul.f32 %v3367, %v4046
        %v4051 = vrot.slane %v4047, 1
        %v4052 = vrot.slane %v4048, 1
        %v4053 = vsel %vm3409, %v4051, %v4052
        %v4055 = vadd.f32 %v4044, %v4053
        %s4056 = sld [smem:[#allocation11 + $0x205]]
        %v4057 = vstv %s4056
        %v4058 = vmul.f32 %v3366, %v4057
        %v4059 = vmul.f32 %v3367, %v4057
        %v4062 = vrot.slane %v4058, 1
        %v4063 = vrot.slane %v4059, 1
        %v4064 = vsel %vm3409, %v4062, %v4063
        %4065 = vrot.lane.b32.xlu0 %v4064, 127
        %v4066 = vpop.permute.xlu0 %4065
        %v4068 = vadd.f32 %v4055, %v4066
        %s4069 = sld [smem:[#allocation11 + $0x285]]
        %v4070 = vstv %s4069
        %v4071 = vmul.f32 %v3366, %v4070
        %v4072 = vmul.f32 %v3367, %v4070
        %v4075 = vrot.slane %v4071, 1
        %v4076 = vrot.slane %v4072, 1
        %v4077 = vsel %vm3409, %v4075, %v4076
        %4078 = vrot.lane.b32.xlu0 %v4077, 126
        %v4079 = vpop.permute.xlu0 %4078
        %v4081 = vadd.f32 %v4068, %v4079
        %s4082 = sld [smem:[#allocation11 + $0x305]]
        %v4083 = vstv %s4082
        %v4084 = vmul.f32 %v3366, %v4083
        %v4085 = vmul.f32 %v3367, %v4083
        %v4088 = vrot.slane %v4084, 2
        %v4089 = vrot.slane %v4085, 2
        %v4090 = vsel %vm3447, %v4088, %v4089
        %v4092 = vadd.f32 %v4081, %v4090
        %s4093 = sld [smem:[#allocation11 + $0x385]]
        %v4094 = vstv %s4093
        %v4095 = vmul.f32 %v3366, %v4094
        %v4096 = vmul.f32 %v3367, %v4094
        %v4099 = vrot.slane %v4095, 2
        %v4100 = vrot.slane %v4096, 2
        %v4101 = vsel %vm3447, %v4099, %v4100
        %4102 = vrot.lane.b32.xlu0 %v4101, 127
        %v4103 = vpop.permute.xlu0 %4102
        %v4105 = vadd.f32 %v4092, %v4103
        %s4106 = sld [smem:[#allocation11 + $0x405]]
        %v4107 = vstv %s4106
        %v4108 = vmul.f32 %v3366, %v4107
        %v4109 = vmul.f32 %v3367, %v4107
        %v4112 = vrot.slane %v4108, 2
        %v4113 = vrot.slane %v4109, 2
        %v4114 = vsel %vm3447, %v4112, %v4113
        %4115 = vrot.lane.b32.xlu0 %v4114, 126
        %v4116 = vpop.permute.xlu0 %4115
        %v4118 = vadd.f32 %v4105, %v4116
        %s4119 = sld [smem:[#allocation12 + $0x5]]
        %v4120 = vstv %s4119
        %v4121 = vadd.f32 %v4118, %v4120
        %v4122 = vmax.f32 %v4121, 0.0
        %v4123 = vsel %vm3483, %v4122, 0.0
        %4124 = vadd.xlane.f32.xlu0 %v4123
        %v4125 = vpop.xlane.xlu0 %4124
        %v4126 = vrot.slane %v4125, 4
        %v4127 = vadd.f32 %v4125, %v4126
        %v4128 = vrot.slane %v4127, 2
        %v4129 = vadd.f32 %v4127, %v4128
        %v4130 = vrot.slane %v4129, 1
        %v4131 = vadd.f32 %v4129, %v4130
        %v4132 = vmul.f32 %v4131, 0.015625
        %v4133 = vmul.f32 %v4132, %v696
        %v4135 = vcombine.high %v4133, %v4133
        %v4137 = vunpack.c.l.s4 1966171168
        %v4138 = vunpack.c.0.s8 %v4137
        %v4139 = vlaneseq
        %v4140 = vshrl.u32 %v4139, 7
        %v4141 = vsub.s32 %v4138, %v4140
        %v4142 = vrot.slane %v4135, %v4141
        %v4143 = vcombine.high %v4142, %v4142
        %v4145 = vunpack.c.l.s4 1966171168
        %v4146 = vunpack.c.0.s8 %v4145
        %v4147 = vlaneseq
        %v4148 = vshrl.u32 %v4147, 7
        %v4149 = vsub.s32 %v4146, %v4148
        %v4150 = vrot.slane %v4143, %v4149
        %v4152 = vadd.f32 %v4020, %v4150
        %s4153 = sld [smem:[#allocation14 + $0x280]]
        %v4154 = vstv %s4153
        %v4155 = vmul.f32 %v4132, %v4154
        %v4156 = vadd.f32 %v4024, %v4155
        %s4157 = sld [smem:[#allocation11 + $0x6]]
        %v4158 = vstv %s4157
        %v4159 = vmul.f32 %v3366, %v4158
        %v4160 = vadd.f32 %v4159, 0.0
        %s4161 = sld [smem:[#allocation11 + $0x86]]
        %v4162 = vstv %s4161
        %v4163 = vmul.f32 %v3366, %v4162
        %4165 = vrot.lane.b32.xlu0 %v4163, 127
        %v4166 = vpop.permute.xlu0 %4165
        %v4168 = vadd.f32 %v4160, %v4166
        %s4169 = sld [smem:[#allocation11 + $0x106]]
        %v4170 = vstv %s4169
        %v4171 = vmul.f32 %v3366, %v4170
        %4173 = vrot.lane.b32.xlu0 %v4171, 126
        %v4174 = vpop.permute.xlu0 %4173
        %v4176 = vadd.f32 %v4168, %v4174
        %s4177 = sld [smem:[#allocation11 + $0x186]]
        %v4178 = vstv %s4177
        %v4179 = vmul.f32 %v3366, %v4178
        %v4180 = vmul.f32 %v3367, %v4178
        %v4183 = vrot.slane %v4179, 1
        %v4184 = vrot.slane %v4180, 1
        %v4185 = vsel %vm3409, %v4183, %v4184
        %v4187 = vadd.f32 %v4176, %v4185
        %s4188 = sld [smem:[#allocation11 + $0x206]]
        %v4189 = vstv %s4188
        %v4190 = vmul.f32 %v3366, %v4189
        %v4191 = vmul.f32 %v3367, %v4189
        %v4194 = vrot.slane %v4190, 1
        %v4195 = vrot.slane %v4191, 1
        %v4196 = vsel %vm3409, %v4194, %v4195
        %4197 = vrot.lane.b32.xlu0 %v4196, 127
        %v4198 = vpop.permute.xlu0 %4197
        %v4200 = vadd.f32 %v4187, %v4198
        %s4201 = sld [smem:[#allocation11 + $0x286]]
        %v4202 = vstv %s4201
        %v4203 = vmul.f32 %v3366, %v4202
        %v4204 = vmul.f32 %v3367, %v4202
        %v4207 = vrot.slane %v4203, 1
        %v4208 = vrot.slane %v4204, 1
        %v4209 = vsel %vm3409, %v4207, %v4208
        %4210 = vrot.lane.b32.xlu0 %v4209, 126
        %v4211 = vpop.permute.xlu0 %4210
        %v4213 = vadd.f32 %v4200, %v4211
        %s4214 = sld [smem:[#allocation11 + $0x306]]
        %v4215 = vstv %s4214
        %v4216 = vmul.f32 %v3366, %v4215
        %v4217 = vmul.f32 %v3367, %v4215
        %v4220 = vrot.slane %v4216, 2
        %v4221 = vrot.slane %v4217, 2
        %v4222 = vsel %vm3447, %v4220, %v4221
        %v4224 = vadd.f32 %v4213, %v4222
        %s4225 = sld [smem:[#allocation11 + $0x386]]
        %v4226 = vstv %s4225
        %v4227 = vmul.f32 %v3366, %v4226
        %v4228 = vmul.f32 %v3367, %v4226
        %v4231 = vrot.slane %v4227, 2
        %v4232 = vrot.slane %v4228, 2
        %v4233 = vsel %vm3447, %v4231, %v4232
        %4234 = vrot.lane.b32.xlu0 %v4233, 127
        %v4235 = vpop.permute.xlu0 %4234
        %v4237 = vadd.f32 %v4224, %v4235
        %s4238 = sld [smem:[#allocation11 + $0x406]]
        %v4239 = vstv %s4238
        %v4240 = vmul.f32 %v3366, %v4239
        %v4241 = vmul.f32 %v3367, %v4239
        %v4244 = vrot.slane %v4240, 2
        %v4245 = vrot.slane %v4241, 2
        %v4246 = vsel %vm3447, %v4244, %v4245
        %4247 = vrot.lane.b32.xlu0 %v4246, 126
        %v4248 = vpop.permute.xlu0 %4247
        %v4250 = vadd.f32 %v4237, %v4248
        %s4251 = sld [smem:[#allocation12 + $0x6]]
        %v4252 = vstv %s4251
        %v4253 = vadd.f32 %v4250, %v4252
        %v4254 = vmax.f32 %v4253, 0.0
        %v4255 = vsel %vm3483, %v4254, 0.0
        %4256 = vadd.xlane.f32.xlu0 %v4255
        %v4257 = vpop.xlane.xlu0 %4256
        %v4258 = vrot.slane %v4257, 4
        %v4259 = vadd.f32 %v4257, %v4258
        %v4260 = vrot.slane %v4259, 2
        %v4261 = vadd.f32 %v4259, %v4260
        %v4262 = vrot.slane %v4261, 1
        %v4263 = vadd.f32 %v4261, %v4262
        %v4264 = vmul.f32 %v4263, 0.015625
        %v4265 = vmul.f32 %v4264, %v696
        %v4267 = vcombine.high %v4265, %v4265
        %v4269 = vunpack.c.l.s4 1966171168
        %v4270 = vunpack.c.0.s8 %v4269
        %v4271 = vlaneseq
        %v4272 = vshrl.u32 %v4271, 7
        %v4273 = vsub.s32 %v4270, %v4272
        %v4274 = vrot.slane %v4267, %v4273
        %v4276 = vunpack.c.l.s4 1966171168
        %v4277 = vunpack.c.0.s8 %v4276
        %v4278 = vlaneseq
        %v4279 = vshrl.u32 %v4278, 7
        %v4280 = vsub.s32 %v4277, %v4279
        %v4281 = vrot.slane %v4274, %v4280
        %v4282 = vcombine.high %v4281, %v4281
        %v4284 = vadd.f32 %v4152, %v4282
        %s4285 = sld [smem:[#allocation14 + $0x300]]
        %v4286 = vstv %s4285
        %v4287 = vmul.f32 %v4264, %v4286
        %v4288 = vadd.f32 %v4156, %v4287
        %s4289 = sld [smem:[#allocation11 + $0x7]]
        %v4290 = vstv %s4289
        %v4291 = vmul.f32 %v3366, %v4290
        %v4292 = vadd.f32 %v4291, 0.0
        %s4293 = sld [smem:[#allocation11 + $0x87]]
        %v4294 = vstv %s4293
        %v4295 = vmul.f32 %v3366, %v4294
        %4297 = vrot.lane.b32.xlu0 %v4295, 127
        %v4298 = vpop.permute.xlu0 %4297
        %v4300 = vadd.f32 %v4292, %v4298
        %s4301 = sld [smem:[#allocation11 + $0x107]]
        %v4302 = vstv %s4301
        %v4303 = vmul.f32 %v3366, %v4302
        %4305 = vrot.lane.b32.xlu0 %v4303, 126
        %v4306 = vpop.permute.xlu0 %4305
        %v4308 = vadd.f32 %v4300, %v4306
        %s4309 = sld [smem:[#allocation11 + $0x187]]
        %v4310 = vstv %s4309
        %v4311 = vmul.f32 %v3366, %v4310
        %v4312 = vmul.f32 %v3367, %v4310
        %v4315 = vrot.slane %v4311, 1
        %v4316 = vrot.slane %v4312, 1
        %v4317 = vsel %vm3409, %v4315, %v4316
        %v4319 = vadd.f32 %v4308, %v4317
        %s4320 = sld [smem:[#allocation11 + $0x207]]
        %v4321 = vstv %s4320
        %v4322 = vmul.f32 %v3366, %v4321
        %v4323 = vmul.f32 %v3367, %v4321
        %v4326 = vrot.slane %v4322, 1
        %v4327 = vrot.slane %v4323, 1
        %v4328 = vsel %vm3409, %v4326, %v4327
        %4329 = vrot.lane.b32.xlu0 %v4328, 127
        %v4330 = vpop.permute.xlu0 %4329
        %v4332 = vadd.f32 %v4319, %v4330
        %s4333 = sld [smem:[#allocation11 + $0x287]]
        %v4334 = vstv %s4333
        %v4335 = vmul.f32 %v3366, %v4334
        %v4336 = vmul.f32 %v3367, %v4334
        %v4339 = vrot.slane %v4335, 1
        %v4340 = vrot.slane %v4336, 1
        %v4341 = vsel %vm3409, %v4339, %v4340
        %4342 = vrot.lane.b32.xlu0 %v4341, 126
        %v4343 = vpop.permute.xlu0 %4342
        %v4345 = vadd.f32 %v4332, %v4343
        %s4346 = sld [smem:[#allocation11 + $0x307]]
        %v4347 = vstv %s4346
        %v4348 = vmul.f32 %v3366, %v4347
        %v4349 = vmul.f32 %v3367, %v4347
        %v4352 = vrot.slane %v4348, 2
        %v4353 = vrot.slane %v4349, 2
        %v4354 = vsel %vm3447, %v4352, %v4353
        %v4356 = vadd.f32 %v4345, %v4354
        %s4357 = sld [smem:[#allocation11 + $0x387]]
        %v4358 = vstv %s4357
        %v4359 = vmul.f32 %v3366, %v4358
        %v4360 = vmul.f32 %v3367, %v4358
        %v4363 = vrot.slane %v4359, 2
        %v4364 = vrot.slane %v4360, 2
        %v4365 = vsel %vm3447, %v4363, %v4364
        %4366 = vrot.lane.b32.xlu0 %v4365, 127
        %v4367 = vpop.permute.xlu0 %4366
        %v4369 = vadd.f32 %v4356, %v4367
        %s4370 = sld [smem:[#allocation11 + $0x407]]
        %v4371 = vstv %s4370
        %v4372 = vmul.f32 %v3366, %v4371
        %v4373 = vmul.f32 %v3367, %v4371
        %v4376 = vrot.slane %v4372, 2
        %v4377 = vrot.slane %v4373, 2
        %v4378 = vsel %vm3447, %v4376, %v4377
        %4379 = vrot.lane.b32.xlu0 %v4378, 126
        %v4380 = vpop.permute.xlu0 %4379
        %v4382 = vadd.f32 %v4369, %v4380
        %s4383 = sld [smem:[#allocation12 + $0x7]]
        %v4384 = vstv %s4383
        %v4385 = vadd.f32 %v4382, %v4384
        %v4386 = vmax.f32 %v4385, 0.0
        %v4387 = vsel %vm3483, %v4386, 0.0
        %4388 = vadd.xlane.f32.xlu0 %v4387
        %v4389 = vpop.xlane.xlu0 %4388
        %v4390 = vrot.slane %v4389, 4
        %v4391 = vadd.f32 %v4389, %v4390
        %v4392 = vrot.slane %v4391, 2
        %v4393 = vadd.f32 %v4391, %v4392
        %v4394 = vrot.slane %v4393, 1
        %v4395 = vadd.f32 %v4393, %v4394
        %v4396 = vmul.f32 %v4395, 0.015625
        %v4397 = vmul.f32 %v4396, %v696
        %v4399 = vcombine.high %v4397, %v4397
        %v4401 = vunpack.c.l.s4 1966171168
        %v4402 = vunpack.c.0.s8 %v4401
        %v4403 = vlaneseq
        %v4404 = vshrl.u32 %v4403, 7
        %v4405 = vsub.s32 %v4402, %v4404
        %v4406 = vrot.slane %v4399, %v4405
        %v4407 = vcombine.high %v4406, %v4406
        %v4409 = vunpack.c.l.s4 1966171168
        %v4410 = vunpack.c.0.s8 %v4409
        %v4411 = vlaneseq
        %v4412 = vshrl.u32 %v4411, 7
        %v4413 = vsub.s32 %v4410, %v4412
        %v4414 = vrot.slane %v4407, %v4413
        %v4415 = vcombine.high %v4414, %v4414
        %v4417 = vadd.f32 %v4284, %v4415
        %s4418 = sld [smem:[#allocation14 + $0x380]]
        %v4419 = vstv %s4418
        %v4420 = vmul.f32 %v4396, %v4419
        %v4421 = vadd.f32 %v4288, %v4420
        %v4422 = vsub.f32 0.0, %v4421
        %v4423 = vmul.f32 %v4422, 1.442695
        %v4424 = vpow.pop %v4423
        %v4425 = vadd.f32 %v4424, 1.0
        %v4426 = vrcp.pop %v4425
        %v4427 = vmul.f32 1.0, %v4426
        %s4429 = vtos %v3121
        %v4430 = vstv %s4429
        %v4432 = vmul.f32 %v4430, %v3122
        %v4433 = vmul.f32 %v4430, %v3123
        %v4434 = vadd.f32 %v4432, 0.0
        %v4435 = vadd.f32 %v4433, 0.0
        %4436 = vrot.lane.b32.xlu0 %v3121, 127
        %v4437 = vpop.permute.xlu0 %4436
        %s4438 = vtos %v4437
        %v4439 = vstv %s4438
        %v4441 = vmul.f32 %v4439, %v3122
        %v4442 = vmul.f32 %v4439, %v3123
        %4445 = vrot.lane.b32.xlu0 %v4441, 120
        %v4446 = vpop.permute.xlu0 %4445
        %4447 = vrot.lane.b32.xlu0 %v4442, 120
        %v4448 = vpop.permute.xlu0 %4447
        %v4451 = vadd.f32 %v4434, %v4446
        %v4452 = vadd.f32 %v4435, %v4448
        %4453 = vrot.lane.b32.xlu0 %v3121, 126
        %v4454 = vpop.permute.xlu0 %4453
        %s4455 = vtos %v4454
        %v4456 = vstv %s4455
        %v4458 = vmul.f32 %v4456, %v3122
        %v4459 = vmul.f32 %v4456, %v3123
        %4462 = vrot.lane.b32.xlu0 %v4458, 112
        %v4463 = vpop.permute.xlu0 %4462
        %4464 = vrot.lane.b32.xlu0 %v4459, 112
        %v4465 = vpop.permute.xlu0 %4464
        %v4468 = vadd.f32 %v4451, %v4463
        %v4469 = vadd.f32 %v4452, %v4465
        %4470 = vrot.lane.b32.xlu0 %v3121, 125
        %v4471 = vpop.permute.xlu0 %4470
        %s4472 = vtos %v4471
        %v4473 = vstv %s4472
        %v4475 = vmul.f32 %v4473, %v3122
        %v4476 = vmul.f32 %v4473, %v3123
        %4479 = vrot.lane.b32.xlu0 %v4475, 104
        %v4480 = vpop.permute.xlu0 %4479
        %4481 = vrot.lane.b32.xlu0 %v4476, 104
        %v4482 = vpop.permute.xlu0 %4481
        %v4485 = vadd.f32 %v4468, %v4480
        %v4486 = vadd.f32 %v4469, %v4482
        %v4487 = vrot.slane %v3121, 1
        %s4488 = vtos %v4487
        %v4489 = vstv %s4488
        %v4491 = vmul.f32 %v4489, %v3124
        %v4492 = vmul.f32 %v4489, %v3125
        %v4493 = vadd.f32 %v4485, %v4491
        %v4494 = vadd.f32 %v4486, %v4492
        %4495 = vrot.lane.b32.xlu0 %v4487, 127
        %v4496 = vpop.permute.xlu0 %4495
        %s4497 = vtos %v4496
        %v4498 = vstv %s4497
        %v4500 = vmul.f32 %v4498, %v3124
        %v4501 = vmul.f32 %v4498, %v3125
        %4504 = vrot.lane.b32.xlu0 %v4500, 120
        %v4505 = vpop.permute.xlu0 %4504
        %4506 = vrot.lane.b32.xlu0 %v4501, 120
        %v4507 = vpop.permute.xlu0 %4506
        %v4510 = vadd.f32 %v4493, %v4505
        %v4511 = vadd.f32 %v4494, %v4507
        %4512 = vrot.lane.b32.xlu0 %v4487, 126
        %v4513 = vpop.permute.xlu0 %4512
        %s4514 = vtos %v4513
        %v4515 = vstv %s4514
        %v4517 = vmul.f32 %v4515, %v3124
        %v4518 = vmul.f32 %v4515, %v3125
        %4521 = vrot.lane.b32.xlu0 %v4517, 112
        %v4522 = vpop.permute.xlu0 %4521
        %4523 = vrot.lane.b32.xlu0 %v4518, 112
        %v4524 = vpop.permute.xlu0 %4523
        %v4527 = vadd.f32 %v4510, %v4522
        %v4528 = vadd.f32 %v4511, %v4524
        %4529 = vrot.lane.b32.xlu0 %v4487, 125
        %v4530 = vpop.permute.xlu0 %4529
        %s4531 = vtos %v4530
        %v4532 = vstv %s4531
        %v4534 = vmul.f32 %v4532, %v3124
        %v4535 = vmul.f32 %v4532, %v3125
        %4538 = vrot.lane.b32.xlu0 %v4534, 104
        %v4539 = vpop.permute.xlu0 %4538
        %4540 = vrot.lane.b32.xlu0 %v4535, 104
        %v4541 = vpop.permute.xlu0 %4540
        %v4544 = vadd.f32 %v4527, %v4539
        %v4545 = vadd.f32 %v4528, %v4541
        %v4546 = vrot.slane %v3121, 2
        %s4547 = vtos %v4546
        %v4548 = vstv %s4547
        %v4550 = vmul.f32 %v4548, %v3126
        %v4551 = vmul.f32 %v4548, %v3127
        %v4552 = vadd.f32 %v4544, %v4550
        %v4553 = vadd.f32 %v4545, %v4551
        %4554 = vrot.lane.b32.xlu0 %v4546, 127
        %v4555 = vpop.permute.xlu0 %4554
        %s4556 = vtos %v4555
        %v4557 = vstv %s4556
        %v4559 = vmul.f32 %v4557, %v3126
        %v4560 = vmul.f32 %v4557, %v3127
        %4563 = vrot.lane.b32.xlu0 %v4559, 120
        %v4564 = vpop.permute.xlu0 %4563
        %4565 = vrot.lane.b32.xlu0 %v4560, 120
        %v4566 = vpop.permute.xlu0 %4565
        %v4569 = vadd.f32 %v4552, %v4564
        %v4570 = vadd.f32 %v4553, %v4566
        %4571 = vrot.lane.b32.xlu0 %v4546, 126
        %v4572 = vpop.permute.xlu0 %4571
        %s4573 = vtos %v4572
        %v4574 = vstv %s4573
        %v4576 = vmul.f32 %v4574, %v3126
        %v4577 = vmul.f32 %v4574, %v3127
        %4580 = vrot.lane.b32.xlu0 %v4576, 112
        %v4581 = vpop.permute.xlu0 %4580
        %4582 = vrot.lane.b32.xlu0 %v4577, 112
        %v4583 = vpop.permute.xlu0 %4582
        %v4586 = vadd.f32 %v4569, %v4581
        %v4587 = vadd.f32 %v4570, %v4583
        %4588 = vrot.lane.b32.xlu0 %v4546, 125
        %v4589 = vpop.permute.xlu0 %4588
        %s4590 = vtos %v4589
        %v4591 = vstv %s4590
        %v4593 = vmul.f32 %v4591, %v3126
        %v4594 = vmul.f32 %v4591, %v3127
        %4597 = vrot.lane.b32.xlu0 %v4593, 104
        %v4598 = vpop.permute.xlu0 %4597
        %4599 = vrot.lane.b32.xlu0 %v4594, 104
        %v4600 = vpop.permute.xlu0 %4599
        %v4603 = vadd.f32 %v4586, %v4598
        %v4604 = vadd.f32 %v4587, %v4600
        %v4605 = vrot.slane %v3121, 3
        %s4606 = vtos %v4605
        %v4607 = vstv %s4606
        %v4609 = vmul.f32 %v4607, %v3128
        %v4610 = vmul.f32 %v4607, %v3129
        %v4611 = vadd.f32 %v4603, %v4609
        %v4612 = vadd.f32 %v4604, %v4610
        %4613 = vrot.lane.b32.xlu0 %v4605, 127
        %v4614 = vpop.permute.xlu0 %4613
        %s4615 = vtos %v4614
        %v4616 = vstv %s4615
        %v4618 = vmul.f32 %v4616, %v3128
        %v4619 = vmul.f32 %v4616, %v3129
        %4622 = vrot.lane.b32.xlu0 %v4618, 120
        %v4623 = vpop.permute.xlu0 %4622
        %4624 = vrot.lane.b32.xlu0 %v4619, 120
        %v4625 = vpop.permute.xlu0 %4624
        %v4628 = vadd.f32 %v4611, %v4623
        %v4629 = vadd.f32 %v4612, %v4625
        %4630 = vrot.lane.b32.xlu0 %v4605, 126
        %v4631 = vpop.permute.xlu0 %4630
        %s4632 = vtos %v4631
        %v4633 = vstv %s4632
        %v4635 = vmul.f32 %v4633, %v3128
        %v4636 = vmul.f32 %v4633, %v3129
        %4639 = vrot.lane.b32.xlu0 %v4635, 112
        %v4640 = vpop.permute.xlu0 %4639
        %4641 = vrot.lane.b32.xlu0 %v4636, 112
        %v4642 = vpop.permute.xlu0 %4641
        %v4645 = vadd.f32 %v4628, %v4640
        %v4646 = vadd.f32 %v4629, %v4642
        %4647 = vrot.lane.b32.xlu0 %v4605, 125
        %v4648 = vpop.permute.xlu0 %4647
        %s4649 = vtos %v4648
        %v4650 = vstv %s4649
        %v4652 = vmul.f32 %v4650, %v3128
        %v4653 = vmul.f32 %v4650, %v3129
        %4656 = vrot.lane.b32.xlu0 %v4652, 104
        %v4657 = vpop.permute.xlu0 %4656
        %4658 = vrot.lane.b32.xlu0 %v4653, 104
        %v4659 = vpop.permute.xlu0 %4658
        %v4662 = vadd.f32 %v4645, %v4657
        %v4663 = vadd.f32 %v4646, %v4659
        %v4664 = vmul.f32 %v4662, %v724
        %v4665 = vmul.f32 %v4663, %v725
        %4668 = vrot.lane.b32.xlu0 %v4662, 127
        %v4669 = vpop.permute.xlu0 %4668
        %4670 = vrot.lane.b32.xlu0 %v4663, 127
        %v4671 = vpop.permute.xlu0 %4670
        %s4674 = scalar_lea.vmem %s685, 8 [#allocation18]
        %4675 = vst.msk [vmem:[%s4674 - $0x1] sm:$0xfe] %vm3376, %v4669
        %4676 = vst.msk [vmem:[%s4674 + $0x7] sm:$0x1] %vm3378, %v4671
        %s4677 = sld [smem:[#allocation2]]
        %v4678 = vstv %s4677
        %v4679 = vadd.f32 %v4678, 0.0
        %s4680 = sld [smem:[#allocation11]]
        %v4681 = vstv %s4680
        %v4682 = vmul.f32 %v4664, %v4681
        %v4683 = vadd.f32 %v4682, 0.0
        %s4684 = sld [smem:[#allocation11 + $0x80]]
        %v4685 = vstv %s4684
        %v4686 = vmul.f32 %v4664, %v4685
        %4688 = vrot.lane.b32.xlu0 %v4686, 127
        %v4689 = vpop.permute.xlu0 %4688
        %v4691 = vadd.f32 %v4683, %v4689
        %s4692 = sld [smem:[#allocation11 + $0x100]]
        %v4693 = vstv %s4692
        %v4694 = vmul.f32 %v4664, %v4693
        %4696 = vrot.lane.b32.xlu0 %v4694, 126
        %v4697 = vpop.permute.xlu0 %4696
        %v4699 = vadd.f32 %v4691, %v4697
        %s4700 = sld [smem:[#allocation11 + $0x180]]
        %v4701 = vstv %s4700
        %v4702 = vmul.f32 %v4664, %v4701
        %v4703 = vmul.f32 %v4665, %v4701
        %v4706 = vrot.slane %v4702, 1
        %v4707 = vrot.slane %v4703, 1
        %v4708 = vsel %vm3409, %v4706, %v4707
        %v4710 = vadd.f32 %v4699, %v4708
        %s4711 = sld [smem:[#allocation11 + $0x200]]
        %v4712 = vstv %s4711
        %v4713 = vmul.f32 %v4664, %v4712
        %v4714 = vmul.f32 %v4665, %v4712
        %v4717 = vrot.slane %v4713, 1
        %v4718 = vrot.slane %v4714, 1
        %v4719 = vsel %vm3409, %v4717, %v4718
        %4720 = vrot.lane.b32.xlu0 %v4719, 127
        %v4721 = vpop.permute.xlu0 %4720
        %v4723 = vadd.f32 %v4710, %v4721
        %s4724 = sld [smem:[#allocation11 + $0x280]]
        %v4725 = vstv %s4724
        %v4726 = vmul.f32 %v4664, %v4725
        %v4727 = vmul.f32 %v4665, %v4725
        %v4730 = vrot.slane %v4726, 1
        %v4731 = vrot.slane %v4727, 1
        %v4732 = vsel %vm3409, %v4730, %v4731
        %4733 = vrot.lane.b32.xlu0 %v4732, 126
        %v4734 = vpop.permute.xlu0 %4733
        %v4736 = vadd.f32 %v4723, %v4734
        %s4737 = sld [smem:[#allocation11 + $0x300]]
        %v4738 = vstv %s4737
        %v4739 = vmul.f32 %v4664, %v4738
        %v4740 = vmul.f32 %v4665, %v4738
        %v4743 = vrot.slane %v4739, 2
        %v4744 = vrot.slane %v4740, 2
        %v4745 = vsel %vm3447, %v4743, %v4744
        %v4747 = vadd.f32 %v4736, %v4745
        %s4748 = sld [smem:[#allocation11 + $0x380]]
        %v4749 = vstv %s4748
        %v4750 = vmul.f32 %v4664, %v4749
        %v4751 = vmul.f32 %v4665, %v4749
        %v4754 = vrot.slane %v4750, 2
        %v4755 = vrot.slane %v4751, 2
        %v4756 = vsel %vm3447, %v4754, %v4755
        %4757 = vrot.lane.b32.xlu0 %v4756, 127
        %v4758 = vpop.permute.xlu0 %4757
        %v4760 = vadd.f32 %v4747, %v4758
        %s4761 = sld [smem:[#allocation11 + $0x400]]
        %v4762 = vstv %s4761
        %v4763 = vmul.f32 %v4664, %v4762
        %v4764 = vmul.f32 %v4665, %v4762
        %v4767 = vrot.slane %v4763, 2
        %v4768 = vrot.slane %v4764, 2
        %v4769 = vsel %vm3447, %v4767, %v4768
        %4770 = vrot.lane.b32.xlu0 %v4769, 126
        %v4771 = vpop.permute.xlu0 %4770
        %v4773 = vadd.f32 %v4760, %v4771
        %s4774 = sld [smem:[#allocation12]]
        %v4775 = vstv %s4774
        %v4776 = vadd.f32 %v4773, %v4775
        %v4777 = vmax.f32 %v4776, 0.0
        %v4778 = vsel %vm3483, %v4777, 0.0
        %4779 = vadd.xlane.f32.xlu0 %v4778
        %v4780 = vpop.xlane.xlu0 %4779
        %v4781 = vrot.slane %v4780, 4
        %v4782 = vadd.f32 %v4780, %v4781
        %v4783 = vrot.slane %v4782, 2
        %v4784 = vadd.f32 %v4782, %v4783
        %v4785 = vrot.slane %v4784, 1
        %v4786 = vadd.f32 %v4784, %v4785
        %v4787 = vmul.f32 %v4786, 0.015625
        %v4788 = vmul.f32 %v4787, %v696
        %v4789 = vadd.f32 %v697, %v4788
        %s4790 = sld [smem:[#allocation14]]
        %v4791 = vstv %s4790
        %v4792 = vmul.f32 %v4787, %v4791
        %v4793 = vadd.f32 %v4679, %v4792
        %s4794 = sld [smem:[#allocation11 + $0x1]]
        %v4795 = vstv %s4794
        %v4796 = vmul.f32 %v4664, %v4795
        %v4797 = vadd.f32 %v4796, 0.0
        %s4798 = sld [smem:[#allocation11 + $0x81]]
        %v4799 = vstv %s4798
        %v4800 = vmul.f32 %v4664, %v4799
        %4802 = vrot.lane.b32.xlu0 %v4800, 127
        %v4803 = vpop.permute.xlu0 %4802
        %v4805 = vadd.f32 %v4797, %v4803
        %s4806 = sld [smem:[#allocation11 + $0x101]]
        %v4807 = vstv %s4806
        %v4808 = vmul.f32 %v4664, %v4807
        %4810 = vrot.lane.b32.xlu0 %v4808, 126
        %v4811 = vpop.permute.xlu0 %4810
        %v4813 = vadd.f32 %v4805, %v4811
        %s4814 = sld [smem:[#allocation11 + $0x181]]
        %v4815 = vstv %s4814
        %v4816 = vmul.f32 %v4664, %v4815
        %v4817 = vmul.f32 %v4665, %v4815
        %v4820 = vrot.slane %v4816, 1
        %v4821 = vrot.slane %v4817, 1
        %v4822 = vsel %vm3409, %v4820, %v4821
        %v4824 = vadd.f32 %v4813, %v4822
        %s4825 = sld [smem:[#allocation11 + $0x201]]
        %v4826 = vstv %s4825
        %v4827 = vmul.f32 %v4664, %v4826
        %v4828 = vmul.f32 %v4665, %v4826
        %v4831 = vrot.slane %v4827, 1
        %v4832 = vrot.slane %v4828, 1
        %v4833 = vsel %vm3409, %v4831, %v4832
        %4834 = vrot.lane.b32.xlu0 %v4833, 127
        %v4835 = vpop.permute.xlu0 %4834
        %v4837 = vadd.f32 %v4824, %v4835
        %s4838 = sld [smem:[#allocation11 + $0x281]]
        %v4839 = vstv %s4838
        %v4840 = vmul.f32 %v4664, %v4839
        %v4841 = vmul.f32 %v4665, %v4839
        %v4844 = vrot.slane %v4840, 1
        %v4845 = vrot.slane %v4841, 1
        %v4846 = vsel %vm3409, %v4844, %v4845
        %4847 = vrot.lane.b32.xlu0 %v4846, 126
        %v4848 = vpop.permute.xlu0 %4847
        %v4850 = vadd.f32 %v4837, %v4848
        %s4851 = sld [smem:[#allocation11 + $0x301]]
        %v4852 = vstv %s4851
        %v4853 = vmul.f32 %v4664, %v4852
        %v4854 = vmul.f32 %v4665, %v4852
        %v4857 = vrot.slane %v4853, 2
        %v4858 = vrot.slane %v4854, 2
        %v4859 = vsel %vm3447, %v4857, %v4858
        %v4861 = vadd.f32 %v4850, %v4859
        %s4862 = sld [smem:[#allocation11 + $0x381]]
        %v4863 = vstv %s4862
        %v4864 = vmul.f32 %v4664, %v4863
        %v4865 = vmul.f32 %v4665, %v4863
        %v4868 = vrot.slane %v4864, 2
        %v4869 = vrot.slane %v4865, 2
        %v4870 = vsel %vm3447, %v4868, %v4869
        %4871 = vrot.lane.b32.xlu0 %v4870, 127
        %v4872 = vpop.permute.xlu0 %4871
        %v4874 = vadd.f32 %v4861, %v4872
        %s4875 = sld [smem:[#allocation11 + $0x401]]
        %v4876 = vstv %s4875
        %v4877 = vmul.f32 %v4664, %v4876
        %v4878 = vmul.f32 %v4665, %v4876
        %v4881 = vrot.slane %v4877, 2
        %v4882 = vrot.slane %v4878, 2
        %v4883 = vsel %vm3447, %v4881, %v4882
        %4884 = vrot.lane.b32.xlu0 %v4883, 126
        %v4885 = vpop.permute.xlu0 %4884
        %v4887 = vadd.f32 %v4874, %v4885
        %s4888 = sld [smem:[#allocation12 + $0x1]]
        %v4889 = vstv %s4888
        %v4890 = vadd.f32 %v4887, %v4889
        %v4891 = vmax.f32 %v4890, 0.0
        %v4892 = vsel %vm3483, %v4891, 0.0
        %4893 = vadd.xlane.f32.xlu0 %v4892
        %v4894 = vpop.xlane.xlu0 %4893
        %v4895 = vrot.slane %v4894, 4
        %v4896 = vadd.f32 %v4894, %v4895
        %v4897 = vrot.slane %v4896, 2
        %v4898 = vadd.f32 %v4896, %v4897
        %v4899 = vrot.slane %v4898, 1
        %v4900 = vadd.f32 %v4898, %v4899
        %v4901 = vmul.f32 %v4900, 0.015625
        %v4902 = vmul.f32 %v4901, %v696
        %v4905 = vunpack.c.l.s4 1966171168
        %v4906 = vunpack.c.0.s8 %v4905
        %v4907 = vlaneseq
        %v4908 = vshrl.u32 %v4907, 7
        %v4909 = vsub.s32 %v4906, %v4908
        %v4910 = vrot.slane %v4902, %v4909
        %v4911 = vcombine.high %v4910, %v4910
        %v4913 = vunpack.c.l.s4 1966171168
        %v4914 = vunpack.c.0.s8 %v4913
        %v4915 = vlaneseq
        %v4916 = vshrl.u32 %v4915, 7
        %v4917 = vsub.s32 %v4914, %v4916
        %v4918 = vrot.slane %v4911, %v4917
        %v4920 = vadd.f32 %v4789, %v4918
        %s4921 = sld [smem:[#allocation14 + $0x80]]
        %v4922 = vstv %s4921
        %v4923 = vmul.f32 %v4901, %v4922
        %v4924 = vadd.f32 %v4793, %v4923
        %s4925 = sld [smem:[#allocation11 + $0x2]]
        %v4926 = vstv %s4925
        %v4927 = vmul.f32 %v4664, %v4926
        %v4928 = vadd.f32 %v4927, 0.0
        %s4929 = sld [smem:[#allocation11 + $0x82]]
        %v4930 = vstv %s4929
        %v4931 = vmul.f32 %v4664, %v4930
        %4933 = vrot.lane.b32.xlu0 %v4931, 127
        %v4934 = vpop.permute.xlu0 %4933
        %v4936 = vadd.f32 %v4928, %v4934
        %s4937 = sld [smem:[#allocation11 + $0x102]]
        %v4938 = vstv %s4937
        %v4939 = vmul.f32 %v4664, %v4938
        %4941 = vrot.lane.b32.xlu0 %v4939, 126
        %v4942 = vpop.permute.xlu0 %4941
        %v4944 = vadd.f32 %v4936, %v4942
        %s4945 = sld [smem:[#allocation11 + $0x182]]
        %v4946 = vstv %s4945
        %v4947 = vmul.f32 %v4664, %v4946
        %v4948 = vmul.f32 %v4665, %v4946
        %v4951 = vrot.slane %v4947, 1
        %v4952 = vrot.slane %v4948, 1
        %v4953 = vsel %vm3409, %v4951, %v4952
        %v4955 = vadd.f32 %v4944, %v4953
        %s4956 = sld [smem:[#allocation11 + $0x202]]
        %v4957 = vstv %s4956
        %v4958 = vmul.f32 %v4664, %v4957
        %v4959 = vmul.f32 %v4665, %v4957
        %v4962 = vrot.slane %v4958, 1
        %v4963 = vrot.slane %v4959, 1
        %v4964 = vsel %vm3409, %v4962, %v4963
        %4965 = vrot.lane.b32.xlu0 %v4964, 127
        %v4966 = vpop.permute.xlu0 %4965
        %v4968 = vadd.f32 %v4955, %v4966
        %s4969 = sld [smem:[#allocation11 + $0x282]]
        %v4970 = vstv %s4969
        %v4971 = vmul.f32 %v4664, %v4970
        %v4972 = vmul.f32 %v4665, %v4970
        %v4975 = vrot.slane %v4971, 1
        %v4976 = vrot.slane %v4972, 1
        %v4977 = vsel %vm3409, %v4975, %v4976
        %4978 = vrot.lane.b32.xlu0 %v4977, 126
        %v4979 = vpop.permute.xlu0 %4978
        %v4981 = vadd.f32 %v4968, %v4979
        %s4982 = sld [smem:[#allocation11 + $0x302]]
        %v4983 = vstv %s4982
        %v4984 = vmul.f32 %v4664, %v4983
        %v4985 = vmul.f32 %v4665, %v4983
        %v4988 = vrot.slane %v4984, 2
        %v4989 = vrot.slane %v4985, 2
        %v4990 = vsel %vm3447, %v4988, %v4989
        %v4992 = vadd.f32 %v4981, %v4990
        %s4993 = sld [smem:[#allocation11 + $0x382]]
        %v4994 = vstv %s4993
        %v4995 = vmul.f32 %v4664, %v4994
        %v4996 = vmul.f32 %v4665, %v4994
        %v4999 = vrot.slane %v4995, 2
        %v5000 = vrot.slane %v4996, 2
        %v5001 = vsel %vm3447, %v4999, %v5000
        %5002 = vrot.lane.b32.xlu0 %v5001, 127
        %v5003 = vpop.permute.xlu0 %5002
        %v5005 = vadd.f32 %v4992, %v5003
        %s5006 = sld [smem:[#allocation11 + $0x402]]
        %v5007 = vstv %s5006
        %v5008 = vmul.f32 %v4664, %v5007
        %v5009 = vmul.f32 %v4665, %v5007
        %v5012 = vrot.slane %v5008, 2
        %v5013 = vrot.slane %v5009, 2
        %v5014 = vsel %vm3447, %v5012, %v5013
        %5015 = vrot.lane.b32.xlu0 %v5014, 126
        %v5016 = vpop.permute.xlu0 %5015
        %v5018 = vadd.f32 %v5005, %v5016
        %s5019 = sld [smem:[#allocation12 + $0x2]]
        %v5020 = vstv %s5019
        %v5021 = vadd.f32 %v5018, %v5020
        %v5022 = vmax.f32 %v5021, 0.0
        %v5023 = vsel %vm3483, %v5022, 0.0
        %5024 = vadd.xlane.f32.xlu0 %v5023
        %v5025 = vpop.xlane.xlu0 %5024
        %v5026 = vrot.slane %v5025, 4
        %v5027 = vadd.f32 %v5025, %v5026
        %v5028 = vrot.slane %v5027, 2
        %v5029 = vadd.f32 %v5027, %v5028
        %v5030 = vrot.slane %v5029, 1
        %v5031 = vadd.f32 %v5029, %v5030
        %v5032 = vmul.f32 %v5031, 0.015625
        %v5033 = vmul.f32 %v5032, %v696
        %v5036 = vunpack.c.l.s4 1966171168
        %v5037 = vunpack.c.0.s8 %v5036
        %v5038 = vlaneseq
        %v5039 = vshrl.u32 %v5038, 7
        %v5040 = vsub.s32 %v5037, %v5039
        %v5041 = vrot.slane %v5033, %v5040
        %v5043 = vunpack.c.l.s4 1966171168
        %v5044 = vunpack.c.0.s8 %v5043
        %v5045 = vlaneseq
        %v5046 = vshrl.u32 %v5045, 7
        %v5047 = vsub.s32 %v5044, %v5046
        %v5048 = vrot.slane %v5041, %v5047
        %v5049 = vcombine.high %v5048, %v5048
        %v5051 = vadd.f32 %v4920, %v5049
        %s5052 = sld [smem:[#allocation14 + $0x100]]
        %v5053 = vstv %s5052
        %v5054 = vmul.f32 %v5032, %v5053
        %v5055 = vadd.f32 %v4924, %v5054
        %s5056 = sld [smem:[#allocation11 + $0x3]]
        %v5057 = vstv %s5056
        %v5058 = vmul.f32 %v4664, %v5057
        %v5059 = vadd.f32 %v5058, 0.0
        %s5060 = sld [smem:[#allocation11 + $0x83]]
        %v5061 = vstv %s5060
        %v5062 = vmul.f32 %v4664, %v5061
        %5064 = vrot.lane.b32.xlu0 %v5062, 127
        %v5065 = vpop.permute.xlu0 %5064
        %v5067 = vadd.f32 %v5059, %v5065
        %s5068 = sld [smem:[#allocation11 + $0x103]]
        %v5069 = vstv %s5068
        %v5070 = vmul.f32 %v4664, %v5069
        %5072 = vrot.lane.b32.xlu0 %v5070, 126
        %v5073 = vpop.permute.xlu0 %5072
        %v5075 = vadd.f32 %v5067, %v5073
        %s5076 = sld [smem:[#allocation11 + $0x183]]
        %v5077 = vstv %s5076
        %v5078 = vmul.f32 %v4664, %v5077
        %v5079 = vmul.f32 %v4665, %v5077
        %v5082 = vrot.slane %v5078, 1
        %v5083 = vrot.slane %v5079, 1
        %v5084 = vsel %vm3409, %v5082, %v5083
        %v5086 = vadd.f32 %v5075, %v5084
        %s5087 = sld [smem:[#allocation11 + $0x203]]
        %v5088 = vstv %s5087
        %v5089 = vmul.f32 %v4664, %v5088
        %v5090 = vmul.f32 %v4665, %v5088
        %v5093 = vrot.slane %v5089, 1
        %v5094 = vrot.slane %v5090, 1
        %v5095 = vsel %vm3409, %v5093, %v5094
        %5096 = vrot.lane.b32.xlu0 %v5095, 127
        %v5097 = vpop.permute.xlu0 %5096
        %v5099 = vadd.f32 %v5086, %v5097
        %s5100 = sld [smem:[#allocation11 + $0x283]]
        %v5101 = vstv %s5100
        %v5102 = vmul.f32 %v4664, %v5101
        %v5103 = vmul.f32 %v4665, %v5101
        %v5106 = vrot.slane %v5102, 1
        %v5107 = vrot.slane %v5103, 1
        %v5108 = vsel %vm3409, %v5106, %v5107
        %5109 = vrot.lane.b32.xlu0 %v5108, 126
        %v5110 = vpop.permute.xlu0 %5109
        %v5112 = vadd.f32 %v5099, %v5110
        %s5113 = sld [smem:[#allocation11 + $0x303]]
        %v5114 = vstv %s5113
        %v5115 = vmul.f32 %v4664, %v5114
        %v5116 = vmul.f32 %v4665, %v5114
        %v5119 = vrot.slane %v5115, 2
        %v5120 = vrot.slane %v5116, 2
        %v5121 = vsel %vm3447, %v5119, %v5120
        %v5123 = vadd.f32 %v5112, %v5121
        %s5124 = sld [smem:[#allocation11 + $0x383]]
        %v5125 = vstv %s5124
        %v5126 = vmul.f32 %v4664, %v5125
        %v5127 = vmul.f32 %v4665, %v5125
        %v5130 = vrot.slane %v5126, 2
        %v5131 = vrot.slane %v5127, 2
        %v5132 = vsel %vm3447, %v5130, %v5131
        %5133 = vrot.lane.b32.xlu0 %v5132, 127
        %v5134 = vpop.permute.xlu0 %5133
        %v5136 = vadd.f32 %v5123, %v5134
        %s5137 = sld [smem:[#allocation11 + $0x403]]
        %v5138 = vstv %s5137
        %v5139 = vmul.f32 %v4664, %v5138
        %v5140 = vmul.f32 %v4665, %v5138
        %v5143 = vrot.slane %v5139, 2
        %v5144 = vrot.slane %v5140, 2
        %v5145 = vsel %vm3447, %v5143, %v5144
        %5146 = vrot.lane.b32.xlu0 %v5145, 126
        %v5147 = vpop.permute.xlu0 %5146
        %v5149 = vadd.f32 %v5136, %v5147
        %s5150 = sld [smem:[#allocation12 + $0x3]]
        %v5151 = vstv %s5150
        %v5152 = vadd.f32 %v5149, %v5151
        %v5153 = vmax.f32 %v5152, 0.0
        %v5154 = vsel %vm3483, %v5153, 0.0
        %5155 = vadd.xlane.f32.xlu0 %v5154
        %v5156 = vpop.xlane.xlu0 %5155
        %v5157 = vrot.slane %v5156, 4
        %v5158 = vadd.f32 %v5156, %v5157
        %v5159 = vrot.slane %v5158, 2
        %v5160 = vadd.f32 %v5158, %v5159
        %v5161 = vrot.slane %v5160, 1
        %v5162 = vadd.f32 %v5160, %v5161
        %v5163 = vmul.f32 %v5162, 0.015625
        %v5164 = vmul.f32 %v5163, %v696
        %v5167 = vunpack.c.l.s4 1966171168
        %v5168 = vunpack.c.0.s8 %v5167
        %v5169 = vlaneseq
        %v5170 = vshrl.u32 %v5169, 7
        %v5171 = vsub.s32 %v5168, %v5170
        %v5172 = vrot.slane %v5164, %v5171
        %v5173 = vcombine.high %v5172, %v5172
        %v5175 = vunpack.c.l.s4 1966171168
        %v5176 = vunpack.c.0.s8 %v5175
        %v5177 = vlaneseq
        %v5178 = vshrl.u32 %v5177, 7
        %v5179 = vsub.s32 %v5176, %v5178
        %v5180 = vrot.slane %v5173, %v5179
        %v5181 = vcombine.high %v5180, %v5180
        %v5183 = vadd.f32 %v5051, %v5181
        %s5184 = sld [smem:[#allocation14 + $0x180]]
        %v5185 = vstv %s5184
        %v5186 = vmul.f32 %v5163, %v5185
        %v5187 = vadd.f32 %v5055, %v5186
        %s5188 = sld [smem:[#allocation11 + $0x4]]
        %v5189 = vstv %s5188
        %v5190 = vmul.f32 %v4664, %v5189
        %v5191 = vadd.f32 %v5190, 0.0
        %s5192 = sld [smem:[#allocation11 + $0x84]]
        %v5193 = vstv %s5192
        %v5194 = vmul.f32 %v4664, %v5193
        %5196 = vrot.lane.b32.xlu0 %v5194, 127
        %v5197 = vpop.permute.xlu0 %5196
        %v5199 = vadd.f32 %v5191, %v5197
        %s5200 = sld [smem:[#allocation11 + $0x104]]
        %v5201 = vstv %s5200
        %v5202 = vmul.f32 %v4664, %v5201
        %5204 = vrot.lane.b32.xlu0 %v5202, 126
        %v5205 = vpop.permute.xlu0 %5204
        %v5207 = vadd.f32 %v5199, %v5205
        %s5208 = sld [smem:[#allocation11 + $0x184]]
        %v5209 = vstv %s5208
        %v5210 = vmul.f32 %v4664, %v5209
        %v5211 = vmul.f32 %v4665, %v5209
        %v5214 = vrot.slane %v5210, 1
        %v5215 = vrot.slane %v5211, 1
        %v5216 = vsel %vm3409, %v5214, %v5215
        %v5218 = vadd.f32 %v5207, %v5216
        %s5219 = sld [smem:[#allocation11 + $0x204]]
        %v5220 = vstv %s5219
        %v5221 = vmul.f32 %v4664, %v5220
        %v5222 = vmul.f32 %v4665, %v5220
        %v5225 = vrot.slane %v5221, 1
        %v5226 = vrot.slane %v5222, 1
        %v5227 = vsel %vm3409, %v5225, %v5226
        %5228 = vrot.lane.b32.xlu0 %v5227, 127
        %v5229 = vpop.permute.xlu0 %5228
        %v5231 = vadd.f32 %v5218, %v5229
        %s5232 = sld [smem:[#allocation11 + $0x284]]
        %v5233 = vstv %s5232
        %v5234 = vmul.f32 %v4664, %v5233
        %v5235 = vmul.f32 %v4665, %v5233
        %v5238 = vrot.slane %v5234, 1
        %v5239 = vrot.slane %v5235, 1
        %v5240 = vsel %vm3409, %v5238, %v5239
        %5241 = vrot.lane.b32.xlu0 %v5240, 126
        %v5242 = vpop.permute.xlu0 %5241
        %v5244 = vadd.f32 %v5231, %v5242
        %s5245 = sld [smem:[#allocation11 + $0x304]]
        %v5246 = vstv %s5245
        %v5247 = vmul.f32 %v4664, %v5246
        %v5248 = vmul.f32 %v4665, %v5246
        %v5251 = vrot.slane %v5247, 2
        %v5252 = vrot.slane %v5248, 2
        %v5253 = vsel %vm3447, %v5251, %v5252
        %v5255 = vadd.f32 %v5244, %v5253
        %s5256 = sld [smem:[#allocation11 + $0x384]]
        %v5257 = vstv %s5256
        %v5258 = vmul.f32 %v4664, %v5257
        %v5259 = vmul.f32 %v4665, %v5257
        %v5262 = vrot.slane %v5258, 2
        %v5263 = vrot.slane %v5259, 2
        %v5264 = vsel %vm3447, %v5262, %v5263
        %5265 = vrot.lane.b32.xlu0 %v5264, 127
        %v5266 = vpop.permute.xlu0 %5265
        %v5268 = vadd.f32 %v5255, %v5266
        %s5269 = sld [smem:[#allocation11 + $0x404]]
        %v5270 = vstv %s5269
        %v5271 = vmul.f32 %v4664, %v5270
        %v5272 = vmul.f32 %v4665, %v5270
        %v5275 = vrot.slane %v5271, 2
        %v5276 = vrot.slane %v5272, 2
        %v5277 = vsel %vm3447, %v5275, %v5276
        %5278 = vrot.lane.b32.xlu0 %v5277, 126
        %v5279 = vpop.permute.xlu0 %5278
        %v5281 = vadd.f32 %v5268, %v5279
        %s5282 = sld [smem:[#allocation12 + $0x4]]
        %v5283 = vstv %s5282
        %v5284 = vadd.f32 %v5281, %v5283
        %v5285 = vmax.f32 %v5284, 0.0
        %v5286 = vsel %vm3483, %v5285, 0.0
        %5287 = vadd.xlane.f32.xlu0 %v5286
        %v5288 = vpop.xlane.xlu0 %5287
        %v5289 = vrot.slane %v5288, 4
        %v5290 = vadd.f32 %v5288, %v5289
        %v5291 = vrot.slane %v5290, 2
        %v5292 = vadd.f32 %v5290, %v5291
        %v5293 = vrot.slane %v5292, 1
        %v5294 = vadd.f32 %v5292, %v5293
        %v5295 = vmul.f32 %v5294, 0.015625
        %v5296 = vmul.f32 %v5295, %v696
        %v5298 = vcombine.high %v5296, %v5296
        %v5300 = vunpack.c.l.s4 1966171168
        %v5301 = vunpack.c.0.s8 %v5300
        %v5302 = vlaneseq
        %v5303 = vshrl.u32 %v5302, 7
        %v5304 = vsub.s32 %v5301, %v5303
        %v5305 = vrot.slane %v5298, %v5304
        %v5307 = vunpack.c.l.s4 1966171168
        %v5308 = vunpack.c.0.s8 %v5307
        %v5309 = vlaneseq
        %v5310 = vshrl.u32 %v5309, 7
        %v5311 = vsub.s32 %v5308, %v5310
        %v5312 = vrot.slane %v5305, %v5311
        %v5314 = vadd.f32 %v5183, %v5312
        %s5315 = sld [smem:[#allocation14 + $0x200]]
        %v5316 = vstv %s5315
        %v5317 = vmul.f32 %v5295, %v5316
        %v5318 = vadd.f32 %v5187, %v5317
        %s5319 = sld [smem:[#allocation11 + $0x5]]
        %v5320 = vstv %s5319
        %v5321 = vmul.f32 %v4664, %v5320
        %v5322 = vadd.f32 %v5321, 0.0
        %s5323 = sld [smem:[#allocation11 + $0x85]]
        %v5324 = vstv %s5323
        %v5325 = vmul.f32 %v4664, %v5324
        %5327 = vrot.lane.b32.xlu0 %v5325, 127
        %v5328 = vpop.permute.xlu0 %5327
        %v5330 = vadd.f32 %v5322, %v5328
        %s5331 = sld [smem:[#allocation11 + $0x105]]
        %v5332 = vstv %s5331
        %v5333 = vmul.f32 %v4664, %v5332
        %5335 = vrot.lane.b32.xlu0 %v5333, 126
        %v5336 = vpop.permute.xlu0 %5335
        %v5338 = vadd.f32 %v5330, %v5336
        %s5339 = sld [smem:[#allocation11 + $0x185]]
        %v5340 = vstv %s5339
        %v5341 = vmul.f32 %v4664, %v5340
        %v5342 = vmul.f32 %v4665, %v5340
        %v5345 = vrot.slane %v5341, 1
        %v5346 = vrot.slane %v5342, 1
        %v5347 = vsel %vm3409, %v5345, %v5346
        %v5349 = vadd.f32 %v5338, %v5347
        %s5350 = sld [smem:[#allocation11 + $0x205]]
        %v5351 = vstv %s5350
        %v5352 = vmul.f32 %v4664, %v5351
        %v5353 = vmul.f32 %v4665, %v5351
        %v5356 = vrot.slane %v5352, 1
        %v5357 = vrot.slane %v5353, 1
        %v5358 = vsel %vm3409, %v5356, %v5357
        %5359 = vrot.lane.b32.xlu0 %v5358, 127
        %v5360 = vpop.permute.xlu0 %5359
        %v5362 = vadd.f32 %v5349, %v5360
        %s5363 = sld [smem:[#allocation11 + $0x285]]
        %v5364 = vstv %s5363
        %v5365 = vmul.f32 %v4664, %v5364
        %v5366 = vmul.f32 %v4665, %v5364
        %v5369 = vrot.slane %v5365, 1
        %v5370 = vrot.slane %v5366, 1
        %v5371 = vsel %vm3409, %v5369, %v5370
        %5372 = vrot.lane.b32.xlu0 %v5371, 126
        %v5373 = vpop.permute.xlu0 %5372
        %v5375 = vadd.f32 %v5362, %v5373
        %s5376 = sld [smem:[#allocation11 + $0x305]]
        %v5377 = vstv %s5376
        %v5378 = vmul.f32 %v4664, %v5377
        %v5379 = vmul.f32 %v4665, %v5377
        %v5382 = vrot.slane %v5378, 2
        %v5383 = vrot.slane %v5379, 2
        %v5384 = vsel %vm3447, %v5382, %v5383
        %v5386 = vadd.f32 %v5375, %v5384
        %s5387 = sld [smem:[#allocation11 + $0x385]]
        %v5388 = vstv %s5387
        %v5389 = vmul.f32 %v4664, %v5388
        %v5390 = vmul.f32 %v4665, %v5388
        %v5393 = vrot.slane %v5389, 2
        %v5394 = vrot.slane %v5390, 2
        %v5395 = vsel %vm3447, %v5393, %v5394
        %5396 = vrot.lane.b32.xlu0 %v5395, 127
        %v5397 = vpop.permute.xlu0 %5396
        %v5399 = vadd.f32 %v5386, %v5397
        %s5400 = sld [smem:[#allocation11 + $0x405]]
        %v5401 = vstv %s5400
        %v5402 = vmul.f32 %v4664, %v5401
        %v5403 = vmul.f32 %v4665, %v5401
        %v5406 = vrot.slane %v5402, 2
        %v5407 = vrot.slane %v5403, 2
        %v5408 = vsel %vm3447, %v5406, %v5407
        %5409 = vrot.lane.b32.xlu0 %v5408, 126
        %v5410 = vpop.permute.xlu0 %5409
        %v5412 = vadd.f32 %v5399, %v5410
        %s5413 = sld [smem:[#allocation12 + $0x5]]
        %v5414 = vstv %s5413
        %v5415 = vadd.f32 %v5412, %v5414
        %v5416 = vmax.f32 %v5415, 0.0
        %v5417 = vsel %vm3483, %v5416, 0.0
        %5418 = vadd.xlane.f32.xlu0 %v5417
        %v5419 = vpop.xlane.xlu0 %5418
        %v5420 = vrot.slane %v5419, 4
        %v5421 = vadd.f32 %v5419, %v5420
        %v5422 = vrot.slane %v5421, 2
        %v5423 = vadd.f32 %v5421, %v5422
        %v5424 = vrot.slane %v5423, 1
        %v5425 = vadd.f32 %v5423, %v5424
        %v5426 = vmul.f32 %v5425, 0.015625
        %v5427 = vmul.f32 %v5426, %v696
        %v5429 = vcombine.high %v5427, %v5427
        %v5431 = vunpack.c.l.s4 1966171168
        %v5432 = vunpack.c.0.s8 %v5431
        %v5433 = vlaneseq
        %v5434 = vshrl.u32 %v5433, 7
        %v5435 = vsub.s32 %v5432, %v5434
        %v5436 = vrot.slane %v5429, %v5435
        %v5437 = vcombine.high %v5436, %v5436
        %v5439 = vunpack.c.l.s4 1966171168
        %v5440 = vunpack.c.0.s8 %v5439
        %v5441 = vlaneseq
        %v5442 = vshrl.u32 %v5441, 7
        %v5443 = vsub.s32 %v5440, %v5442
        %v5444 = vrot.slane %v5437, %v5443
        %v5446 = vadd.f32 %v5314, %v5444
        %s5447 = sld [smem:[#allocation14 + $0x280]]
        %v5448 = vstv %s5447
        %v5449 = vmul.f32 %v5426, %v5448
        %v5450 = vadd.f32 %v5318, %v5449
        %s5451 = sld [smem:[#allocation11 + $0x6]]
        %v5452 = vstv %s5451
        %v5453 = vmul.f32 %v4664, %v5452
        %v5454 = vadd.f32 %v5453, 0.0
        %s5455 = sld [smem:[#allocation11 + $0x86]]
        %v5456 = vstv %s5455
        %v5457 = vmul.f32 %v4664, %v5456
        %5459 = vrot.lane.b32.xlu0 %v5457, 127
        %v5460 = vpop.permute.xlu0 %5459
        %v5462 = vadd.f32 %v5454, %v5460
        %s5463 = sld [smem:[#allocation11 + $0x106]]
        %v5464 = vstv %s5463
        %v5465 = vmul.f32 %v4664, %v5464
        %5467 = vrot.lane.b32.xlu0 %v5465, 126
        %v5468 = vpop.permute.xlu0 %5467
        %v5470 = vadd.f32 %v5462, %v5468
        %s5471 = sld [smem:[#allocation11 + $0x186]]
        %v5472 = vstv %s5471
        %v5473 = vmul.f32 %v4664, %v5472
        %v5474 = vmul.f32 %v4665, %v5472
        %v5477 = vrot.slane %v5473, 1
        %v5478 = vrot.slane %v5474, 1
        %v5479 = vsel %vm3409, %v5477, %v5478
        %v5481 = vadd.f32 %v5470, %v5479
        %s5482 = sld [smem:[#allocation11 + $0x206]]
        %v5483 = vstv %s5482
        %v5484 = vmul.f32 %v4664, %v5483
        %v5485 = vmul.f32 %v4665, %v5483
        %v5488 = vrot.slane %v5484, 1
        %v5489 = vrot.slane %v5485, 1
        %v5490 = vsel %vm3409, %v5488, %v5489
        %5491 = vrot.lane.b32.xlu0 %v5490, 127
        %v5492 = vpop.permute.xlu0 %5491
        %v5494 = vadd.f32 %v5481, %v5492
        %s5495 = sld [smem:[#allocation11 + $0x286]]
        %v5496 = vstv %s5495
        %v5497 = vmul.f32 %v4664, %v5496
        %v5498 = vmul.f32 %v4665, %v5496
        %v5501 = vrot.slane %v5497, 1
        %v5502 = vrot.slane %v5498, 1
        %v5503 = vsel %vm3409, %v5501, %v5502
        %5504 = vrot.lane.b32.xlu0 %v5503, 126
        %v5505 = vpop.permute.xlu0 %5504
        %v5507 = vadd.f32 %v5494, %v5505
        %s5508 = sld [smem:[#allocation11 + $0x306]]
        %v5509 = vstv %s5508
        %v5510 = vmul.f32 %v4664, %v5509
        %v5511 = vmul.f32 %v4665, %v5509
        %v5514 = vrot.slane %v5510, 2
        %v5515 = vrot.slane %v5511, 2
        %v5516 = vsel %vm3447, %v5514, %v5515
        %v5518 = vadd.f32 %v5507, %v5516
        %s5519 = sld [smem:[#allocation11 + $0x386]]
        %v5520 = vstv %s5519
        %v5521 = vmul.f32 %v4664, %v5520
        %v5522 = vmul.f32 %v4665, %v5520
        %v5525 = vrot.slane %v5521, 2
        %v5526 = vrot.slane %v5522, 2
        %v5527 = vsel %vm3447, %v5525, %v5526
        %5528 = vrot.lane.b32.xlu0 %v5527, 127
        %v5529 = vpop.permute.xlu0 %5528
        %v5531 = vadd.f32 %v5518, %v5529
        %s5532 = sld [smem:[#allocation11 + $0x406]]
        %v5533 = vstv %s5532
        %v5534 = vmul.f32 %v4664, %v5533
        %v5535 = vmul.f32 %v4665, %v5533
        %v5538 = vrot.slane %v5534, 2
        %v5539 = vrot.slane %v5535, 2
        %v5540 = vsel %vm3447, %v5538, %v5539
        %5541 = vrot.lane.b32.xlu0 %v5540, 126
        %v5542 = vpop.permute.xlu0 %5541
        %v5544 = vadd.f32 %v5531, %v5542
        %s5545 = sld [smem:[#allocation12 + $0x6]]
        %v5546 = vstv %s5545
        %v5547 = vadd.f32 %v5544, %v5546
        %v5548 = vmax.f32 %v5547, 0.0
        %v5549 = vsel %vm3483, %v5548, 0.0
        %5550 = vadd.xlane.f32.xlu0 %v5549
        %v5551 = vpop.xlane.xlu0 %5550
        %v5552 = vrot.slane %v5551, 4
        %v5553 = vadd.f32 %v5551, %v5552
        %v5554 = vrot.slane %v5553, 2
        %v5555 = vadd.f32 %v5553, %v5554
        %v5556 = vrot.slane %v5555, 1
        %v5557 = vadd.f32 %v5555, %v5556
        %v5558 = vmul.f32 %v5557, 0.015625
        %v5559 = vmul.f32 %v5558, %v696
        %v5561 = vcombine.high %v5559, %v5559
        %v5563 = vunpack.c.l.s4 1966171168
        %v5564 = vunpack.c.0.s8 %v5563
        %v5565 = vlaneseq
        %v5566 = vshrl.u32 %v5565, 7
        %v5567 = vsub.s32 %v5564, %v5566
        %v5568 = vrot.slane %v5561, %v5567
        %v5570 = vunpack.c.l.s4 1966171168
        %v5571 = vunpack.c.0.s8 %v5570
        %v5572 = vlaneseq
        %v5573 = vshrl.u32 %v5572, 7
        %v5574 = vsub.s32 %v5571, %v5573
        %v5575 = vrot.slane %v5568, %v5574
        %v5576 = vcombine.high %v5575, %v5575
        %v5578 = vadd.f32 %v5446, %v5576
        %s5579 = sld [smem:[#allocation14 + $0x300]]
        %v5580 = vstv %s5579
        %v5581 = vmul.f32 %v5558, %v5580
        %v5582 = vadd.f32 %v5450, %v5581
        %s5583 = sld [smem:[#allocation11 + $0x7]]
        %v5584 = vstv %s5583
        %v5585 = vmul.f32 %v4664, %v5584
        %v5586 = vadd.f32 %v5585, 0.0
        %s5587 = sld [smem:[#allocation11 + $0x87]]
        %v5588 = vstv %s5587
        %v5589 = vmul.f32 %v4664, %v5588
        %5591 = vrot.lane.b32.xlu0 %v5589, 127
        %v5592 = vpop.permute.xlu0 %5591
        %v5594 = vadd.f32 %v5586, %v5592
        %s5595 = sld [smem:[#allocation11 + $0x107]]
        %v5596 = vstv %s5595
        %v5597 = vmul.f32 %v4664, %v5596
        %5599 = vrot.lane.b32.xlu0 %v5597, 126
        %v5600 = vpop.permute.xlu0 %5599
        %v5602 = vadd.f32 %v5594, %v5600
        %s5603 = sld [smem:[#allocation11 + $0x187]]
        %v5604 = vstv %s5603
        %v5605 = vmul.f32 %v4664, %v5604
        %v5606 = vmul.f32 %v4665, %v5604
        %v5609 = vrot.slane %v5605, 1
        %v5610 = vrot.slane %v5606, 1
        %v5611 = vsel %vm3409, %v5609, %v5610
        %v5613 = vadd.f32 %v5602, %v5611
        %s5614 = sld [smem:[#allocation11 + $0x207]]
        %v5615 = vstv %s5614
        %v5616 = vmul.f32 %v4664, %v5615
        %v5617 = vmul.f32 %v4665, %v5615
        %v5620 = vrot.slane %v5616, 1
        %v5621 = vrot.slane %v5617, 1
        %v5622 = vsel %vm3409, %v5620, %v5621
        %5623 = vrot.lane.b32.xlu0 %v5622, 127
        %v5624 = vpop.permute.xlu0 %5623
        %v5626 = vadd.f32 %v5613, %v5624
        %s5627 = sld [smem:[#allocation11 + $0x287]]
        %v5628 = vstv %s5627
        %v5629 = vmul.f32 %v4664, %v5628
        %v5630 = vmul.f32 %v4665, %v5628
        %v5633 = vrot.slane %v5629, 1
        %v5634 = vrot.slane %v5630, 1
        %v5635 = vsel %vm3409, %v5633, %v5634
        %5636 = vrot.lane.b32.xlu0 %v5635, 126
        %v5637 = vpop.permute.xlu0 %5636
        %v5639 = vadd.f32 %v5626, %v5637
        %s5640 = sld [smem:[#allocation11 + $0x307]]
        %v5641 = vstv %s5640
        %v5642 = vmul.f32 %v4664, %v5641
        %v5643 = vmul.f32 %v4665, %v5641
        %v5646 = vrot.slane %v5642, 2
        %v5647 = vrot.slane %v5643, 2
        %v5648 = vsel %vm3447, %v5646, %v5647
        %v5650 = vadd.f32 %v5639, %v5648
        %s5651 = sld [smem:[#allocation11 + $0x387]]
        %v5652 = vstv %s5651
        %v5653 = vmul.f32 %v4664, %v5652
        %v5654 = vmul.f32 %v4665, %v5652
        %v5657 = vrot.slane %v5653, 2
        %v5658 = vrot.slane %v5654, 2
        %v5659 = vsel %vm3447, %v5657, %v5658
        %5660 = vrot.lane.b32.xlu0 %v5659, 127
        %v5661 = vpop.permute.xlu0 %5660
        %v5663 = vadd.f32 %v5650, %v5661
        %s5664 = sld [smem:[#allocation11 + $0x407]]
        %v5665 = vstv %s5664
        %v5666 = vmul.f32 %v4664, %v5665
        %v5667 = vmul.f32 %v4665, %v5665
        %v5670 = vrot.slane %v5666, 2
        %v5671 = vrot.slane %v5667, 2
        %v5672 = vsel %vm3447, %v5670, %v5671
        %5673 = vrot.lane.b32.xlu0 %v5672, 126
        %v5674 = vpop.permute.xlu0 %5673
        %v5676 = vadd.f32 %v5663, %v5674
        %s5677 = sld [smem:[#allocation12 + $0x7]]
        %v5678 = vstv %s5677
        %v5679 = vadd.f32 %v5676, %v5678
        %v5680 = vmax.f32 %v5679, 0.0
        %v5681 = vsel %vm3483, %v5680, 0.0
        %5682 = vadd.xlane.f32.xlu0 %v5681
        %v5683 = vpop.xlane.xlu0 %5682
        %v5684 = vrot.slane %v5683, 4
        %v5685 = vadd.f32 %v5683, %v5684
        %v5686 = vrot.slane %v5685, 2
        %v5687 = vadd.f32 %v5685, %v5686
        %v5688 = vrot.slane %v5687, 1
        %v5689 = vadd.f32 %v5687, %v5688
        %v5690 = vmul.f32 %v5689, 0.015625
        %v5691 = vmul.f32 %v5690, %v696
        %v5693 = vcombine.high %v5691, %v5691
        %v5695 = vunpack.c.l.s4 1966171168
        %v5696 = vunpack.c.0.s8 %v5695
        %v5697 = vlaneseq
        %v5698 = vshrl.u32 %v5697, 7
        %v5699 = vsub.s32 %v5696, %v5698
        %v5700 = vrot.slane %v5693, %v5699
        %v5701 = vcombine.high %v5700, %v5700
        %v5703 = vunpack.c.l.s4 1966171168
        %v5704 = vunpack.c.0.s8 %v5703
        %v5705 = vlaneseq
        %v5706 = vshrl.u32 %v5705, 7
        %v5707 = vsub.s32 %v5704, %v5706
        %v5708 = vrot.slane %v5701, %v5707
        %v5709 = vcombine.high %v5708, %v5708
        %v5711 = vadd.f32 %v5578, %v5709
        %s5712 = sld [smem:[#allocation14 + $0x380]]
        %v5713 = vstv %s5712
        %v5714 = vmul.f32 %v5690, %v5713
        %v5715 = vadd.f32 %v5582, %v5714
        %v5716 = vsub.f32 0.0, %v5715
        %v5717 = vmul.f32 %v5716, 1.442695
        %v5718 = vpow.pop %v5717
        %v5719 = vadd.f32 %v5718, 1.0
        %v5720 = vrcp.pop %v5719
        %v5721 = vmul.f32 1.0, %v5720
        %v5722 = vsub.f32 1.0, %v2921
        %v5723 = vadd.f32 %v4427, %v5721
        %v5724 = vadd.f32 %v5723, 1e-08
        %v5725 = vrcp.pop %v5724
        %v5726 = vmul.f32 1.0, %v5725
        %v5727 = vmul.f32 %v4427, %v5726
        %v5728 = vmul.f32 %v5727, %v4417
        %v5729 = vadd.f32 %v5728, 0.0
        %v5730 = vmul.f32 %v5721, %v5726
        %v5731 = vmul.f32 %v5730, %v5711
        %v5732 = vadd.f32 %v5729, %v5731
        %v5733 = vmul.f32 %v5722, %v2762
        %v5734 = vsub.f32 1.0, %v5722
        %v5735 = vmul.f32 %v5734, %v5732
        %v5736 = vadd.f32 %v5733, %v5735
        %v5738 = vlaneseq
        %v5739 = vshrl.u32 %v5738, 7
        %v5740 = vsub.s32 0, %v5739
        %v5741 = vrot.slane %v2762, %v5740
        %5742 = vrot.lane.b32.xlu0 %v5741, 3
        %v5743 = vpop.permute.xlu0 %5742
        %v5746 = vlaneseq
        %v5747 = vshrl.u32 %v5746, 7
        %v5748 = vsub.s32 0, %v5747
        %v5749 = vrot.slane %v4417, %v5748
        %5750 = vrot.lane.b32.xlu0 %v5749, 6
        %v5751 = vpop.permute.xlu0 %5750
        %v5754 = vlaneseq
        %v5755 = vshrl.u32 %v5754, 7
        %v5756 = vsub.s32 0, %v5755
        %v5757 = vrot.slane %v5711, %v5756
        %5758 = vrot.lane.b32.xlu0 %v5757, 9
        %v5759 = vpop.permute.xlu0 %5758
        %vm5761 = vcmask 23552
        %v5762 = vsel %vm5761, %v5736, %v5743
        %vm5763 = vcmask 48128
        %v5764 = vsel %vm5763, %v5762, %v5751
        %vm5765 = vcmask 72704
        %v5766 = vsel %vm5765, %v5764, %v5759
        %vm5767 = vcmask 97280
        %v5768 = vsel %vm5767, %v5766, %v4427
        %vm5769 = vcmask 105472
        %v5770 = vsel %vm5769, %v5768, %v5721
        %vm5771 = vcmask 113664
        %v5772 = vsel %vm5771, %v5770, %v5722
        %vm5773 = vcmask 121856
        %v5774 = vsel %vm5773, %v5772, %v2921
        %vm5775 = vcmask 130048
        %v5776 = vsel %vm5775, %v5774, %v3092
        %vm5777 = vcmask 138240
        %v5778 = vsel %vm5777, %v5776, %v3118
        %vm5779 = vcmask 146432
        %v5780 = vsel %vm5779, %v5778, 0.0
        %5781 = vst [vmem:[%s693] sm:$0x1] %v5780
        %p5782 = scmp.lt.s32.totalorder %s41, 1
        %s5783 = scalar_select %p5782, %s41, 1
        %s5784 = scalar_lea.vmem %s15, %s5783
        %s5785 = sand.u32 %s395, 1
        %s5786 = scalar_lea.sflag [#allocation4], %s5785
        %s5787 = sand.u32 %s395, 1
        %s5788 = smul.addr %s5787, 32
        %s5789 = scalar_lea.vmem [#allocation15], %s5788
        %s5790 = sand.u32 %s41, 1
        %s5791 = scalar_lea.sflag [#allocation17], %s5790
        %s5792 = sand.u32 %s421, 1
        %s5793 = smul.addr %s5792, 64
        %s5794 = scalar_lea.vmem [#allocation16], %s5793
        %s5795 = sand.u32 %s41, 1
        %s5796 = scalar_lea.sflag [#allocation17], %s5795
        %s5797 = sand.u32 %s447, 1
        %s5798 = smul.addr %s5797, 16
        %s5799 = scalar_lea.vmem [#allocation18], %s5798
        // Predicated region
        $region109: #{ugpl_forward.1} parent=79 // pred_check
          %p5800 = pneg %p379
        $region110: #{ugpl_forward.1} parent=79 // pred_check_branch
          %5802 = sbr.rel (%p5800) target = $region112
        $region111: #{ugpl_forward.1} parent=79 // pred_region
          _
        $region112: #{ugpl_forward.1} parent=79 // pred_fallthru
          _
        // Predicated region
        $region113: #{ugpl_forward.1} parent=79 // pred_check
          %p5803 = pneg %p405
        $region114: #{ugpl_forward.1} parent=79 // pred_check_branch
          %5805 = sbr.rel (%p5803) target = $region116
        $region115: #{ugpl_forward.1} parent=79 // pred_region
          %s5807 = ssub.s32 512, 512
          %5808 = vsyncadd %s5786, %s5807
          %s5809 = smul.addr %s41, 4
          %s5810 = smul.addr %s5809, 128
          %s5811 = scalar_lea.hbm %s16, %s5810
          %s5812 = sshll.u32 %s5789, 4
          %s5813 = int_to_ptr.vmem [resolvable:$true] %s5812
          %5818 = dma.vmem_to_hbm [thread:$0]  %s5813, 512, %s5811, %s5786, 128, 128, 8
        $region116: #{ugpl_forward.1} parent=79 // pred_fallthru
          _
        // Predicated region
        $region117: #{ugpl_forward.1} parent=79 // pred_check
          %p5819 = pneg %p431
        $region118: #{ugpl_forward.1} parent=79 // pred_check_branch
          %5821 = sbr.rel (%p5819) target = $region120
        $region119: #{ugpl_forward.1} parent=79 // pred_region
          %s5823 = ssub.s32 1024, 1024
          %5824 = vsyncadd %s5791, %s5823
          %s5825 = smul.addr %s41, 8
          %s5826 = smul.addr %s5825, 128
          %s5827 = scalar_lea.hbm %s17, %s5826
          %s5828 = sshll.u32 %s5794, 4
          %s5829 = int_to_ptr.vmem [resolvable:$true] %s5828
          %5834 = dma.vmem_to_hbm [thread:$0]  %s5829, 1024, %s5827, %s5791, 128, 128, 8
        $region120: #{ugpl_forward.1} parent=79 // pred_fallthru
          _
        // Predicated region
        $region121: #{ugpl_forward.1} parent=79 // pred_check
          %p5835 = pneg %p457
        $region122: #{ugpl_forward.1} parent=79 // pred_check_branch
          %5837 = sbr.rel (%p5835) target = $region124
        $region123: #{ugpl_forward.1} parent=79 // pred_region
          %s5839 = ssub.s32 256, 256
          %5840 = vsyncadd %s5796, %s5839
          %s5841 = smul.addr %s41, 2
          %s5842 = smul.addr %s5841, 128
          %s5843 = scalar_lea.hbm %s18, %s5842
          %s5844 = sshll.u32 %s5799, 4
          %s5845 = int_to_ptr.vmem [resolvable:$true] %s5844
          %5850 = dma.vmem_to_hbm [thread:$0]  %s5845, 256, %s5843, %s5796, 128, 128, 8
        $region124: #{ugpl_forward.1} parent=79 // pred_fallthru
          _
      $region80: #{ugpl_forward.1} parent=5 // pred_fallthru
        _
      %p5851 = scmp.le.s32.totalorder 2, %s36
      // Predicated region
      $region125: #{ugpl_forward.1} parent=5 // pred_check
        %p5852 = pneg %p5851
      $region126: #{ugpl_forward.1} parent=5 // pred_check_branch
        %5854 = sbr.rel (%p5852) target = $region128
      $region127: #{ugpl_forward.1} parent=5 // pred_region
        %s5855 = ssub.s32 %s36, 2
        // Predicated region
        $region129: #{ugpl_forward.1} parent=127 // pred_check
          %p5856 = pneg %p385
        $region130: #{ugpl_forward.1} parent=127 // pred_check_branch
          %5858 = sbr.rel (%p5856) target = $region132
        $region131: #{ugpl_forward.1} parent=127 // pred_region
          %p5859 = scmp.lt.s32.totalorder %s42, 1
          %s5860 = scalar_select %p5859, %s42, 1
          %s5861 = scalar_lea.vmem %s15, %s5860
        $region132: #{ugpl_forward.1} parent=127 // pred_fallthru
          _
        // Predicated region
        $region133: #{ugpl_forward.1} parent=127 // pred_check
          %p5862 = pneg %p411
        $region134: #{ugpl_forward.1} parent=127 // pred_check_branch
          %5864 = sbr.rel (%p5862) target = $region136
        $region135: #{ugpl_forward.1} parent=127 // pred_region
          %s5865 = sand.u32 %s396, 1
          %s5866 = scalar_lea.sflag [#allocation4], %s5865
          %s5867 = sand.u32 %s396, 1
          %s5868 = smul.addr %s5867, 32
          %s5869 = scalar_lea.vmem [#allocation15], %s5868
          %5870 = dma.done %s5866, 512
        $region136: #{ugpl_forward.1} parent=127 // pred_fallthru
          _
        // Predicated region
        $region137: #{ugpl_forward.1} parent=127 // pred_check
          %p5871 = pneg %p437
        $region138: #{ugpl_forward.1} parent=127 // pred_check_branch
          %5873 = sbr.rel (%p5871) target = $region140
        $region139: #{ugpl_forward.1} parent=127 // pred_region
          %s5874 = sand.u32 %s42, 1
          %s5875 = scalar_lea.sflag [#allocation17], %s5874
          %s5876 = sand.u32 %s422, 1
          %s5877 = smul.addr %s5876, 64
          %s5878 = scalar_lea.vmem [#allocation16], %s5877
          %5879 = dma.done %s5875, 1024
        $region140: #{ugpl_forward.1} parent=127 // pred_fallthru
          _
        // Predicated region
        $region141: #{ugpl_forward.1} parent=127 // pred_check
          %p5880 = pneg %p463
        $region142: #{ugpl_forward.1} parent=127 // pred_check_branch
          %5882 = sbr.rel (%p5880) target = $region144
        $region143: #{ugpl_forward.1} parent=127 // pred_region
          %s5883 = sand.u32 %s42, 1
          %s5884 = scalar_lea.sflag [#allocation17], %s5883
          %s5885 = sand.u32 %s448, 1
          %s5886 = smul.addr %s5885, 16
          %s5887 = scalar_lea.vmem [#allocation18], %s5886
          %5888 = dma.done %s5884, 256
        $region144: #{ugpl_forward.1} parent=127 // pred_fallthru
          _
      $region128: #{ugpl_forward.1} parent=5 // pred_fallthru
        _
    $region6: #{ugpl_forward.1} parent=1 // loop_footer
      %s40 = sadd.s32 1, %s36
    $region7: #{ugpl_forward.1} parent=1 // loop_footer_branch
      %35 = sbr.rel target = $region3
    $region8: #{ugpl_forward.1} parent=1 // loop_exit
      _
    %5889 = vsyncpa [#allocation4], 1
    %s5890 = scalar_lea.sflag [#allocation4], 1
    %5891 = vsyncpa %s5890, 1
    %5892 = vsyncpa [#allocation17], 1
    %s5893 = scalar_lea.sflag [#allocation17], 1
    %5894 = vsyncpa %s5893, 1
    %5895 = vsyncpa [#allocation5], 1
    %s5896 = scalar_lea.sflag [#allocation5], 1
    %5897 = vsyncpa %s5896, 1
    %5898 = vsyncpa [#allocation7], 1
    %5899 = vsyncpa [#allocation10], 1
    %5900 = vsyncpa [#allocation13], 1

</llo_original>
